<compile_context>
chip_gen: v5e
topology: v5e:2x2
jax: 0.10.0
libtpu: 0.0.40
codegen_flags: <defaults>
</compile_context>

<pallas_src>
import jax
import jax.numpy as jnp
from jax import lax
from jax.experimental import pallas as pl
from jax.experimental.pallas import tpu as pltpu


# ------------------------------ fused kernel --------------------------------

def _inception_a_kernel(x_ref, invc_ref, wr_ref, bact_ref,
                        w1_ref, b1_ref, w2b_ref, b2b_ref, w2c_ref, b2c_ref,
                        b3_ref, out_ref, padc_ref, padp_ref, patch_ref):
    # x_ref    : (B, H, W, 384) bf16   input block (B images)
    # invc_ref : (H, W, 1) f32         1 / (valid 3x3 neighbour count)
    # wr_ref   : (384, 512) bf16       packed root: [b1a|0|b2a|0|b0|0|b3|0], 128-col slots
    # bact_ref : (1, 384) f32          folded-BN biases for the activated root cols
    # w1/w2b   : (576, 96) bf16        3x3 weights, rows = (dy*3+dx)*Cin + c
    # w2c_ref  : (864, 96) bf16
    # b*_ref   : (1, 96) f32
    # out_ref  : (B, H, W, 384) bf16   [x0 | x1 | x2 | x3] channel layout
    # padc_ref : (H+2, W+2, 128) f32   zero-halo scratch for the 3x3 convs
    # padp_ref : (H+2, W+2, 128) f32   zero-halo scratch for the avg-pool of z3
    # patch_ref: (B, H, W, 864) bf16   im2col patch slab (bf16 -> half the vst traffic)
    B, H, W, C = x_ref.shape
    M = H * W
    BM = B * M
    f32, bf16 = jnp.float32, jnp.bfloat16

    def zero_ring(ref):
        # Zero only the halo ring (2 row strips + 2 column strips); interiors are
        # always overwritten before being read.  Done every step on purpose:
        # each TensorCore has its own scratch under "parallel" semantics.
        Hp, Wp, Cc = ref.shape
        ref[0:1, :, :] = jnp.zeros((1, Wp, Cc), ref.dtype)
        ref[Hp - 1:Hp, :, :] = jnp.zeros((1, Wp, Cc), ref.dtype)
        ref[:, 0:1, :] = jnp.zeros((Hp, 1, Cc), ref.dtype)
        ref[:, Wp - 1:Wp, :] = jnp.zeros((Hp, 1, Cc), ref.dtype)

    def tap_sum(ref, c):
        s = None
        for dy in range(3):
            for dx in range(3):
                t = ref[dy:dy + H, dx:dx + W, 0:c]
                s = t if s is None else s + t
        return s                                          # (H, W, c) f32

    zero_ring(padc_ref)
    zero_ring(padp_ref)

    # ---- fused root 1x1 convs: ONE K=384 matmul producing b1a|b2a|b0|b3 ----
    xf = x_ref[...].reshape(BM, C)                        # bf16
    y = jnp.dot(xf, wr_ref[...], preferred_element_type=f32)       # (BM, 512) f32
    y_act = jnp.maximum(y[:, 0:384] + bact_ref[...], 0.0)          # bias+ReLU slots
    z3 = y[:, 384:480]                                    # raw x@w3 (pool comes first)

    x0 = y_act[:, 256:352].astype(bf16)                   # branch0 output (BM, 96)

    # ---- branch3: 3x3 avg-pool (count_include_pad=False) AFTER the 1x1 ----
    # pool(x) @ w3 == pool(x @ w3); the valid-count scaling is the precomputed
    # (H, W, 1) reciprocal constant applied to 96 channels instead of 384.
    invc = invc_ref[...]                                  # (H, W, 1) f32
    x3_parts = []
    for b in range(B):
        padp_ref[1:H + 1, 1:W + 1, 0:96] = z3[b * M:(b + 1) * M, :].reshape(H, W, 96)
        s = tap_sum(padp_ref, 96)                         # (H, W, 96) f32
        x3b = jnp.maximum(s * invc + b3_ref[...], 0.0)
        x3_parts.append(x3b.reshape(M, 96).astype(bf16))
    x3 = x3_parts[0] if B == 1 else jnp.concatenate(x3_parts, axis=0)   # (BM, 96)

    # ---- 3x3 conv (padding=1) via per-image im2col + one big-K matmul/block ----
    def conv3x3_relu(src, cin, w_r, b_r):
        # src: (BM, cin) f32/bf16 activation in flattened NHWC row order.
        for b in range(B):
            padc_ref[1:H + 1, 1:W + 1, 0:cin] = (
                src[b * M:(b + 1) * M, :].reshape(H, W, cin).astype(f32))
            for k in range(9):
                dy, dx = divmod(k, 3)
                patch_ref[b, :, :, k * cin:(k + 1) * cin] = (
                    padc_ref[dy:dy + H, dx:dx + W, 0:cin].astype(bf16))
        p = patch_ref[:, :, :, 0:9 * cin].reshape(BM, 9 * cin)
        yc = jnp.dot(p, w_r[...], preferred_element_type=f32)        # (BM, 96)
        return jnp.maximum(yc + b_r[...], 0.0)

    # branch1: 1x1 (64) -> 3x3 (96)
    x1 = conv3x3_relu(y_act[:, 0:64], 64, w1_ref, b1_ref).astype(bf16)

    # branch2: 1x1 (64) -> 3x3 (96) -> 3x3 (96)
    y2 = conv3x3_relu(y_act[:, 128:192], 64, w2b_ref, b2b_ref)
    x2 = conv3x3_relu(y2, 96, w2c_ref, b2c_ref).astype(bf16)

    # ---- single lane-dense store of the concatenated block output ----
    out = jnp.concatenate([x0, x1, x2, x3], axis=-1)      # (BM, 384) bf16
    out_ref[...] = out.reshape(B, H, W, 384)


# ------------------------------ JAX wrappers ---------------------------------

def _inv_count(H, W):
    """1 / (valid 3x3 neighbour count) for AvgPool2d(3,1,1, count_include_pad=False)."""
    r = jnp.arange(H)
    c = jnp.arange(W)
    ch = 1.0 + (r > 0) + (r < H - 1)
    cw = 1.0 + (c > 0) + (c < W - 1)
    cnt = ch[:, None] * cw[None, :]
    return (1.0 / cnt).reshape(H, W, 1).astype(jnp.float32)


def inception_a_forward_nhwc(x_nhwc, pk, block_n=1):
    """Core entry: NHWC bf16 in, NHWC bf16 out.  `block_n` images per grid step."""
    N, H, W, C = x_nhwc.shape
    assert C == 384, "Inception_A expects 384 input channels"
    assert N % block_n == 0, "block_n must divide the batch"
    B = block_n
    x = x_nhwc.astype(jnp.bfloat16)
    inv_cnt = _inv_count(H, W)

    return pl.pallas_call(
        _inception_a_kernel,
        out_shape=jax.ShapeDtypeStruct((N, H, W, 384), jnp.bfloat16),
        grid_spec=pltpu.PrefetchScalarGridSpec(
            num_scalar_prefetch=0,
            grid=(N // B,),
            in_specs=[
                pl.BlockSpec((B, H, W, C), lambda n: (n, 0, 0, 0)),   # x
                pl.BlockSpec((H, W, 1), lambda n: (0, 0, 0)),         # inv_cnt
                pl.BlockSpec((C, 512), lambda n: (0, 0)),             # w_root (packed)
                pl.BlockSpec((1, 384), lambda n: (0, 0)),             # b_act
                pl.BlockSpec((9 * 64, 96), lambda n: (0, 0)),         # w1b
                pl.BlockSpec((1, 96), lambda n: (0, 0)),              # b1b
                pl.BlockSpec((9 * 64, 96), lambda n: (0, 0)),         # w2b
                pl.BlockSpec((1, 96), lambda n: (0, 0)),              # b2b
                pl.BlockSpec((9 * 96, 96), lambda n: (0, 0)),         # w2c
                pl.BlockSpec((1, 96), lambda n: (0, 0)),              # b2c
                pl.BlockSpec((1, 96), lambda n: (0, 0)),              # b3
            ],
            out_specs=pl.BlockSpec((B, H, W, 384), lambda n: (n, 0, 0, 0)),
            scratch_shapes=[
                pltpu.VMEM((H + 2, W + 2, 128), jnp.float32),    # conv zero-halo
                pltpu.VMEM((H + 2, W + 2, 128), jnp.float32),    # pool zero-halo
                pltpu.VMEM((B, H, W, 9 * 96), jnp.bfloat16),     # im2col patches
            ],
        ),
        compiler_params=pltpu.CompilerParams(
            dimension_semantics=("parallel",),
        ),
    )(x, inv_cnt, pk["w_root"], pk["b_act"], pk["w1b"], pk["b1b"],
      pk["w2b"], pk["b2b"], pk["w2c"], pk["b2c"], pk["b3"])


def inception_a_forward(x_nchw, pk, block_n=1):
    """PyTorch-compatible wrapper: NCHW in, NCHW (bf16) out.
    Prefer inception_a_forward_nhwc in a full network to avoid the transposes."""
    x = jnp.transpose(x_nchw, (0, 2, 3, 1))
    out = inception_a_forward_nhwc(x, pk, block_n=block_n)
    return jnp.transpose(out, (0, 3, 1, 2))


# --------------------- deterministic parameter creation ---------------------

def _conv_bn_params(key, cin, cout, ksize):
    """Random conv weight + BatchNorm(eval, eps=1e-3) params folded into (w, bias)."""
    k1, k2, k3, k4, k5 = jax.random.split(key, 5)
    if ksize == 1:
        w = jax.random.normal(k1, (cin, cout), jnp.float32) * 0.05
    else:
        w = jax.random.normal(k1, (ksize, ksize, cin, cout), jnp.float32) * 0.05
    gamma = jax.random.uniform(k2, (cout,), jnp.float32, 0.5, 1.5)
    beta = jax.random.normal(k3, (cout,), jnp.float32) * 0.1
    mean = jax.random.normal(k4, (cout,), jnp.float32) * 0.1
    var = jax.random.uniform(k5, (cout,), jnp.float32, 0.5, 1.5)
    scale = gamma / jnp.sqrt(var + 1e-3)
    return (w * scale).astype(jnp.float32), (beta - mean * scale).astype(jnp.float32)


def make_params(key):
    ks = jax.random.split(key, 7)
    return {
        "b0":  _conv_bn_params(ks[0], 384, 96, 1),
        "b1a": _conv_bn_params(ks[1], 384, 64, 1),
        "b1b": _conv_bn_params(ks[2], 64, 96, 3),
        "b2a": _conv_bn_params(ks[3], 384, 64, 1),
        "b2b": _conv_bn_params(ks[4], 64, 96, 3),
        "b2c": _conv_bn_params(ks[5], 96, 96, 3),
        "b3":  _conv_bn_params(ks[6], 384, 96, 1),
    }


def pack_params(p):
    """Pack folded per-conv params into the fused-kernel layout.

    Root weight (384, 512), 128-lane-aligned column slots (zero-padded):
      [0:64]=b1a  [128:192]=b2a  [256:352]=b0  [384:480]=b3 (raw, pooled later)
    """
    f32, bf16 = jnp.float32, jnp.bfloat16

    def pack3(w):   # (3,3,Cin,Cout) -> (9*Cin, Cout), row = (dy*3+dx)*Cin + c
        return w.reshape(9 * w.shape[2], w.shape[3]).astype(bf16)

    def row(b):
        return b.reshape(1, -1).astype(f32)

    w_root = jnp.zeros((384, 512), f32)
    w_root = w_root.at[:, 0:64].set(p["b1a"][0])
    w_root = w_root.at[:, 128:192].set(p["b2a"][0])
    w_root = w_root.at[:, 256:352].set(p["b0"][0])
    w_root = w_root.at[:, 384:480].set(p["b3"][0])

    b_act = jnp.zeros((1, 384), f32)
    b_act = b_act.at[:, 0:64].set(p["b1a"][1][None, :])
    b_act = b_act.at[:, 128:192].set(p["b2a"][1][None, :])
    b_act = b_act.at[:, 256:352].set(p["b0"][1][None, :])

    return {
        "w_root": w_root.astype(bf16), "b_act": b_act,
        "w1b": pack3(p["b1b"][0]), "b1b": row(p["b1b"][1]),
        "w2b": pack3(p["b2b"][0]), "b2b": row(p["b2b"][1]),
        "w2c": pack3(p["b2c"][0]), "b2c": row(p["b2c"][1]),
        "b3": row(p["b3"][1]),
    }


# ------------------------- pure-JAX reference (check) -----------------------

def _ref_cbr(x, w, b, ksize):
    """conv(+folded BN bias)+ReLU at kernel-matching precision (bf16 in, f32 acc)."""
    if ksize == 1:
        w4 = w.reshape(1, 1, *w.shape)
        pad = "VALID"
    else:
        w4 = w
        pad = "SAME"
    y = lax.conv_general_dilated(
        x.astype(jnp.bfloat16), w4.astype(jnp.bfloat16), (1, 1), pad,
        dimension_numbers=("NHWC", "HWIO", "NHWC"),
        preferred_element_type=jnp.float32)
    return jnp.maximum(y + b.reshape(1, 1, 1, -1), 0.0)


def ref_inception_a(x_nchw, p):
    x = jnp.transpose(x_nchw, (0, 2, 3, 1)).astype(jnp.float32)
    x0 = _ref_cbr(x, *p["b0"], 1)
    x1 = _ref_cbr(_ref_cbr(x, *p["b1a"], 1), *p["b1b"], 3)
    x2 = _ref_cbr(x, *p["b2a"], 1)
    x2 = _ref_cbr(x2, *p["b2b"], 3)
    x2 = _ref_cbr(x2, *p["b2c"], 3)
    pad = [(0, 0), (1, 1), (1, 1), (0, 0)]
    s = lax.reduce_window(x, 0.0, lax.add, (1, 3, 3, 1), (1, 1, 1, 1), pad)
    cnt = lax.reduce_window(jnp.ones_like(x), 0.0, lax.add, (1, 3, 3, 1),
                            (1, 1, 1, 1), pad)
    x3 = _ref_cbr(s / cnt, *p["b3"], 1)
    out = jnp.concatenate([x0, x1, x2, x3], axis=-1)
    return jnp.transpose(out, (0, 3, 1, 2))


# ----------------------------------- main ------------------------------------

if __name__ == "__main__":
    key = jax.random.PRNGKey(0)
    k_x, k_p = jax.random.split(key)

    # Channels are fixed at 384 by the module; N=4 with block_n=2 gives a
    # 2-step "parallel" grid (keeps both v7x TensorCores busy) and M=128 rows
    # per matmul.
    N, C, H, W = 4, 384, 8, 8
    x = jax.random.normal(k_x, (N, C, H, W), jnp.float32)
    params = make_params(k_p)
    packed = pack_params(params)

    fwd = jax.jit(inception_a_forward, static_argnames=("block_n",))
    out = jax.block_until_ready(fwd(x, packed, block_n=2))
    assert out.shape == (N, 384, H, W), out.shape      # 96 * 4 = 384 output channels

    ref = jax.block_until_ready(ref_inception_a(x, params))
    outf = out.astype(jnp.float32)
    max_err = float(jnp.max(jnp.abs(outf - ref)))
    # bf16 matmuls / f32 accumulation on both sides; extra deltas come only from
    # bf16 output rounding and the (exact-in-infinite-precision) pool/1x1 swap.
    assert jnp.allclose(outf, ref, rtol=2e-2, atol=2e-2), max_err

    print("KERNEL_OK")
</pallas_src>

<mosaic_0001>
module attributes {stable_mosaic.version = 11 : i64} {
  func.func @_inception_a_kernel(%arg0: i32, %arg1: memref<2x8x8x384xbf16, #tpu.memory_space<vmem>>, %arg2: memref<8x8x1xf32, #tpu.memory_space<vmem>>, %arg3: memref<384x512xbf16, #tpu.memory_space<vmem>>, %arg4: memref<1x384xf32, #tpu.memory_space<vmem>>, %arg5: memref<576x96xbf16, #tpu.memory_space<vmem>>, %arg6: memref<1x96xf32, #tpu.memory_space<vmem>>, %arg7: memref<576x96xbf16, #tpu.memory_space<vmem>>, %arg8: memref<1x96xf32, #tpu.memory_space<vmem>>, %arg9: memref<864x96xbf16, #tpu.memory_space<vmem>>, %arg10: memref<1x96xf32, #tpu.memory_space<vmem>>, %arg11: memref<1x96xf32, #tpu.memory_space<vmem>>, %arg12: memref<2x8x8x384xbf16, #tpu.memory_space<vmem>>, %arg13: memref<10x10x128xf32, #tpu.memory_space<vmem>>, %arg14: memref<10x10x128xf32, #tpu.memory_space<vmem>>, %arg15: memref<2x8x8x864xbf16, #tpu.memory_space<vmem>>) attributes {dimension_semantics = [#tpu.dimension_semantics<parallel>], iteration_bounds = array<i64: 2>, scalar_prefetch = 0 : i64, scratch_operands = 3 : i64, tpu.core_type = #tpu.core_type<tc>, window_params = [{transform_indices = @transform_0, window_bounds = array<i64: 2, 8, 8, 384>}, {pipeline_mode = #tpu.pipeline_mode<synchronous>, transform_indices = @transform_1, window_bounds = array<i64: 8, 8, 1>}, {pipeline_mode = #tpu.pipeline_mode<synchronous>, transform_indices = @transform_2, window_bounds = array<i64: 384, 512>}, {pipeline_mode = #tpu.pipeline_mode<synchronous>, transform_indices = @transform_3, window_bounds = array<i64: 1, 384>}, {pipeline_mode = #tpu.pipeline_mode<synchronous>, transform_indices = @transform_4, window_bounds = array<i64: 576, 96>}, {pipeline_mode = #tpu.pipeline_mode<synchronous>, transform_indices = @transform_5, window_bounds = array<i64: 1, 96>}, {pipeline_mode = #tpu.pipeline_mode<synchronous>, transform_indices = @transform_6, window_bounds = array<i64: 576, 96>}, {pipeline_mode = #tpu.pipeline_mode<synchronous>, transform_indices = @transform_7, window_bounds = array<i64: 1, 96>}, {pipeline_mode = #tpu.pipeline_mode<synchronous>, transform_indices = @transform_8, window_bounds = array<i64: 864, 96>}, {pipeline_mode = #tpu.pipeline_mode<synchronous>, transform_indices = @transform_9, window_bounds = array<i64: 1, 96>}, {pipeline_mode = #tpu.pipeline_mode<synchronous>, transform_indices = @transform_10, window_bounds = array<i64: 1, 96>}, {transform_indices = @transform_11, window_bounds = array<i64: 2, 8, 8, 384>}]} {
    %cst = arith.constant 0.000000e+00 : f32
    %0 = vector.broadcast %cst : f32 to vector<1x10x128xf32>
    %c0 = arith.constant 0 : index
    %c0_0 = arith.constant 0 : index
    %c0_1 = arith.constant 0 : index
    %1 = vector.load %arg13[%c0, %c0_0, %c0_1] : memref<10x10x128xf32, #tpu.memory_space<vmem>>, vector<1x10x128xf32>
    tpu.vector_store %arg13[%c0, %c0_0, %c0_1], %0 {strides = array<i32>} : memref<10x10x128xf32, #tpu.memory_space<vmem>>, vector<1x10x128xf32>,
    %cst_2 = arith.constant 0.000000e+00 : f32
    %2 = vector.broadcast %cst_2 : f32 to vector<1x10x128xf32>
    %c9 = arith.constant 9 : index
    %c0_3 = arith.constant 0 : index
    %c0_4 = arith.constant 0 : index
    %3 = vector.load %arg13[%c9, %c0_3, %c0_4] : memref<10x10x128xf32, #tpu.memory_space<vmem>>, vector<1x10x128xf32>
    tpu.vector_store %arg13[%c9, %c0_3, %c0_4], %2 {strides = array<i32>} : memref<10x10x128xf32, #tpu.memory_space<vmem>>, vector<1x10x128xf32>,
    %cst_5 = arith.constant 0.000000e+00 : f32
    %4 = vector.broadcast %cst_5 : f32 to vector<10x1x128xf32>
    %c0_6 = arith.constant 0 : index
    %c0_7 = arith.constant 0 : index
    %c0_8 = arith.constant 0 : index
    %5 = vector.load %arg13[%c0_6, %c0_7, %c0_8] : memref<10x10x128xf32, #tpu.memory_space<vmem>>, vector<10x1x128xf32>
    tpu.vector_store %arg13[%c0_6, %c0_7, %c0_8], %4 {strides = array<i32>} : memref<10x10x128xf32, #tpu.memory_space<vmem>>, vector<10x1x128xf32>,
    %cst_9 = arith.constant 0.000000e+00 : f32
    %6 = vector.broadcast %cst_9 : f32 to vector<10x1x128xf32>
    %c0_10 = arith.constant 0 : index
    %c9_11 = arith.constant 9 : index
    %c0_12 = arith.constant 0 : index
    %7 = vector.load %arg13[%c0_10, %c9_11, %c0_12] : memref<10x10x128xf32, #tpu.memory_space<vmem>>, vector<10x1x128xf32>
    tpu.vector_store %arg13[%c0_10, %c9_11, %c0_12], %6 {strides = array<i32>} : memref<10x10x128xf32, #tpu.memory_space<vmem>>, vector<10x1x128xf32>,
    %cst_13 = arith.constant 0.000000e+00 : f32
    %8 = vector.broadcast %cst_13 : f32 to vector<1x10x128xf32>
    %c0_14 = arith.constant 0 : index
    %c0_15 = arith.constant 0 : index
    %c0_16 = arith.constant 0 : index
    %9 = vector.load %arg14[%c0_14, %c0_15, %c0_16] : memref<10x10x128xf32, #tpu.memory_space<vmem>>, vector<1x10x128xf32>
    tpu.vector_store %arg14[%c0_14, %c0_15, %c0_16], %8 {strides = array<i32>} : memref<10x10x128xf32, #tpu.memory_space<vmem>>, vector<1x10x128xf32>,
    %cst_17 = arith.constant 0.000000e+00 : f32
    %10 = vector.broadcast %cst_17 : f32 to vector<1x10x128xf32>
    %c9_18 = arith.constant 9 : index
    %c0_19 = arith.constant 0 : index
    %c0_20 = arith.constant 0 : index
    %11 = vector.load %arg14[%c9_18, %c0_19, %c0_20] : memref<10x10x128xf32, #tpu.memory_space<vmem>>, vector<1x10x128xf32>
    tpu.vector_store %arg14[%c9_18, %c0_19, %c0_20], %10 {strides = array<i32>} : memref<10x10x128xf32, #tpu.memory_space<vmem>>, vector<1x10x128xf32>,
    %cst_21 = arith.constant 0.000000e+00 : f32
    %12 = vector.broadcast %cst_21 : f32 to vector<10x1x128xf32>
    %c0_22 = arith.constant 0 : index
    %c0_23 = arith.constant 0 : index
    %c0_24 = arith.constant 0 : index
    %13 = vector.load %arg14[%c0_22, %c0_23, %c0_24] : memref<10x10x128xf32, #tpu.memory_space<vmem>>, vector<10x1x128xf32>
    tpu.vector_store %arg14[%c0_22, %c0_23, %c0_24], %12 {strides = array<i32>} : memref<10x10x128xf32, #tpu.memory_space<vmem>>, vector<10x1x128xf32>,
    %cst_25 = arith.constant 0.000000e+00 : f32
    %14 = vector.broadcast %cst_25 : f32 to vector<10x1x128xf32>
    %c0_26 = arith.constant 0 : index
    %c9_27 = arith.constant 9 : index
    %c0_28 = arith.constant 0 : index
    %15 = vector.load %arg14[%c0_26, %c9_27, %c0_28] : memref<10x10x128xf32, #tpu.memory_space<vmem>>, vector<10x1x128xf32>
    tpu.vector_store %arg14[%c0_26, %c9_27, %c0_28], %14 {strides = array<i32>} : memref<10x10x128xf32, #tpu.memory_space<vmem>>, vector<10x1x128xf32>,
    %c0_29 = arith.constant 0 : index
    %c0_30 = arith.constant 0 : index
    %c0_31 = arith.constant 0 : index
    %c0_32 = arith.constant 0 : index
    %16 = vector.load %arg1[%c0_29, %c0_30, %c0_31, %c0_32] : memref<2x8x8x384xbf16, #tpu.memory_space<vmem>>, vector<2x8x8x384xbf16>
    %17 = vector.shape_cast %16 : vector<2x8x8x384xbf16> to vector<128x384xbf16>
    %c0_33 = arith.constant 0 : index
    %c0_34 = arith.constant 0 : index
    %18 = vector.load %arg3[%c0_33, %c0_34] : memref<384x512xbf16, #tpu.memory_space<vmem>>, vector<384x512xbf16>
    %cst_35 = arith.constant dense<0.000000e+00> : vector<128x512xf32>
    %19 = tpu.matmul %17, %18, %cst_35 {dimension_numbers = #tpu.dot_dimension_numbers<[1], [0], [0], [1], [0, 0, 1, 1], [], []>} : vector<128x384xbf16>, vector<384x512xbf16>, vector<128x512xf32> -> vector<128x512xf32>
    %20 = vector.extract_strided_slice %19 {offsets = [0, 0], sizes = [128, 384], strides = [1, 1]} : vector<128x512xf32> to vector<128x384xf32>
    %c0_36 = arith.constant 0 : index
    %c0_37 = arith.constant 0 : index
    %21 = vector.load %arg4[%c0_36, %c0_37] : memref<1x384xf32, #tpu.memory_space<vmem>>, vector<1x384xf32>
    %22 = vector.broadcast %21 : vector<1x384xf32> to vector<128x384xf32>
    %23 = arith.addf %20, %22 : vector<128x384xf32>
    %cst_38 = arith.constant 0.000000e+00 : f32
    %24 = vector.broadcast %cst_38 : f32 to vector<128x384xf32>
    %25 = arith.maximumf %23, %24 : vector<128x384xf32>
    %26 = vector.extract_strided_slice %19 {offsets = [0, 384], sizes = [128, 96], strides = [1, 1]} : vector<128x512xf32> to vector<128x96xf32>
    %27 = vector.extract_strided_slice %25 {offsets = [0, 256], sizes = [128, 96], strides = [1, 1]} : vector<128x384xf32> to vector<128x96xf32>
    %28 = arith.truncf %27 : vector<128x96xf32> to vector<128x96xbf16>
    %c0_39 = arith.constant 0 : index
    %c0_40 = arith.constant 0 : index
    %c0_41 = arith.constant 0 : index
    %29 = vector.load %arg2[%c0_39, %c0_40, %c0_41] : memref<8x8x1xf32, #tpu.memory_space<vmem>>, vector<8x8x1xf32>
    %30 = vector.extract_strided_slice %26 {offsets = [0, 0], sizes = [64, 96], strides = [1, 1]} : vector<128x96xf32> to vector<64x96xf32>
    %31 = vector.shape_cast %30 : vector<64x96xf32> to vector<8x8x96xf32>
    %c1 = arith.constant 1 : index
    %c1_42 = arith.constant 1 : index
    %c0_43 = arith.constant 0 : index
    %32 = vector.load %arg14[%c1, %c1_42, %c0_43] : memref<10x10x128xf32, #tpu.memory_space<vmem>>, vector<8x8x96xf32>
    tpu.vector_store %arg14[%c1, %c1_42, %c0_43], %31 {strides = array<i32>} : memref<10x10x128xf32, #tpu.memory_space<vmem>>, vector<8x8x96xf32>,
    %c0_44 = arith.constant 0 : index
    %c0_45 = arith.constant 0 : index
    %c0_46 = arith.constant 0 : index
    %33 = vector.load %arg14[%c0_44, %c0_45, %c0_46] : memref<10x10x128xf32, #tpu.memory_space<vmem>>, vector<8x8x96xf32>
    %c0_47 = arith.constant 0 : index
    %c1_48 = arith.constant 1 : index
    %c0_49 = arith.constant 0 : index
    %34 = vector.load %arg14[%c0_47, %c1_48, %c0_49] : memref<10x10x128xf32, #tpu.memory_space<vmem>>, vector<8x8x96xf32>
    %35 = arith.addf %33, %34 : vector<8x8x96xf32>
    %c0_50 = arith.constant 0 : index
    %c2 = arith.constant 2 : index
    %c0_51 = arith.constant 0 : index
    %36 = vector.load %arg14[%c0_50, %c2, %c0_51] : memref<10x10x128xf32, #tpu.memory_space<vmem>>, vector<8x8x96xf32>
    %37 = arith.addf %35, %36 : vector<8x8x96xf32>
    %c1_52 = arith.constant 1 : index
    %c0_53 = arith.constant 0 : index
    %c0_54 = arith.constant 0 : index
    %38 = vector.load %arg14[%c1_52, %c0_53, %c0_54] : memref<10x10x128xf32, #tpu.memory_space<vmem>>, vector<8x8x96xf32>
    %39 = arith.addf %37, %38 : vector<8x8x96xf32>
    %c1_55 = arith.constant 1 : index
    %c1_56 = arith.constant 1 : index
    %c0_57 = arith.constant 0 : index
    %40 = vector.load %arg14[%c1_55, %c1_56, %c0_57] : memref<10x10x128xf32, #tpu.memory_space<vmem>>, vector<8x8x96xf32>
    %41 = arith.addf %39, %40 : vector<8x8x96xf32>
    %c1_58 = arith.constant 1 : index
    %c2_59 = arith.constant 2 : index
    %c0_60 = arith.constant 0 : index
    %42 = vector.load %arg14[%c1_58, %c2_59, %c0_60] : memref<10x10x128xf32, #tpu.memory_space<vmem>>, vector<8x8x96xf32>
    %43 = arith.addf %41, %42 : vector<8x8x96xf32>
    %c2_61 = arith.constant 2 : index
    %c0_62 = arith.constant 0 : index
    %c0_63 = arith.constant 0 : index
    %44 = vector.load %arg14[%c2_61, %c0_62, %c0_63] : memref<10x10x128xf32, #tpu.memory_space<vmem>>, vector<8x8x96xf32>
    %45 = arith.addf %43, %44 : vector<8x8x96xf32>
    %c2_64 = arith.constant 2 : index
    %c1_65 = arith.constant 1 : index
    %c0_66 = arith.constant 0 : index
    %46 = vector.load %arg14[%c2_64, %c1_65, %c0_66] : memref<10x10x128xf32, #tpu.memory_space<vmem>>, vector<8x8x96xf32>
    %47 = arith.addf %45, %46 : vector<8x8x96xf32>
    %c2_67 = arith.constant 2 : index
    %c2_68 = arith.constant 2 : index
    %c0_69 = arith.constant 0 : index
    %48 = vector.load %arg14[%c2_67, %c2_68, %c0_69] : memref<10x10x128xf32, #tpu.memory_space<vmem>>, vector<8x8x96xf32>
    %49 = arith.addf %47, %48 : vector<8x8x96xf32>
    %50 = vector.broadcast %29 : vector<8x8x1xf32> to vector<8x8x96xf32>
    %51 = arith.mulf %49, %50 : vector<8x8x96xf32>
    %c0_70 = arith.constant 0 : index
    %c0_71 = arith.constant 0 : index
    %52 = vector.load %arg11[%c0_70, %c0_71] : memref<1x96xf32, #tpu.memory_space<vmem>>, vector<1x96xf32>
    %53 = vector.shape_cast %52 : vector<1x96xf32> to vector<1x1x96xf32>
    %54 = vector.broadcast %53 : vector<1x1x96xf32> to vector<8x8x96xf32>
    %55 = arith.addf %51, %54 : vector<8x8x96xf32>
    %cst_72 = arith.constant 0.000000e+00 : f32
    %56 = vector.broadcast %cst_72 : f32 to vector<8x8x96xf32>
    %57 = arith.maximumf %55, %56 : vector<8x8x96xf32>
    %58 = vector.shape_cast %57 : vector<8x8x96xf32> to vector<64x96xf32>
    %59 = arith.truncf %58 : vector<64x96xf32> to vector<64x96xbf16>
    %60 = vector.extract_strided_slice %26 {offsets = [64, 0], sizes = [64, 96], strides = [1, 1]} : vector<128x96xf32> to vector<64x96xf32>
    %61 = vector.shape_cast %60 : vector<64x96xf32> to vector<8x8x96xf32>
    %c1_73 = arith.constant 1 : index
    %c1_74 = arith.constant 1 : index
    %c0_75 = arith.constant 0 : index
    %62 = vector.load %arg14[%c1_73, %c1_74, %c0_75] : memref<10x10x128xf32, #tpu.memory_space<vmem>>, vector<8x8x96xf32>
    tpu.vector_store %arg14[%c1_73, %c1_74, %c0_75], %61 {strides = array<i32>} : memref<10x10x128xf32, #tpu.memory_space<vmem>>, vector<8x8x96xf32>,
    %c0_76 = arith.constant 0 : index
    %c0_77 = arith.constant 0 : index
    %c0_78 = arith.constant 0 : index
    %63 = vector.load %arg14[%c0_76, %c0_77, %c0_78] : memref<10x10x128xf32, #tpu.memory_space<vmem>>, vector<8x8x96xf32>
    %c0_79 = arith.constant 0 : index
    %c1_80 = arith.constant 1 : index
    %c0_81 = arith.constant 0 : index
    %64 = vector.load %arg14[%c0_79, %c1_80, %c0_81] : memref<10x10x128xf32, #tpu.memory_space<vmem>>, vector<8x8x96xf32>
    %65 = arith.addf %63, %64 : vector<8x8x96xf32>
    %c0_82 = arith.constant 0 : index
    %c2_83 = arith.constant 2 : index
    %c0_84 = arith.constant 0 : index
    %66 = vector.load %arg14[%c0_82, %c2_83, %c0_84] : memref<10x10x128xf32, #tpu.memory_space<vmem>>, vector<8x8x96xf32>
    %67 = arith.addf %65, %66 : vector<8x8x96xf32>
    %c1_85 = arith.constant 1 : index
    %c0_86 = arith.constant 0 : index
    %c0_87 = arith.constant 0 : index
    %68 = vector.load %arg14[%c1_85, %c0_86, %c0_87] : memref<10x10x128xf32, #tpu.memory_space<vmem>>, vector<8x8x96xf32>
    %69 = arith.addf %67, %68 : vector<8x8x96xf32>
    %c1_88 = arith.constant 1 : index
    %c1_89 = arith.constant 1 : index
    %c0_90 = arith.constant 0 : index
    %70 = vector.load %arg14[%c1_88, %c1_89, %c0_90] : memref<10x10x128xf32, #tpu.memory_space<vmem>>, vector<8x8x96xf32>
    %71 = arith.addf %69, %70 : vector<8x8x96xf32>
    %c1_91 = arith.constant 1 : index
    %c2_92 = arith.constant 2 : index
    %c0_93 = arith.constant 0 : index
    %72 = vector.load %arg14[%c1_91, %c2_92, %c0_93] : memref<10x10x128xf32, #tpu.memory_space<vmem>>, vector<8x8x96xf32>
    %73 = arith.addf %71, %72 : vector<8x8x96xf32>
    %c2_94 = arith.constant 2 : index
    %c0_95 = arith.constant 0 : index
    %c0_96 = arith.constant 0 : index
    %74 = vector.load %arg14[%c2_94, %c0_95, %c0_96] : memref<10x10x128xf32, #tpu.memory_space<vmem>>, vector<8x8x96xf32>
    %75 = arith.addf %73, %74 : vector<8x8x96xf32>
    %c2_97 = arith.constant 2 : index
    %c1_98 = arith.constant 1 : index
    %c0_99 = arith.constant 0 : index
    %76 = vector.load %arg14[%c2_97, %c1_98, %c0_99] : memref<10x10x128xf32, #tpu.memory_space<vmem>>, vector<8x8x96xf32>
    %77 = arith.addf %75, %76 : vector<8x8x96xf32>
    %c2_100 = arith.constant 2 : index
    %c2_101 = arith.constant 2 : index
    %c0_102 = arith.constant 0 : index
    %78 = vector.load %arg14[%c2_100, %c2_101, %c0_102] : memref<10x10x128xf32, #tpu.memory_space<vmem>>, vector<8x8x96xf32>
    %79 = arith.addf %77, %78 : vector<8x8x96xf32>
    %80 = vector.broadcast %29 : vector<8x8x1xf32> to vector<8x8x96xf32>
    %81 = arith.mulf %79, %80 : vector<8x8x96xf32>
    %c0_103 = arith.constant 0 : index
    %c0_104 = arith.constant 0 : index
    %82 = vector.load %arg11[%c0_103, %c0_104] : memref<1x96xf32, #tpu.memory_space<vmem>>, vector<1x96xf32>
    %83 = vector.shape_cast %82 : vector<1x96xf32> to vector<1x1x96xf32>
    %84 = vector.broadcast %83 : vector<1x1x96xf32> to vector<8x8x96xf32>
    %85 = arith.addf %81, %84 : vector<8x8x96xf32>
    %cst_105 = arith.constant 0.000000e+00 : f32
    %86 = vector.broadcast %cst_105 : f32 to vector<8x8x96xf32>
    %87 = arith.maximumf %85, %86 : vector<8x8x96xf32>
    %88 = vector.shape_cast %87 : vector<8x8x96xf32> to vector<64x96xf32>
    %89 = arith.truncf %88 : vector<64x96xf32> to vector<64x96xbf16>
    %90 = tpu.concatenate %59, %89 in 0 : vector<64x96xbf16>, vector<64x96xbf16> -> vector<128x96xbf16>
    %91 = vector.extract_strided_slice %25 {offsets = [0, 0], sizes = [128, 64], strides = [1, 1]} : vector<128x384xf32> to vector<128x64xf32>
    %92 = vector.extract_strided_slice %91 {offsets = [0, 0], sizes = [64, 64], strides = [1, 1]} : vector<128x64xf32> to vector<64x64xf32>
    %93 = vector.shape_cast %92 : vector<64x64xf32> to vector<8x8x64xf32>
    %c1_106 = arith.constant 1 : index
    %c1_107 = arith.constant 1 : index
    %c0_108 = arith.constant 0 : index
    %94 = vector.load %arg13[%c1_106, %c1_107, %c0_108] : memref<10x10x128xf32, #tpu.memory_space<vmem>>, vector<8x8x64xf32>
    tpu.vector_store %arg13[%c1_106, %c1_107, %c0_108], %93 {strides = array<i32>} : memref<10x10x128xf32, #tpu.memory_space<vmem>>, vector<8x8x64xf32>,
    %c0_109 = arith.constant 0 : index
    %c0_110 = arith.constant 0 : index
    %c0_111 = arith.constant 0 : index
    %95 = vector.load %arg13[%c0_109, %c0_110, %c0_111] : memref<10x10x128xf32, #tpu.memory_space<vmem>>, vector<8x8x64xf32>
    %96 = arith.truncf %95 : vector<8x8x64xf32> to vector<8x8x64xbf16>
    %c0_112 = arith.constant 0 : index
    %c0_113 = arith.constant 0 : index
    %c0_114 = arith.constant 0 : index
    %c0_115 = arith.constant 0 : index
    %97 = vector.load %arg15[%c0_112, %c0_113, %c0_114, %c0_115] : memref<2x8x8x864xbf16, #tpu.memory_space<vmem>>, vector<1x8x8x64xbf16>
    %98 = vector.shape_cast %97 : vector<1x8x8x64xbf16> to vector<8x8x64xbf16>
    %99 = vector.shape_cast %96 : vector<8x8x64xbf16> to vector<1x8x8x64xbf16>
    tpu.vector_store %arg15[%c0_112, %c0_113, %c0_114, %c0_115], %99 {strides = array<i32>} : memref<2x8x8x864xbf16, #tpu.memory_space<vmem>>, vector<1x8x8x64xbf16>,
    %c0_116 = arith.constant 0 : index
    %c1_117 = arith.constant 1 : index
    %c0_118 = arith.constant 0 : index
    %100 = vector.load %arg13[%c0_116, %c1_117, %c0_118] : memref<10x10x128xf32, #tpu.memory_space<vmem>>, vector<8x8x64xf32>
    %101 = arith.truncf %100 : vector<8x8x64xf32> to vector<8x8x64xbf16>
    %c0_119 = arith.constant 0 : index
    %c0_120 = arith.constant 0 : index
    %c0_121 = arith.constant 0 : index
    %c64 = arith.constant 64 : index
    %102 = vector.load %arg15[%c0_119, %c0_120, %c0_121, %c64] : memref<2x8x8x864xbf16, #tpu.memory_space<vmem>>, vector<1x8x8x64xbf16>
    %103 = vector.shape_cast %102 : vector<1x8x8x64xbf16> to vector<8x8x64xbf16>
    %104 = vector.shape_cast %101 : vector<8x8x64xbf16> to vector<1x8x8x64xbf16>
    tpu.vector_store %arg15[%c0_119, %c0_120, %c0_121, %c64], %104 {strides = array<i32>} : memref<2x8x8x864xbf16, #tpu.memory_space<vmem>>, vector<1x8x8x64xbf16>,
    %c0_122 = arith.constant 0 : index
    %c2_123 = arith.constant 2 : index
    %c0_124 = arith.constant 0 : index
    %105 = vector.load %arg13[%c0_122, %c2_123, %c0_124] : memref<10x10x128xf32, #tpu.memory_space<vmem>>, vector<8x8x64xf32>
    %106 = arith.truncf %105 : vector<8x8x64xf32> to vector<8x8x64xbf16>
    %c0_125 = arith.constant 0 : index
    %c0_126 = arith.constant 0 : index
    %c0_127 = arith.constant 0 : index
    %c128 = arith.constant 128 : index
    %107 = vector.load %arg15[%c0_125, %c0_126, %c0_127, %c128] : memref<2x8x8x864xbf16, #tpu.memory_space<vmem>>, vector<1x8x8x64xbf16>
    %108 = vector.shape_cast %107 : vector<1x8x8x64xbf16> to vector<8x8x64xbf16>
    %109 = vector.shape_cast %106 : vector<8x8x64xbf16> to vector<1x8x8x64xbf16>
    tpu.vector_store %arg15[%c0_125, %c0_126, %c0_127, %c128], %109 {strides = array<i32>} : memref<2x8x8x864xbf16, #tpu.memory_space<vmem>>, vector<1x8x8x64xbf16>,
    %c1_128 = arith.constant 1 : index
    %c0_129 = arith.constant 0 : index
    %c0_130 = arith.constant 0 : index
    %110 = vector.load %arg13[%c1_128, %c0_129, %c0_130] : memref<10x10x128xf32, #tpu.memory_space<vmem>>, vector<8x8x64xf32>
    %111 = arith.truncf %110 : vector<8x8x64xf32> to vector<8x8x64xbf16>
    %c0_131 = arith.constant 0 : index
    %c0_132 = arith.constant 0 : index
    %c0_133 = arith.constant 0 : index
    %c192 = arith.constant 192 : index
    %112 = vector.load %arg15[%c0_131, %c0_132, %c0_133, %c192] : memref<2x8x8x864xbf16, #tpu.memory_space<vmem>>, vector<1x8x8x64xbf16>
    %113 = vector.shape_cast %112 : vector<1x8x8x64xbf16> to vector<8x8x64xbf16>
    %114 = vector.shape_cast %111 : vector<8x8x64xbf16> to vector<1x8x8x64xbf16>
    tpu.vector_store %arg15[%c0_131, %c0_132, %c0_133, %c192], %114 {strides = array<i32>} : memref<2x8x8x864xbf16, #tpu.memory_space<vmem>>, vector<1x8x8x64xbf16>,
    %c1_134 = arith.constant 1 : index
    %c1_135 = arith.constant 1 : index
    %c0_136 = arith.constant 0 : index
    %115 = vector.load %arg13[%c1_134, %c1_135, %c0_136] : memref<10x10x128xf32, #tpu.memory_space<vmem>>, vector<8x8x64xf32>
    %116 = arith.truncf %115 : vector<8x8x64xf32> to vector<8x8x64xbf16>
    %c0_137 = arith.constant 0 : index
    %c0_138 = arith.constant 0 : index
    %c0_139 = arith.constant 0 : index
    %c256 = arith.constant 256 : index
    %117 = vector.load %arg15[%c0_137, %c0_138, %c0_139, %c256] : memref<2x8x8x864xbf16, #tpu.memory_space<vmem>>, vector<1x8x8x64xbf16>
    %118 = vector.shape_cast %117 : vector<1x8x8x64xbf16> to vector<8x8x64xbf16>
    %119 = vector.shape_cast %116 : vector<8x8x64xbf16> to vector<1x8x8x64xbf16>
    tpu.vector_store %arg15[%c0_137, %c0_138, %c0_139, %c256], %119 {strides = array<i32>} : memref<2x8x8x864xbf16, #tpu.memory_space<vmem>>, vector<1x8x8x64xbf16>,
    %c1_140 = arith.constant 1 : index
    %c2_141 = arith.constant 2 : index
    %c0_142 = arith.constant 0 : index
    %120 = vector.load %arg13[%c1_140, %c2_141, %c0_142] : memref<10x10x128xf32, #tpu.memory_space<vmem>>, vector<8x8x64xf32>
    %121 = arith.truncf %120 : vector<8x8x64xf32> to vector<8x8x64xbf16>
    %c0_143 = arith.constant 0 : index
    %c0_144 = arith.constant 0 : index
    %c0_145 = arith.constant 0 : index
    %c320 = arith.constant 320 : index
    %122 = vector.load %arg15[%c0_143, %c0_144, %c0_145, %c320] : memref<2x8x8x864xbf16, #tpu.memory_space<vmem>>, vector<1x8x8x64xbf16>
    %123 = vector.shape_cast %122 : vector<1x8x8x64xbf16> to vector<8x8x64xbf16>
    %124 = vector.shape_cast %121 : vector<8x8x64xbf16> to vector<1x8x8x64xbf16>
    tpu.vector_store %arg15[%c0_143, %c0_144, %c0_145, %c320], %124 {strides = array<i32>} : memref<2x8x8x864xbf16, #tpu.memory_space<vmem>>, vector<1x8x8x64xbf16>,
    %c2_146 = arith.constant 2 : index
    %c0_147 = arith.constant 0 : index
    %c0_148 = arith.constant 0 : index
    %125 = vector.load %arg13[%c2_146, %c0_147, %c0_148] : memref<10x10x128xf32, #tpu.memory_space<vmem>>, vector<8x8x64xf32>
    %126 = arith.truncf %125 : vector<8x8x64xf32> to vector<8x8x64xbf16>
    %c0_149 = arith.constant 0 : index
    %c0_150 = arith.constant 0 : index
    %c0_151 = arith.constant 0 : index
    %c384 = arith.constant 384 : index
    %127 = vector.load %arg15[%c0_149, %c0_150, %c0_151, %c384] : memref<2x8x8x864xbf16, #tpu.memory_space<vmem>>, vector<1x8x8x64xbf16>
    %128 = vector.shape_cast %127 : vector<1x8x8x64xbf16> to vector<8x8x64xbf16>
    %129 = vector.shape_cast %126 : vector<8x8x64xbf16> to vector<1x8x8x64xbf16>
    tpu.vector_store %arg15[%c0_149, %c0_150, %c0_151, %c384], %129 {strides = array<i32>} : memref<2x8x8x864xbf16, #tpu.memory_space<vmem>>, vector<1x8x8x64xbf16>,
    %c2_152 = arith.constant 2 : index
    %c1_153 = arith.constant 1 : index
    %c0_154 = arith.constant 0 : index
    %130 = vector.load %arg13[%c2_152, %c1_153, %c0_154] : memref<10x10x128xf32, #tpu.memory_space<vmem>>, vector<8x8x64xf32>
    %131 = arith.truncf %130 : vector<8x8x64xf32> to vector<8x8x64xbf16>
    %c0_155 = arith.constant 0 : index
    %c0_156 = arith.constant 0 : index
    %c0_157 = arith.constant 0 : index
    %c448 = arith.constant 448 : index
    %132 = vector.load %arg15[%c0_155, %c0_156, %c0_157, %c448] : memref<2x8x8x864xbf16, #tpu.memory_space<vmem>>, vector<1x8x8x64xbf16>
    %133 = vector.shape_cast %132 : vector<1x8x8x64xbf16> to vector<8x8x64xbf16>
    %134 = vector.shape_cast %131 : vector<8x8x64xbf16> to vector<1x8x8x64xbf16>
    tpu.vector_store %arg15[%c0_155, %c0_156, %c0_157, %c448], %134 {strides = array<i32>} : memref<2x8x8x864xbf16, #tpu.memory_space<vmem>>, vector<1x8x8x64xbf16>,
    %c2_158 = arith.constant 2 : index
    %c2_159 = arith.constant 2 : index
    %c0_160 = arith.constant 0 : index
    %135 = vector.load %arg13[%c2_158, %c2_159, %c0_160] : memref<10x10x128xf32, #tpu.memory_space<vmem>>, vector<8x8x64xf32>
    %136 = arith.truncf %135 : vector<8x8x64xf32> to vector<8x8x64xbf16>
    %c0_161 = arith.constant 0 : index
    %c0_162 = arith.constant 0 : index
    %c0_163 = arith.constant 0 : index
    %c512 = arith.constant 512 : index
    %137 = vector.load %arg15[%c0_161, %c0_162, %c0_163, %c512] : memref<2x8x8x864xbf16, #tpu.memory_space<vmem>>, vector<1x8x8x64xbf16>
    %138 = vector.shape_cast %137 : vector<1x8x8x64xbf16> to vector<8x8x64xbf16>
    %139 = vector.shape_cast %136 : vector<8x8x64xbf16> to vector<1x8x8x64xbf16>
    tpu.vector_store %arg15[%c0_161, %c0_162, %c0_163, %c512], %139 {strides = array<i32>} : memref<2x8x8x864xbf16, #tpu.memory_space<vmem>>, vector<1x8x8x64xbf16>,
    %140 = vector.extract_strided_slice %91 {offsets = [64, 0], sizes = [64, 64], strides = [1, 1]} : vector<128x64xf32> to vector<64x64xf32>
    %141 = vector.shape_cast %140 : vector<64x64xf32> to vector<8x8x64xf32>
    %c1_164 = arith.constant 1 : index
    %c1_165 = arith.constant 1 : index
    %c0_166 = arith.constant 0 : index
    %142 = vector.load %arg13[%c1_164, %c1_165, %c0_166] : memref<10x10x128xf32, #tpu.memory_space<vmem>>, vector<8x8x64xf32>
    tpu.vector_store %arg13[%c1_164, %c1_165, %c0_166], %141 {strides = array<i32>} : memref<10x10x128xf32, #tpu.memory_space<vmem>>, vector<8x8x64xf32>,
    %c0_167 = arith.constant 0 : index
    %c0_168 = arith.constant 0 : index
    %c0_169 = arith.constant 0 : index
    %143 = vector.load %arg13[%c0_167, %c0_168, %c0_169] : memref<10x10x128xf32, #tpu.memory_space<vmem>>, vector<8x8x64xf32>
    %144 = arith.truncf %143 : vector<8x8x64xf32> to vector<8x8x64xbf16>
    %c1_170 = arith.constant 1 : index
    %c0_171 = arith.constant 0 : index
    %c0_172 = arith.constant 0 : index
    %c0_173 = arith.constant 0 : index
    %145 = vector.load %arg15[%c1_170, %c0_171, %c0_172, %c0_173] : memref<2x8x8x864xbf16, #tpu.memory_space<vmem>>, vector<1x8x8x64xbf16>
    %146 = vector.shape_cast %145 : vector<1x8x8x64xbf16> to vector<8x8x64xbf16>
    %147 = vector.shape_cast %144 : vector<8x8x64xbf16> to vector<1x8x8x64xbf16>
    tpu.vector_store %arg15[%c1_170, %c0_171, %c0_172, %c0_173], %147 {strides = array<i32>} : memref<2x8x8x864xbf16, #tpu.memory_space<vmem>>, vector<1x8x8x64xbf16>,
    %c0_174 = arith.constant 0 : index
    %c1_175 = arith.constant 1 : index
    %c0_176 = arith.constant 0 : index
    %148 = vector.load %arg13[%c0_174, %c1_175, %c0_176] : memref<10x10x128xf32, #tpu.memory_space<vmem>>, vector<8x8x64xf32>
    %149 = arith.truncf %148 : vector<8x8x64xf32> to vector<8x8x64xbf16>
    %c1_177 = arith.constant 1 : index
    %c0_178 = arith.constant 0 : index
    %c0_179 = arith.constant 0 : index
    %c64_180 = arith.constant 64 : index
    %150 = vector.load %arg15[%c1_177, %c0_178, %c0_179, %c64_180] : memref<2x8x8x864xbf16, #tpu.memory_space<vmem>>, vector<1x8x8x64xbf16>
    %151 = vector.shape_cast %150 : vector<1x8x8x64xbf16> to vector<8x8x64xbf16>
    %152 = vector.shape_cast %149 : vector<8x8x64xbf16> to vector<1x8x8x64xbf16>
    tpu.vector_store %arg15[%c1_177, %c0_178, %c0_179, %c64_180], %152 {strides = array<i32>} : memref<2x8x8x864xbf16, #tpu.memory_space<vmem>>, vector<1x8x8x64xbf16>,
    %c0_181 = arith.constant 0 : index
    %c2_182 = arith.constant 2 : index
    %c0_183 = arith.constant 0 : index
    %153 = vector.load %arg13[%c0_181, %c2_182, %c0_183] : memref<10x10x128xf32, #tpu.memory_space<vmem>>, vector<8x8x64xf32>
    %154 = arith.truncf %153 : vector<8x8x64xf32> to vector<8x8x64xbf16>
    %c1_184 = arith.constant 1 : index
    %c0_185 = arith.constant 0 : index
    %c0_186 = arith.constant 0 : index
    %c128_187 = arith.constant 128 : index
    %155 = vector.load %arg15[%c1_184, %c0_185, %c0_186, %c128_187] : memref<2x8x8x864xbf16, #tpu.memory_space<vmem>>, vector<1x8x8x64xbf16>
    %156 = vector.shape_cast %155 : vector<1x8x8x64xbf16> to vector<8x8x64xbf16>
    %157 = vector.shape_cast %154 : vector<8x8x64xbf16> to vector<1x8x8x64xbf16>
    tpu.vector_store %arg15[%c1_184, %c0_185, %c0_186, %c128_187], %157 {strides = array<i32>} : memref<2x8x8x864xbf16, #tpu.memory_space<vmem>>, vector<1x8x8x64xbf16>,
    %c1_188 = arith.constant 1 : index
    %c0_189 = arith.constant 0 : index
    %c0_190 = arith.constant 0 : index
    %158 = vector.load %arg13[%c1_188, %c0_189, %c0_190] : memref<10x10x128xf32, #tpu.memory_space<vmem>>, vector<8x8x64xf32>
    %159 = arith.truncf %158 : vector<8x8x64xf32> to vector<8x8x64xbf16>
    %c1_191 = arith.constant 1 : index
    %c0_192 = arith.constant 0 : index
    %c0_193 = arith.constant 0 : index
    %c192_194 = arith.constant 192 : index
    %160 = vector.load %arg15[%c1_191, %c0_192, %c0_193, %c192_194] : memref<2x8x8x864xbf16, #tpu.memory_space<vmem>>, vector<1x8x8x64xbf16>
    %161 = vector.shape_cast %160 : vector<1x8x8x64xbf16> to vector<8x8x64xbf16>
    %162 = vector.shape_cast %159 : vector<8x8x64xbf16> to vector<1x8x8x64xbf16>
    tpu.vector_store %arg15[%c1_191, %c0_192, %c0_193, %c192_194], %162 {strides = array<i32>} : memref<2x8x8x864xbf16, #tpu.memory_space<vmem>>, vector<1x8x8x64xbf16>,
    %c1_195 = arith.constant 1 : index
    %c1_196 = arith.constant 1 : index
    %c0_197 = arith.constant 0 : index
    %163 = vector.load %arg13[%c1_195, %c1_196, %c0_197] : memref<10x10x128xf32, #tpu.memory_space<vmem>>, vector<8x8x64xf32>
    %164 = arith.truncf %163 : vector<8x8x64xf32> to vector<8x8x64xbf16>
    %c1_198 = arith.constant 1 : index
    %c0_199 = arith.constant 0 : index
    %c0_200 = arith.constant 0 : index
    %c256_201 = arith.constant 256 : index
    %165 = vector.load %arg15[%c1_198, %c0_199, %c0_200, %c256_201] : memref<2x8x8x864xbf16, #tpu.memory_space<vmem>>, vector<1x8x8x64xbf16>
    %166 = vector.shape_cast %165 : vector<1x8x8x64xbf16> to vector<8x8x64xbf16>
    %167 = vector.shape_cast %164 : vector<8x8x64xbf16> to vector<1x8x8x64xbf16>
    tpu.vector_store %arg15[%c1_198, %c0_199, %c0_200, %c256_201], %167 {strides = array<i32>} : memref<2x8x8x864xbf16, #tpu.memory_space<vmem>>, vector<1x8x8x64xbf16>,
    %c1_202 = arith.constant 1 : index
    %c2_203 = arith.constant 2 : index
    %c0_204 = arith.constant 0 : index
    %168 = vector.load %arg13[%c1_202, %c2_203, %c0_204] : memref<10x10x128xf32, #tpu.memory_space<vmem>>, vector<8x8x64xf32>
    %169 = arith.truncf %168 : vector<8x8x64xf32> to vector<8x8x64xbf16>
    %c1_205 = arith.constant 1 : index
    %c0_206 = arith.constant 0 : index
    %c0_207 = arith.constant 0 : index
    %c320_208 = arith.constant 320 : index
    %170 = vector.load %arg15[%c1_205, %c0_206, %c0_207, %c320_208] : memref<2x8x8x864xbf16, #tpu.memory_space<vmem>>, vector<1x8x8x64xbf16>
    %171 = vector.shape_cast %170 : vector<1x8x8x64xbf16> to vector<8x8x64xbf16>
    %172 = vector.shape_cast %169 : vector<8x8x64xbf16> to vector<1x8x8x64xbf16>
    tpu.vector_store %arg15[%c1_205, %c0_206, %c0_207, %c320_208], %172 {strides = array<i32>} : memref<2x8x8x864xbf16, #tpu.memory_space<vmem>>, vector<1x8x8x64xbf16>,
    %c2_209 = arith.constant 2 : index
    %c0_210 = arith.constant 0 : index
    %c0_211 = arith.constant 0 : index
    %173 = vector.load %arg13[%c2_209, %c0_210, %c0_211] : memref<10x10x128xf32, #tpu.memory_space<vmem>>, vector<8x8x64xf32>
    %174 = arith.truncf %173 : vector<8x8x64xf32> to vector<8x8x64xbf16>
    %c1_212 = arith.constant 1 : index
    %c0_213 = arith.constant 0 : index
    %c0_214 = arith.constant 0 : index
    %c384_215 = arith.constant 384 : index
    %175 = vector.load %arg15[%c1_212, %c0_213, %c0_214, %c384_215] : memref<2x8x8x864xbf16, #tpu.memory_space<vmem>>, vector<1x8x8x64xbf16>
    %176 = vector.shape_cast %175 : vector<1x8x8x64xbf16> to vector<8x8x64xbf16>
    %177 = vector.shape_cast %174 : vector<8x8x64xbf16> to vector<1x8x8x64xbf16>
    tpu.vector_store %arg15[%c1_212, %c0_213, %c0_214, %c384_215], %177 {strides = array<i32>} : memref<2x8x8x864xbf16, #tpu.memory_space<vmem>>, vector<1x8x8x64xbf16>,
    %c2_216 = arith.constant 2 : index
    %c1_217 = arith.constant 1 : index
    %c0_218 = arith.constant 0 : index
    %178 = vector.load %arg13[%c2_216, %c1_217, %c0_218] : memref<10x10x128xf32, #tpu.memory_space<vmem>>, vector<8x8x64xf32>
    %179 = arith.truncf %178 : vector<8x8x64xf32> to vector<8x8x64xbf16>
    %c1_219 = arith.constant 1 : index
    %c0_220 = arith.constant 0 : index
    %c0_221 = arith.constant 0 : index
    %c448_222 = arith.constant 448 : index
    %180 = vector.load %arg15[%c1_219, %c0_220, %c0_221, %c448_222] : memref<2x8x8x864xbf16, #tpu.memory_space<vmem>>, vector<1x8x8x64xbf16>
    %181 = vector.shape_cast %180 : vector<1x8x8x64xbf16> to vector<8x8x64xbf16>
    %182 = vector.shape_cast %179 : vector<8x8x64xbf16> to vector<1x8x8x64xbf16>
    tpu.vector_store %arg15[%c1_219, %c0_220, %c0_221, %c448_222], %182 {strides = array<i32>} : memref<2x8x8x864xbf16, #tpu.memory_space<vmem>>, vector<1x8x8x64xbf16>,
    %c2_223 = arith.constant 2 : index
    %c2_224 = arith.constant 2 : index
    %c0_225 = arith.constant 0 : index
    %183 = vector.load %arg13[%c2_223, %c2_224, %c0_225] : memref<10x10x128xf32, #tpu.memory_space<vmem>>, vector<8x8x64xf32>
    %184 = arith.truncf %183 : vector<8x8x64xf32> to vector<8x8x64xbf16>
    %c1_226 = arith.constant 1 : index
    %c0_227 = arith.constant 0 : index
    %c0_228 = arith.constant 0 : index
    %c512_229 = arith.constant 512 : index
    %185 = vector.load %arg15[%c1_226, %c0_227, %c0_228, %c512_229] : memref<2x8x8x864xbf16, #tpu.memory_space<vmem>>, vector<1x8x8x64xbf16>
    %186 = vector.shape_cast %185 : vector<1x8x8x64xbf16> to vector<8x8x64xbf16>
    %187 = vector.shape_cast %184 : vector<8x8x64xbf16> to vector<1x8x8x64xbf16>
    tpu.vector_store %arg15[%c1_226, %c0_227, %c0_228, %c512_229], %187 {strides = array<i32>} : memref<2x8x8x864xbf16, #tpu.memory_space<vmem>>, vector<1x8x8x64xbf16>,
    %c0_230 = arith.constant 0 : index
    %c0_231 = arith.constant 0 : index
    %c0_232 = arith.constant 0 : index
    %c0_233 = arith.constant 0 : index
    %188 = vector.load %arg15[%c0_230, %c0_231, %c0_232, %c0_233] : memref<2x8x8x864xbf16, #tpu.memory_space<vmem>>, vector<2x8x8x576xbf16>
    %189 = vector.shape_cast %188 : vector<2x8x8x576xbf16> to vector<128x576xbf16>
    %c0_234 = arith.constant 0 : index
    %c0_235 = arith.constant 0 : index
    %190 = vector.load %arg5[%c0_234, %c0_235] : memref<576x96xbf16, #tpu.memory_space<vmem>>, vector<576x96xbf16>
    %cst_236 = arith.constant dense<0.000000e+00> : vector<128x96xf32>
    %191 = tpu.matmul %189, %190, %cst_236 {dimension_numbers = #tpu.dot_dimension_numbers<[1], [0], [0], [1], [0, 0, 1, 1], [], []>} : vector<128x576xbf16>, vector<576x96xbf16>, vector<128x96xf32> -> vector<128x96xf32>
    %c0_237 = arith.constant 0 : index
    %c0_238 = arith.constant 0 : index
    %192 = vector.load %arg6[%c0_237, %c0_238] : memref<1x96xf32, #tpu.memory_space<vmem>>, vector<1x96xf32>
    %193 = vector.broadcast %192 : vector<1x96xf32> to vector<128x96xf32>
    %194 = arith.addf %191, %193 : vector<128x96xf32>
    %cst_239 = arith.constant 0.000000e+00 : f32
    %195 = vector.broadcast %cst_239 : f32 to vector<128x96xf32>
    %196 = arith.maximumf %194, %195 : vector<128x96xf32>
    %197 = arith.truncf %196 : vector<128x96xf32> to vector<128x96xbf16>
    %198 = vector.extract_strided_slice %25 {offsets = [0, 128], sizes = [128, 64], strides = [1, 1]} : vector<128x384xf32> to vector<128x64xf32>
    %199 = vector.extract_strided_slice %198 {offsets = [0, 0], sizes = [64, 64], strides = [1, 1]} : vector<128x64xf32> to vector<64x64xf32>
    %200 = vector.shape_cast %199 : vector<64x64xf32> to vector<8x8x64xf32>
    %c1_240 = arith.constant 1 : index
    %c1_241 = arith.constant 1 : index
    %c0_242 = arith.constant 0 : index
    %201 = vector.load %arg13[%c1_240, %c1_241, %c0_242] : memref<10x10x128xf32, #tpu.memory_space<vmem>>, vector<8x8x64xf32>
    tpu.vector_store %arg13[%c1_240, %c1_241, %c0_242], %200 {strides = array<i32>} : memref<10x10x128xf32, #tpu.memory_space<vmem>>, vector<8x8x64xf32>,
    %c0_243 = arith.constant 0 : index
    %c0_244 = arith.constant 0 : index
    %c0_245 = arith.constant 0 : index
    %202 = vector.load %arg13[%c0_243, %c0_244, %c0_245] : memref<10x10x128xf32, #tpu.memory_space<vmem>>, vector<8x8x64xf32>
    %203 = arith.truncf %202 : vector<8x8x64xf32> to vector<8x8x64xbf16>
    %c0_246 = arith.constant 0 : index
    %c0_247 = arith.constant 0 : index
    %c0_248 = arith.constant 0 : index
    %c0_249 = arith.constant 0 : index
    %204 = vector.load %arg15[%c0_246, %c0_247, %c0_248, %c0_249] : memref<2x8x8x864xbf16, #tpu.memory_space<vmem>>, vector<1x8x8x64xbf16>
    %205 = vector.shape_cast %204 : vector<1x8x8x64xbf16> to vector<8x8x64xbf16>
    %206 = vector.shape_cast %203 : vector<8x8x64xbf16> to vector<1x8x8x64xbf16>
    tpu.vector_store %arg15[%c0_246, %c0_247, %c0_248, %c0_249], %206 {strides = array<i32>} : memref<2x8x8x864xbf16, #tpu.memory_space<vmem>>, vector<1x8x8x64xbf16>,
    %c0_250 = arith.constant 0 : index
    %c1_251 = arith.constant 1 : index
    %c0_252 = arith.constant 0 : index
    %207 = vector.load %arg13[%c0_250, %c1_251, %c0_252] : memref<10x10x128xf32, #tpu.memory_space<vmem>>, vector<8x8x64xf32>
    %208 = arith.truncf %207 : vector<8x8x64xf32> to vector<8x8x64xbf16>
    %c0_253 = arith.constant 0 : index
    %c0_254 = arith.constant 0 : index
    %c0_255 = arith.constant 0 : index
    %c64_256 = arith.constant 64 : index
    %209 = vector.load %arg15[%c0_253, %c0_254, %c0_255, %c64_256] : memref<2x8x8x864xbf16, #tpu.memory_space<vmem>>, vector<1x8x8x64xbf16>
    %210 = vector.shape_cast %209 : vector<1x8x8x64xbf16> to vector<8x8x64xbf16>
    %211 = vector.shape_cast %208 : vector<8x8x64xbf16> to vector<1x8x8x64xbf16>
    tpu.vector_store %arg15[%c0_253, %c0_254, %c0_255, %c64_256], %211 {strides = array<i32>} : memref<2x8x8x864xbf16, #tpu.memory_space<vmem>>, vector<1x8x8x64xbf16>,
    %c0_257 = arith.constant 0 : index
    %c2_258 = arith.constant 2 : index
    %c0_259 = arith.constant 0 : index
    %212 = vector.load %arg13[%c0_257, %c2_258, %c0_259] : memref<10x10x128xf32, #tpu.memory_space<vmem>>, vector<8x8x64xf32>
    %213 = arith.truncf %212 : vector<8x8x64xf32> to vector<8x8x64xbf16>
    %c0_260 = arith.constant 0 : index
    %c0_261 = arith.constant 0 : index
    %c0_262 = arith.constant 0 : index
    %c128_263 = arith.constant 128 : index
    %214 = vector.load %arg15[%c0_260, %c0_261, %c0_262, %c128_263] : memref<2x8x8x864xbf16, #tpu.memory_space<vmem>>, vector<1x8x8x64xbf16>
    %215 = vector.shape_cast %214 : vector<1x8x8x64xbf16> to vector<8x8x64xbf16>
    %216 = vector.shape_cast %213 : vector<8x8x64xbf16> to vector<1x8x8x64xbf16>
    tpu.vector_store %arg15[%c0_260, %c0_261, %c0_262, %c128_263], %216 {strides = array<i32>} : memref<2x8x8x864xbf16, #tpu.memory_space<vmem>>, vector<1x8x8x64xbf16>,
    %c1_264 = arith.constant 1 : index
    %c0_265 = arith.constant 0 : index
    %c0_266 = arith.constant 0 : index
    %217 = vector.load %arg13[%c1_264, %c0_265, %c0_266] : memref<10x10x128xf32, #tpu.memory_space<vmem>>, vector<8x8x64xf32>
    %218 = arith.truncf %217 : vector<8x8x64xf32> to vector<8x8x64xbf16>
    %c0_267 = arith.constant 0 : index
    %c0_268 = arith.constant 0 : index
    %c0_269 = arith.constant 0 : index
    %c192_270 = arith.constant 192 : index
    %219 = vector.load %arg15[%c0_267, %c0_268, %c0_269, %c192_270] : memref<2x8x8x864xbf16, #tpu.memory_space<vmem>>, vector<1x8x8x64xbf16>
    %220 = vector.shape_cast %219 : vector<1x8x8x64xbf16> to vector<8x8x64xbf16>
    %221 = vector.shape_cast %218 : vector<8x8x64xbf16> to vector<1x8x8x64xbf16>
    tpu.vector_store %arg15[%c0_267, %c0_268, %c0_269, %c192_270], %221 {strides = array<i32>} : memref<2x8x8x864xbf16, #tpu.memory_space<vmem>>, vector<1x8x8x64xbf16>,
    %c1_271 = arith.constant 1 : index
    %c1_272 = arith.constant 1 : index
    %c0_273 = arith.constant 0 : index
    %222 = vector.load %arg13[%c1_271, %c1_272, %c0_273] : memref<10x10x128xf32, #tpu.memory_space<vmem>>, vector<8x8x64xf32>
    %223 = arith.truncf %222 : vector<8x8x64xf32> to vector<8x8x64xbf16>
    %c0_274 = arith.constant 0 : index
    %c0_275 = arith.constant 0 : index
    %c0_276 = arith.constant 0 : index
    %c256_277 = arith.constant 256 : index
    %224 = vector.load %arg15[%c0_274, %c0_275, %c0_276, %c256_277] : memref<2x8x8x864xbf16, #tpu.memory_space<vmem>>, vector<1x8x8x64xbf16>
    %225 = vector.shape_cast %224 : vector<1x8x8x64xbf16> to vector<8x8x64xbf16>
    %226 = vector.shape_cast %223 : vector<8x8x64xbf16> to vector<1x8x8x64xbf16>
    tpu.vector_store %arg15[%c0_274, %c0_275, %c0_276, %c256_277], %226 {strides = array<i32>} : memref<2x8x8x864xbf16, #tpu.memory_space<vmem>>, vector<1x8x8x64xbf16>,
    %c1_278 = arith.constant 1 : index
    %c2_279 = arith.constant 2 : index
    %c0_280 = arith.constant 0 : index
    %227 = vector.load %arg13[%c1_278, %c2_279, %c0_280] : memref<10x10x128xf32, #tpu.memory_space<vmem>>, vector<8x8x64xf32>
    %228 = arith.truncf %227 : vector<8x8x64xf32> to vector<8x8x64xbf16>
    %c0_281 = arith.constant 0 : index
    %c0_282 = arith.constant 0 : index
    %c0_283 = arith.constant 0 : index
    %c320_284 = arith.constant 320 : index
    %229 = vector.load %arg15[%c0_281, %c0_282, %c0_283, %c320_284] : memref<2x8x8x864xbf16, #tpu.memory_space<vmem>>, vector<1x8x8x64xbf16>
    %230 = vector.shape_cast %229 : vector<1x8x8x64xbf16> to vector<8x8x64xbf16>
    %231 = vector.shape_cast %228 : vector<8x8x64xbf16> to vector<1x8x8x64xbf16>
    tpu.vector_store %arg15[%c0_281, %c0_282, %c0_283, %c320_284], %231 {strides = array<i32>} : memref<2x8x8x864xbf16, #tpu.memory_space<vmem>>, vector<1x8x8x64xbf16>,
    %c2_285 = arith.constant 2 : index
    %c0_286 = arith.constant 0 : index
    %c0_287 = arith.constant 0 : index
    %232 = vector.load %arg13[%c2_285, %c0_286, %c0_287] : memref<10x10x128xf32, #tpu.memory_space<vmem>>, vector<8x8x64xf32>
    %233 = arith.truncf %232 : vector<8x8x64xf32> to vector<8x8x64xbf16>
    %c0_288 = arith.constant 0 : index
    %c0_289 = arith.constant 0 : index
    %c0_290 = arith.constant 0 : index
    %c384_291 = arith.constant 384 : index
    %234 = vector.load %arg15[%c0_288, %c0_289, %c0_290, %c384_291] : memref<2x8x8x864xbf16, #tpu.memory_space<vmem>>, vector<1x8x8x64xbf16>
    %235 = vector.shape_cast %234 : vector<1x8x8x64xbf16> to vector<8x8x64xbf16>
    %236 = vector.shape_cast %233 : vector<8x8x64xbf16> to vector<1x8x8x64xbf16>
    tpu.vector_store %arg15[%c0_288, %c0_289, %c0_290, %c384_291], %236 {strides = array<i32>} : memref<2x8x8x864xbf16, #tpu.memory_space<vmem>>, vector<1x8x8x64xbf16>,
    %c2_292 = arith.constant 2 : index
    %c1_293 = arith.constant 1 : index
    %c0_294 = arith.constant 0 : index
    %237 = vector.load %arg13[%c2_292, %c1_293, %c0_294] : memref<10x10x128xf32, #tpu.memory_space<vmem>>, vector<8x8x64xf32>
    %238 = arith.truncf %237 : vector<8x8x64xf32> to vector<8x8x64xbf16>
    %c0_295 = arith.constant 0 : index
    %c0_296 = arith.constant 0 : index
    %c0_297 = arith.constant 0 : index
    %c448_298 = arith.constant 448 : index
    %239 = vector.load %arg15[%c0_295, %c0_296, %c0_297, %c448_298] : memref<2x8x8x864xbf16, #tpu.memory_space<vmem>>, vector<1x8x8x64xbf16>
    %240 = vector.shape_cast %239 : vector<1x8x8x64xbf16> to vector<8x8x64xbf16>
    %241 = vector.shape_cast %238 : vector<8x8x64xbf16> to vector<1x8x8x64xbf16>
    tpu.vector_store %arg15[%c0_295, %c0_296, %c0_297, %c448_298], %241 {strides = array<i32>} : memref<2x8x8x864xbf16, #tpu.memory_space<vmem>>, vector<1x8x8x64xbf16>,
    %c2_299 = arith.constant 2 : index
    %c2_300 = arith.constant 2 : index
    %c0_301 = arith.constant 0 : index
    %242 = vector.load %arg13[%c2_299, %c2_300, %c0_301] : memref<10x10x128xf32, #tpu.memory_space<vmem>>, vector<8x8x64xf32>
    %243 = arith.truncf %242 : vector<8x8x64xf32> to vector<8x8x64xbf16>
    %c0_302 = arith.constant 0 : index
    %c0_303 = arith.constant 0 : index
    %c0_304 = arith.constant 0 : index
    %c512_305 = arith.constant 512 : index
    %244 = vector.load %arg15[%c0_302, %c0_303, %c0_304, %c512_305] : memref<2x8x8x864xbf16, #tpu.memory_space<vmem>>, vector<1x8x8x64xbf16>
    %245 = vector.shape_cast %244 : vector<1x8x8x64xbf16> to vector<8x8x64xbf16>
    %246 = vector.shape_cast %243 : vector<8x8x64xbf16> to vector<1x8x8x64xbf16>
    tpu.vector_store %arg15[%c0_302, %c0_303, %c0_304, %c512_305], %246 {strides = array<i32>} : memref<2x8x8x864xbf16, #tpu.memory_space<vmem>>, vector<1x8x8x64xbf16>,
    %247 = vector.extract_strided_slice %198 {offsets = [64, 0], sizes = [64, 64], strides = [1, 1]} : vector<128x64xf32> to vector<64x64xf32>
    %248 = vector.shape_cast %247 : vector<64x64xf32> to vector<8x8x64xf32>
    %c1_306 = arith.constant 1 : index
    %c1_307 = arith.constant 1 : index
    %c0_308 = arith.constant 0 : index
    %249 = vector.load %arg13[%c1_306, %c1_307, %c0_308] : memref<10x10x128xf32, #tpu.memory_space<vmem>>, vector<8x8x64xf32>
    tpu.vector_store %arg13[%c1_306, %c1_307, %c0_308], %248 {strides = array<i32>} : memref<10x10x128xf32, #tpu.memory_space<vmem>>, vector<8x8x64xf32>,
    %c0_309 = arith.constant 0 : index
    %c0_310 = arith.constant 0 : index
    %c0_311 = arith.constant 0 : index
    %250 = vector.load %arg13[%c0_309, %c0_310, %c0_311] : memref<10x10x128xf32, #tpu.memory_space<vmem>>, vector<8x8x64xf32>
    %251 = arith.truncf %250 : vector<8x8x64xf32> to vector<8x8x64xbf16>
    %c1_312 = arith.constant 1 : index
    %c0_313 = arith.constant 0 : index
    %c0_314 = arith.constant 0 : index
    %c0_315 = arith.constant 0 : index
    %252 = vector.load %arg15[%c1_312, %c0_313, %c0_314, %c0_315] : memref<2x8x8x864xbf16, #tpu.memory_space<vmem>>, vector<1x8x8x64xbf16>
    %253 = vector.shape_cast %252 : vector<1x8x8x64xbf16> to vector<8x8x64xbf16>
    %254 = vector.shape_cast %251 : vector<8x8x64xbf16> to vector<1x8x8x64xbf16>
    tpu.vector_store %arg15[%c1_312, %c0_313, %c0_314, %c0_315], %254 {strides = array<i32>} : memref<2x8x8x864xbf16, #tpu.memory_space<vmem>>, vector<1x8x8x64xbf16>,
    %c0_316 = arith.constant 0 : index
    %c1_317 = arith.constant 1 : index
    %c0_318 = arith.constant 0 : index
    %255 = vector.load %arg13[%c0_316, %c1_317, %c0_318] : memref<10x10x128xf32, #tpu.memory_space<vmem>>, vector<8x8x64xf32>
    %256 = arith.truncf %255 : vector<8x8x64xf32> to vector<8x8x64xbf16>
    %c1_319 = arith.constant 1 : index
    %c0_320 = arith.constant 0 : index
    %c0_321 = arith.constant 0 : index
    %c64_322 = arith.constant 64 : index
    %257 = vector.load %arg15[%c1_319, %c0_320, %c0_321, %c64_322] : memref<2x8x8x864xbf16, #tpu.memory_space<vmem>>, vector<1x8x8x64xbf16>
    %258 = vector.shape_cast %257 : vector<1x8x8x64xbf16> to vector<8x8x64xbf16>
    %259 = vector.shape_cast %256 : vector<8x8x64xbf16> to vector<1x8x8x64xbf16>
    tpu.vector_store %arg15[%c1_319, %c0_320, %c0_321, %c64_322], %259 {strides = array<i32>} : memref<2x8x8x864xbf16, #tpu.memory_space<vmem>>, vector<1x8x8x64xbf16>,
    %c0_323 = arith.constant 0 : index
    %c2_324 = arith.constant 2 : index
    %c0_325 = arith.constant 0 : index
    %260 = vector.load %arg13[%c0_323, %c2_324, %c0_325] : memref<10x10x128xf32, #tpu.memory_space<vmem>>, vector<8x8x64xf32>
    %261 = arith.truncf %260 : vector<8x8x64xf32> to vector<8x8x64xbf16>
    %c1_326 = arith.constant 1 : index
    %c0_327 = arith.constant 0 : index
    %c0_328 = arith.constant 0 : index
    %c128_329 = arith.constant 128 : index
    %262 = vector.load %arg15[%c1_326, %c0_327, %c0_328, %c128_329] : memref<2x8x8x864xbf16, #tpu.memory_space<vmem>>, vector<1x8x8x64xbf16>
    %263 = vector.shape_cast %262 : vector<1x8x8x64xbf16> to vector<8x8x64xbf16>
    %264 = vector.shape_cast %261 : vector<8x8x64xbf16> to vector<1x8x8x64xbf16>
    tpu.vector_store %arg15[%c1_326, %c0_327, %c0_328, %c128_329], %264 {strides = array<i32>} : memref<2x8x8x864xbf16, #tpu.memory_space<vmem>>, vector<1x8x8x64xbf16>,
    %c1_330 = arith.constant 1 : index
    %c0_331 = arith.constant 0 : index
    %c0_332 = arith.constant 0 : index
    %265 = vector.load %arg13[%c1_330, %c0_331, %c0_332] : memref<10x10x128xf32, #tpu.memory_space<vmem>>, vector<8x8x64xf32>
    %266 = arith.truncf %265 : vector<8x8x64xf32> to vector<8x8x64xbf16>
    %c1_333 = arith.constant 1 : index
    %c0_334 = arith.constant 0 : index
    %c0_335 = arith.constant 0 : index
    %c192_336 = arith.constant 192 : index
    %267 = vector.load %arg15[%c1_333, %c0_334, %c0_335, %c192_336] : memref<2x8x8x864xbf16, #tpu.memory_space<vmem>>, vector<1x8x8x64xbf16>
    %268 = vector.shape_cast %267 : vector<1x8x8x64xbf16> to vector<8x8x64xbf16>
    %269 = vector.shape_cast %266 : vector<8x8x64xbf16> to vector<1x8x8x64xbf16>
    tpu.vector_store %arg15[%c1_333, %c0_334, %c0_335, %c192_336], %269 {strides = array<i32>} : memref<2x8x8x864xbf16, #tpu.memory_space<vmem>>, vector<1x8x8x64xbf16>,
    %c1_337 = arith.constant 1 : index
    %c1_338 = arith.constant 1 : index
    %c0_339 = arith.constant 0 : index
    %270 = vector.load %arg13[%c1_337, %c1_338, %c0_339] : memref<10x10x128xf32, #tpu.memory_space<vmem>>, vector<8x8x64xf32>
    %271 = arith.truncf %270 : vector<8x8x64xf32> to vector<8x8x64xbf16>
    %c1_340 = arith.constant 1 : index
    %c0_341 = arith.constant 0 : index
    %c0_342 = arith.constant 0 : index
    %c256_343 = arith.constant 256 : index
    %272 = vector.load %arg15[%c1_340, %c0_341, %c0_342, %c256_343] : memref<2x8x8x864xbf16, #tpu.memory_space<vmem>>, vector<1x8x8x64xbf16>
    %273 = vector.shape_cast %272 : vector<1x8x8x64xbf16> to vector<8x8x64xbf16>
    %274 = vector.shape_cast %271 : vector<8x8x64xbf16> to vector<1x8x8x64xbf16>
    tpu.vector_store %arg15[%c1_340, %c0_341, %c0_342, %c256_343], %274 {strides = array<i32>} : memref<2x8x8x864xbf16, #tpu.memory_space<vmem>>, vector<1x8x8x64xbf16>,
    %c1_344 = arith.constant 1 : index
    %c2_345 = arith.constant 2 : index
    %c0_346 = arith.constant 0 : index
    %275 = vector.load %arg13[%c1_344, %c2_345, %c0_346] : memref<10x10x128xf32, #tpu.memory_space<vmem>>, vector<8x8x64xf32>
    %276 = arith.truncf %275 : vector<8x8x64xf32> to vector<8x8x64xbf16>
    %c1_347 = arith.constant 1 : index
    %c0_348 = arith.constant 0 : index
    %c0_349 = arith.constant 0 : index
    %c320_350 = arith.constant 320 : index
    %277 = vector.load %arg15[%c1_347, %c0_348, %c0_349, %c320_350] : memref<2x8x8x864xbf16, #tpu.memory_space<vmem>>, vector<1x8x8x64xbf16>
    %278 = vector.shape_cast %277 : vector<1x8x8x64xbf16> to vector<8x8x64xbf16>
    %279 = vector.shape_cast %276 : vector<8x8x64xbf16> to vector<1x8x8x64xbf16>
    tpu.vector_store %arg15[%c1_347, %c0_348, %c0_349, %c320_350], %279 {strides = array<i32>} : memref<2x8x8x864xbf16, #tpu.memory_space<vmem>>, vector<1x8x8x64xbf16>,
    %c2_351 = arith.constant 2 : index
    %c0_352 = arith.constant 0 : index
    %c0_353 = arith.constant 0 : index
    %280 = vector.load %arg13[%c2_351, %c0_352, %c0_353] : memref<10x10x128xf32, #tpu.memory_space<vmem>>, vector<8x8x64xf32>
    %281 = arith.truncf %280 : vector<8x8x64xf32> to vector<8x8x64xbf16>
    %c1_354 = arith.constant 1 : index
    %c0_355 = arith.constant 0 : index
    %c0_356 = arith.constant 0 : index
    %c384_357 = arith.constant 384 : index
    %282 = vector.load %arg15[%c1_354, %c0_355, %c0_356, %c384_357] : memref<2x8x8x864xbf16, #tpu.memory_space<vmem>>, vector<1x8x8x64xbf16>
    %283 = vector.shape_cast %282 : vector<1x8x8x64xbf16> to vector<8x8x64xbf16>
    %284 = vector.shape_cast %281 : vector<8x8x64xbf16> to vector<1x8x8x64xbf16>
    tpu.vector_store %arg15[%c1_354, %c0_355, %c0_356, %c384_357], %284 {strides = array<i32>} : memref<2x8x8x864xbf16, #tpu.memory_space<vmem>>, vector<1x8x8x64xbf16>,
    %c2_358 = arith.constant 2 : index
    %c1_359 = arith.constant 1 : index
    %c0_360 = arith.constant 0 : index
    %285 = vector.load %arg13[%c2_358, %c1_359, %c0_360] : memref<10x10x128xf32, #tpu.memory_space<vmem>>, vector<8x8x64xf32>
    %286 = arith.truncf %285 : vector<8x8x64xf32> to vector<8x8x64xbf16>
    %c1_361 = arith.constant 1 : index
    %c0_362 = arith.constant 0 : index
    %c0_363 = arith.constant 0 : index
    %c448_364 = arith.constant 448 : index
    %287 = vector.load %arg15[%c1_361, %c0_362, %c0_363, %c448_364] : memref<2x8x8x864xbf16, #tpu.memory_space<vmem>>, vector<1x8x8x64xbf16>
    %288 = vector.shape_cast %287 : vector<1x8x8x64xbf16> to vector<8x8x64xbf16>
    %289 = vector.shape_cast %286 : vector<8x8x64xbf16> to vector<1x8x8x64xbf16>
    tpu.vector_store %arg15[%c1_361, %c0_362, %c0_363, %c448_364], %289 {strides = array<i32>} : memref<2x8x8x864xbf16, #tpu.memory_space<vmem>>, vector<1x8x8x64xbf16>,
    %c2_365 = arith.constant 2 : index
    %c2_366 = arith.constant 2 : index
    %c0_367 = arith.constant 0 : index
    %290 = vector.load %arg13[%c2_365, %c2_366, %c0_367] : memref<10x10x128xf32, #tpu.memory_space<vmem>>, vector<8x8x64xf32>
    %291 = arith.truncf %290 : vector<8x8x64xf32> to vector<8x8x64xbf16>
    %c1_368 = arith.constant 1 : index
    %c0_369 = arith.constant 0 : index
    %c0_370 = arith.constant 0 : index
    %c512_371 = arith.constant 512 : index
    %292 = vector.load %arg15[%c1_368, %c0_369, %c0_370, %c512_371] : memref<2x8x8x864xbf16, #tpu.memory_space<vmem>>, vector<1x8x8x64xbf16>
    %293 = vector.shape_cast %292 : vector<1x8x8x64xbf16> to vector<8x8x64xbf16>
    %294 = vector.shape_cast %291 : vector<8x8x64xbf16> to vector<1x8x8x64xbf16>
    tpu.vector_store %arg15[%c1_368, %c0_369, %c0_370, %c512_371], %294 {strides = array<i32>} : memref<2x8x8x864xbf16, #tpu.memory_space<vmem>>, vector<1x8x8x64xbf16>,
    %c0_372 = arith.constant 0 : index
    %c0_373 = arith.constant 0 : index
    %c0_374 = arith.constant 0 : index
    %c0_375 = arith.constant 0 : index
    %295 = vector.load %arg15[%c0_372, %c0_373, %c0_374, %c0_375] : memref<2x8x8x864xbf16, #tpu.memory_space<vmem>>, vector<2x8x8x576xbf16>
    %296 = vector.shape_cast %295 : vector<2x8x8x576xbf16> to vector<128x576xbf16>
    %c0_376 = arith.constant 0 : index
    %c0_377 = arith.constant 0 : index
    %297 = vector.load %arg7[%c0_376, %c0_377] : memref<576x96xbf16, #tpu.memory_space<vmem>>, vector<576x96xbf16>
    %cst_378 = arith.constant dense<0.000000e+00> : vector<128x96xf32>
    %298 = tpu.matmul %296, %297, %cst_378 {dimension_numbers = #tpu.dot_dimension_numbers<[1], [0], [0], [1], [0, 0, 1, 1], [], []>} : vector<128x576xbf16>, vector<576x96xbf16>, vector<128x96xf32> -> vector<128x96xf32>
    %c0_379 = arith.constant 0 : index
    %c0_380 = arith.constant 0 : index
    %299 = vector.load %arg8[%c0_379, %c0_380] : memref<1x96xf32, #tpu.memory_space<vmem>>, vector<1x96xf32>
    %300 = vector.broadcast %299 : vector<1x96xf32> to vector<128x96xf32>
    %301 = arith.addf %298, %300 : vector<128x96xf32>
    %cst_381 = arith.constant 0.000000e+00 : f32
    %302 = vector.broadcast %cst_381 : f32 to vector<128x96xf32>
    %303 = arith.maximumf %301, %302 : vector<128x96xf32>
    %304 = vector.extract_strided_slice %303 {offsets = [0, 0], sizes = [64, 96], strides = [1, 1]} : vector<128x96xf32> to vector<64x96xf32>
    %305 = vector.shape_cast %304 : vector<64x96xf32> to vector<8x8x96xf32>
    %c1_382 = arith.constant 1 : index
    %c1_383 = arith.constant 1 : index
    %c0_384 = arith.constant 0 : index
    %306 = vector.load %arg13[%c1_382, %c1_383, %c0_384] : memref<10x10x128xf32, #tpu.memory_space<vmem>>, vector<8x8x96xf32>
    tpu.vector_store %arg13[%c1_382, %c1_383, %c0_384], %305 {strides = array<i32>} : memref<10x10x128xf32, #tpu.memory_space<vmem>>, vector<8x8x96xf32>,
    %c0_385 = arith.constant 0 : index
    %c0_386 = arith.constant 0 : index
    %c0_387 = arith.constant 0 : index
    %307 = vector.load %arg13[%c0_385, %c0_386, %c0_387] : memref<10x10x128xf32, #tpu.memory_space<vmem>>, vector<8x8x96xf32>
    %308 = arith.truncf %307 : vector<8x8x96xf32> to vector<8x8x96xbf16>
    %c0_388 = arith.constant 0 : index
    %c0_389 = arith.constant 0 : index
    %c0_390 = arith.constant 0 : index
    %c0_391 = arith.constant 0 : index
    %309 = vector.load %arg15[%c0_388, %c0_389, %c0_390, %c0_391] : memref<2x8x8x864xbf16, #tpu.memory_space<vmem>>, vector<1x8x8x96xbf16>
    %310 = vector.shape_cast %309 : vector<1x8x8x96xbf16> to vector<8x8x96xbf16>
    %311 = vector.shape_cast %308 : vector<8x8x96xbf16> to vector<1x8x8x96xbf16>
    tpu.vector_store %arg15[%c0_388, %c0_389, %c0_390, %c0_391], %311 {strides = array<i32>} : memref<2x8x8x864xbf16, #tpu.memory_space<vmem>>, vector<1x8x8x96xbf16>,
    %c0_392 = arith.constant 0 : index
    %c1_393 = arith.constant 1 : index
    %c0_394 = arith.constant 0 : index
    %312 = vector.load %arg13[%c0_392, %c1_393, %c0_394] : memref<10x10x128xf32, #tpu.memory_space<vmem>>, vector<8x8x96xf32>
    %313 = arith.truncf %312 : vector<8x8x96xf32> to vector<8x8x96xbf16>
    %c0_395 = arith.constant 0 : index
    %c0_396 = arith.constant 0 : index
    %c0_397 = arith.constant 0 : index
    %c96 = arith.constant 96 : index
    %314 = vector.load %arg15[%c0_395, %c0_396, %c0_397, %c96] : memref<2x8x8x864xbf16, #tpu.memory_space<vmem>>, vector<1x8x8x96xbf16>
    %315 = vector.shape_cast %314 : vector<1x8x8x96xbf16> to vector<8x8x96xbf16>
    %316 = vector.shape_cast %313 : vector<8x8x96xbf16> to vector<1x8x8x96xbf16>
    tpu.vector_store %arg15[%c0_395, %c0_396, %c0_397, %c96], %316 {strides = array<i32>} : memref<2x8x8x864xbf16, #tpu.memory_space<vmem>>, vector<1x8x8x96xbf16>,
    %c0_398 = arith.constant 0 : index
    %c2_399 = arith.constant 2 : index
    %c0_400 = arith.constant 0 : index
    %317 = vector.load %arg13[%c0_398, %c2_399, %c0_400] : memref<10x10x128xf32, #tpu.memory_space<vmem>>, vector<8x8x96xf32>
    %318 = arith.truncf %317 : vector<8x8x96xf32> to vector<8x8x96xbf16>
    %c0_401 = arith.constant 0 : index
    %c0_402 = arith.constant 0 : index
    %c0_403 = arith.constant 0 : index
    %c192_404 = arith.constant 192 : index
    %319 = vector.load %arg15[%c0_401, %c0_402, %c0_403, %c192_404] : memref<2x8x8x864xbf16, #tpu.memory_space<vmem>>, vector<1x8x8x96xbf16>
    %320 = vector.shape_cast %319 : vector<1x8x8x96xbf16> to vector<8x8x96xbf16>
    %321 = vector.shape_cast %318 : vector<8x8x96xbf16> to vector<1x8x8x96xbf16>
    tpu.vector_store %arg15[%c0_401, %c0_402, %c0_403, %c192_404], %321 {strides = array<i32>} : memref<2x8x8x864xbf16, #tpu.memory_space<vmem>>, vector<1x8x8x96xbf16>,
    %c1_405 = arith.constant 1 : index
    %c0_406 = arith.constant 0 : index
    %c0_407 = arith.constant 0 : index
    %322 = vector.load %arg13[%c1_405, %c0_406, %c0_407] : memref<10x10x128xf32, #tpu.memory_space<vmem>>, vector<8x8x96xf32>
    %323 = arith.truncf %322 : vector<8x8x96xf32> to vector<8x8x96xbf16>
    %c0_408 = arith.constant 0 : index
    %c0_409 = arith.constant 0 : index
    %c0_410 = arith.constant 0 : index
    %c288 = arith.constant 288 : index
    %324 = vector.load %arg15[%c0_408, %c0_409, %c0_410, %c288] : memref<2x8x8x864xbf16, #tpu.memory_space<vmem>>, vector<1x8x8x96xbf16>
    %325 = vector.shape_cast %324 : vector<1x8x8x96xbf16> to vector<8x8x96xbf16>
    %326 = vector.shape_cast %323 : vector<8x8x96xbf16> to vector<1x8x8x96xbf16>
    tpu.vector_store %arg15[%c0_408, %c0_409, %c0_410, %c288], %326 {strides = array<i32>} : memref<2x8x8x864xbf16, #tpu.memory_space<vmem>>, vector<1x8x8x96xbf16>,
    %c1_411 = arith.constant 1 : index
    %c1_412 = arith.constant 1 : index
    %c0_413 = arith.constant 0 : index
    %327 = vector.load %arg13[%c1_411, %c1_412, %c0_413] : memref<10x10x128xf32, #tpu.memory_space<vmem>>, vector<8x8x96xf32>
    %328 = arith.truncf %327 : vector<8x8x96xf32> to vector<8x8x96xbf16>
    %c0_414 = arith.constant 0 : index
    %c0_415 = arith.constant 0 : index
    %c0_416 = arith.constant 0 : index
    %c384_417 = arith.constant 384 : index
    %329 = vector.load %arg15[%c0_414, %c0_415, %c0_416, %c384_417] : memref<2x8x8x864xbf16, #tpu.memory_space<vmem>>, vector<1x8x8x96xbf16>
    %330 = vector.shape_cast %329 : vector<1x8x8x96xbf16> to vector<8x8x96xbf16>
    %331 = vector.shape_cast %328 : vector<8x8x96xbf16> to vector<1x8x8x96xbf16>
    tpu.vector_store %arg15[%c0_414, %c0_415, %c0_416, %c384_417], %331 {strides = array<i32>} : memref<2x8x8x864xbf16, #tpu.memory_space<vmem>>, vector<1x8x8x96xbf16>,
    %c1_418 = arith.constant 1 : index
    %c2_419 = arith.constant 2 : index
    %c0_420 = arith.constant 0 : index
    %332 = vector.load %arg13[%c1_418, %c2_419, %c0_420] : memref<10x10x128xf32, #tpu.memory_space<vmem>>, vector<8x8x96xf32>
    %333 = arith.truncf %332 : vector<8x8x96xf32> to vector<8x8x96xbf16>
    %c0_421 = arith.constant 0 : index
    %c0_422 = arith.constant 0 : index
    %c0_423 = arith.constant 0 : index
    %c480 = arith.constant 480 : index
    %334 = vector.load %arg15[%c0_421, %c0_422, %c0_423, %c480] : memref<2x8x8x864xbf16, #tpu.memory_space<vmem>>, vector<1x8x8x96xbf16>
    %335 = vector.shape_cast %334 : vector<1x8x8x96xbf16> to vector<8x8x96xbf16>
    %336 = vector.shape_cast %333 : vector<8x8x96xbf16> to vector<1x8x8x96xbf16>
    tpu.vector_store %arg15[%c0_421, %c0_422, %c0_423, %c480], %336 {strides = array<i32>} : memref<2x8x8x864xbf16, #tpu.memory_space<vmem>>, vector<1x8x8x96xbf16>,
    %c2_424 = arith.constant 2 : index
    %c0_425 = arith.constant 0 : index
    %c0_426 = arith.constant 0 : index
    %337 = vector.load %arg13[%c2_424, %c0_425, %c0_426] : memref<10x10x128xf32, #tpu.memory_space<vmem>>, vector<8x8x96xf32>
    %338 = arith.truncf %337 : vector<8x8x96xf32> to vector<8x8x96xbf16>
    %c0_427 = arith.constant 0 : index
    %c0_428 = arith.constant 0 : index
    %c0_429 = arith.constant 0 : index
    %c576 = arith.constant 576 : index
    %339 = vector.load %arg15[%c0_427, %c0_428, %c0_429, %c576] : memref<2x8x8x864xbf16, #tpu.memory_space<vmem>>, vector<1x8x8x96xbf16>
    %340 = vector.shape_cast %339 : vector<1x8x8x96xbf16> to vector<8x8x96xbf16>
    %341 = vector.shape_cast %338 : vector<8x8x96xbf16> to vector<1x8x8x96xbf16>
    tpu.vector_store %arg15[%c0_427, %c0_428, %c0_429, %c576], %341 {strides = array<i32>} : memref<2x8x8x864xbf16, #tpu.memory_space<vmem>>, vector<1x8x8x96xbf16>,
    %c2_430 = arith.constant 2 : index
    %c1_431 = arith.constant 1 : index
    %c0_432 = arith.constant 0 : index
    %342 = vector.load %arg13[%c2_430, %c1_431, %c0_432] : memref<10x10x128xf32, #tpu.memory_space<vmem>>, vector<8x8x96xf32>
    %343 = arith.truncf %342 : vector<8x8x96xf32> to vector<8x8x96xbf16>
    %c0_433 = arith.constant 0 : index
    %c0_434 = arith.constant 0 : index
    %c0_435 = arith.constant 0 : index
    %c672 = arith.constant 672 : index
    %344 = vector.load %arg15[%c0_433, %c0_434, %c0_435, %c672] : memref<2x8x8x864xbf16, #tpu.memory_space<vmem>>, vector<1x8x8x96xbf16>
    %345 = vector.shape_cast %344 : vector<1x8x8x96xbf16> to vector<8x8x96xbf16>
    %346 = vector.shape_cast %343 : vector<8x8x96xbf16> to vector<1x8x8x96xbf16>
    tpu.vector_store %arg15[%c0_433, %c0_434, %c0_435, %c672], %346 {strides = array<i32>} : memref<2x8x8x864xbf16, #tpu.memory_space<vmem>>, vector<1x8x8x96xbf16>,
    %c2_436 = arith.constant 2 : index
    %c2_437 = arith.constant 2 : index
    %c0_438 = arith.constant 0 : index
    %347 = vector.load %arg13[%c2_436, %c2_437, %c0_438] : memref<10x10x128xf32, #tpu.memory_space<vmem>>, vector<8x8x96xf32>
    %348 = arith.truncf %347 : vector<8x8x96xf32> to vector<8x8x96xbf16>
    %c0_439 = arith.constant 0 : index
    %c0_440 = arith.constant 0 : index
    %c0_441 = arith.constant 0 : index
    %c768 = arith.constant 768 : index
    %349 = vector.load %arg15[%c0_439, %c0_440, %c0_441, %c768] : memref<2x8x8x864xbf16, #tpu.memory_space<vmem>>, vector<1x8x8x96xbf16>
    %350 = vector.shape_cast %349 : vector<1x8x8x96xbf16> to vector<8x8x96xbf16>
    %351 = vector.shape_cast %348 : vector<8x8x96xbf16> to vector<1x8x8x96xbf16>
    tpu.vector_store %arg15[%c0_439, %c0_440, %c0_441, %c768], %351 {strides = array<i32>} : memref<2x8x8x864xbf16, #tpu.memory_space<vmem>>, vector<1x8x8x96xbf16>,
    %352 = vector.extract_strided_slice %303 {offsets = [64, 0], sizes = [64, 96], strides = [1, 1]} : vector<128x96xf32> to vector<64x96xf32>
    %353 = vector.shape_cast %352 : vector<64x96xf32> to vector<8x8x96xf32>
    %c1_442 = arith.constant 1 : index
    %c1_443 = arith.constant 1 : index
    %c0_444 = arith.constant 0 : index
    %354 = vector.load %arg13[%c1_442, %c1_443, %c0_444] : memref<10x10x128xf32, #tpu.memory_space<vmem>>, vector<8x8x96xf32>
    tpu.vector_store %arg13[%c1_442, %c1_443, %c0_444], %353 {strides = array<i32>} : memref<10x10x128xf32, #tpu.memory_space<vmem>>, vector<8x8x96xf32>,
    %c0_445 = arith.constant 0 : index
    %c0_446 = arith.constant 0 : index
    %c0_447 = arith.constant 0 : index
    %355 = vector.load %arg13[%c0_445, %c0_446, %c0_447] : memref<10x10x128xf32, #tpu.memory_space<vmem>>, vector<8x8x96xf32>
    %356 = arith.truncf %355 : vector<8x8x96xf32> to vector<8x8x96xbf16>
    %c1_448 = arith.constant 1 : index
    %c0_449 = arith.constant 0 : index
    %c0_450 = arith.constant 0 : index
    %c0_451 = arith.constant 0 : index
    %357 = vector.load %arg15[%c1_448, %c0_449, %c0_450, %c0_451] : memref<2x8x8x864xbf16, #tpu.memory_space<vmem>>, vector<1x8x8x96xbf16>
    %358 = vector.shape_cast %357 : vector<1x8x8x96xbf16> to vector<8x8x96xbf16>
    %359 = vector.shape_cast %356 : vector<8x8x96xbf16> to vector<1x8x8x96xbf16>
    tpu.vector_store %arg15[%c1_448, %c0_449, %c0_450, %c0_451], %359 {strides = array<i32>} : memref<2x8x8x864xbf16, #tpu.memory_space<vmem>>, vector<1x8x8x96xbf16>,
    %c0_452 = arith.constant 0 : index
    %c1_453 = arith.constant 1 : index
    %c0_454 = arith.constant 0 : index
    %360 = vector.load %arg13[%c0_452, %c1_453, %c0_454] : memref<10x10x128xf32, #tpu.memory_space<vmem>>, vector<8x8x96xf32>
    %361 = arith.truncf %360 : vector<8x8x96xf32> to vector<8x8x96xbf16>
    %c1_455 = arith.constant 1 : index
    %c0_456 = arith.constant 0 : index
    %c0_457 = arith.constant 0 : index
    %c96_458 = arith.constant 96 : index
    %362 = vector.load %arg15[%c1_455, %c0_456, %c0_457, %c96_458] : memref<2x8x8x864xbf16, #tpu.memory_space<vmem>>, vector<1x8x8x96xbf16>
    %363 = vector.shape_cast %362 : vector<1x8x8x96xbf16> to vector<8x8x96xbf16>
    %364 = vector.shape_cast %361 : vector<8x8x96xbf16> to vector<1x8x8x96xbf16>
    tpu.vector_store %arg15[%c1_455, %c0_456, %c0_457, %c96_458], %364 {strides = array<i32>} : memref<2x8x8x864xbf16, #tpu.memory_space<vmem>>, vector<1x8x8x96xbf16>,
    %c0_459 = arith.constant 0 : index
    %c2_460 = arith.constant 2 : index
    %c0_461 = arith.constant 0 : index
    %365 = vector.load %arg13[%c0_459, %c2_460, %c0_461] : memref<10x10x128xf32, #tpu.memory_space<vmem>>, vector<8x8x96xf32>
    %366 = arith.truncf %365 : vector<8x8x96xf32> to vector<8x8x96xbf16>
    %c1_462 = arith.constant 1 : index
    %c0_463 = arith.constant 0 : index
    %c0_464 = arith.constant 0 : index
    %c192_465 = arith.constant 192 : index
    %367 = vector.load %arg15[%c1_462, %c0_463, %c0_464, %c192_465] : memref<2x8x8x864xbf16, #tpu.memory_space<vmem>>, vector<1x8x8x96xbf16>
    %368 = vector.shape_cast %367 : vector<1x8x8x96xbf16> to vector<8x8x96xbf16>
    %369 = vector.shape_cast %366 : vector<8x8x96xbf16> to vector<1x8x8x96xbf16>
    tpu.vector_store %arg15[%c1_462, %c0_463, %c0_464, %c192_465], %369 {strides = array<i32>} : memref<2x8x8x864xbf16, #tpu.memory_space<vmem>>, vector<1x8x8x96xbf16>,
    %c1_466 = arith.constant 1 : index
    %c0_467 = arith.constant 0 : index
    %c0_468 = arith.constant 0 : index
    %370 = vector.load %arg13[%c1_466, %c0_467, %c0_468] : memref<10x10x128xf32, #tpu.memory_space<vmem>>, vector<8x8x96xf32>
    %371 = arith.truncf %370 : vector<8x8x96xf32> to vector<8x8x96xbf16>
    %c1_469 = arith.constant 1 : index
    %c0_470 = arith.constant 0 : index
    %c0_471 = arith.constant 0 : index
    %c288_472 = arith.constant 288 : index
    %372 = vector.load %arg15[%c1_469, %c0_470, %c0_471, %c288_472] : memref<2x8x8x864xbf16, #tpu.memory_space<vmem>>, vector<1x8x8x96xbf16>
    %373 = vector.shape_cast %372 : vector<1x8x8x96xbf16> to vector<8x8x96xbf16>
    %374 = vector.shape_cast %371 : vector<8x8x96xbf16> to vector<1x8x8x96xbf16>
    tpu.vector_store %arg15[%c1_469, %c0_470, %c0_471, %c288_472], %374 {strides = array<i32>} : memref<2x8x8x864xbf16, #tpu.memory_space<vmem>>, vector<1x8x8x96xbf16>,
    %c1_473 = arith.constant 1 : index
    %c1_474 = arith.constant 1 : index
    %c0_475 = arith.constant 0 : index
    %375 = vector.load %arg13[%c1_473, %c1_474, %c0_475] : memref<10x10x128xf32, #tpu.memory_space<vmem>>, vector<8x8x96xf32>
    %376 = arith.truncf %375 : vector<8x8x96xf32> to vector<8x8x96xbf16>
    %c1_476 = arith.constant 1 : index
    %c0_477 = arith.constant 0 : index
    %c0_478 = arith.constant 0 : index
    %c384_479 = arith.constant 384 : index
    %377 = vector.load %arg15[%c1_476, %c0_477, %c0_478, %c384_479] : memref<2x8x8x864xbf16, #tpu.memory_space<vmem>>, vector<1x8x8x96xbf16>
    %378 = vector.shape_cast %377 : vector<1x8x8x96xbf16> to vector<8x8x96xbf16>
    %379 = vector.shape_cast %376 : vector<8x8x96xbf16> to vector<1x8x8x96xbf16>
    tpu.vector_store %arg15[%c1_476, %c0_477, %c0_478, %c384_479], %379 {strides = array<i32>} : memref<2x8x8x864xbf16, #tpu.memory_space<vmem>>, vector<1x8x8x96xbf16>,
    %c1_480 = arith.constant 1 : index
    %c2_481 = arith.constant 2 : index
    %c0_482 = arith.constant 0 : index
    %380 = vector.load %arg13[%c1_480, %c2_481, %c0_482] : memref<10x10x128xf32, #tpu.memory_space<vmem>>, vector<8x8x96xf32>
    %381 = arith.truncf %380 : vector<8x8x96xf32> to vector<8x8x96xbf16>
    %c1_483 = arith.constant 1 : index
    %c0_484 = arith.constant 0 : index
    %c0_485 = arith.constant 0 : index
    %c480_486 = arith.constant 480 : index
    %382 = vector.load %arg15[%c1_483, %c0_484, %c0_485, %c480_486] : memref<2x8x8x864xbf16, #tpu.memory_space<vmem>>, vector<1x8x8x96xbf16>
    %383 = vector.shape_cast %382 : vector<1x8x8x96xbf16> to vector<8x8x96xbf16>
    %384 = vector.shape_cast %381 : vector<8x8x96xbf16> to vector<1x8x8x96xbf16>
    tpu.vector_store %arg15[%c1_483, %c0_484, %c0_485, %c480_486], %384 {strides = array<i32>} : memref<2x8x8x864xbf16, #tpu.memory_space<vmem>>, vector<1x8x8x96xbf16>,
    %c2_487 = arith.constant 2 : index
    %c0_488 = arith.constant 0 : index
    %c0_489 = arith.constant 0 : index
    %385 = vector.load %arg13[%c2_487, %c0_488, %c0_489] : memref<10x10x128xf32, #tpu.memory_space<vmem>>, vector<8x8x96xf32>
    %386 = arith.truncf %385 : vector<8x8x96xf32> to vector<8x8x96xbf16>
    %c1_490 = arith.constant 1 : index
    %c0_491 = arith.constant 0 : index
    %c0_492 = arith.constant 0 : index
    %c576_493 = arith.constant 576 : index
    %387 = vector.load %arg15[%c1_490, %c0_491, %c0_492, %c576_493] : memref<2x8x8x864xbf16, #tpu.memory_space<vmem>>, vector<1x8x8x96xbf16>
    %388 = vector.shape_cast %387 : vector<1x8x8x96xbf16> to vector<8x8x96xbf16>
    %389 = vector.shape_cast %386 : vector<8x8x96xbf16> to vector<1x8x8x96xbf16>
    tpu.vector_store %arg15[%c1_490, %c0_491, %c0_492, %c576_493], %389 {strides = array<i32>} : memref<2x8x8x864xbf16, #tpu.memory_space<vmem>>, vector<1x8x8x96xbf16>,
    %c2_494 = arith.constant 2 : index
    %c1_495 = arith.constant 1 : index
    %c0_496 = arith.constant 0 : index
    %390 = vector.load %arg13[%c2_494, %c1_495, %c0_496] : memref<10x10x128xf32, #tpu.memory_space<vmem>>, vector<8x8x96xf32>
    %391 = arith.truncf %390 : vector<8x8x96xf32> to vector<8x8x96xbf16>
    %c1_497 = arith.constant 1 : index
    %c0_498 = arith.constant 0 : index
    %c0_499 = arith.constant 0 : index
    %c672_500 = arith.constant 672 : index
    %392 = vector.load %arg15[%c1_497, %c0_498, %c0_499, %c672_500] : memref<2x8x8x864xbf16, #tpu.memory_space<vmem>>, vector<1x8x8x96xbf16>
    %393 = vector.shape_cast %392 : vector<1x8x8x96xbf16> to vector<8x8x96xbf16>
    %394 = vector.shape_cast %391 : vector<8x8x96xbf16> to vector<1x8x8x96xbf16>
    tpu.vector_store %arg15[%c1_497, %c0_498, %c0_499, %c672_500], %394 {strides = array<i32>} : memref<2x8x8x864xbf16, #tpu.memory_space<vmem>>, vector<1x8x8x96xbf16>,
    %c2_501 = arith.constant 2 : index
    %c2_502 = arith.constant 2 : index
    %c0_503 = arith.constant 0 : index
    %395 = vector.load %arg13[%c2_501, %c2_502, %c0_503] : memref<10x10x128xf32, #tpu.memory_space<vmem>>, vector<8x8x96xf32>
    %396 = arith.truncf %395 : vector<8x8x96xf32> to vector<8x8x96xbf16>
    %c1_504 = arith.constant 1 : index
    %c0_505 = arith.constant 0 : index
    %c0_506 = arith.constant 0 : index
    %c768_507 = arith.constant 768 : index
    %397 = vector.load %arg15[%c1_504, %c0_505, %c0_506, %c768_507] : memref<2x8x8x864xbf16, #tpu.memory_space<vmem>>, vector<1x8x8x96xbf16>
    %398 = vector.shape_cast %397 : vector<1x8x8x96xbf16> to vector<8x8x96xbf16>
    %399 = vector.shape_cast %396 : vector<8x8x96xbf16> to vector<1x8x8x96xbf16>
    tpu.vector_store %arg15[%c1_504, %c0_505, %c0_506, %c768_507], %399 {strides = array<i32>} : memref<2x8x8x864xbf16, #tpu.memory_space<vmem>>, vector<1x8x8x96xbf16>,
    %c0_508 = arith.constant 0 : index
    %c0_509 = arith.constant 0 : index
    %c0_510 = arith.constant 0 : index
    %c0_511 = arith.constant 0 : index
    %400 = vector.load %arg15[%c0_508, %c0_509, %c0_510, %c0_511] : memref<2x8x8x864xbf16, #tpu.memory_space<vmem>>, vector<2x8x8x864xbf16>
    %401 = vector.shape_cast %400 : vector<2x8x8x864xbf16> to vector<128x864xbf16>
    %c0_512 = arith.constant 0 : index
    %c0_513 = arith.constant 0 : index
    %402 = vector.load %arg9[%c0_512, %c0_513] : memref<864x96xbf16, #tpu.memory_space<vmem>>, vector<864x96xbf16>
    %cst_514 = arith.constant dense<0.000000e+00> : vector<128x96xf32>
    %403 = tpu.matmul %401, %402, %cst_514 {dimension_numbers = #tpu.dot_dimension_numbers<[1], [0], [0], [1], [0, 0, 1, 1], [], []>} : vector<128x864xbf16>, vector<864x96xbf16>, vector<128x96xf32> -> vector<128x96xf32>
    %c0_515 = arith.constant 0 : index
    %c0_516 = arith.constant 0 : index
    %404 = vector.load %arg10[%c0_515, %c0_516] : memref<1x96xf32, #tpu.memory_space<vmem>>, vector<1x96xf32>
    %405 = vector.broadcast %404 : vector<1x96xf32> to vector<128x96xf32>
    %406 = arith.addf %403, %405 : vector<128x96xf32>
    %cst_517 = arith.constant 0.000000e+00 : f32
    %407 = vector.broadcast %cst_517 : f32 to vector<128x96xf32>
    %408 = arith.maximumf %406, %407 : vector<128x96xf32>
    %409 = arith.truncf %408 : vector<128x96xf32> to vector<128x96xbf16>
    %410 = tpu.concatenate %28, %197, %409, %90 in 1 : vector<128x96xbf16>, vector<128x96xbf16>, vector<128x96xbf16>, vector<128x96xbf16> -> vector<128x384xbf16>
    %411 = vector.shape_cast %410 : vector<128x384xbf16> to vector<2x8x8x384xbf16>
    %c0_518 = arith.constant 0 : index
    %c0_519 = arith.constant 0 : index
    %c0_520 = arith.constant 0 : index
    %c0_521 = arith.constant 0 : index
    %412 = vector.load %arg12[%c0_518, %c0_519, %c0_520, %c0_521] : memref<2x8x8x384xbf16, #tpu.memory_space<vmem>>, vector<2x8x8x384xbf16>
    tpu.vector_store %arg12[%c0_518, %c0_519, %c0_520, %c0_521], %411 {strides = array<i32>} : memref<2x8x8x384xbf16, #tpu.memory_space<vmem>>, vector<2x8x8x384xbf16>,
    return
  }
  func.func @transform_0(%arg0: i32) -> (i32, i32, i32, i32) {
    %c0_i32 = arith.constant 0 : i32
    %c0_i32_0 = arith.constant 0 : i32
    %c0_i32_1 = arith.constant 0 : i32
    %c0_i32_2 = arith.constant 0 : i32
    return %arg0, %c0_i32, %c0_i32_0, %c0_i32_1 : i32, i32, i32, i32
  }
  func.func @transform_1(%arg0: i32) -> (i32, i32, i32) {
    %c0_i32 = arith.constant 0 : i32
    %c0_i32_0 = arith.constant 0 : i32
    %c0_i32_1 = arith.constant 0 : i32
    %c0_i32_2 = arith.constant 0 : i32
    return %c0_i32, %c0_i32_0, %c0_i32_1 : i32, i32, i32
  }
  func.func @transform_2(%arg0: i32) -> (i32, i32) {
    %c0_i32 = arith.constant 0 : i32
    %c0_i32_0 = arith.constant 0 : i32
    %c0_i32_1 = arith.constant 0 : i32
    return %c0_i32, %c0_i32_0 : i32, i32
  }
  func.func @transform_3(%arg0: i32) -> (i32, i32) {
    %c0_i32 = arith.constant 0 : i32
    %c0_i32_0 = arith.constant 0 : i32
    %c0_i32_1 = arith.constant 0 : i32
    return %c0_i32, %c0_i32_0 : i32, i32
  }
  func.func @transform_4(%arg0: i32) -> (i32, i32) {
    %c0_i32 = arith.constant 0 : i32
    %c0_i32_0 = arith.constant 0 : i32
    %c0_i32_1 = arith.constant 0 : i32
    return %c0_i32, %c0_i32_0 : i32, i32
  }
  func.func @transform_5(%arg0: i32) -> (i32, i32) {
    %c0_i32 = arith.constant 0 : i32
    %c0_i32_0 = arith.constant 0 : i32
    %c0_i32_1 = arith.constant 0 : i32
    return %c0_i32, %c0_i32_0 : i32, i32
  }
  func.func @transform_6(%arg0: i32) -> (i32, i32) {
    %c0_i32 = arith.constant 0 : i32
    %c0_i32_0 = arith.constant 0 : i32
    %c0_i32_1 = arith.constant 0 : i32
    return %c0_i32, %c0_i32_0 : i32, i32
  }
  func.func @transform_7(%arg0: i32) -> (i32, i32) {
    %c0_i32 = arith.constant 0 : i32
    %c0_i32_0 = arith.constant 0 : i32
    %c0_i32_1 = arith.constant 0 : i32
    return %c0_i32, %c0_i32_0 : i32, i32
  }
  func.func @transform_8(%arg0: i32) -> (i32, i32) {
    %c0_i32 = arith.constant 0 : i32
    %c0_i32_0 = arith.constant 0 : i32
    %c0_i32_1 = arith.constant 0 : i32
    return %c0_i32, %c0_i32_0 : i32, i32
  }
  func.func @transform_9(%arg0: i32) -> (i32, i32) {
    %c0_i32 = arith.constant 0 : i32
    %c0_i32_0 = arith.constant 0 : i32
    %c0_i32_1 = arith.constant 0 : i32
    return %c0_i32, %c0_i32_0 : i32, i32
  }
  func.func @transform_10(%arg0: i32) -> (i32, i32) {
    %c0_i32 = arith.constant 0 : i32
    %c0_i32_0 = arith.constant 0 : i32
    %c0_i32_1 = arith.constant 0 : i32
    return %c0_i32, %c0_i32_0 : i32, i32
  }
  func.func @transform_11(%arg0: i32) -> (i32, i32, i32, i32) {
    %c0_i32 = arith.constant 0 : i32
    %c0_i32_0 = arith.constant 0 : i32
    %c0_i32_1 = arith.constant 0 : i32
    %c0_i32_2 = arith.constant 0 : i32
    return %arg0, %c0_i32, %c0_i32_0, %c0_i32_1 : i32, i32, i32, i32
  }
}

</mosaic_0001>

<llo_original>
// kernel: inception_a_forward.1
$region0: #{inception_a_forward.1}
  #allocation0 [shape = 'u32[]', space=smem, size = 0x4, offset = 0x4, fixed_abs, tag = 'smem constant byte address 0x4 - core index']
  #allocation1 [shape = 'u32[72,128]{1,0:T(1,128)}', space=vmem, size = 0x9000, scoped, tag = 'internal scratch']
  #allocation2 [shape = 'f32[10,10,128]{2,1,0:T(8,128)}', space=vmem, size = 0x14000, scoped, tag = 'scratch operand']
  #allocation3 [shape = 'f32[10,10,128]{2,1,0:T(8,128)}', space=vmem, size = 0x14000, scoped, tag = 'scratch operand']
  #allocation4 [shape = 'bf16[2,8,8,864]{3,2,1,0:T(8,128)(2,1)}', space=vmem, size = 0x38000, scoped, tag = 'scratch operand']
  %s0 = inlined_call_operand.vmem [shape: bf16[4,8,8,384], index: 0, kind: input, shape index: {}]
  %s1 = inlined_call_operand.vmem [shape: f32[8,8,1], index: 1, kind: input, shape index: {}]
  %s2 = inlined_call_operand.vmem [shape: bf16[384,512], index: 2, kind: input, shape index: {}]
  %s3 = inlined_call_operand.vmem [shape: f32[1,384], index: 3, kind: input, shape index: {}]
  %s4 = inlined_call_operand.vmem [shape: bf16[576,96], index: 4, kind: input, shape index: {}]
  %s5 = inlined_call_operand.vmem [shape: f32[1,96], index: 5, kind: input, shape index: {}]
  %s6 = inlined_call_operand.vmem [shape: bf16[576,96], index: 6, kind: input, shape index: {}]
  %s7 = inlined_call_operand.vmem [shape: f32[1,96], index: 7, kind: input, shape index: {}]
  %s8 = inlined_call_operand.vmem [shape: bf16[864,96], index: 8, kind: input, shape index: {}]
  %s9 = inlined_call_operand.vmem [shape: f32[1,96], index: 9, kind: input, shape index: {}]
  %s10 = inlined_call_operand.vmem [shape: f32[1,96], index: 10, kind: input, shape index: {}]
  %s11 = inlined_call_operand.hbm [shape: bf16[4,8,8,384], index: 11, kind: output, shape index: {}]
  %s12 = sld [smem:[#allocation0]]
  $region77: #{inception_a_forward.1} parent=0
    _
  %s14 = ssub.s32 1, %s12
  %s15 = scalar_select 0, %s14, %s12
  $region1: #{inception_a_forward.1} parent=0
    #allocation5 [shape = 'u8[196608]{0}', space=vmem, size = 0x30000, scoped, tag = 'output window, operand 0']
    #allocation6 [shape = 's32[2]{0}', space=sflag, size = 0x8, scoped, tag = 'scoped memory for inception_a_forward.1']
    %16 = vsyncpa [#allocation6], 0
    %s17 = scalar_lea.sflag [#allocation6], 1
    %18 = vsyncpa %s17, 0
    loop: start=0, step=1, limit=4
    $region2: #{inception_a_forward.1} parent=1 // loop_pre_header
      _
    $region3: #{inception_a_forward.1} parent=1 // loop_header
      %s20 = sphi 0, %s24
      %p21 = scmp.ge.s32.totalorder %s20, 4
      %s30 = sphi 0, %s32
      %s33 = sphi 0, %s30
      %s34 = sphi 0, %s33
      %s50 = sphi 0, %s34
      %s54 = sphi 0, %s54
      %s56 = sphi 0, %s54
      %s57 = sphi 0, %s56
      %s71 = sphi 0, %s57
      %s75 = sphi 0, %s75
      %s77 = sphi 0, %s75
      %s78 = sphi 0, %s77
      %s92 = sphi 0, %s78
      %s96 = sphi 0, %s96
      %s98 = sphi 0, %s96
      %s99 = sphi 0, %s98
      %s113 = sphi 0, %s99
      %s117 = sphi 0, %s117
      %s119 = sphi 0, %s117
      %s120 = sphi 0, %s119
      %s134 = sphi 0, %s120
      %s138 = sphi 0, %s138
      %s140 = sphi 0, %s138
      %s141 = sphi 0, %s140
      %s155 = sphi 0, %s141
      %s159 = sphi 0, %s159
      %s161 = sphi 0, %s159
      %s162 = sphi 0, %s161
      %s176 = sphi 0, %s162
      %s180 = sphi 0, %s180
      %s182 = sphi 0, %s180
      %s183 = sphi 0, %s182
      %s197 = sphi 0, %s183
      %s201 = sphi 0, %s201
      %s203 = sphi 0, %s201
      %s204 = sphi 0, %s203
      %s218 = sphi 0, %s204
      %s222 = sphi 0, %s222
      %s224 = sphi 0, %s222
      %s225 = sphi 0, %s224
      %s239 = sphi 0, %s225
      %s243 = sphi 0, %s243
      %s245 = sphi 0, %s243
      %s246 = sphi 0, %s245
      %s260 = sphi 0, %s246
      %s266 = sphi 0, %s268
      %s269 = sphi 0, %s266
      %s270 = sphi 0, %s269
      %s286 = sphi 0, %s270
    $region4: #{inception_a_forward.1} parent=1 // loop_header_branch
      %23 = sbr.rel (%p21) target = $region8
    $region5: #{inception_a_forward.1} parent=1 // loop_body
      %s25 = ssub.s32 %s20, 1
      %s26 = ssub.s32 %s20, 2
      %s27 = sadd.s32 %s20, 1
      %s28 = ssub.s32 %s20, %s27
      %p29 = scmp.eq.s32.totalorder %s28, 0
      %s31 = sadd.s32 %s30, 1
      %s32 = scalar_select %p29, %s30, %s31
      %p35 = pneg %p29
      %p36 = scmp.eq.s32.totalorder %s20, 1
      %p37 = por %p35, %p36
      %p38 = scmp.ne.s32.totalorder %s30, %s33
      %p39 = scmp.eq.s32.totalorder %s20, 0
      %p40 = por %p38, %p39
      %p41 = scmp.ne.s32.totalorder %s30, %s33
      %p42 = scmp.eq.s32.totalorder %s25, 1
      %p43 = por %p41, %p42
      %p44 = scmp.ne.s32.totalorder %s33, %s34
      %p45 = scmp.eq.s32.totalorder %s25, 0
      %p46 = por %p44, %p45
      %p47 = scmp.ne.s32.totalorder %s33, %s34
      %p48 = scmp.eq.s32.totalorder %s26, 1
      %p49 = por %p47, %p48
      %p51 = scmp.ne.s32.totalorder %s34, %s50
      %p52 = scmp.eq.s32.totalorder %s26, 0
      %p53 = por %p51, %p52
      %s55 = sadd.s32 %s54, 1
      %p58 = scmp.eq.s32.totalorder %s20, 1
      %p59 = scmp.ne.s32.totalorder %s54, %s56
      %p60 = scmp.eq.s32.totalorder %s20, 0
      %p61 = por %p59, %p60
      %p62 = scmp.ne.s32.totalorder %s54, %s56
      %p63 = scmp.eq.s32.totalorder %s25, 1
      %p64 = por %p62, %p63
      %p65 = scmp.ne.s32.totalorder %s56, %s57
      %p66 = scmp.eq.s32.totalorder %s25, 0
      %p67 = por %p65, %p66
      %p68 = scmp.ne.s32.totalorder %s56, %s57
      %p69 = scmp.eq.s32.totalorder %s26, 1
      %p70 = por %p68, %p69
      %p72 = scmp.ne.s32.totalorder %s57, %s71
      %p73 = scmp.eq.s32.totalorder %s26, 0
      %p74 = por %p72, %p73
      %s76 = sadd.s32 %s75, 1
      %p79 = scmp.eq.s32.totalorder %s20, 1
      %p80 = scmp.ne.s32.totalorder %s75, %s77
      %p81 = scmp.eq.s32.totalorder %s20, 0
      %p82 = por %p80, %p81
      %p83 = scmp.ne.s32.totalorder %s75, %s77
      %p84 = scmp.eq.s32.totalorder %s25, 1
      %p85 = por %p83, %p84
      %p86 = scmp.ne.s32.totalorder %s77, %s78
      %p87 = scmp.eq.s32.totalorder %s25, 0
      %p88 = por %p86, %p87
      %p89 = scmp.ne.s32.totalorder %s77, %s78
      %p90 = scmp.eq.s32.totalorder %s26, 1
      %p91 = por %p89, %p90
      %p93 = scmp.ne.s32.totalorder %s78, %s92
      %p94 = scmp.eq.s32.totalorder %s26, 0
      %p95 = por %p93, %p94
      %s97 = sadd.s32 %s96, 1
      %p100 = scmp.eq.s32.totalorder %s20, 1
      %p101 = scmp.ne.s32.totalorder %s96, %s98
      %p102 = scmp.eq.s32.totalorder %s20, 0
      %p103 = por %p101, %p102
      %p104 = scmp.ne.s32.totalorder %s96, %s98
      %p105 = scmp.eq.s32.totalorder %s25, 1
      %p106 = por %p104, %p105
      %p107 = scmp.ne.s32.totalorder %s98, %s99
      %p108 = scmp.eq.s32.totalorder %s25, 0
      %p109 = por %p107, %p108
      %p110 = scmp.ne.s32.totalorder %s98, %s99
      %p111 = scmp.eq.s32.totalorder %s26, 1
      %p112 = por %p110, %p111
      %p114 = scmp.ne.s32.totalorder %s99, %s113
      %p115 = scmp.eq.s32.totalorder %s26, 0
      %p116 = por %p114, %p115
      %s118 = sadd.s32 %s117, 1
      %p121 = scmp.eq.s32.totalorder %s20, 1
      %p122 = scmp.ne.s32.totalorder %s117, %s119
      %p123 = scmp.eq.s32.totalorder %s20, 0
      %p124 = por %p122, %p123
      %p125 = scmp.ne.s32.totalorder %s117, %s119
      %p126 = scmp.eq.s32.totalorder %s25, 1
      %p127 = por %p125, %p126
      %p128 = scmp.ne.s32.totalorder %s119, %s120
      %p129 = scmp.eq.s32.totalorder %s25, 0
      %p130 = por %p128, %p129
      %p131 = scmp.ne.s32.totalorder %s119, %s120
      %p132 = scmp.eq.s32.totalorder %s26, 1
      %p133 = por %p131, %p132
      %p135 = scmp.ne.s32.totalorder %s120, %s134
      %p136 = scmp.eq.s32.totalorder %s26, 0
      %p137 = por %p135, %p136
      %s139 = sadd.s32 %s138, 1
      %p142 = scmp.eq.s32.totalorder %s20, 1
      %p143 = scmp.ne.s32.totalorder %s138, %s140
      %p144 = scmp.eq.s32.totalorder %s20, 0
      %p145 = por %p143, %p144
      %p146 = scmp.ne.s32.totalorder %s138, %s140
      %p147 = scmp.eq.s32.totalorder %s25, 1
      %p148 = por %p146, %p147
      %p149 = scmp.ne.s32.totalorder %s140, %s141
      %p150 = scmp.eq.s32.totalorder %s25, 0
      %p151 = por %p149, %p150
      %p152 = scmp.ne.s32.totalorder %s140, %s141
      %p153 = scmp.eq.s32.totalorder %s26, 1
      %p154 = por %p152, %p153
      %p156 = scmp.ne.s32.totalorder %s141, %s155
      %p157 = scmp.eq.s32.totalorder %s26, 0
      %p158 = por %p156, %p157
      %s160 = sadd.s32 %s159, 1
      %p163 = scmp.eq.s32.totalorder %s20, 1
      %p164 = scmp.ne.s32.totalorder %s159, %s161
      %p165 = scmp.eq.s32.totalorder %s20, 0
      %p166 = por %p164, %p165
      %p167 = scmp.ne.s32.totalorder %s159, %s161
      %p168 = scmp.eq.s32.totalorder %s25, 1
      %p169 = por %p167, %p168
      %p170 = scmp.ne.s32.totalorder %s161, %s162
      %p171 = scmp.eq.s32.totalorder %s25, 0
      %p172 = por %p170, %p171
      %p173 = scmp.ne.s32.totalorder %s161, %s162
      %p174 = scmp.eq.s32.totalorder %s26, 1
      %p175 = por %p173, %p174
      %p177 = scmp.ne.s32.totalorder %s162, %s176
      %p178 = scmp.eq.s32.totalorder %s26, 0
      %p179 = por %p177, %p178
      %s181 = sadd.s32 %s180, 1
      %p184 = scmp.eq.s32.totalorder %s20, 1
      %p185 = scmp.ne.s32.totalorder %s180, %s182
      %p186 = scmp.eq.s32.totalorder %s20, 0
      %p187 = por %p185, %p186
      %p188 = scmp.ne.s32.totalorder %s180, %s182
      %p189 = scmp.eq.s32.totalorder %s25, 1
      %p190 = por %p188, %p189
      %p191 = scmp.ne.s32.totalorder %s182, %s183
      %p192 = scmp.eq.s32.totalorder %s25, 0
      %p193 = por %p191, %p192
      %p194 = scmp.ne.s32.totalorder %s182, %s183
      %p195 = scmp.eq.s32.totalorder %s26, 1
      %p196 = por %p194, %p195
      %p198 = scmp.ne.s32.totalorder %s183, %s197
      %p199 = scmp.eq.s32.totalorder %s26, 0
      %p200 = por %p198, %p199
      %s202 = sadd.s32 %s201, 1
      %p205 = scmp.eq.s32.totalorder %s20, 1
      %p206 = scmp.ne.s32.totalorder %s201, %s203
      %p207 = scmp.eq.s32.totalorder %s20, 0
      %p208 = por %p206, %p207
      %p209 = scmp.ne.s32.totalorder %s201, %s203
      %p210 = scmp.eq.s32.totalorder %s25, 1
      %p211 = por %p209, %p210
      %p212 = scmp.ne.s32.totalorder %s203, %s204
      %p213 = scmp.eq.s32.totalorder %s25, 0
      %p214 = por %p212, %p213
      %p215 = scmp.ne.s32.totalorder %s203, %s204
      %p216 = scmp.eq.s32.totalorder %s26, 1
      %p217 = por %p215, %p216
      %p219 = scmp.ne.s32.totalorder %s204, %s218
      %p220 = scmp.eq.s32.totalorder %s26, 0
      %p221 = por %p219, %p220
      %s223 = sadd.s32 %s222, 1
      %p226 = scmp.eq.s32.totalorder %s20, 1
      %p227 = scmp.ne.s32.totalorder %s222, %s224
      %p228 = scmp.eq.s32.totalorder %s20, 0
      %p229 = por %p227, %p228
      %p230 = scmp.ne.s32.totalorder %s222, %s224
      %p231 = scmp.eq.s32.totalorder %s25, 1
      %p232 = por %p230, %p231
      %p233 = scmp.ne.s32.totalorder %s224, %s225
      %p234 = scmp.eq.s32.totalorder %s25, 0
      %p235 = por %p233, %p234
      %p236 = scmp.ne.s32.totalorder %s224, %s225
      %p237 = scmp.eq.s32.totalorder %s26, 1
      %p238 = por %p236, %p237
      %p240 = scmp.ne.s32.totalorder %s225, %s239
      %p241 = scmp.eq.s32.totalorder %s26, 0
      %p242 = por %p240, %p241
      %s244 = sadd.s32 %s243, 1
      %p247 = scmp.eq.s32.totalorder %s20, 1
      %p248 = scmp.ne.s32.totalorder %s243, %s245
      %p249 = scmp.eq.s32.totalorder %s20, 0
      %p250 = por %p248, %p249
      %p251 = scmp.ne.s32.totalorder %s243, %s245
      %p252 = scmp.eq.s32.totalorder %s25, 1
      %p253 = por %p251, %p252
      %p254 = scmp.ne.s32.totalorder %s245, %s246
      %p255 = scmp.eq.s32.totalorder %s25, 0
      %p256 = por %p254, %p255
      %p257 = scmp.ne.s32.totalorder %s245, %s246
      %p258 = scmp.eq.s32.totalorder %s26, 1
      %p259 = por %p257, %p258
      %p261 = scmp.ne.s32.totalorder %s246, %s260
      %p262 = scmp.eq.s32.totalorder %s26, 0
      %p263 = por %p261, %p262
      %s264 = ssub.s32 %s20, %s27
      %p265 = scmp.eq.s32.totalorder %s264, 0
      %s267 = sadd.s32 %s266, 1
      %s268 = scalar_select %p265, %s266, %s267
      %p271 = pneg %p265
      %p272 = scmp.eq.s32.totalorder %s20, 1
      %p273 = por %p271, %p272
      %p274 = scmp.ne.s32.totalorder %s266, %s269
      %p275 = scmp.eq.s32.totalorder %s20, 0
      %p276 = por %p274, %p275
      %p277 = scmp.ne.s32.totalorder %s266, %s269
      %p278 = scmp.eq.s32.totalorder %s25, 1
      %p279 = por %p277, %p278
      %p280 = scmp.ne.s32.totalorder %s269, %s270
      %p281 = scmp.eq.s32.totalorder %s25, 0
      %p282 = por %p280, %p281
      %p283 = scmp.ne.s32.totalorder %s269, %s270
      %p284 = scmp.eq.s32.totalorder %s26, 1
      %p285 = por %p283, %p284
      %p287 = scmp.ne.s32.totalorder %s270, %s286
      %p288 = scmp.eq.s32.totalorder %s26, 0
      %p289 = por %p287, %p288
      %p290 = scmp.le.s32.totalorder 1, %s20
      %p291 = scmp.lt.s32.totalorder %s20, 3
      %p292 = pnand %p290, %p291
      %p293 = pneg %p292
      // Predicated region
      $region9: #{inception_a_forward.1} parent=5 // pred_check
        _
      $region10: #{inception_a_forward.1} parent=5 // pred_check_branch
        %295 = sbr.rel (%p292) target = $region12
      $region11: #{inception_a_forward.1} parent=5 // pred_region
        %s296 = ssub.s32 %s20, 1
        // Predicated region
        $region13: #{inception_a_forward.1} parent=11 // pred_check
          %p297 = pneg %p67
        $region14: #{inception_a_forward.1} parent=11 // pred_check_branch
          %299 = sbr.rel (%p297) target = $region16
        $region15: #{inception_a_forward.1} parent=11 // pred_region
          _
        $region16: #{inception_a_forward.1} parent=11 // pred_fallthru
          _
        // Predicated region
        $region17: #{inception_a_forward.1} parent=11 // pred_check
          %p300 = pneg %p88
        $region18: #{inception_a_forward.1} parent=11 // pred_check_branch
          %302 = sbr.rel (%p300) target = $region20
        $region19: #{inception_a_forward.1} parent=11 // pred_region
          _
        $region20: #{inception_a_forward.1} parent=11 // pred_fallthru
          _
        // Predicated region
        $region21: #{inception_a_forward.1} parent=11 // pred_check
          %p303 = pneg %p109
        $region22: #{inception_a_forward.1} parent=11 // pred_check_branch
          %305 = sbr.rel (%p303) target = $region24
        $region23: #{inception_a_forward.1} parent=11 // pred_region
          _
        $region24: #{inception_a_forward.1} parent=11 // pred_fallthru
          _
        // Predicated region
        $region25: #{inception_a_forward.1} parent=11 // pred_check
          %p306 = pneg %p130
        $region26: #{inception_a_forward.1} parent=11 // pred_check_branch
          %308 = sbr.rel (%p306) target = $region28
        $region27: #{inception_a_forward.1} parent=11 // pred_region
          _
        $region28: #{inception_a_forward.1} parent=11 // pred_fallthru
          _
        // Predicated region
        $region29: #{inception_a_forward.1} parent=11 // pred_check
          %p309 = pneg %p151
        $region30: #{inception_a_forward.1} parent=11 // pred_check_branch
          %311 = sbr.rel (%p309) target = $region32
        $region31: #{inception_a_forward.1} parent=11 // pred_region
          _
        $region32: #{inception_a_forward.1} parent=11 // pred_fallthru
          _
        // Predicated region
        $region33: #{inception_a_forward.1} parent=11 // pred_check
          %p312 = pneg %p172
        $region34: #{inception_a_forward.1} parent=11 // pred_check_branch
          %314 = sbr.rel (%p312) target = $region36
        $region35: #{inception_a_forward.1} parent=11 // pred_region
          _
        $region36: #{inception_a_forward.1} parent=11 // pred_fallthru
          _
        // Predicated region
        $region37: #{inception_a_forward.1} parent=11 // pred_check
          %p315 = pneg %p193
        $region38: #{inception_a_forward.1} parent=11 // pred_check_branch
          %317 = sbr.rel (%p315) target = $region40
        $region39: #{inception_a_forward.1} parent=11 // pred_region
          _
        $region40: #{inception_a_forward.1} parent=11 // pred_fallthru
          _
        // Predicated region
        $region41: #{inception_a_forward.1} parent=11 // pred_check
          %p318 = pneg %p214
        $region42: #{inception_a_forward.1} parent=11 // pred_check_branch
          %320 = sbr.rel (%p318) target = $region44
        $region43: #{inception_a_forward.1} parent=11 // pred_region
          _
        $region44: #{inception_a_forward.1} parent=11 // pred_fallthru
          _
        // Predicated region
        $region45: #{inception_a_forward.1} parent=11 // pred_check
          %p321 = pneg %p235
        $region46: #{inception_a_forward.1} parent=11 // pred_check_branch
          %323 = sbr.rel (%p321) target = $region48
        $region47: #{inception_a_forward.1} parent=11 // pred_region
          _
        $region48: #{inception_a_forward.1} parent=11 // pred_fallthru
          _
        // Predicated region
        $region49: #{inception_a_forward.1} parent=11 // pred_check
          %p324 = pneg %p256
        $region50: #{inception_a_forward.1} parent=11 // pred_check_branch
          %326 = sbr.rel (%p324) target = $region52
        $region51: #{inception_a_forward.1} parent=11 // pred_region
          _
        $region52: #{inception_a_forward.1} parent=11 // pred_fallthru
          _
      $region12: #{inception_a_forward.1} parent=5 // pred_fallthru
        _
      %p327 = scmp.lt.s32.totalorder %s20, 2
      // Predicated region
      $region53: #{inception_a_forward.1} parent=5 // pred_check
        %p328 = pneg %p327
      $region54: #{inception_a_forward.1} parent=5 // pred_check_branch
        %330 = sbr.rel (%p328) target = $region56
      $region55: #{inception_a_forward.1} parent=5 // pred_region
        // Predicated region
        $region57: #{inception_a_forward.1} parent=55 // pred_check
          %p331 = pneg %p40
        $region58: #{inception_a_forward.1} parent=55 // pred_check_branch
          %333 = sbr.rel (%p331) target = $region60
        $region59: #{inception_a_forward.1} parent=55 // pred_region
          %s334 = smul.u32 2, %s20
          %p335 = scmp.lt.s32.totalorder %s334, 3
          %s336 = scalar_select %p335, %s334, 3
          %s337 = smul.addr %s336, 24
          %s338 = smul.addr %s337, 4
          %s339 = scalar_lea.vmem %s0, %s338
          %s340 = smul.u32 2, %s20
        $region60: #{inception_a_forward.1} parent=55 // pred_fallthru
          _
      $region56: #{inception_a_forward.1} parent=5 // pred_fallthru
        _
      %p341 = scmp.le.s32.totalorder 1, %s20
      %p342 = scmp.lt.s32.totalorder %s20, 3
      %p343 = pnand %p341, %p342
      %p344 = pneg %p343
      // Predicated region
      $region61: #{inception_a_forward.1} parent=5 // pred_check
        _
      $region62: #{inception_a_forward.1} parent=5 // pred_check_branch
        %346 = sbr.rel (%p343) target = $region64
      $region63: #{inception_a_forward.1} parent=5 // pred_region
        %s347 = ssub.s32 %s20, 1
        %s348 = smul.u32 2, %s25
        %p349 = scmp.lt.s32.totalorder %s348, 3
        %s350 = scalar_select %p349, %s348, 3
        %s351 = smul.addr %s350, 24
        %s352 = smul.addr %s351, 4
        %s353 = scalar_lea.vmem %s0, %s352
        %p354 = pneg %p46
        %p355 = pneg %p43
        %p356 = pneg %p67
        %p357 = pneg %p64
        %p358 = pneg %p88
        %p359 = pneg %p85
        %p360 = pneg %p109
        %p361 = pneg %p106
        %p362 = pneg %p130
        %p363 = pneg %p127
        %p364 = pneg %p151
        %p365 = pneg %p148
        %p366 = pneg %p172
        %p367 = pneg %p169
        %p368 = pneg %p193
        %p369 = pneg %p190
        %p370 = pneg %p214
        %p371 = pneg %p211
        %p372 = pneg %p235
        %p373 = pneg %p232
        %p374 = pneg %p256
        %p375 = pneg %p253
        %p376 = pneg %p282
        %p377 = pneg %p279
        %s378 = sand.u32 %s269, 1
        %s379 = scalar_lea.sflag [#allocation6], %s378
        %s380 = sand.u32 %s269, 1
        %s381 = smul.addr %s380, 192
        %s382 = scalar_lea.vmem [#allocation5], %s381
        %s383 = smul.u32 2, %s25
        %p384 = scmp.lt.s32.totalorder %s383, 3
        %s385 = scalar_select %p384, %s383, 3
        %s386 = smul.addr %s385, 24
        %s387 = smul.addr %s386, 4
        %s388 = scalar_lea.vmem %s0, %s387
        %s389 = smul.u32 2, %s25
        %s390 = smul.u32 2, %s25
        %392 = vst [vmem:[#allocation2] sm:$0xff] 0.0
        %393 = vst [vmem:[#allocation2 + $0x8] sm:$0x3] 0.0
        %s394 = scalar_lea.vmem [#allocation2], 144
        %395 = vst [vmem:[%s394] sm:$0xff] 0.0
        %396 = vst [vmem:[%s394 + $0x8] sm:$0x3] 0.0
        %397 = vst [vmem:[#allocation2] sm:$0x1] 0.0
        %398 = vst [vmem:[#allocation2 + $0x10] sm:$0x1] 0.0
        %399 = vst [vmem:[#allocation2 + $0x20] sm:$0x1] 0.0
        %400 = vst [vmem:[#allocation2 + $0x30] sm:$0x1] 0.0
        %401 = vst [vmem:[#allocation2 + $0x40] sm:$0x1] 0.0
        %402 = vst [vmem:[#allocation2 + $0x50] sm:$0x1] 0.0
        %403 = vst [vmem:[#allocation2 + $0x60] sm:$0x1] 0.0
        %404 = vst [vmem:[#allocation2 + $0x70] sm:$0x1] 0.0
        %405 = vst [vmem:[#allocation2 + $0x80] sm:$0x1] 0.0
        %406 = vst [vmem:[#allocation2 + $0x90] sm:$0x1] 0.0
        %407 = vst [vmem:[#allocation2 + $0x9] sm:$0x1] 0.0
        %408 = vst [vmem:[#allocation2 + $0x19] sm:$0x1] 0.0
        %409 = vst [vmem:[#allocation2 + $0x29] sm:$0x1] 0.0
        %410 = vst [vmem:[#allocation2 + $0x39] sm:$0x1] 0.0
        %411 = vst [vmem:[#allocation2 + $0x49] sm:$0x1] 0.0
        %412 = vst [vmem:[#allocation2 + $0x59] sm:$0x1] 0.0
        %413 = vst [vmem:[#allocation2 + $0x69] sm:$0x1] 0.0
        %414 = vst [vmem:[#allocation2 + $0x79] sm:$0x1] 0.0
        %415 = vst [vmem:[#allocation2 + $0x89] sm:$0x1] 0.0
        %416 = vst [vmem:[#allocation2 + $0x99] sm:$0x1] 0.0
        %417 = vst [vmem:[#allocation3] sm:$0xff] 0.0
        %418 = vst [vmem:[#allocation3 + $0x8] sm:$0x3] 0.0
        %s419 = scalar_lea.vmem [#allocation3], 144
        %420 = vst [vmem:[%s419] sm:$0xff] 0.0
        %421 = vst [vmem:[%s419 + $0x8] sm:$0x3] 0.0
        %422 = vst [vmem:[#allocation3] sm:$0x1] 0.0
        %423 = vst [vmem:[#allocation3 + $0x10] sm:$0x1] 0.0
        %424 = vst [vmem:[#allocation3 + $0x20] sm:$0x1] 0.0
        %425 = vst [vmem:[#allocation3 + $0x30] sm:$0x1] 0.0
        %426 = vst [vmem:[#allocation3 + $0x40] sm:$0x1] 0.0
        %427 = vst [vmem:[#allocation3 + $0x50] sm:$0x1] 0.0
        %428 = vst [vmem:[#allocation3 + $0x60] sm:$0x1] 0.0
        %429 = vst [vmem:[#allocation3 + $0x70] sm:$0x1] 0.0
        %430 = vst [vmem:[#allocation3 + $0x80] sm:$0x1] 0.0
        %431 = vst [vmem:[#allocation3 + $0x90] sm:$0x1] 0.0
        %432 = vst [vmem:[#allocation3 + $0x9] sm:$0x1] 0.0
        %433 = vst [vmem:[#allocation3 + $0x19] sm:$0x1] 0.0
        %434 = vst [vmem:[#allocation3 + $0x29] sm:$0x1] 0.0
        %435 = vst [vmem:[#allocation3 + $0x39] sm:$0x1] 0.0
        %436 = vst [vmem:[#allocation3 + $0x49] sm:$0x1] 0.0
        %437 = vst [vmem:[#allocation3 + $0x59] sm:$0x1] 0.0
        %438 = vst [vmem:[#allocation3 + $0x69] sm:$0x1] 0.0
        %439 = vst [vmem:[#allocation3 + $0x79] sm:$0x1] 0.0
        %440 = vst [vmem:[#allocation3 + $0x89] sm:$0x1] 0.0
        %441 = vst [vmem:[#allocation3 + $0x99] sm:$0x1] 0.0
        %v442 = vld [vmem:[%s388] sm:$0xff]
        %v443 = vld [vmem:[%s388 + $0x8] sm:$0xf]
        %v444 = vld [vmem:[%s388 + $0xc] sm:$0xff]
        %v445 = vld [vmem:[%s388 + $0x14] sm:$0xf]
        %v446 = vld [vmem:[%s388 + $0x18] sm:$0xff]
        %v447 = vld [vmem:[%s388 + $0x20] sm:$0xf]
        %v448 = vld [vmem:[%s388 + $0x24] sm:$0xff]
        %v449 = vld [vmem:[%s388 + $0x2c] sm:$0xf]
        %v450 = vld [vmem:[%s388 + $0x30] sm:$0xff]
        %v451 = vld [vmem:[%s388 + $0x38] sm:$0xf]
        %v452 = vld [vmem:[%s388 + $0x3c] sm:$0xff]
        %v453 = vld [vmem:[%s388 + $0x44] sm:$0xf]
        %v454 = vld [vmem:[%s388 + $0x48] sm:$0xff]
        %v455 = vld [vmem:[%s388 + $0x50] sm:$0xf]
        %v456 = vld [vmem:[%s388 + $0x54] sm:$0xff]
        %v457 = vld [vmem:[%s388 + $0x5c] sm:$0xf]
        %v458 = vld [vmem:[%s388 + $0x60] sm:$0xff]
        %v459 = vld [vmem:[%s388 + $0x68] sm:$0xf]
        %v460 = vld [vmem:[%s388 + $0x6c] sm:$0xff]
        %v461 = vld [vmem:[%s388 + $0x74] sm:$0xf]
        %v462 = vld [vmem:[%s388 + $0x78] sm:$0xff]
        %v463 = vld [vmem:[%s388 + $0x80] sm:$0xf]
        %v464 = vld [vmem:[%s388 + $0x84] sm:$0xff]
        %v465 = vld [vmem:[%s388 + $0x8c] sm:$0xf]
        %v466 = vld [vmem:[%s388 + $0x90] sm:$0xff]
        %v467 = vld [vmem:[%s388 + $0x98] sm:$0xf]
        %v468 = vld [vmem:[%s388 + $0x9c] sm:$0xff]
        %v469 = vld [vmem:[%s388 + $0xa4] sm:$0xf]
        %v470 = vld [vmem:[%s388 + $0xa8] sm:$0xff]
        %v471 = vld [vmem:[%s388 + $0xb0] sm:$0xf]
        %v472 = vld [vmem:[%s388 + $0xb4] sm:$0xff]
        %v473 = vld [vmem:[%s388 + $0xbc] sm:$0xf]
        %v474 = vld [vmem:[%s2] sm:$0xff]
        %v475 = vld [vmem:[%s2 + $0x8] sm:$0xff]
        %v476 = vld [vmem:[%s2 + $0x10] sm:$0xff]
        %v477 = vld [vmem:[%s2 + $0x18] sm:$0xff]
        %v478 = vld [vmem:[%s2 + $0x20] sm:$0xff]
        %v479 = vld [vmem:[%s2 + $0x28] sm:$0xff]
        %v480 = vld [vmem:[%s2 + $0x30] sm:$0xff]
        %v481 = vld [vmem:[%s2 + $0x38] sm:$0xff]
        %v482 = vld [vmem:[%s2 + $0x40] sm:$0xff]
        %v483 = vld [vmem:[%s2 + $0x48] sm:$0xff]
        %v484 = vld [vmem:[%s2 + $0x50] sm:$0xff]
        %v485 = vld [vmem:[%s2 + $0x58] sm:$0xff]
        %v486 = vld [vmem:[%s2 + $0x60] sm:$0xff]
        %v487 = vld [vmem:[%s2 + $0x68] sm:$0xff]
        %v488 = vld [vmem:[%s2 + $0x70] sm:$0xff]
        %v489 = vld [vmem:[%s2 + $0x78] sm:$0xff]
        %v490 = vld [vmem:[%s2 + $0x80] sm:$0xff]
        %v491 = vld [vmem:[%s2 + $0x88] sm:$0xff]
        %v492 = vld [vmem:[%s2 + $0x90] sm:$0xff]
        %v493 = vld [vmem:[%s2 + $0x98] sm:$0xff]
        %v494 = vld [vmem:[%s2 + $0xa0] sm:$0xff]
        %v495 = vld [vmem:[%s2 + $0xa8] sm:$0xff]
        %v496 = vld [vmem:[%s2 + $0xb0] sm:$0xff]
        %v497 = vld [vmem:[%s2 + $0xb8] sm:$0xff]
        %v498 = vld [vmem:[%s2 + $0xc0] sm:$0xff]
        %v499 = vld [vmem:[%s2 + $0xc8] sm:$0xff]
        %v500 = vld [vmem:[%s2 + $0xd0] sm:$0xff]
        %v501 = vld [vmem:[%s2 + $0xd8] sm:$0xff]
        %v502 = vld [vmem:[%s2 + $0xe0] sm:$0xff]
        %v503 = vld [vmem:[%s2 + $0xe8] sm:$0xff]
        %v504 = vld [vmem:[%s2 + $0xf0] sm:$0xff]
        %v505 = vld [vmem:[%s2 + $0xf8] sm:$0xff]
        %v506 = vld [vmem:[%s2 + $0x100] sm:$0xff]
        %v507 = vld [vmem:[%s2 + $0x108] sm:$0xff]
        %v508 = vld [vmem:[%s2 + $0x110] sm:$0xff]
        %v509 = vld [vmem:[%s2 + $0x118] sm:$0xff]
        %v510 = vld [vmem:[%s2 + $0x120] sm:$0xff]
        %v511 = vld [vmem:[%s2 + $0x128] sm:$0xff]
        %v512 = vld [vmem:[%s2 + $0x130] sm:$0xff]
        %v513 = vld [vmem:[%s2 + $0x138] sm:$0xff]
        %v514 = vld [vmem:[%s2 + $0x140] sm:$0xff]
        %v515 = vld [vmem:[%s2 + $0x148] sm:$0xff]
        %v516 = vld [vmem:[%s2 + $0x150] sm:$0xff]
        %v517 = vld [vmem:[%s2 + $0x158] sm:$0xff]
        %v518 = vld [vmem:[%s2 + $0x160] sm:$0xff]
        %v519 = vld [vmem:[%s2 + $0x168] sm:$0xff]
        %v520 = vld [vmem:[%s2 + $0x170] sm:$0xff]
        %v521 = vld [vmem:[%s2 + $0x178] sm:$0xff]
        %v522 = vld [vmem:[%s2 + $0x180] sm:$0xff]
        %v523 = vld [vmem:[%s2 + $0x188] sm:$0xff]
        %v524 = vld [vmem:[%s2 + $0x190] sm:$0xff]
        %v525 = vld [vmem:[%s2 + $0x198] sm:$0xff]
        %v526 = vld [vmem:[%s2 + $0x1a0] sm:$0xff]
        %v527 = vld [vmem:[%s2 + $0x1a8] sm:$0xff]
        %v528 = vld [vmem:[%s2 + $0x1b0] sm:$0xff]
        %v529 = vld [vmem:[%s2 + $0x1b8] sm:$0xff]
        %v530 = vld [vmem:[%s2 + $0x1c0] sm:$0xff]
        %v531 = vld [vmem:[%s2 + $0x1c8] sm:$0xff]
        %v532 = vld [vmem:[%s2 + $0x1d0] sm:$0xff]
        %v533 = vld [vmem:[%s2 + $0x1d8] sm:$0xff]
        %v534 = vld [vmem:[%s2 + $0x1e0] sm:$0xff]
        %v535 = vld [vmem:[%s2 + $0x1e8] sm:$0xff]
        %v536 = vld [vmem:[%s2 + $0x1f0] sm:$0xff]
        %v537 = vld [vmem:[%s2 + $0x1f8] sm:$0xff]
        %v538 = vld [vmem:[%s2 + $0x200] sm:$0xff]
        %v539 = vld [vmem:[%s2 + $0x208] sm:$0xff]
        %v540 = vld [vmem:[%s2 + $0x210] sm:$0xff]
        %v541 = vld [vmem:[%s2 + $0x218] sm:$0xff]
        %v542 = vld [vmem:[%s2 + $0x220] sm:$0xff]
        %v543 = vld [vmem:[%s2 + $0x228] sm:$0xff]
        %v544 = vld [vmem:[%s2 + $0x230] sm:$0xff]
        %v545 = vld [vmem:[%s2 + $0x238] sm:$0xff]
        %v546 = vld [vmem:[%s2 + $0x240] sm:$0xff]
        %v547 = vld [vmem:[%s2 + $0x248] sm:$0xff]
        %v548 = vld [vmem:[%s2 + $0x250] sm:$0xff]
        %v549 = vld [vmem:[%s2 + $0x258] sm:$0xff]
        %v550 = vld [vmem:[%s2 + $0x260] sm:$0xff]
        %v551 = vld [vmem:[%s2 + $0x268] sm:$0xff]
        %v552 = vld [vmem:[%s2 + $0x270] sm:$0xff]
        %v553 = vld [vmem:[%s2 + $0x278] sm:$0xff]
        %v554 = vld [vmem:[%s2 + $0x280] sm:$0xff]
        %v555 = vld [vmem:[%s2 + $0x288] sm:$0xff]
        %v556 = vld [vmem:[%s2 + $0x290] sm:$0xff]
        %v557 = vld [vmem:[%s2 + $0x298] sm:$0xff]
        %v558 = vld [vmem:[%s2 + $0x2a0] sm:$0xff]
        %v559 = vld [vmem:[%s2 + $0x2a8] sm:$0xff]
        %v560 = vld [vmem:[%s2 + $0x2b0] sm:$0xff]
        %v561 = vld [vmem:[%s2 + $0x2b8] sm:$0xff]
        %v562 = vld [vmem:[%s2 + $0x2c0] sm:$0xff]
        %v563 = vld [vmem:[%s2 + $0x2c8] sm:$0xff]
        %v564 = vld [vmem:[%s2 + $0x2d0] sm:$0xff]
        %v565 = vld [vmem:[%s2 + $0x2d8] sm:$0xff]
        %v566 = vld [vmem:[%s2 + $0x2e0] sm:$0xff]
        %v567 = vld [vmem:[%s2 + $0x2e8] sm:$0xff]
        %v568 = vld [vmem:[%s2 + $0x2f0] sm:$0xff]
        %v569 = vld [vmem:[%s2 + $0x2f8] sm:$0xff]
        %v602 = vunpack.c.l.b16 %v442
        %v603 = vunpack.c.h.b16 %v442
        %v604 = vunpack.c.l.b16 %v443
        %v605 = vunpack.c.l.b16 %v444
        %v606 = vunpack.c.h.b16 %v444
        %v607 = vunpack.c.l.b16 %v445
        %v608 = vunpack.c.l.b16 %v446
        %v609 = vunpack.c.h.b16 %v446
        %v610 = vunpack.c.l.b16 %v447
        %v611 = vunpack.c.l.b16 %v448
        %v612 = vunpack.c.h.b16 %v448
        %v613 = vunpack.c.l.b16 %v449
        %v614 = vunpack.c.l.b16 %v450
        %v615 = vunpack.c.h.b16 %v450
        %v616 = vunpack.c.l.b16 %v451
        %v617 = vunpack.c.l.b16 %v452
        %v618 = vunpack.c.h.b16 %v452
        %v619 = vunpack.c.l.b16 %v453
        %v620 = vunpack.c.l.b16 %v454
        %v621 = vunpack.c.h.b16 %v454
        %v622 = vunpack.c.l.b16 %v455
        %v623 = vunpack.c.l.b16 %v456
        %v624 = vunpack.c.h.b16 %v456
        %v625 = vunpack.c.l.b16 %v457
        %v626 = vunpack.c.l.b16 %v458
        %v627 = vunpack.c.h.b16 %v458
        %v628 = vunpack.c.l.b16 %v459
        %v629 = vunpack.c.l.b16 %v460
        %v630 = vunpack.c.h.b16 %v460
        %v631 = vunpack.c.l.b16 %v461
        %v632 = vunpack.c.l.b16 %v462
        %v633 = vunpack.c.h.b16 %v462
        %v634 = vunpack.c.l.b16 %v463
        %v635 = vunpack.c.l.b16 %v464
        %v636 = vunpack.c.h.b16 %v464
        %v637 = vunpack.c.l.b16 %v465
        %v638 = vunpack.c.l.b16 %v466
        %v639 = vunpack.c.h.b16 %v466
        %v640 = vunpack.c.l.b16 %v467
        %v641 = vunpack.c.l.b16 %v468
        %v642 = vunpack.c.h.b16 %v468
        %v643 = vunpack.c.l.b16 %v469
        %v644 = vunpack.c.l.b16 %v470
        %v645 = vunpack.c.h.b16 %v470
        %v646 = vunpack.c.l.b16 %v471
        %v647 = vunpack.c.l.b16 %v472
        %v648 = vunpack.c.h.b16 %v472
        %v649 = vunpack.c.l.b16 %v473
        %v650 = vpack.c.b16 %v605, %v602
        %v651 = vpack.c.b16 %v606, %v603
        %v652 = vpack.c.b16 %v607, %v604
        %v653 = vpack.c.b16 %v611, %v608
        %v654 = vpack.c.b16 %v612, %v609
        %v655 = vpack.c.b16 %v613, %v610
        %v656 = vpack.c.b16 %v617, %v614
        %v657 = vpack.c.b16 %v618, %v615
        %v658 = vpack.c.b16 %v619, %v616
        %v659 = vpack.c.b16 %v623, %v620
        %v660 = vpack.c.b16 %v624, %v621
        %v661 = vpack.c.b16 %v625, %v622
        %v662 = vpack.c.b16 %v629, %v626
        %v663 = vpack.c.b16 %v630, %v627
        %v664 = vpack.c.b16 %v631, %v628
        %v665 = vpack.c.b16 %v635, %v632
        %v666 = vpack.c.b16 %v636, %v633
        %v667 = vpack.c.b16 %v637, %v634
        %v668 = vpack.c.b16 %v641, %v638
        %v669 = vpack.c.b16 %v642, %v639
        %v670 = vpack.c.b16 %v643, %v640
        %v671 = vpack.c.b16 %v647, %v644
        %v672 = vpack.c.b16 %v648, %v645
        %v673 = vpack.c.b16 %v649, %v646
        %v794 = vunpack.c.l.b16 %v474
        %v795 = vunpack.c.h.b16 %v474
        %v796 = vunpack.c.l.b16 %v475
        %v797 = vunpack.c.h.b16 %v475
        %v798 = vunpack.c.l.b16 %v476
        %v799 = vunpack.c.h.b16 %v476
        %v800 = vunpack.c.l.b16 %v477
        %v801 = vunpack.c.h.b16 %v477
        %v802 = vunpack.c.l.b16 %v478
        %v803 = vunpack.c.h.b16 %v478
        %v804 = vunpack.c.l.b16 %v479
        %v805 = vunpack.c.h.b16 %v479
        %v806 = vunpack.c.l.b16 %v480
        %v807 = vunpack.c.h.b16 %v480
        %v808 = vunpack.c.l.b16 %v481
        %v809 = vunpack.c.h.b16 %v481
        %v810 = vunpack.c.l.b16 %v482
        %v811 = vunpack.c.h.b16 %v482
        %v812 = vunpack.c.l.b16 %v483
        %v813 = vunpack.c.h.b16 %v483
        %v814 = vunpack.c.l.b16 %v484
        %v815 = vunpack.c.h.b16 %v484
        %v816 = vunpack.c.l.b16 %v485
        %v817 = vunpack.c.h.b16 %v485
        %v818 = vunpack.c.l.b16 %v486
        %v819 = vunpack.c.h.b16 %v486
        %v820 = vunpack.c.l.b16 %v487
        %v821 = vunpack.c.h.b16 %v487
        %v822 = vunpack.c.l.b16 %v488
        %v823 = vunpack.c.h.b16 %v488
        %v824 = vunpack.c.l.b16 %v489
        %v825 = vunpack.c.h.b16 %v489
        %v826 = vunpack.c.l.b16 %v490
        %v827 = vunpack.c.h.b16 %v490
        %v828 = vunpack.c.l.b16 %v491
        %v829 = vunpack.c.h.b16 %v491
        %v830 = vunpack.c.l.b16 %v492
        %v831 = vunpack.c.h.b16 %v492
        %v832 = vunpack.c.l.b16 %v493
        %v833 = vunpack.c.h.b16 %v493
        %v834 = vunpack.c.l.b16 %v494
        %v835 = vunpack.c.h.b16 %v494
        %v836 = vunpack.c.l.b16 %v495
        %v837 = vunpack.c.h.b16 %v495
        %v838 = vunpack.c.l.b16 %v496
        %v839 = vunpack.c.h.b16 %v496
        %v840 = vunpack.c.l.b16 %v497
        %v841 = vunpack.c.h.b16 %v497
        %v842 = vunpack.c.l.b16 %v498
        %v843 = vunpack.c.h.b16 %v498
        %v844 = vunpack.c.l.b16 %v499
        %v845 = vunpack.c.h.b16 %v499
        %v846 = vunpack.c.l.b16 %v500
        %v847 = vunpack.c.h.b16 %v500
        %v848 = vunpack.c.l.b16 %v501
        %v849 = vunpack.c.h.b16 %v501
        %v850 = vunpack.c.l.b16 %v502
        %v851 = vunpack.c.h.b16 %v502
        %v852 = vunpack.c.l.b16 %v503
        %v853 = vunpack.c.h.b16 %v503
        %v854 = vunpack.c.l.b16 %v504
        %v855 = vunpack.c.h.b16 %v504
        %v856 = vunpack.c.l.b16 %v505
        %v857 = vunpack.c.h.b16 %v505
        %v858 = vunpack.c.l.b16 %v506
        %v859 = vunpack.c.h.b16 %v506
        %v860 = vunpack.c.l.b16 %v507
        %v861 = vunpack.c.h.b16 %v507
        %v862 = vunpack.c.l.b16 %v508
        %v863 = vunpack.c.h.b16 %v508
        %v864 = vunpack.c.l.b16 %v509
        %v865 = vunpack.c.h.b16 %v509
        %v866 = vunpack.c.l.b16 %v510
        %v867 = vunpack.c.h.b16 %v510
        %v868 = vunpack.c.l.b16 %v511
        %v869 = vunpack.c.h.b16 %v511
        %v870 = vunpack.c.l.b16 %v512
        %v871 = vunpack.c.h.b16 %v512
        %v872 = vunpack.c.l.b16 %v513
        %v873 = vunpack.c.h.b16 %v513
        %v874 = vunpack.c.l.b16 %v514
        %v875 = vunpack.c.h.b16 %v514
        %v876 = vunpack.c.l.b16 %v515
        %v877 = vunpack.c.h.b16 %v515
        %v878 = vunpack.c.l.b16 %v516
        %v879 = vunpack.c.h.b16 %v516
        %v880 = vunpack.c.l.b16 %v517
        %v881 = vunpack.c.h.b16 %v517
        %v882 = vunpack.c.l.b16 %v518
        %v883 = vunpack.c.h.b16 %v518
        %v884 = vunpack.c.l.b16 %v519
        %v885 = vunpack.c.h.b16 %v519
        %v886 = vunpack.c.l.b16 %v520
        %v887 = vunpack.c.h.b16 %v520
        %v888 = vunpack.c.l.b16 %v521
        %v889 = vunpack.c.h.b16 %v521
        %v890 = vunpack.c.l.b16 %v522
        %v891 = vunpack.c.h.b16 %v522
        %v892 = vunpack.c.l.b16 %v523
        %v893 = vunpack.c.h.b16 %v523
        %v894 = vunpack.c.l.b16 %v524
        %v895 = vunpack.c.h.b16 %v524
        %v896 = vunpack.c.l.b16 %v525
        %v897 = vunpack.c.h.b16 %v525
        %v898 = vunpack.c.l.b16 %v526
        %v899 = vunpack.c.h.b16 %v526
        %v900 = vunpack.c.l.b16 %v527
        %v901 = vunpack.c.h.b16 %v527
        %v902 = vunpack.c.l.b16 %v528
        %v903 = vunpack.c.h.b16 %v528
        %v904 = vunpack.c.l.b16 %v529
        %v905 = vunpack.c.h.b16 %v529
        %v906 = vunpack.c.l.b16 %v530
        %v907 = vunpack.c.h.b16 %v530
        %v908 = vunpack.c.l.b16 %v531
        %v909 = vunpack.c.h.b16 %v531
        %v910 = vunpack.c.l.b16 %v532
        %v911 = vunpack.c.h.b16 %v532
        %v912 = vunpack.c.l.b16 %v533
        %v913 = vunpack.c.h.b16 %v533
        %v914 = vunpack.c.l.b16 %v534
        %v915 = vunpack.c.h.b16 %v534
        %v916 = vunpack.c.l.b16 %v535
        %v917 = vunpack.c.h.b16 %v535
        %v918 = vunpack.c.l.b16 %v536
        %v919 = vunpack.c.h.b16 %v536
        %v920 = vunpack.c.l.b16 %v537
        %v921 = vunpack.c.h.b16 %v537
        %v922 = vunpack.c.l.b16 %v538
        %v923 = vunpack.c.h.b16 %v538
        %v924 = vunpack.c.l.b16 %v539
        %v925 = vunpack.c.h.b16 %v539
        %v926 = vunpack.c.l.b16 %v540
        %v927 = vunpack.c.h.b16 %v540
        %v928 = vunpack.c.l.b16 %v541
        %v929 = vunpack.c.h.b16 %v541
        %v930 = vunpack.c.l.b16 %v542
        %v931 = vunpack.c.h.b16 %v542
        %v932 = vunpack.c.l.b16 %v543
        %v933 = vunpack.c.h.b16 %v543
        %v934 = vunpack.c.l.b16 %v544
        %v935 = vunpack.c.h.b16 %v544
        %v936 = vunpack.c.l.b16 %v545
        %v937 = vunpack.c.h.b16 %v545
        %v938 = vunpack.c.l.b16 %v546
        %v939 = vunpack.c.h.b16 %v546
        %v940 = vunpack.c.l.b16 %v547
        %v941 = vunpack.c.h.b16 %v547
        %v942 = vunpack.c.l.b16 %v548
        %v943 = vunpack.c.h.b16 %v548
        %v944 = vunpack.c.l.b16 %v549
        %v945 = vunpack.c.h.b16 %v549
        %v946 = vunpack.c.l.b16 %v550
        %v947 = vunpack.c.h.b16 %v550
        %v948 = vunpack.c.l.b16 %v551
        %v949 = vunpack.c.h.b16 %v551
        %v950 = vunpack.c.l.b16 %v552
        %v951 = vunpack.c.h.b16 %v552
        %v952 = vunpack.c.l.b16 %v553
        %v953 = vunpack.c.h.b16 %v553
        %v954 = vunpack.c.l.b16 %v554
        %v955 = vunpack.c.h.b16 %v554
        %v956 = vunpack.c.l.b16 %v555
        %v957 = vunpack.c.h.b16 %v555
        %v958 = vunpack.c.l.b16 %v556
        %v959 = vunpack.c.h.b16 %v556
        %v960 = vunpack.c.l.b16 %v557
        %v961 = vunpack.c.h.b16 %v557
        %v962 = vunpack.c.l.b16 %v558
        %v963 = vunpack.c.h.b16 %v558
        %v964 = vunpack.c.l.b16 %v559
        %v965 = vunpack.c.h.b16 %v559
        %v966 = vunpack.c.l.b16 %v560
        %v967 = vunpack.c.h.b16 %v560
        %v968 = vunpack.c.l.b16 %v561
        %v969 = vunpack.c.h.b16 %v561
        %v970 = vunpack.c.l.b16 %v562
        %v971 = vunpack.c.h.b16 %v562
        %v972 = vunpack.c.l.b16 %v563
        %v973 = vunpack.c.h.b16 %v563
        %v974 = vunpack.c.l.b16 %v564
        %v975 = vunpack.c.h.b16 %v564
        %v976 = vunpack.c.l.b16 %v565
        %v977 = vunpack.c.h.b16 %v565
        %v978 = vunpack.c.l.b16 %v566
        %v979 = vunpack.c.h.b16 %v566
        %v980 = vunpack.c.l.b16 %v567
        %v981 = vunpack.c.h.b16 %v567
        %v982 = vunpack.c.l.b16 %v568
        %v983 = vunpack.c.h.b16 %v568
        %v984 = vunpack.c.l.b16 %v569
        %v985 = vunpack.c.h.b16 %v569
        %v986 = vpack.c.b16 %v798, %v794
        %v987 = vpack.c.b16 %v799, %v795
        %v988 = vpack.c.b16 %v800, %v796
        %v989 = vpack.c.b16 %v801, %v797
        %v990 = vpack.c.b16 %v806, %v802
        %v991 = vpack.c.b16 %v807, %v803
        %v992 = vpack.c.b16 %v808, %v804
        %v993 = vpack.c.b16 %v809, %v805
        %v994 = vpack.c.b16 %v814, %v810
        %v995 = vpack.c.b16 %v815, %v811
        %v996 = vpack.c.b16 %v816, %v812
        %v997 = vpack.c.b16 %v817, %v813
        %v998 = vpack.c.b16 %v822, %v818
        %v999 = vpack.c.b16 %v823, %v819
        %v1000 = vpack.c.b16 %v824, %v820
        %v1001 = vpack.c.b16 %v825, %v821
        %v1002 = vpack.c.b16 %v830, %v826
        %v1003 = vpack.c.b16 %v831, %v827
        %v1004 = vpack.c.b16 %v832, %v828
        %v1005 = vpack.c.b16 %v833, %v829
        %v1006 = vpack.c.b16 %v838, %v834
        %v1007 = vpack.c.b16 %v839, %v835
        %v1008 = vpack.c.b16 %v840, %v836
        %v1009 = vpack.c.b16 %v841, %v837
        %v1010 = vpack.c.b16 %v846, %v842
        %v1011 = vpack.c.b16 %v847, %v843
        %v1012 = vpack.c.b16 %v848, %v844
        %v1013 = vpack.c.b16 %v849, %v845
        %v1014 = vpack.c.b16 %v854, %v850
        %v1015 = vpack.c.b16 %v855, %v851
        %v1016 = vpack.c.b16 %v856, %v852
        %v1017 = vpack.c.b16 %v857, %v853
        %v1018 = vpack.c.b16 %v862, %v858
        %v1019 = vpack.c.b16 %v863, %v859
        %v1020 = vpack.c.b16 %v864, %v860
        %v1021 = vpack.c.b16 %v865, %v861
        %v1022 = vpack.c.b16 %v870, %v866
        %v1023 = vpack.c.b16 %v871, %v867
        %v1024 = vpack.c.b16 %v872, %v868
        %v1025 = vpack.c.b16 %v873, %v869
        %v1026 = vpack.c.b16 %v878, %v874
        %v1027 = vpack.c.b16 %v879, %v875
        %v1028 = vpack.c.b16 %v880, %v876
        %v1029 = vpack.c.b16 %v881, %v877
        %v1030 = vpack.c.b16 %v886, %v882
        %v1031 = vpack.c.b16 %v887, %v883
        %v1032 = vpack.c.b16 %v888, %v884
        %v1033 = vpack.c.b16 %v889, %v885
        %v1034 = vpack.c.b16 %v894, %v890
        %v1035 = vpack.c.b16 %v895, %v891
        %v1036 = vpack.c.b16 %v896, %v892
        %v1037 = vpack.c.b16 %v897, %v893
        %v1038 = vpack.c.b16 %v902, %v898
        %v1039 = vpack.c.b16 %v903, %v899
        %v1040 = vpack.c.b16 %v904, %v900
        %v1041 = vpack.c.b16 %v905, %v901
        %v1042 = vpack.c.b16 %v910, %v906
        %v1043 = vpack.c.b16 %v911, %v907
        %v1044 = vpack.c.b16 %v912, %v908
        %v1045 = vpack.c.b16 %v913, %v909
        %v1046 = vpack.c.b16 %v918, %v914
        %v1047 = vpack.c.b16 %v919, %v915
        %v1048 = vpack.c.b16 %v920, %v916
        %v1049 = vpack.c.b16 %v921, %v917
        %v1050 = vpack.c.b16 %v926, %v922
        %v1051 = vpack.c.b16 %v927, %v923
        %v1052 = vpack.c.b16 %v928, %v924
        %v1053 = vpack.c.b16 %v929, %v925
        %v1054 = vpack.c.b16 %v934, %v930
        %v1055 = vpack.c.b16 %v935, %v931
        %v1056 = vpack.c.b16 %v936, %v932
        %v1057 = vpack.c.b16 %v937, %v933
        %v1058 = vpack.c.b16 %v942, %v938
        %v1059 = vpack.c.b16 %v943, %v939
        %v1060 = vpack.c.b16 %v944, %v940
        %v1061 = vpack.c.b16 %v945, %v941
        %v1062 = vpack.c.b16 %v950, %v946
        %v1063 = vpack.c.b16 %v951, %v947
        %v1064 = vpack.c.b16 %v952, %v948
        %v1065 = vpack.c.b16 %v953, %v949
        %v1066 = vpack.c.b16 %v958, %v954
        %v1067 = vpack.c.b16 %v959, %v955
        %v1068 = vpack.c.b16 %v960, %v956
        %v1069 = vpack.c.b16 %v961, %v957
        %v1070 = vpack.c.b16 %v966, %v962
        %v1071 = vpack.c.b16 %v967, %v963
        %v1072 = vpack.c.b16 %v968, %v964
        %v1073 = vpack.c.b16 %v969, %v965
        %v1074 = vpack.c.b16 %v974, %v970
        %v1075 = vpack.c.b16 %v975, %v971
        %v1076 = vpack.c.b16 %v976, %v972
        %v1077 = vpack.c.b16 %v977, %v973
        %v1078 = vpack.c.b16 %v982, %v978
        %v1079 = vpack.c.b16 %v983, %v979
        %v1080 = vpack.c.b16 %v984, %v980
        %v1081 = vpack.c.b16 %v985, %v981
        %1178 = vmatpush.bf16.msra.mxu0 %v1014
        %1179 = vmatpush.bf16.msra.mxu0 %v1010
        %1180 = vmatpush.bf16.msra.mxu0 %v1006
        %1181 = vmatpush.bf16.msra.mxu0 %v1002
        %1182 = vmatpush.bf16.msra.mxu0 %v998
        %1183 = vmatpush.bf16.msra.mxu0 %v994
        %1184 = vmatpush.bf16.msra.mxu0 %v990
        %1185 = vmatpush.bf16.msra.mxu0 %v986
        %1186 = vmatmul.bf16.gmra.mxu0 %v650
        %v1187 = vpop.f32.mrf.mxu0
        %v1188 = vadd.f32 0.0, %v1187
        %v1189 = vpop.f32.mrf.mxu0
        %v1190 = vadd.f32 0.0, %v1189
        %1191 = vmatmul.bf16.gmra.mxu0 %v653
        %v1192 = vpop.f32.mrf.mxu0
        %v1193 = vadd.f32 0.0, %v1192
        %v1194 = vpop.f32.mrf.mxu0
        %v1195 = vadd.f32 0.0, %v1194
        %1196 = vmatmul.bf16.gmra.mxu0 %v656
        %v1197 = vpop.f32.mrf.mxu0
        %v1198 = vadd.f32 0.0, %v1197
        %v1199 = vpop.f32.mrf.mxu0
        %v1200 = vadd.f32 0.0, %v1199
        %1201 = vmatmul.bf16.gmra.mxu0 %v659
        %v1202 = vpop.f32.mrf.mxu0
        %v1203 = vadd.f32 0.0, %v1202
        %v1204 = vpop.f32.mrf.mxu0
        %v1205 = vadd.f32 0.0, %v1204
        %1206 = vmatmul.bf16.gmra.mxu0 %v662
        %v1207 = vpop.f32.mrf.mxu0
        %v1208 = vadd.f32 0.0, %v1207
        %v1209 = vpop.f32.mrf.mxu0
        %v1210 = vadd.f32 0.0, %v1209
        %1211 = vmatmul.bf16.gmra.mxu0 %v665
        %v1212 = vpop.f32.mrf.mxu0
        %v1213 = vadd.f32 0.0, %v1212
        %v1214 = vpop.f32.mrf.mxu0
        %v1215 = vadd.f32 0.0, %v1214
        %1216 = vmatmul.bf16.gmra.mxu0 %v668
        %v1217 = vpop.f32.mrf.mxu0
        %v1218 = vadd.f32 0.0, %v1217
        %v1219 = vpop.f32.mrf.mxu0
        %v1220 = vadd.f32 0.0, %v1219
        %1221 = vmatmul.bf16.gmra.mxu0 %v671
        %v1222 = vpop.f32.mrf.mxu0
        %v1223 = vadd.f32 0.0, %v1222
        %v1224 = vpop.f32.mrf.mxu0
        %v1225 = vadd.f32 0.0, %v1224
        %1226 = vdwg.mxu0
        %1227 = vmatpush.bf16.msra.mxu0 %v1046
        %1228 = vmatpush.bf16.msra.mxu0 %v1042
        %1229 = vmatpush.bf16.msra.mxu0 %v1038
        %1230 = vmatpush.bf16.msra.mxu0 %v1034
        %1231 = vmatpush.bf16.msra.mxu0 %v1030
        %1232 = vmatpush.bf16.msra.mxu0 %v1026
        %1233 = vmatpush.bf16.msra.mxu0 %v1022
        %1234 = vmatpush.bf16.msra.mxu0 %v1018
        %1235 = vmatmul.bf16.gmra.mxu0 %v651
        %v1236 = vpop.f32.mrf.mxu0
        %v1237 = vadd.f32 %v1188, %v1236
        %v1238 = vpop.f32.mrf.mxu0
        %v1239 = vadd.f32 %v1190, %v1238
        %1240 = vmatmul.bf16.gmra.mxu0 %v654
        %v1241 = vpop.f32.mrf.mxu0
        %v1242 = vadd.f32 %v1193, %v1241
        %v1243 = vpop.f32.mrf.mxu0
        %v1244 = vadd.f32 %v1195, %v1243
        %1245 = vmatmul.bf16.gmra.mxu0 %v657
        %v1246 = vpop.f32.mrf.mxu0
        %v1247 = vadd.f32 %v1198, %v1246
        %v1248 = vpop.f32.mrf.mxu0
        %v1249 = vadd.f32 %v1200, %v1248
        %1250 = vmatmul.bf16.gmra.mxu0 %v660
        %v1251 = vpop.f32.mrf.mxu0
        %v1252 = vadd.f32 %v1203, %v1251
        %v1253 = vpop.f32.mrf.mxu0
        %v1254 = vadd.f32 %v1205, %v1253
        %1255 = vmatmul.bf16.gmra.mxu0 %v663
        %v1256 = vpop.f32.mrf.mxu0
        %v1257 = vadd.f32 %v1208, %v1256
        %v1258 = vpop.f32.mrf.mxu0
        %v1259 = vadd.f32 %v1210, %v1258
        %1260 = vmatmul.bf16.gmra.mxu0 %v666
        %v1261 = vpop.f32.mrf.mxu0
        %v1262 = vadd.f32 %v1213, %v1261
        %v1263 = vpop.f32.mrf.mxu0
        %v1264 = vadd.f32 %v1215, %v1263
        %1265 = vmatmul.bf16.gmra.mxu0 %v669
        %v1266 = vpop.f32.mrf.mxu0
        %v1267 = vadd.f32 %v1218, %v1266
        %v1268 = vpop.f32.mrf.mxu0
        %v1269 = vadd.f32 %v1220, %v1268
        %1270 = vmatmul.bf16.gmra.mxu0 %v672
        %v1271 = vpop.f32.mrf.mxu0
        %v1272 = vadd.f32 %v1223, %v1271
        %v1273 = vpop.f32.mrf.mxu0
        %v1274 = vadd.f32 %v1225, %v1273
        %1275 = vdwg.mxu0
        %1276 = vmatpush.bf16.msra.mxu0 %v1078
        %1277 = vmatpush.bf16.msra.mxu0 %v1074
        %1278 = vmatpush.bf16.msra.mxu0 %v1070
        %1279 = vmatpush.bf16.msra.mxu0 %v1066
        %1280 = vmatpush.bf16.msra.mxu0 %v1062
        %1281 = vmatpush.bf16.msra.mxu0 %v1058
        %1282 = vmatpush.bf16.msra.mxu0 %v1054
        %1283 = vmatpush.bf16.msra.mxu0 %v1050
        %1284 = vmatmul.bf16.gmra.mxu0 %v652
        %v1285 = vpop.f32.mrf.mxu0
        %v1286 = vadd.f32 %v1237, %v1285
        %v1287 = vpop.f32.mrf.mxu0
        %v1288 = vadd.f32 %v1239, %v1287
        %1289 = vmatmul.bf16.gmra.mxu0 %v655
        %v1290 = vpop.f32.mrf.mxu0
        %v1291 = vadd.f32 %v1242, %v1290
        %v1292 = vpop.f32.mrf.mxu0
        %v1293 = vadd.f32 %v1244, %v1292
        %1294 = vmatmul.bf16.gmra.mxu0 %v658
        %v1295 = vpop.f32.mrf.mxu0
        %v1296 = vadd.f32 %v1247, %v1295
        %v1297 = vpop.f32.mrf.mxu0
        %v1298 = vadd.f32 %v1249, %v1297
        %1299 = vmatmul.bf16.gmra.mxu0 %v661
        %v1300 = vpop.f32.mrf.mxu0
        %v1301 = vadd.f32 %v1252, %v1300
        %v1302 = vpop.f32.mrf.mxu0
        %v1303 = vadd.f32 %v1254, %v1302
        %1304 = vmatmul.bf16.gmra.mxu0 %v664
        %v1305 = vpop.f32.mrf.mxu0
        %v1306 = vadd.f32 %v1257, %v1305
        %v1307 = vpop.f32.mrf.mxu0
        %v1308 = vadd.f32 %v1259, %v1307
        %1309 = vmatmul.bf16.gmra.mxu0 %v667
        %v1310 = vpop.f32.mrf.mxu0
        %v1311 = vadd.f32 %v1262, %v1310
        %v1312 = vpop.f32.mrf.mxu0
        %v1313 = vadd.f32 %v1264, %v1312
        %1314 = vmatmul.bf16.gmra.mxu0 %v670
        %v1315 = vpop.f32.mrf.mxu0
        %v1316 = vadd.f32 %v1267, %v1315
        %v1317 = vpop.f32.mrf.mxu0
        %v1318 = vadd.f32 %v1269, %v1317
        %1319 = vmatmul.bf16.gmra.mxu0 %v673
        %v1320 = vpop.f32.mrf.mxu0
        %v1321 = vadd.f32 %v1272, %v1320
        %v1322 = vpop.f32.mrf.mxu0
        %v1323 = vadd.f32 %v1274, %v1322
        %1324 = vdwg.mxu0
        %1325 = vmatpush.bf16.msra.mxu0 %v1015
        %1326 = vmatpush.bf16.msra.mxu0 %v1011
        %1327 = vmatpush.bf16.msra.mxu0 %v1007
        %1328 = vmatpush.bf16.msra.mxu0 %v1003
        %1329 = vmatpush.bf16.msra.mxu0 %v999
        %1330 = vmatpush.bf16.msra.mxu0 %v995
        %1331 = vmatpush.bf16.msra.mxu0 %v991
        %1332 = vmatpush.bf16.msra.mxu0 %v987
        %1333 = vmatmul.bf16.gmra.mxu0 %v650
        %v1334 = vpop.f32.mrf.mxu0
        %v1335 = vadd.f32 0.0, %v1334
        %v1336 = vpop.f32.mrf.mxu0
        %v1337 = vadd.f32 0.0, %v1336
        %1338 = vmatmul.bf16.gmra.mxu0 %v653
        %v1339 = vpop.f32.mrf.mxu0
        %v1340 = vadd.f32 0.0, %v1339
        %v1341 = vpop.f32.mrf.mxu0
        %v1342 = vadd.f32 0.0, %v1341
        %1343 = vmatmul.bf16.gmra.mxu0 %v656
        %v1344 = vpop.f32.mrf.mxu0
        %v1345 = vadd.f32 0.0, %v1344
        %v1346 = vpop.f32.mrf.mxu0
        %v1347 = vadd.f32 0.0, %v1346
        %1348 = vmatmul.bf16.gmra.mxu0 %v659
        %v1349 = vpop.f32.mrf.mxu0
        %v1350 = vadd.f32 0.0, %v1349
        %v1351 = vpop.f32.mrf.mxu0
        %v1352 = vadd.f32 0.0, %v1351
        %1353 = vmatmul.bf16.gmra.mxu0 %v662
        %v1354 = vpop.f32.mrf.mxu0
        %v1355 = vadd.f32 0.0, %v1354
        %v1356 = vpop.f32.mrf.mxu0
        %v1357 = vadd.f32 0.0, %v1356
        %1358 = vmatmul.bf16.gmra.mxu0 %v665
        %v1359 = vpop.f32.mrf.mxu0
        %v1360 = vadd.f32 0.0, %v1359
        %v1361 = vpop.f32.mrf.mxu0
        %v1362 = vadd.f32 0.0, %v1361
        %1363 = vmatmul.bf16.gmra.mxu0 %v668
        %v1364 = vpop.f32.mrf.mxu0
        %v1365 = vadd.f32 0.0, %v1364
        %v1366 = vpop.f32.mrf.mxu0
        %v1367 = vadd.f32 0.0, %v1366
        %1368 = vmatmul.bf16.gmra.mxu0 %v671
        %v1369 = vpop.f32.mrf.mxu0
        %v1370 = vadd.f32 0.0, %v1369
        %v1371 = vpop.f32.mrf.mxu0
        %v1372 = vadd.f32 0.0, %v1371
        %1373 = vdwg.mxu0
        %1374 = vmatpush.bf16.msra.mxu0 %v1047
        %1375 = vmatpush.bf16.msra.mxu0 %v1043
        %1376 = vmatpush.bf16.msra.mxu0 %v1039
        %1377 = vmatpush.bf16.msra.mxu0 %v1035
        %1378 = vmatpush.bf16.msra.mxu0 %v1031
        %1379 = vmatpush.bf16.msra.mxu0 %v1027
        %1380 = vmatpush.bf16.msra.mxu0 %v1023
        %1381 = vmatpush.bf16.msra.mxu0 %v1019
        %1382 = vmatmul.bf16.gmra.mxu0 %v651
        %v1383 = vpop.f32.mrf.mxu0
        %v1384 = vadd.f32 %v1335, %v1383
        %v1385 = vpop.f32.mrf.mxu0
        %v1386 = vadd.f32 %v1337, %v1385
        %1387 = vmatmul.bf16.gmra.mxu0 %v654
        %v1388 = vpop.f32.mrf.mxu0
        %v1389 = vadd.f32 %v1340, %v1388
        %v1390 = vpop.f32.mrf.mxu0
        %v1391 = vadd.f32 %v1342, %v1390
        %1392 = vmatmul.bf16.gmra.mxu0 %v657
        %v1393 = vpop.f32.mrf.mxu0
        %v1394 = vadd.f32 %v1345, %v1393
        %v1395 = vpop.f32.mrf.mxu0
        %v1396 = vadd.f32 %v1347, %v1395
        %1397 = vmatmul.bf16.gmra.mxu0 %v660
        %v1398 = vpop.f32.mrf.mxu0
        %v1399 = vadd.f32 %v1350, %v1398
        %v1400 = vpop.f32.mrf.mxu0
        %v1401 = vadd.f32 %v1352, %v1400
        %1402 = vmatmul.bf16.gmra.mxu0 %v663
        %v1403 = vpop.f32.mrf.mxu0
        %v1404 = vadd.f32 %v1355, %v1403
        %v1405 = vpop.f32.mrf.mxu0
        %v1406 = vadd.f32 %v1357, %v1405
        %1407 = vmatmul.bf16.gmra.mxu0 %v666
        %v1408 = vpop.f32.mrf.mxu0
        %v1409 = vadd.f32 %v1360, %v1408
        %v1410 = vpop.f32.mrf.mxu0
        %v1411 = vadd.f32 %v1362, %v1410
        %1412 = vmatmul.bf16.gmra.mxu0 %v669
        %v1413 = vpop.f32.mrf.mxu0
        %v1414 = vadd.f32 %v1365, %v1413
        %v1415 = vpop.f32.mrf.mxu0
        %v1416 = vadd.f32 %v1367, %v1415
        %1417 = vmatmul.bf16.gmra.mxu0 %v672
        %v1418 = vpop.f32.mrf.mxu0
        %v1419 = vadd.f32 %v1370, %v1418
        %v1420 = vpop.f32.mrf.mxu0
        %v1421 = vadd.f32 %v1372, %v1420
        %1422 = vdwg.mxu0
        %1423 = vmatpush.bf16.msra.mxu0 %v1079
        %1424 = vmatpush.bf16.msra.mxu0 %v1075
        %1425 = vmatpush.bf16.msra.mxu0 %v1071
        %1426 = vmatpush.bf16.msra.mxu0 %v1067
        %1427 = vmatpush.bf16.msra.mxu0 %v1063
        %1428 = vmatpush.bf16.msra.mxu0 %v1059
        %1429 = vmatpush.bf16.msra.mxu0 %v1055
        %1430 = vmatpush.bf16.msra.mxu0 %v1051
        %1431 = vmatmul.bf16.gmra.mxu0 %v652
        %v1432 = vpop.f32.mrf.mxu0
        %v1433 = vadd.f32 %v1384, %v1432
        %v1434 = vpop.f32.mrf.mxu0
        %v1435 = vadd.f32 %v1386, %v1434
        %1436 = vmatmul.bf16.gmra.mxu0 %v655
        %v1437 = vpop.f32.mrf.mxu0
        %v1438 = vadd.f32 %v1389, %v1437
        %v1439 = vpop.f32.mrf.mxu0
        %v1440 = vadd.f32 %v1391, %v1439
        %1441 = vmatmul.bf16.gmra.mxu0 %v658
        %v1442 = vpop.f32.mrf.mxu0
        %v1443 = vadd.f32 %v1394, %v1442
        %v1444 = vpop.f32.mrf.mxu0
        %v1445 = vadd.f32 %v1396, %v1444
        %1446 = vmatmul.bf16.gmra.mxu0 %v661
        %v1447 = vpop.f32.mrf.mxu0
        %v1448 = vadd.f32 %v1399, %v1447
        %v1449 = vpop.f32.mrf.mxu0
        %v1450 = vadd.f32 %v1401, %v1449
        %1451 = vmatmul.bf16.gmra.mxu0 %v664
        %v1452 = vpop.f32.mrf.mxu0
        %v1453 = vadd.f32 %v1404, %v1452
        %v1454 = vpop.f32.mrf.mxu0
        %v1455 = vadd.f32 %v1406, %v1454
        %1456 = vmatmul.bf16.gmra.mxu0 %v667
        %v1457 = vpop.f32.mrf.mxu0
        %v1458 = vadd.f32 %v1409, %v1457
        %v1459 = vpop.f32.mrf.mxu0
        %v1460 = vadd.f32 %v1411, %v1459
        %1461 = vmatmul.bf16.gmra.mxu0 %v670
        %v1462 = vpop.f32.mrf.mxu0
        %v1463 = vadd.f32 %v1414, %v1462
        %v1464 = vpop.f32.mrf.mxu0
        %v1465 = vadd.f32 %v1416, %v1464
        %1466 = vmatmul.bf16.gmra.mxu0 %v673
        %v1467 = vpop.f32.mrf.mxu0
        %v1468 = vadd.f32 %v1419, %v1467
        %v1469 = vpop.f32.mrf.mxu0
        %v1470 = vadd.f32 %v1421, %v1469
        %1471 = vdwg.mxu0
        %1472 = vmatpush.bf16.msra.mxu0 %v1016
        %1473 = vmatpush.bf16.msra.mxu0 %v1012
        %1474 = vmatpush.bf16.msra.mxu0 %v1008
        %1475 = vmatpush.bf16.msra.mxu0 %v1004
        %1476 = vmatpush.bf16.msra.mxu0 %v1000
        %1477 = vmatpush.bf16.msra.mxu0 %v996
        %1478 = vmatpush.bf16.msra.mxu0 %v992
        %1479 = vmatpush.bf16.msra.mxu0 %v988
        %1480 = vmatmul.bf16.gmra.mxu0 %v650
        %v1481 = vpop.f32.mrf.mxu0
        %v1482 = vadd.f32 0.0, %v1481
        %v1483 = vpop.f32.mrf.mxu0
        %v1484 = vadd.f32 0.0, %v1483
        %1485 = vmatmul.bf16.gmra.mxu0 %v653
        %v1486 = vpop.f32.mrf.mxu0
        %v1487 = vadd.f32 0.0, %v1486
        %v1488 = vpop.f32.mrf.mxu0
        %v1489 = vadd.f32 0.0, %v1488
        %1490 = vmatmul.bf16.gmra.mxu0 %v656
        %v1491 = vpop.f32.mrf.mxu0
        %v1492 = vadd.f32 0.0, %v1491
        %v1493 = vpop.f32.mrf.mxu0
        %v1494 = vadd.f32 0.0, %v1493
        %1495 = vmatmul.bf16.gmra.mxu0 %v659
        %v1496 = vpop.f32.mrf.mxu0
        %v1497 = vadd.f32 0.0, %v1496
        %v1498 = vpop.f32.mrf.mxu0
        %v1499 = vadd.f32 0.0, %v1498
        %1500 = vmatmul.bf16.gmra.mxu0 %v662
        %v1501 = vpop.f32.mrf.mxu0
        %v1502 = vadd.f32 0.0, %v1501
        %v1503 = vpop.f32.mrf.mxu0
        %v1504 = vadd.f32 0.0, %v1503
        %1505 = vmatmul.bf16.gmra.mxu0 %v665
        %v1506 = vpop.f32.mrf.mxu0
        %v1507 = vadd.f32 0.0, %v1506
        %v1508 = vpop.f32.mrf.mxu0
        %v1509 = vadd.f32 0.0, %v1508
        %1510 = vmatmul.bf16.gmra.mxu0 %v668
        %v1511 = vpop.f32.mrf.mxu0
        %v1512 = vadd.f32 0.0, %v1511
        %v1513 = vpop.f32.mrf.mxu0
        %v1514 = vadd.f32 0.0, %v1513
        %1515 = vmatmul.bf16.gmra.mxu0 %v671
        %v1516 = vpop.f32.mrf.mxu0
        %v1517 = vadd.f32 0.0, %v1516
        %v1518 = vpop.f32.mrf.mxu0
        %v1519 = vadd.f32 0.0, %v1518
        %1520 = vdwg.mxu0
        %1521 = vmatpush.bf16.msra.mxu0 %v1048
        %1522 = vmatpush.bf16.msra.mxu0 %v1044
        %1523 = vmatpush.bf16.msra.mxu0 %v1040
        %1524 = vmatpush.bf16.msra.mxu0 %v1036
        %1525 = vmatpush.bf16.msra.mxu0 %v1032
        %1526 = vmatpush.bf16.msra.mxu0 %v1028
        %1527 = vmatpush.bf16.msra.mxu0 %v1024
        %1528 = vmatpush.bf16.msra.mxu0 %v1020
        %1529 = vmatmul.bf16.gmra.mxu0 %v651
        %v1530 = vpop.f32.mrf.mxu0
        %v1531 = vadd.f32 %v1482, %v1530
        %v1532 = vpop.f32.mrf.mxu0
        %v1533 = vadd.f32 %v1484, %v1532
        %1534 = vmatmul.bf16.gmra.mxu0 %v654
        %v1535 = vpop.f32.mrf.mxu0
        %v1536 = vadd.f32 %v1487, %v1535
        %v1537 = vpop.f32.mrf.mxu0
        %v1538 = vadd.f32 %v1489, %v1537
        %1539 = vmatmul.bf16.gmra.mxu0 %v657
        %v1540 = vpop.f32.mrf.mxu0
        %v1541 = vadd.f32 %v1492, %v1540
        %v1542 = vpop.f32.mrf.mxu0
        %v1543 = vadd.f32 %v1494, %v1542
        %1544 = vmatmul.bf16.gmra.mxu0 %v660
        %v1545 = vpop.f32.mrf.mxu0
        %v1546 = vadd.f32 %v1497, %v1545
        %v1547 = vpop.f32.mrf.mxu0
        %v1548 = vadd.f32 %v1499, %v1547
        %1549 = vmatmul.bf16.gmra.mxu0 %v663
        %v1550 = vpop.f32.mrf.mxu0
        %v1551 = vadd.f32 %v1502, %v1550
        %v1552 = vpop.f32.mrf.mxu0
        %v1553 = vadd.f32 %v1504, %v1552
        %1554 = vmatmul.bf16.gmra.mxu0 %v666
        %v1555 = vpop.f32.mrf.mxu0
        %v1556 = vadd.f32 %v1507, %v1555
        %v1557 = vpop.f32.mrf.mxu0
        %v1558 = vadd.f32 %v1509, %v1557
        %1559 = vmatmul.bf16.gmra.mxu0 %v669
        %v1560 = vpop.f32.mrf.mxu0
        %v1561 = vadd.f32 %v1512, %v1560
        %v1562 = vpop.f32.mrf.mxu0
        %v1563 = vadd.f32 %v1514, %v1562
        %1564 = vmatmul.bf16.gmra.mxu0 %v672
        %v1565 = vpop.f32.mrf.mxu0
        %v1566 = vadd.f32 %v1517, %v1565
        %v1567 = vpop.f32.mrf.mxu0
        %v1568 = vadd.f32 %v1519, %v1567
        %1569 = vdwg.mxu0
        %1570 = vmatpush.bf16.msra.mxu0 %v1080
        %1571 = vmatpush.bf16.msra.mxu0 %v1076
        %1572 = vmatpush.bf16.msra.mxu0 %v1072
        %1573 = vmatpush.bf16.msra.mxu0 %v1068
        %1574 = vmatpush.bf16.msra.mxu0 %v1064
        %1575 = vmatpush.bf16.msra.mxu0 %v1060
        %1576 = vmatpush.bf16.msra.mxu0 %v1056
        %1577 = vmatpush.bf16.msra.mxu0 %v1052
        %1578 = vmatmul.bf16.gmra.mxu0 %v652
        %v1579 = vpop.f32.mrf.mxu0
        %v1580 = vadd.f32 %v1531, %v1579
        %v1581 = vpop.f32.mrf.mxu0
        %v1582 = vadd.f32 %v1533, %v1581
        %1583 = vmatmul.bf16.gmra.mxu0 %v655
        %v1584 = vpop.f32.mrf.mxu0
        %v1585 = vadd.f32 %v1536, %v1584
        %v1586 = vpop.f32.mrf.mxu0
        %v1587 = vadd.f32 %v1538, %v1586
        %1588 = vmatmul.bf16.gmra.mxu0 %v658
        %v1589 = vpop.f32.mrf.mxu0
        %v1590 = vadd.f32 %v1541, %v1589
        %v1591 = vpop.f32.mrf.mxu0
        %v1592 = vadd.f32 %v1543, %v1591
        %1593 = vmatmul.bf16.gmra.mxu0 %v661
        %v1594 = vpop.f32.mrf.mxu0
        %v1595 = vadd.f32 %v1546, %v1594
        %v1596 = vpop.f32.mrf.mxu0
        %v1597 = vadd.f32 %v1548, %v1596
        %1598 = vmatmul.bf16.gmra.mxu0 %v664
        %v1599 = vpop.f32.mrf.mxu0
        %v1600 = vadd.f32 %v1551, %v1599
        %v1601 = vpop.f32.mrf.mxu0
        %v1602 = vadd.f32 %v1553, %v1601
        %1603 = vmatmul.bf16.gmra.mxu0 %v667
        %v1604 = vpop.f32.mrf.mxu0
        %v1605 = vadd.f32 %v1556, %v1604
        %v1606 = vpop.f32.mrf.mxu0
        %v1607 = vadd.f32 %v1558, %v1606
        %1608 = vmatmul.bf16.gmra.mxu0 %v670
        %v1609 = vpop.f32.mrf.mxu0
        %v1610 = vadd.f32 %v1561, %v1609
        %v1611 = vpop.f32.mrf.mxu0
        %v1612 = vadd.f32 %v1563, %v1611
        %1613 = vmatmul.bf16.gmra.mxu0 %v673
        %v1614 = vpop.f32.mrf.mxu0
        %v1615 = vadd.f32 %v1566, %v1614
        %v1616 = vpop.f32.mrf.mxu0
        %v1617 = vadd.f32 %v1568, %v1616
        %1618 = vdwg.mxu0
        %1619 = vmatpush.bf16.msra.mxu0 %v1017
        %1620 = vmatpush.bf16.msra.mxu0 %v1013
        %1621 = vmatpush.bf16.msra.mxu0 %v1009
        %1622 = vmatpush.bf16.msra.mxu0 %v1005
        %1623 = vmatpush.bf16.msra.mxu0 %v1001
        %1624 = vmatpush.bf16.msra.mxu0 %v997
        %1625 = vmatpush.bf16.msra.mxu0 %v993
        %1626 = vmatpush.bf16.msra.mxu0 %v989
        %1627 = vmatmul.bf16.gmra.mxu0 %v650
        %v1628 = vpop.f32.mrf.mxu0
        %v1629 = vadd.f32 0.0, %v1628
        %v1630 = vpop.f32.mrf.mxu0
        %v1631 = vadd.f32 0.0, %v1630
        %1632 = vmatmul.bf16.gmra.mxu0 %v653
        %v1633 = vpop.f32.mrf.mxu0
        %v1634 = vadd.f32 0.0, %v1633
        %v1635 = vpop.f32.mrf.mxu0
        %v1636 = vadd.f32 0.0, %v1635
        %1637 = vmatmul.bf16.gmra.mxu0 %v656
        %v1638 = vpop.f32.mrf.mxu0
        %v1639 = vadd.f32 0.0, %v1638
        %v1640 = vpop.f32.mrf.mxu0
        %v1641 = vadd.f32 0.0, %v1640
        %1642 = vmatmul.bf16.gmra.mxu0 %v659
        %v1643 = vpop.f32.mrf.mxu0
        %v1644 = vadd.f32 0.0, %v1643
        %v1645 = vpop.f32.mrf.mxu0
        %v1646 = vadd.f32 0.0, %v1645
        %1647 = vmatmul.bf16.gmra.mxu0 %v662
        %v1648 = vpop.f32.mrf.mxu0
        %v1649 = vadd.f32 0.0, %v1648
        %v1650 = vpop.f32.mrf.mxu0
        %v1651 = vadd.f32 0.0, %v1650
        %1652 = vmatmul.bf16.gmra.mxu0 %v665
        %v1653 = vpop.f32.mrf.mxu0
        %v1654 = vadd.f32 0.0, %v1653
        %v1655 = vpop.f32.mrf.mxu0
        %v1656 = vadd.f32 0.0, %v1655
        %1657 = vmatmul.bf16.gmra.mxu0 %v668
        %v1658 = vpop.f32.mrf.mxu0
        %v1659 = vadd.f32 0.0, %v1658
        %v1660 = vpop.f32.mrf.mxu0
        %v1661 = vadd.f32 0.0, %v1660
        %1662 = vmatmul.bf16.gmra.mxu0 %v671
        %v1663 = vpop.f32.mrf.mxu0
        %v1664 = vadd.f32 0.0, %v1663
        %v1665 = vpop.f32.mrf.mxu0
        %v1666 = vadd.f32 0.0, %v1665
        %1667 = vdwg.mxu0
        %1668 = vmatpush.bf16.msra.mxu0 %v1049
        %1669 = vmatpush.bf16.msra.mxu0 %v1045
        %1670 = vmatpush.bf16.msra.mxu0 %v1041
        %1671 = vmatpush.bf16.msra.mxu0 %v1037
        %1672 = vmatpush.bf16.msra.mxu0 %v1033
        %1673 = vmatpush.bf16.msra.mxu0 %v1029
        %1674 = vmatpush.bf16.msra.mxu0 %v1025
        %1675 = vmatpush.bf16.msra.mxu0 %v1021
        %1676 = vmatmul.bf16.gmra.mxu0 %v651
        %v1677 = vpop.f32.mrf.mxu0
        %v1678 = vadd.f32 %v1629, %v1677
        %v1679 = vpop.f32.mrf.mxu0
        %v1680 = vadd.f32 %v1631, %v1679
        %1681 = vmatmul.bf16.gmra.mxu0 %v654
        %v1682 = vpop.f32.mrf.mxu0
        %v1683 = vadd.f32 %v1634, %v1682
        %v1684 = vpop.f32.mrf.mxu0
        %v1685 = vadd.f32 %v1636, %v1684
        %1686 = vmatmul.bf16.gmra.mxu0 %v657
        %v1687 = vpop.f32.mrf.mxu0
        %v1688 = vadd.f32 %v1639, %v1687
        %v1689 = vpop.f32.mrf.mxu0
        %v1690 = vadd.f32 %v1641, %v1689
        %1691 = vmatmul.bf16.gmra.mxu0 %v660
        %v1692 = vpop.f32.mrf.mxu0
        %v1693 = vadd.f32 %v1644, %v1692
        %v1694 = vpop.f32.mrf.mxu0
        %v1695 = vadd.f32 %v1646, %v1694
        %1696 = vmatmul.bf16.gmra.mxu0 %v663
        %v1697 = vpop.f32.mrf.mxu0
        %v1698 = vadd.f32 %v1649, %v1697
        %v1699 = vpop.f32.mrf.mxu0
        %v1700 = vadd.f32 %v1651, %v1699
        %1701 = vmatmul.bf16.gmra.mxu0 %v666
        %v1702 = vpop.f32.mrf.mxu0
        %v1703 = vadd.f32 %v1654, %v1702
        %v1704 = vpop.f32.mrf.mxu0
        %v1705 = vadd.f32 %v1656, %v1704
        %1706 = vmatmul.bf16.gmra.mxu0 %v669
        %v1707 = vpop.f32.mrf.mxu0
        %v1708 = vadd.f32 %v1659, %v1707
        %v1709 = vpop.f32.mrf.mxu0
        %v1710 = vadd.f32 %v1661, %v1709
        %1711 = vmatmul.bf16.gmra.mxu0 %v672
        %v1712 = vpop.f32.mrf.mxu0
        %v1713 = vadd.f32 %v1664, %v1712
        %v1714 = vpop.f32.mrf.mxu0
        %v1715 = vadd.f32 %v1666, %v1714
        %1716 = vdwg.mxu0
        %1717 = vmatpush.bf16.msra.mxu0 %v1081
        %1718 = vmatpush.bf16.msra.mxu0 %v1077
        %1719 = vmatpush.bf16.msra.mxu0 %v1073
        %1720 = vmatpush.bf16.msra.mxu0 %v1069
        %1721 = vmatpush.bf16.msra.mxu0 %v1065
        %1722 = vmatpush.bf16.msra.mxu0 %v1061
        %1723 = vmatpush.bf16.msra.mxu0 %v1057
        %1724 = vmatpush.bf16.msra.mxu0 %v1053
        %1725 = vmatmul.bf16.gmra.mxu0 %v652
        %v1726 = vpop.f32.mrf.mxu0
        %v1727 = vadd.f32 %v1678, %v1726
        %v1728 = vpop.f32.mrf.mxu0
        %v1729 = vadd.f32 %v1680, %v1728
        %1730 = vmatmul.bf16.gmra.mxu0 %v655
        %v1731 = vpop.f32.mrf.mxu0
        %v1732 = vadd.f32 %v1683, %v1731
        %v1733 = vpop.f32.mrf.mxu0
        %v1734 = vadd.f32 %v1685, %v1733
        %1735 = vmatmul.bf16.gmra.mxu0 %v658
        %v1736 = vpop.f32.mrf.mxu0
        %v1737 = vadd.f32 %v1688, %v1736
        %v1738 = vpop.f32.mrf.mxu0
        %v1739 = vadd.f32 %v1690, %v1738
        %1740 = vmatmul.bf16.gmra.mxu0 %v661
        %v1741 = vpop.f32.mrf.mxu0
        %v1742 = vadd.f32 %v1693, %v1741
        %v1743 = vpop.f32.mrf.mxu0
        %v1744 = vadd.f32 %v1695, %v1743
        %1745 = vmatmul.bf16.gmra.mxu0 %v664
        %v1746 = vpop.f32.mrf.mxu0
        %v1747 = vadd.f32 %v1698, %v1746
        %v1748 = vpop.f32.mrf.mxu0
        %v1749 = vadd.f32 %v1700, %v1748
        %1750 = vmatmul.bf16.gmra.mxu0 %v667
        %v1751 = vpop.f32.mrf.mxu0
        %v1752 = vadd.f32 %v1703, %v1751
        %v1753 = vpop.f32.mrf.mxu0
        %v1754 = vadd.f32 %v1705, %v1753
        %1755 = vmatmul.bf16.gmra.mxu0 %v670
        %v1756 = vpop.f32.mrf.mxu0
        %v1757 = vadd.f32 %v1708, %v1756
        %v1758 = vpop.f32.mrf.mxu0
        %v1759 = vadd.f32 %v1710, %v1758
        %1760 = vmatmul.bf16.gmra.mxu0 %v673
        %v1761 = vpop.f32.mrf.mxu0
        %v1762 = vadd.f32 %v1713, %v1761
        %v1763 = vpop.f32.mrf.mxu0
        %v1764 = vadd.f32 %v1715, %v1763
        %1765 = vdwg.mxu0
        %v1766 = vld [vmem:[%s3] sm:$0x7]
        %v1768 = vperm.slane %v1766, 0
        %v1769 = vperm.slane %v1766, 1
        %v1770 = vperm.slane %v1766, 2
        %v1774 = vadd.f32 %v1286, %v1768
        %v1775 = vadd.f32 %v1433, %v1769
        %v1776 = vadd.f32 %v1580, %v1770
        %v1777 = vadd.f32 %v1288, %v1768
        %v1778 = vadd.f32 %v1435, %v1769
        %v1779 = vadd.f32 %v1582, %v1770
        %v1780 = vadd.f32 %v1291, %v1768
        %v1781 = vadd.f32 %v1438, %v1769
        %v1782 = vadd.f32 %v1585, %v1770
        %v1783 = vadd.f32 %v1293, %v1768
        %v1784 = vadd.f32 %v1440, %v1769
        %v1785 = vadd.f32 %v1587, %v1770
        %v1786 = vadd.f32 %v1296, %v1768
        %v1787 = vadd.f32 %v1443, %v1769
        %v1788 = vadd.f32 %v1590, %v1770
        %v1789 = vadd.f32 %v1298, %v1768
        %v1790 = vadd.f32 %v1445, %v1769
        %v1791 = vadd.f32 %v1592, %v1770
        %v1792 = vadd.f32 %v1301, %v1768
        %v1793 = vadd.f32 %v1448, %v1769
        %v1794 = vadd.f32 %v1595, %v1770
        %v1795 = vadd.f32 %v1303, %v1768
        %v1796 = vadd.f32 %v1450, %v1769
        %v1797 = vadd.f32 %v1597, %v1770
        %v1798 = vadd.f32 %v1306, %v1768
        %v1799 = vadd.f32 %v1453, %v1769
        %v1800 = vadd.f32 %v1600, %v1770
        %v1801 = vadd.f32 %v1308, %v1768
        %v1802 = vadd.f32 %v1455, %v1769
        %v1803 = vadd.f32 %v1602, %v1770
        %v1804 = vadd.f32 %v1311, %v1768
        %v1805 = vadd.f32 %v1458, %v1769
        %v1806 = vadd.f32 %v1605, %v1770
        %v1807 = vadd.f32 %v1313, %v1768
        %v1808 = vadd.f32 %v1460, %v1769
        %v1809 = vadd.f32 %v1607, %v1770
        %v1810 = vadd.f32 %v1316, %v1768
        %v1811 = vadd.f32 %v1463, %v1769
        %v1812 = vadd.f32 %v1610, %v1770
        %v1813 = vadd.f32 %v1318, %v1768
        %v1814 = vadd.f32 %v1465, %v1769
        %v1815 = vadd.f32 %v1612, %v1770
        %v1816 = vadd.f32 %v1321, %v1768
        %v1817 = vadd.f32 %v1468, %v1769
        %v1818 = vadd.f32 %v1615, %v1770
        %v1819 = vadd.f32 %v1323, %v1768
        %v1820 = vadd.f32 %v1470, %v1769
        %v1821 = vadd.f32 %v1617, %v1770
        %v1822 = vmax.f32 %v1774, 0.0
        %v1823 = vmax.f32 %v1775, 0.0
        %v1824 = vmax.f32 %v1776, 0.0
        %v1825 = vmax.f32 %v1777, 0.0
        %v1826 = vmax.f32 %v1778, 0.0
        %v1827 = vmax.f32 %v1779, 0.0
        %v1828 = vmax.f32 %v1780, 0.0
        %v1829 = vmax.f32 %v1781, 0.0
        %v1830 = vmax.f32 %v1782, 0.0
        %v1831 = vmax.f32 %v1783, 0.0
        %v1832 = vmax.f32 %v1784, 0.0
        %v1833 = vmax.f32 %v1785, 0.0
        %v1834 = vmax.f32 %v1786, 0.0
        %v1835 = vmax.f32 %v1787, 0.0
        %v1836 = vmax.f32 %v1788, 0.0
        %v1837 = vmax.f32 %v1789, 0.0
        %v1838 = vmax.f32 %v1790, 0.0
        %v1839 = vmax.f32 %v1791, 0.0
        %v1840 = vmax.f32 %v1792, 0.0
        %v1841 = vmax.f32 %v1793, 0.0
        %v1842 = vmax.f32 %v1794, 0.0
        %v1843 = vmax.f32 %v1795, 0.0
        %v1844 = vmax.f32 %v1796, 0.0
        %v1845 = vmax.f32 %v1797, 0.0
        %v1846 = vmax.f32 %v1798, 0.0
        %v1847 = vmax.f32 %v1799, 0.0
        %v1848 = vmax.f32 %v1800, 0.0
        %v1849 = vmax.f32 %v1801, 0.0
        %v1850 = vmax.f32 %v1802, 0.0
        %v1851 = vmax.f32 %v1803, 0.0
        %v1852 = vmax.f32 %v1804, 0.0
        %v1853 = vmax.f32 %v1805, 0.0
        %v1854 = vmax.f32 %v1806, 0.0
        %v1855 = vmax.f32 %v1807, 0.0
        %v1856 = vmax.f32 %v1808, 0.0
        %v1857 = vmax.f32 %v1809, 0.0
        %v1858 = vmax.f32 %v1810, 0.0
        %v1859 = vmax.f32 %v1811, 0.0
        %v1860 = vmax.f32 %v1812, 0.0
        %v1861 = vmax.f32 %v1813, 0.0
        %v1862 = vmax.f32 %v1814, 0.0
        %v1863 = vmax.f32 %v1815, 0.0
        %v1864 = vmax.f32 %v1816, 0.0
        %v1865 = vmax.f32 %v1817, 0.0
        %v1866 = vmax.f32 %v1818, 0.0
        %v1867 = vmax.f32 %v1819, 0.0
        %v1868 = vmax.f32 %v1820, 0.0
        %v1869 = vmax.f32 %v1821, 0.0
        %v1870 = vpack.c.bf16 %v1824, %v1824
        %v1871 = vpack.c.bf16 %v1827, %v1827
        %v1872 = vpack.c.bf16 %v1830, %v1830
        %v1873 = vpack.c.bf16 %v1833, %v1833
        %v1874 = vpack.c.bf16 %v1836, %v1836
        %v1875 = vpack.c.bf16 %v1839, %v1839
        %v1876 = vpack.c.bf16 %v1842, %v1842
        %v1877 = vpack.c.bf16 %v1845, %v1845
        %v1878 = vpack.c.bf16 %v1848, %v1848
        %v1879 = vpack.c.bf16 %v1851, %v1851
        %v1880 = vpack.c.bf16 %v1854, %v1854
        %v1881 = vpack.c.bf16 %v1857, %v1857
        %v1882 = vpack.c.bf16 %v1860, %v1860
        %v1883 = vpack.c.bf16 %v1863, %v1863
        %v1884 = vpack.c.bf16 %v1866, %v1866
        %v1885 = vpack.c.bf16 %v1869, %v1869
        %v1886 = vld [vmem:[%s1] sm:$0xff]
        %v1887 = vld [vmem:[%s1 + $0x8] sm:$0xff]
        %v1888 = vld [vmem:[%s1 + $0x10] sm:$0xff]
        %v1889 = vld [vmem:[%s1 + $0x18] sm:$0xff]
        %v1890 = vld [vmem:[%s1 + $0x20] sm:$0xff]
        %v1891 = vld [vmem:[%s1 + $0x28] sm:$0xff]
        %v1892 = vld [vmem:[%s1 + $0x30] sm:$0xff]
        %v1893 = vld [vmem:[%s1 + $0x38] sm:$0xff]
        %s1894 = scalar_lea.vmem [#allocation3], 16
        %vm1895 = vcmask 785408
        %1896 = vst.msk [vmem:[%s1894 + $0x1] sm:$0xff] %vm1895, %v1727
        %1897 = vst.msk [vmem:[%s1894 + $0x11] sm:$0xff] %vm1895, %v1729
        %1898 = vst.msk [vmem:[%s1894 + $0x21] sm:$0xff] %vm1895, %v1732
        %1899 = vst.msk [vmem:[%s1894 + $0x31] sm:$0xff] %vm1895, %v1734
        %1900 = vst.msk [vmem:[%s1894 + $0x41] sm:$0xff] %vm1895, %v1737
        %1901 = vst.msk [vmem:[%s1894 + $0x51] sm:$0xff] %vm1895, %v1739
        %1902 = vst.msk [vmem:[%s1894 + $0x61] sm:$0xff] %vm1895, %v1742
        %1903 = vst.msk [vmem:[%s1894 + $0x71] sm:$0xff] %vm1895, %v1744
        %v1904 = vld [vmem:[#allocation3] sm:$0xff]
        %v1905 = vld [vmem:[#allocation3 + $0x10] sm:$0xff]
        %v1906 = vld [vmem:[#allocation3 + $0x20] sm:$0xff]
        %v1907 = vld [vmem:[#allocation3 + $0x30] sm:$0xff]
        %v1908 = vld [vmem:[#allocation3 + $0x40] sm:$0xff]
        %v1909 = vld [vmem:[#allocation3 + $0x50] sm:$0xff]
        %v1910 = vld [vmem:[#allocation3 + $0x60] sm:$0xff]
        %v1911 = vld [vmem:[#allocation3 + $0x70] sm:$0xff]
        %v1912 = vld [vmem:[#allocation3 + $0x1] sm:$0xff]
        %v1913 = vld [vmem:[#allocation3 + $0x11] sm:$0xff]
        %v1914 = vld [vmem:[#allocation3 + $0x21] sm:$0xff]
        %v1915 = vld [vmem:[#allocation3 + $0x31] sm:$0xff]
        %v1916 = vld [vmem:[#allocation3 + $0x41] sm:$0xff]
        %v1917 = vld [vmem:[#allocation3 + $0x51] sm:$0xff]
        %v1918 = vld [vmem:[#allocation3 + $0x61] sm:$0xff]
        %v1919 = vld [vmem:[#allocation3 + $0x71] sm:$0xff]
        %v1920 = vadd.f32 %v1904, %v1912
        %v1921 = vadd.f32 %v1905, %v1913
        %v1922 = vadd.f32 %v1906, %v1914
        %v1923 = vadd.f32 %v1907, %v1915
        %v1924 = vadd.f32 %v1908, %v1916
        %v1925 = vadd.f32 %v1909, %v1917
        %v1926 = vadd.f32 %v1910, %v1918
        %v1927 = vadd.f32 %v1911, %v1919
        %v1928 = vld [vmem:[#allocation3 + $0x2] sm:$0xff]
        %v1929 = vld [vmem:[#allocation3 + $0x12] sm:$0xff]
        %v1930 = vld [vmem:[#allocation3 + $0x22] sm:$0xff]
        %v1931 = vld [vmem:[#allocation3 + $0x32] sm:$0xff]
        %v1932 = vld [vmem:[#allocation3 + $0x42] sm:$0xff]
        %v1933 = vld [vmem:[#allocation3 + $0x52] sm:$0xff]
        %v1934 = vld [vmem:[#allocation3 + $0x62] sm:$0xff]
        %v1935 = vld [vmem:[#allocation3 + $0x72] sm:$0xff]
        %v1936 = vadd.f32 %v1920, %v1928
        %v1937 = vadd.f32 %v1921, %v1929
        %v1938 = vadd.f32 %v1922, %v1930
        %v1939 = vadd.f32 %v1923, %v1931
        %v1940 = vadd.f32 %v1924, %v1932
        %v1941 = vadd.f32 %v1925, %v1933
        %v1942 = vadd.f32 %v1926, %v1934
        %v1943 = vadd.f32 %v1927, %v1935
        %v1944 = vld [vmem:[%s1894] sm:$0xff]
        %v1945 = vld [vmem:[%s1894 + $0x10] sm:$0xff]
        %v1946 = vld [vmem:[%s1894 + $0x20] sm:$0xff]
        %v1947 = vld [vmem:[%s1894 + $0x30] sm:$0xff]
        %v1948 = vld [vmem:[%s1894 + $0x40] sm:$0xff]
        %v1949 = vld [vmem:[%s1894 + $0x50] sm:$0xff]
        %v1950 = vld [vmem:[%s1894 + $0x60] sm:$0xff]
        %v1951 = vld [vmem:[%s1894 + $0x70] sm:$0xff]
        %v1952 = vadd.f32 %v1936, %v1944
        %v1953 = vadd.f32 %v1937, %v1945
        %v1954 = vadd.f32 %v1938, %v1946
        %v1955 = vadd.f32 %v1939, %v1947
        %v1956 = vadd.f32 %v1940, %v1948
        %v1957 = vadd.f32 %v1941, %v1949
        %v1958 = vadd.f32 %v1942, %v1950
        %v1959 = vadd.f32 %v1943, %v1951
        %v1960 = vld [vmem:[%s1894 + $0x1] sm:$0xff]
        %v1961 = vld [vmem:[%s1894 + $0x11] sm:$0xff]
        %v1962 = vld [vmem:[%s1894 + $0x21] sm:$0xff]
        %v1963 = vld [vmem:[%s1894 + $0x31] sm:$0xff]
        %v1964 = vld [vmem:[%s1894 + $0x41] sm:$0xff]
        %v1965 = vld [vmem:[%s1894 + $0x51] sm:$0xff]
        %v1966 = vld [vmem:[%s1894 + $0x61] sm:$0xff]
        %v1967 = vld [vmem:[%s1894 + $0x71] sm:$0xff]
        %v1968 = vadd.f32 %v1952, %v1960
        %v1969 = vadd.f32 %v1953, %v1961
        %v1970 = vadd.f32 %v1954, %v1962
        %v1971 = vadd.f32 %v1955, %v1963
        %v1972 = vadd.f32 %v1956, %v1964
        %v1973 = vadd.f32 %v1957, %v1965
        %v1974 = vadd.f32 %v1958, %v1966
        %v1975 = vadd.f32 %v1959, %v1967
        %v1976 = vld [vmem:[%s1894 + $0x2] sm:$0xff]
        %v1977 = vld [vmem:[%s1894 + $0x12] sm:$0xff]
        %v1978 = vld [vmem:[%s1894 + $0x22] sm:$0xff]
        %v1979 = vld [vmem:[%s1894 + $0x32] sm:$0xff]
        %v1980 = vld [vmem:[%s1894 + $0x42] sm:$0xff]
        %v1981 = vld [vmem:[%s1894 + $0x52] sm:$0xff]
        %v1982 = vld [vmem:[%s1894 + $0x62] sm:$0xff]
        %v1983 = vld [vmem:[%s1894 + $0x72] sm:$0xff]
        %v1984 = vadd.f32 %v1968, %v1976
        %v1985 = vadd.f32 %v1969, %v1977
        %v1986 = vadd.f32 %v1970, %v1978
        %v1987 = vadd.f32 %v1971, %v1979
        %v1988 = vadd.f32 %v1972, %v1980
        %v1989 = vadd.f32 %v1973, %v1981
        %v1990 = vadd.f32 %v1974, %v1982
        %v1991 = vadd.f32 %v1975, %v1983
        %s1992 = scalar_lea.vmem [#allocation3], 32
        %v1993 = vld [vmem:[%s1992] sm:$0xff]
        %v1994 = vld [vmem:[%s1992 + $0x10] sm:$0xff]
        %v1995 = vld [vmem:[%s1992 + $0x20] sm:$0xff]
        %v1996 = vld [vmem:[%s1992 + $0x30] sm:$0xff]
        %v1997 = vld [vmem:[%s1992 + $0x40] sm:$0xff]
        %v1998 = vld [vmem:[%s1992 + $0x50] sm:$0xff]
        %v1999 = vld [vmem:[%s1992 + $0x60] sm:$0xff]
        %v2000 = vld [vmem:[%s1992 + $0x70] sm:$0xff]
        %v2001 = vadd.f32 %v1984, %v1993
        %v2002 = vadd.f32 %v1985, %v1994
        %v2003 = vadd.f32 %v1986, %v1995
        %v2004 = vadd.f32 %v1987, %v1996
        %v2005 = vadd.f32 %v1988, %v1997
        %v2006 = vadd.f32 %v1989, %v1998
        %v2007 = vadd.f32 %v1990, %v1999
        %v2008 = vadd.f32 %v1991, %v2000
        %v2009 = vld [vmem:[%s1992 + $0x1] sm:$0xff]
        %v2010 = vld [vmem:[%s1992 + $0x11] sm:$0xff]
        %v2011 = vld [vmem:[%s1992 + $0x21] sm:$0xff]
        %v2012 = vld [vmem:[%s1992 + $0x31] sm:$0xff]
        %v2013 = vld [vmem:[%s1992 + $0x41] sm:$0xff]
        %v2014 = vld [vmem:[%s1992 + $0x51] sm:$0xff]
        %v2015 = vld [vmem:[%s1992 + $0x61] sm:$0xff]
        %v2016 = vld [vmem:[%s1992 + $0x71] sm:$0xff]
        %v2017 = vadd.f32 %v2001, %v2009
        %v2018 = vadd.f32 %v2002, %v2010
        %v2019 = vadd.f32 %v2003, %v2011
        %v2020 = vadd.f32 %v2004, %v2012
        %v2021 = vadd.f32 %v2005, %v2013
        %v2022 = vadd.f32 %v2006, %v2014
        %v2023 = vadd.f32 %v2007, %v2015
        %v2024 = vadd.f32 %v2008, %v2016
        %v2025 = vld [vmem:[%s1992 + $0x2] sm:$0xff]
        %v2026 = vld [vmem:[%s1992 + $0x12] sm:$0xff]
        %v2027 = vld [vmem:[%s1992 + $0x22] sm:$0xff]
        %v2028 = vld [vmem:[%s1992 + $0x32] sm:$0xff]
        %v2029 = vld [vmem:[%s1992 + $0x42] sm:$0xff]
        %v2030 = vld [vmem:[%s1992 + $0x52] sm:$0xff]
        %v2031 = vld [vmem:[%s1992 + $0x62] sm:$0xff]
        %v2032 = vld [vmem:[%s1992 + $0x72] sm:$0xff]
        %v2033 = vadd.f32 %v2017, %v2025
        %v2034 = vadd.f32 %v2018, %v2026
        %v2035 = vadd.f32 %v2019, %v2027
        %v2036 = vadd.f32 %v2020, %v2028
        %v2037 = vadd.f32 %v2021, %v2029
        %v2038 = vadd.f32 %v2022, %v2030
        %v2039 = vadd.f32 %v2023, %v2031
        %v2040 = vadd.f32 %v2024, %v2032
        %2042 = vset.pattern.permute.xlu0 0
        %2043 = vperm.xlu0 %2042, %v1886
        %v2044 = vpop.permute.xlu0 %2043
        %2047 = vset.pattern.permute.xlu0 0
        %2048 = vperm.xlu0 %2047, %v1887
        %v2049 = vpop.permute.xlu0 %2048
        %2052 = vset.pattern.permute.xlu0 0
        %2053 = vperm.xlu0 %2052, %v1888
        %v2054 = vpop.permute.xlu0 %2053
        %2057 = vset.pattern.permute.xlu0 0
        %2058 = vperm.xlu0 %2057, %v1889
        %v2059 = vpop.permute.xlu0 %2058
        %2062 = vset.pattern.permute.xlu0 0
        %2063 = vperm.xlu0 %2062, %v1890
        %v2064 = vpop.permute.xlu0 %2063
        %2067 = vset.pattern.permute.xlu0 0
        %2068 = vperm.xlu0 %2067, %v1891
        %v2069 = vpop.permute.xlu0 %2068
        %2072 = vset.pattern.permute.xlu0 0
        %2073 = vperm.xlu0 %2072, %v1892
        %v2074 = vpop.permute.xlu0 %2073
        %2077 = vset.pattern.permute.xlu0 0
        %2078 = vperm.xlu0 %2077, %v1893
        %v2079 = vpop.permute.xlu0 %2078
        %v2081 = vmul.f32 %v2033, %v2044
        %v2082 = vmul.f32 %v2034, %v2049
        %v2083 = vmul.f32 %v2035, %v2054
        %v2084 = vmul.f32 %v2036, %v2059
        %v2085 = vmul.f32 %v2037, %v2064
        %v2086 = vmul.f32 %v2038, %v2069
        %v2087 = vmul.f32 %v2039, %v2074
        %v2088 = vmul.f32 %v2040, %v2079
        %v2089 = vld [vmem:[%s10] sm:$0x1]
        %v2091 = vperm.slane %v2089, 0
        %v2093 = vadd.f32 %v2081, %v2091
        %v2094 = vadd.f32 %v2082, %v2091
        %v2095 = vadd.f32 %v2083, %v2091
        %v2096 = vadd.f32 %v2084, %v2091
        %v2097 = vadd.f32 %v2085, %v2091
        %v2098 = vadd.f32 %v2086, %v2091
        %v2099 = vadd.f32 %v2087, %v2091
        %v2100 = vadd.f32 %v2088, %v2091
        %v2101 = vmax.f32 %v2093, 0.0
        %v2102 = vmax.f32 %v2094, 0.0
        %v2103 = vmax.f32 %v2095, 0.0
        %v2104 = vmax.f32 %v2096, 0.0
        %v2105 = vmax.f32 %v2097, 0.0
        %v2106 = vmax.f32 %v2098, 0.0
        %v2107 = vmax.f32 %v2099, 0.0
        %v2108 = vmax.f32 %v2100, 0.0
        %v2109 = vpack.c.bf16 %v2101, %v2101
        %v2110 = vpack.c.bf16 %v2102, %v2102
        %v2111 = vpack.c.bf16 %v2103, %v2103
        %v2112 = vpack.c.bf16 %v2104, %v2104
        %v2113 = vpack.c.bf16 %v2105, %v2105
        %v2114 = vpack.c.bf16 %v2106, %v2106
        %v2115 = vpack.c.bf16 %v2107, %v2107
        %v2116 = vpack.c.bf16 %v2108, %v2108
        %2117 = vst.msk [vmem:[%s1894 + $0x1] sm:$0xff] %vm1895, %v1747
        %2118 = vst.msk [vmem:[%s1894 + $0x11] sm:$0xff] %vm1895, %v1749
        %2119 = vst.msk [vmem:[%s1894 + $0x21] sm:$0xff] %vm1895, %v1752
        %2120 = vst.msk [vmem:[%s1894 + $0x31] sm:$0xff] %vm1895, %v1754
        %2121 = vst.msk [vmem:[%s1894 + $0x41] sm:$0xff] %vm1895, %v1757
        %2122 = vst.msk [vmem:[%s1894 + $0x51] sm:$0xff] %vm1895, %v1759
        %2123 = vst.msk [vmem:[%s1894 + $0x61] sm:$0xff] %vm1895, %v1762
        %2124 = vst.msk [vmem:[%s1894 + $0x71] sm:$0xff] %vm1895, %v1764
        %v2125 = vld [vmem:[#allocation3] sm:$0xff]
        %v2126 = vld [vmem:[#allocation3 + $0x10] sm:$0xff]
        %v2127 = vld [vmem:[#allocation3 + $0x20] sm:$0xff]
        %v2128 = vld [vmem:[#allocation3 + $0x30] sm:$0xff]
        %v2129 = vld [vmem:[#allocation3 + $0x40] sm:$0xff]
        %v2130 = vld [vmem:[#allocation3 + $0x50] sm:$0xff]
        %v2131 = vld [vmem:[#allocation3 + $0x60] sm:$0xff]
        %v2132 = vld [vmem:[#allocation3 + $0x70] sm:$0xff]
        %v2133 = vld [vmem:[#allocation3 + $0x1] sm:$0xff]
        %v2134 = vld [vmem:[#allocation3 + $0x11] sm:$0xff]
        %v2135 = vld [vmem:[#allocation3 + $0x21] sm:$0xff]
        %v2136 = vld [vmem:[#allocation3 + $0x31] sm:$0xff]
        %v2137 = vld [vmem:[#allocation3 + $0x41] sm:$0xff]
        %v2138 = vld [vmem:[#allocation3 + $0x51] sm:$0xff]
        %v2139 = vld [vmem:[#allocation3 + $0x61] sm:$0xff]
        %v2140 = vld [vmem:[#allocation3 + $0x71] sm:$0xff]
        %v2141 = vadd.f32 %v2125, %v2133
        %v2142 = vadd.f32 %v2126, %v2134
        %v2143 = vadd.f32 %v2127, %v2135
        %v2144 = vadd.f32 %v2128, %v2136
        %v2145 = vadd.f32 %v2129, %v2137
        %v2146 = vadd.f32 %v2130, %v2138
        %v2147 = vadd.f32 %v2131, %v2139
        %v2148 = vadd.f32 %v2132, %v2140
        %v2149 = vld [vmem:[#allocation3 + $0x2] sm:$0xff]
        %v2150 = vld [vmem:[#allocation3 + $0x12] sm:$0xff]
        %v2151 = vld [vmem:[#allocation3 + $0x22] sm:$0xff]
        %v2152 = vld [vmem:[#allocation3 + $0x32] sm:$0xff]
        %v2153 = vld [vmem:[#allocation3 + $0x42] sm:$0xff]
        %v2154 = vld [vmem:[#allocation3 + $0x52] sm:$0xff]
        %v2155 = vld [vmem:[#allocation3 + $0x62] sm:$0xff]
        %v2156 = vld [vmem:[#allocation3 + $0x72] sm:$0xff]
        %v2157 = vadd.f32 %v2141, %v2149
        %v2158 = vadd.f32 %v2142, %v2150
        %v2159 = vadd.f32 %v2143, %v2151
        %v2160 = vadd.f32 %v2144, %v2152
        %v2161 = vadd.f32 %v2145, %v2153
        %v2162 = vadd.f32 %v2146, %v2154
        %v2163 = vadd.f32 %v2147, %v2155
        %v2164 = vadd.f32 %v2148, %v2156
        %v2165 = vld [vmem:[%s1894] sm:$0xff]
        %v2166 = vld [vmem:[%s1894 + $0x10] sm:$0xff]
        %v2167 = vld [vmem:[%s1894 + $0x20] sm:$0xff]
        %v2168 = vld [vmem:[%s1894 + $0x30] sm:$0xff]
        %v2169 = vld [vmem:[%s1894 + $0x40] sm:$0xff]
        %v2170 = vld [vmem:[%s1894 + $0x50] sm:$0xff]
        %v2171 = vld [vmem:[%s1894 + $0x60] sm:$0xff]
        %v2172 = vld [vmem:[%s1894 + $0x70] sm:$0xff]
        %v2173 = vadd.f32 %v2157, %v2165
        %v2174 = vadd.f32 %v2158, %v2166
        %v2175 = vadd.f32 %v2159, %v2167
        %v2176 = vadd.f32 %v2160, %v2168
        %v2177 = vadd.f32 %v2161, %v2169
        %v2178 = vadd.f32 %v2162, %v2170
        %v2179 = vadd.f32 %v2163, %v2171
        %v2180 = vadd.f32 %v2164, %v2172
        %v2181 = vld [vmem:[%s1894 + $0x1] sm:$0xff]
        %v2182 = vld [vmem:[%s1894 + $0x11] sm:$0xff]
        %v2183 = vld [vmem:[%s1894 + $0x21] sm:$0xff]
        %v2184 = vld [vmem:[%s1894 + $0x31] sm:$0xff]
        %v2185 = vld [vmem:[%s1894 + $0x41] sm:$0xff]
        %v2186 = vld [vmem:[%s1894 + $0x51] sm:$0xff]
        %v2187 = vld [vmem:[%s1894 + $0x61] sm:$0xff]
        %v2188 = vld [vmem:[%s1894 + $0x71] sm:$0xff]
        %v2189 = vadd.f32 %v2173, %v2181
        %v2190 = vadd.f32 %v2174, %v2182
        %v2191 = vadd.f32 %v2175, %v2183
        %v2192 = vadd.f32 %v2176, %v2184
        %v2193 = vadd.f32 %v2177, %v2185
        %v2194 = vadd.f32 %v2178, %v2186
        %v2195 = vadd.f32 %v2179, %v2187
        %v2196 = vadd.f32 %v2180, %v2188
        %v2197 = vld [vmem:[%s1894 + $0x2] sm:$0xff]
        %v2198 = vld [vmem:[%s1894 + $0x12] sm:$0xff]
        %v2199 = vld [vmem:[%s1894 + $0x22] sm:$0xff]
        %v2200 = vld [vmem:[%s1894 + $0x32] sm:$0xff]
        %v2201 = vld [vmem:[%s1894 + $0x42] sm:$0xff]
        %v2202 = vld [vmem:[%s1894 + $0x52] sm:$0xff]
        %v2203 = vld [vmem:[%s1894 + $0x62] sm:$0xff]
        %v2204 = vld [vmem:[%s1894 + $0x72] sm:$0xff]
        %v2205 = vadd.f32 %v2189, %v2197
        %v2206 = vadd.f32 %v2190, %v2198
        %v2207 = vadd.f32 %v2191, %v2199
        %v2208 = vadd.f32 %v2192, %v2200
        %v2209 = vadd.f32 %v2193, %v2201
        %v2210 = vadd.f32 %v2194, %v2202
        %v2211 = vadd.f32 %v2195, %v2203
        %v2212 = vadd.f32 %v2196, %v2204
        %v2213 = vld [vmem:[%s1992] sm:$0xff]
        %v2214 = vld [vmem:[%s1992 + $0x10] sm:$0xff]
        %v2215 = vld [vmem:[%s1992 + $0x20] sm:$0xff]
        %v2216 = vld [vmem:[%s1992 + $0x30] sm:$0xff]
        %v2217 = vld [vmem:[%s1992 + $0x40] sm:$0xff]
        %v2218 = vld [vmem:[%s1992 + $0x50] sm:$0xff]
        %v2219 = vld [vmem:[%s1992 + $0x60] sm:$0xff]
        %v2220 = vld [vmem:[%s1992 + $0x70] sm:$0xff]
        %v2221 = vadd.f32 %v2205, %v2213
        %v2222 = vadd.f32 %v2206, %v2214
        %v2223 = vadd.f32 %v2207, %v2215
        %v2224 = vadd.f32 %v2208, %v2216
        %v2225 = vadd.f32 %v2209, %v2217
        %v2226 = vadd.f32 %v2210, %v2218
        %v2227 = vadd.f32 %v2211, %v2219
        %v2228 = vadd.f32 %v2212, %v2220
        %v2229 = vld [vmem:[%s1992 + $0x1] sm:$0xff]
        %v2230 = vld [vmem:[%s1992 + $0x11] sm:$0xff]
        %v2231 = vld [vmem:[%s1992 + $0x21] sm:$0xff]
        %v2232 = vld [vmem:[%s1992 + $0x31] sm:$0xff]
        %v2233 = vld [vmem:[%s1992 + $0x41] sm:$0xff]
        %v2234 = vld [vmem:[%s1992 + $0x51] sm:$0xff]
        %v2235 = vld [vmem:[%s1992 + $0x61] sm:$0xff]
        %v2236 = vld [vmem:[%s1992 + $0x71] sm:$0xff]
        %v2237 = vadd.f32 %v2221, %v2229
        %v2238 = vadd.f32 %v2222, %v2230
        %v2239 = vadd.f32 %v2223, %v2231
        %v2240 = vadd.f32 %v2224, %v2232
        %v2241 = vadd.f32 %v2225, %v2233
        %v2242 = vadd.f32 %v2226, %v2234
        %v2243 = vadd.f32 %v2227, %v2235
        %v2244 = vadd.f32 %v2228, %v2236
        %v2245 = vld [vmem:[%s1992 + $0x2] sm:$0xff]
        %v2246 = vld [vmem:[%s1992 + $0x12] sm:$0xff]
        %v2247 = vld [vmem:[%s1992 + $0x22] sm:$0xff]
        %v2248 = vld [vmem:[%s1992 + $0x32] sm:$0xff]
        %v2249 = vld [vmem:[%s1992 + $0x42] sm:$0xff]
        %v2250 = vld [vmem:[%s1992 + $0x52] sm:$0xff]
        %v2251 = vld [vmem:[%s1992 + $0x62] sm:$0xff]
        %v2252 = vld [vmem:[%s1992 + $0x72] sm:$0xff]
        %v2253 = vadd.f32 %v2237, %v2245
        %v2254 = vadd.f32 %v2238, %v2246
        %v2255 = vadd.f32 %v2239, %v2247
        %v2256 = vadd.f32 %v2240, %v2248
        %v2257 = vadd.f32 %v2241, %v2249
        %v2258 = vadd.f32 %v2242, %v2250
        %v2259 = vadd.f32 %v2243, %v2251
        %v2260 = vadd.f32 %v2244, %v2252
        %v2261 = vmul.f32 %v2253, %v2044
        %v2262 = vmul.f32 %v2254, %v2049
        %v2263 = vmul.f32 %v2255, %v2054
        %v2264 = vmul.f32 %v2256, %v2059
        %v2265 = vmul.f32 %v2257, %v2064
        %v2266 = vmul.f32 %v2258, %v2069
        %v2267 = vmul.f32 %v2259, %v2074
        %v2268 = vmul.f32 %v2260, %v2079
        %v2269 = vld [vmem:[%s10] sm:$0x1]
        %v2271 = vperm.slane %v2269, 0
        %v2273 = vadd.f32 %v2261, %v2271
        %v2274 = vadd.f32 %v2262, %v2271
        %v2275 = vadd.f32 %v2263, %v2271
        %v2276 = vadd.f32 %v2264, %v2271
        %v2277 = vadd.f32 %v2265, %v2271
        %v2278 = vadd.f32 %v2266, %v2271
        %v2279 = vadd.f32 %v2267, %v2271
        %v2280 = vadd.f32 %v2268, %v2271
        %v2281 = vmax.f32 %v2273, 0.0
        %v2282 = vmax.f32 %v2274, 0.0
        %v2283 = vmax.f32 %v2275, 0.0
        %v2284 = vmax.f32 %v2276, 0.0
        %v2285 = vmax.f32 %v2277, 0.0
        %v2286 = vmax.f32 %v2278, 0.0
        %v2287 = vmax.f32 %v2279, 0.0
        %v2288 = vmax.f32 %v2280, 0.0
        %v2289 = vpack.c.bf16 %v2281, %v2281
        %v2290 = vpack.c.bf16 %v2282, %v2282
        %v2291 = vpack.c.bf16 %v2283, %v2283
        %v2292 = vpack.c.bf16 %v2284, %v2284
        %v2293 = vpack.c.bf16 %v2285, %v2285
        %v2294 = vpack.c.bf16 %v2286, %v2286
        %v2295 = vpack.c.bf16 %v2287, %v2287
        %v2296 = vpack.c.bf16 %v2288, %v2288
        %v2305 = vunpack.c.l.b16 %v2109
        %v2306 = vunpack.c.l.b16 %v2110
        %v2307 = vunpack.c.l.b16 %v2111
        %v2308 = vunpack.c.l.b16 %v2112
        %v2309 = vunpack.c.l.b16 %v2113
        %v2310 = vunpack.c.l.b16 %v2114
        %v2311 = vunpack.c.l.b16 %v2115
        %v2312 = vunpack.c.l.b16 %v2116
        %v2313 = vpack.c.b16 %v2306, %v2305
        %v2314 = vpack.c.b16 %v2308, %v2307
        %v2315 = vpack.c.b16 %v2310, %v2309
        %v2316 = vpack.c.b16 %v2312, %v2311
        %v2325 = vunpack.c.l.b16 %v2289
        %v2326 = vunpack.c.l.b16 %v2290
        %v2327 = vunpack.c.l.b16 %v2291
        %v2328 = vunpack.c.l.b16 %v2292
        %v2329 = vunpack.c.l.b16 %v2293
        %v2330 = vunpack.c.l.b16 %v2294
        %v2331 = vunpack.c.l.b16 %v2295
        %v2332 = vunpack.c.l.b16 %v2296
        %v2333 = vpack.c.b16 %v2326, %v2325
        %v2334 = vpack.c.b16 %v2328, %v2327
        %v2335 = vpack.c.b16 %v2330, %v2329
        %v2336 = vpack.c.b16 %v2332, %v2331
        %s2337 = scalar_lea.vmem [#allocation2], 16
        %vm2338 = vcmask 523264
        %2339 = vst.msk [vmem:[%s2337 + $0x1] sm:$0xff] %vm2338, %v1822
        %2340 = vst.msk [vmem:[%s2337 + $0x11] sm:$0xff] %vm2338, %v1825
        %2341 = vst.msk [vmem:[%s2337 + $0x21] sm:$0xff] %vm2338, %v1828
        %2342 = vst.msk [vmem:[%s2337 + $0x31] sm:$0xff] %vm2338, %v1831
        %2343 = vst.msk [vmem:[%s2337 + $0x41] sm:$0xff] %vm2338, %v1834
        %2344 = vst.msk [vmem:[%s2337 + $0x51] sm:$0xff] %vm2338, %v1837
        %2345 = vst.msk [vmem:[%s2337 + $0x61] sm:$0xff] %vm2338, %v1840
        %2346 = vst.msk [vmem:[%s2337 + $0x71] sm:$0xff] %vm2338, %v1843
        %v2347 = vld [vmem:[#allocation2] sm:$0xff]
        %v2348 = vld [vmem:[#allocation2 + $0x10] sm:$0xff]
        %v2349 = vld [vmem:[#allocation2 + $0x20] sm:$0xff]
        %v2350 = vld [vmem:[#allocation2 + $0x30] sm:$0xff]
        %v2351 = vld [vmem:[#allocation2 + $0x40] sm:$0xff]
        %v2352 = vld [vmem:[#allocation2 + $0x50] sm:$0xff]
        %v2353 = vld [vmem:[#allocation2 + $0x60] sm:$0xff]
        %v2354 = vld [vmem:[#allocation2 + $0x70] sm:$0xff]
        %v2355 = vpack.c.bf16 %v2347, %v2347
        %v2356 = vpack.c.bf16 %v2348, %v2348
        %v2357 = vpack.c.bf16 %v2349, %v2349
        %v2358 = vpack.c.bf16 %v2350, %v2350
        %v2359 = vpack.c.bf16 %v2351, %v2351
        %v2360 = vpack.c.bf16 %v2352, %v2352
        %v2361 = vpack.c.bf16 %v2353, %v2353
        %v2362 = vpack.c.bf16 %v2354, %v2354
        %vm2363 = vcmask 519168
        %2364 = vst.msk [vmem:[#allocation4] sm:$0xf] %vm2363, %v2355
        %2365 = vst.msk [vmem:[#allocation4 + $0x1c] sm:$0xf] %vm2363, %v2356
        %2366 = vst.msk [vmem:[#allocation4 + $0x38] sm:$0xf] %vm2363, %v2357
        %2367 = vst.msk [vmem:[#allocation4 + $0x54] sm:$0xf] %vm2363, %v2358
        %2368 = vst.msk [vmem:[#allocation4 + $0x70] sm:$0xf] %vm2363, %v2359
        %2369 = vst.msk [vmem:[#allocation4 + $0x8c] sm:$0xf] %vm2363, %v2360
        %2370 = vst.msk [vmem:[#allocation4 + $0xa8] sm:$0xf] %vm2363, %v2361
        %2371 = vst.msk [vmem:[#allocation4 + $0xc4] sm:$0xf] %vm2363, %v2362
        %v2372 = vld [vmem:[#allocation2 + $0x1] sm:$0xff]
        %v2373 = vld [vmem:[#allocation2 + $0x11] sm:$0xff]
        %v2374 = vld [vmem:[#allocation2 + $0x21] sm:$0xff]
        %v2375 = vld [vmem:[#allocation2 + $0x31] sm:$0xff]
        %v2376 = vld [vmem:[#allocation2 + $0x41] sm:$0xff]
        %v2377 = vld [vmem:[#allocation2 + $0x51] sm:$0xff]
        %v2378 = vld [vmem:[#allocation2 + $0x61] sm:$0xff]
        %v2379 = vld [vmem:[#allocation2 + $0x71] sm:$0xff]
        %v2380 = vpack.c.bf16 %v2372, %v2372
        %v2381 = vpack.c.bf16 %v2373, %v2373
        %v2382 = vpack.c.bf16 %v2374, %v2374
        %v2383 = vpack.c.bf16 %v2375, %v2375
        %v2384 = vpack.c.bf16 %v2376, %v2376
        %v2385 = vpack.c.bf16 %v2377, %v2377
        %v2386 = vpack.c.bf16 %v2378, %v2378
        %v2387 = vpack.c.bf16 %v2379, %v2379
        %2396 = vrot.lane.b32.xlu0 %v2380, 64
        %v2397 = vpop.permute.xlu0 %2396
        %2398 = vrot.lane.b32.xlu0 %v2381, 64
        %v2399 = vpop.permute.xlu0 %2398
        %2400 = vrot.lane.b32.xlu0 %v2382, 64
        %v2401 = vpop.permute.xlu0 %2400
        %2402 = vrot.lane.b32.xlu0 %v2383, 64
        %v2403 = vpop.permute.xlu0 %2402
        %2404 = vrot.lane.b32.xlu0 %v2384, 64
        %v2405 = vpop.permute.xlu0 %2404
        %2406 = vrot.lane.b32.xlu0 %v2385, 64
        %v2407 = vpop.permute.xlu0 %2406
        %2408 = vrot.lane.b32.xlu0 %v2386, 64
        %v2409 = vpop.permute.xlu0 %2408
        %2410 = vrot.lane.b32.xlu0 %v2387, 64
        %v2411 = vpop.permute.xlu0 %2410
        %vm2420 = vcmask 1043968
        %2421 = vst.msk [vmem:[#allocation4] sm:$0xf] %vm2420, %v2397
        %2422 = vst.msk [vmem:[#allocation4 + $0x1c] sm:$0xf] %vm2420, %v2399
        %2423 = vst.msk [vmem:[#allocation4 + $0x38] sm:$0xf] %vm2420, %v2401
        %2424 = vst.msk [vmem:[#allocation4 + $0x54] sm:$0xf] %vm2420, %v2403
        %2425 = vst.msk [vmem:[#allocation4 + $0x70] sm:$0xf] %vm2420, %v2405
        %2426 = vst.msk [vmem:[#allocation4 + $0x8c] sm:$0xf] %vm2420, %v2407
        %2427 = vst.msk [vmem:[#allocation4 + $0xa8] sm:$0xf] %vm2420, %v2409
        %2428 = vst.msk [vmem:[#allocation4 + $0xc4] sm:$0xf] %vm2420, %v2411
        %v2429 = vld [vmem:[#allocation2 + $0x2] sm:$0xff]
        %v2430 = vld [vmem:[#allocation2 + $0x12] sm:$0xff]
        %v2431 = vld [vmem:[#allocation2 + $0x22] sm:$0xff]
        %v2432 = vld [vmem:[#allocation2 + $0x32] sm:$0xff]
        %v2433 = vld [vmem:[#allocation2 + $0x42] sm:$0xff]
        %v2434 = vld [vmem:[#allocation2 + $0x52] sm:$0xff]
        %v2435 = vld [vmem:[#allocation2 + $0x62] sm:$0xff]
        %v2436 = vld [vmem:[#allocation2 + $0x72] sm:$0xff]
        %v2437 = vpack.c.bf16 %v2429, %v2429
        %v2438 = vpack.c.bf16 %v2430, %v2430
        %v2439 = vpack.c.bf16 %v2431, %v2431
        %v2440 = vpack.c.bf16 %v2432, %v2432
        %v2441 = vpack.c.bf16 %v2433, %v2433
        %v2442 = vpack.c.bf16 %v2434, %v2434
        %v2443 = vpack.c.bf16 %v2435, %v2435
        %v2444 = vpack.c.bf16 %v2436, %v2436
        %2445 = vst.msk [vmem:[#allocation4 + $0x4] sm:$0xf] %vm2363, %v2437
        %2446 = vst.msk [vmem:[#allocation4 + $0x20] sm:$0xf] %vm2363, %v2438
        %2447 = vst.msk [vmem:[#allocation4 + $0x3c] sm:$0xf] %vm2363, %v2439
        %2448 = vst.msk [vmem:[#allocation4 + $0x58] sm:$0xf] %vm2363, %v2440
        %2449 = vst.msk [vmem:[#allocation4 + $0x74] sm:$0xf] %vm2363, %v2441
        %2450 = vst.msk [vmem:[#allocation4 + $0x90] sm:$0xf] %vm2363, %v2442
        %2451 = vst.msk [vmem:[#allocation4 + $0xac] sm:$0xf] %vm2363, %v2443
        %2452 = vst.msk [vmem:[#allocation4 + $0xc8] sm:$0xf] %vm2363, %v2444
        %v2453 = vld [vmem:[%s2337] sm:$0xff]
        %v2454 = vld [vmem:[%s2337 + $0x10] sm:$0xff]
        %v2455 = vld [vmem:[%s2337 + $0x20] sm:$0xff]
        %v2456 = vld [vmem:[%s2337 + $0x30] sm:$0xff]
        %v2457 = vld [vmem:[%s2337 + $0x40] sm:$0xff]
        %v2458 = vld [vmem:[%s2337 + $0x50] sm:$0xff]
        %v2459 = vld [vmem:[%s2337 + $0x60] sm:$0xff]
        %v2460 = vld [vmem:[%s2337 + $0x70] sm:$0xff]
        %v2461 = vpack.c.bf16 %v2453, %v2453
        %v2462 = vpack.c.bf16 %v2454, %v2454
        %v2463 = vpack.c.bf16 %v2455, %v2455
        %v2464 = vpack.c.bf16 %v2456, %v2456
        %v2465 = vpack.c.bf16 %v2457, %v2457
        %v2466 = vpack.c.bf16 %v2458, %v2458
        %v2467 = vpack.c.bf16 %v2459, %v2459
        %v2468 = vpack.c.bf16 %v2460, %v2460
        %2477 = vrot.lane.b32.xlu0 %v2461, 64
        %v2478 = vpop.permute.xlu0 %2477
        %2479 = vrot.lane.b32.xlu0 %v2462, 64
        %v2480 = vpop.permute.xlu0 %2479
        %2481 = vrot.lane.b32.xlu0 %v2463, 64
        %v2482 = vpop.permute.xlu0 %2481
        %2483 = vrot.lane.b32.xlu0 %v2464, 64
        %v2484 = vpop.permute.xlu0 %2483
        %2485 = vrot.lane.b32.xlu0 %v2465, 64
        %v2486 = vpop.permute.xlu0 %2485
        %2487 = vrot.lane.b32.xlu0 %v2466, 64
        %v2488 = vpop.permute.xlu0 %2487
        %2489 = vrot.lane.b32.xlu0 %v2467, 64
        %v2490 = vpop.permute.xlu0 %2489
        %2491 = vrot.lane.b32.xlu0 %v2468, 64
        %v2492 = vpop.permute.xlu0 %2491
        %2501 = vst.msk [vmem:[#allocation4 + $0x4] sm:$0xf] %vm2420, %v2478
        %2502 = vst.msk [vmem:[#allocation4 + $0x20] sm:$0xf] %vm2420, %v2480
        %2503 = vst.msk [vmem:[#allocation4 + $0x3c] sm:$0xf] %vm2420, %v2482
        %2504 = vst.msk [vmem:[#allocation4 + $0x58] sm:$0xf] %vm2420, %v2484
        %2505 = vst.msk [vmem:[#allocation4 + $0x74] sm:$0xf] %vm2420, %v2486
        %2506 = vst.msk [vmem:[#allocation4 + $0x90] sm:$0xf] %vm2420, %v2488
        %2507 = vst.msk [vmem:[#allocation4 + $0xac] sm:$0xf] %vm2420, %v2490
        %2508 = vst.msk [vmem:[#allocation4 + $0xc8] sm:$0xf] %vm2420, %v2492
        %v2509 = vld [vmem:[%s2337 + $0x1] sm:$0xff]
        %v2510 = vld [vmem:[%s2337 + $0x11] sm:$0xff]
        %v2511 = vld [vmem:[%s2337 + $0x21] sm:$0xff]
        %v2512 = vld [vmem:[%s2337 + $0x31] sm:$0xff]
        %v2513 = vld [vmem:[%s2337 + $0x41] sm:$0xff]
        %v2514 = vld [vmem:[%s2337 + $0x51] sm:$0xff]
        %v2515 = vld [vmem:[%s2337 + $0x61] sm:$0xff]
        %v2516 = vld [vmem:[%s2337 + $0x71] sm:$0xff]
        %v2517 = vpack.c.bf16 %v2509, %v2509
        %v2518 = vpack.c.bf16 %v2510, %v2510
        %v2519 = vpack.c.bf16 %v2511, %v2511
        %v2520 = vpack.c.bf16 %v2512, %v2512
        %v2521 = vpack.c.bf16 %v2513, %v2513
        %v2522 = vpack.c.bf16 %v2514, %v2514
        %v2523 = vpack.c.bf16 %v2515, %v2515
        %v2524 = vpack.c.bf16 %v2516, %v2516
        %2525 = vst.msk [vmem:[#allocation4 + $0x8] sm:$0xf] %vm2363, %v2517
        %2526 = vst.msk [vmem:[#allocation4 + $0x24] sm:$0xf] %vm2363, %v2518
        %2527 = vst.msk [vmem:[#allocation4 + $0x40] sm:$0xf] %vm2363, %v2519
        %2528 = vst.msk [vmem:[#allocation4 + $0x5c] sm:$0xf] %vm2363, %v2520
        %2529 = vst.msk [vmem:[#allocation4 + $0x78] sm:$0xf] %vm2363, %v2521
        %2530 = vst.msk [vmem:[#allocation4 + $0x94] sm:$0xf] %vm2363, %v2522
        %2531 = vst.msk [vmem:[#allocation4 + $0xb0] sm:$0xf] %vm2363, %v2523
        %2532 = vst.msk [vmem:[#allocation4 + $0xcc] sm:$0xf] %vm2363, %v2524
        %v2533 = vld [vmem:[%s2337 + $0x2] sm:$0xff]
        %v2534 = vld [vmem:[%s2337 + $0x12] sm:$0xff]
        %v2535 = vld [vmem:[%s2337 + $0x22] sm:$0xff]
        %v2536 = vld [vmem:[%s2337 + $0x32] sm:$0xff]
        %v2537 = vld [vmem:[%s2337 + $0x42] sm:$0xff]
        %v2538 = vld [vmem:[%s2337 + $0x52] sm:$0xff]
        %v2539 = vld [vmem:[%s2337 + $0x62] sm:$0xff]
        %v2540 = vld [vmem:[%s2337 + $0x72] sm:$0xff]
        %v2541 = vpack.c.bf16 %v2533, %v2533
        %v2542 = vpack.c.bf16 %v2534, %v2534
        %v2543 = vpack.c.bf16 %v2535, %v2535
        %v2544 = vpack.c.bf16 %v2536, %v2536
        %v2545 = vpack.c.bf16 %v2537, %v2537
        %v2546 = vpack.c.bf16 %v2538, %v2538
        %v2547 = vpack.c.bf16 %v2539, %v2539
        %v2548 = vpack.c.bf16 %v2540, %v2540
        %2557 = vrot.lane.b32.xlu0 %v2541, 64
        %v2558 = vpop.permute.xlu0 %2557
        %2559 = vrot.lane.b32.xlu0 %v2542, 64
        %v2560 = vpop.permute.xlu0 %2559
        %2561 = vrot.lane.b32.xlu0 %v2543, 64
        %v2562 = vpop.permute.xlu0 %2561
        %2563 = vrot.lane.b32.xlu0 %v2544, 64
        %v2564 = vpop.permute.xlu0 %2563
        %2565 = vrot.lane.b32.xlu0 %v2545, 64
        %v2566 = vpop.permute.xlu0 %2565
        %2567 = vrot.lane.b32.xlu0 %v2546, 64
        %v2568 = vpop.permute.xlu0 %2567
        %2569 = vrot.lane.b32.xlu0 %v2547, 64
        %v2570 = vpop.permute.xlu0 %2569
        %2571 = vrot.lane.b32.xlu0 %v2548, 64
        %v2572 = vpop.permute.xlu0 %2571
        %2581 = vst.msk [vmem:[#allocation4 + $0x8] sm:$0xf] %vm2420, %v2558
        %2582 = vst.msk [vmem:[#allocation4 + $0x24] sm:$0xf] %vm2420, %v2560
        %2583 = vst.msk [vmem:[#allocation4 + $0x40] sm:$0xf] %vm2420, %v2562
        %2584 = vst.msk [vmem:[#allocation4 + $0x5c] sm:$0xf] %vm2420, %v2564
        %2585 = vst.msk [vmem:[#allocation4 + $0x78] sm:$0xf] %vm2420, %v2566
        %2586 = vst.msk [vmem:[#allocation4 + $0x94] sm:$0xf] %vm2420, %v2568
        %2587 = vst.msk [vmem:[#allocation4 + $0xb0] sm:$0xf] %vm2420, %v2570
        %2588 = vst.msk [vmem:[#allocation4 + $0xcc] sm:$0xf] %vm2420, %v2572
        %s2589 = scalar_lea.vmem [#allocation2], 32
        %v2590 = vld [vmem:[%s2589] sm:$0xff]
        %v2591 = vld [vmem:[%s2589 + $0x10] sm:$0xff]
        %v2592 = vld [vmem:[%s2589 + $0x20] sm:$0xff]
        %v2593 = vld [vmem:[%s2589 + $0x30] sm:$0xff]
        %v2594 = vld [vmem:[%s2589 + $0x40] sm:$0xff]
        %v2595 = vld [vmem:[%s2589 + $0x50] sm:$0xff]
        %v2596 = vld [vmem:[%s2589 + $0x60] sm:$0xff]
        %v2597 = vld [vmem:[%s2589 + $0x70] sm:$0xff]
        %v2598 = vpack.c.bf16 %v2590, %v2590
        %v2599 = vpack.c.bf16 %v2591, %v2591
        %v2600 = vpack.c.bf16 %v2592, %v2592
        %v2601 = vpack.c.bf16 %v2593, %v2593
        %v2602 = vpack.c.bf16 %v2594, %v2594
        %v2603 = vpack.c.bf16 %v2595, %v2595
        %v2604 = vpack.c.bf16 %v2596, %v2596
        %v2605 = vpack.c.bf16 %v2597, %v2597
        %2606 = vst.msk [vmem:[#allocation4 + $0xc] sm:$0xf] %vm2363, %v2598
        %2607 = vst.msk [vmem:[#allocation4 + $0x28] sm:$0xf] %vm2363, %v2599
        %2608 = vst.msk [vmem:[#allocation4 + $0x44] sm:$0xf] %vm2363, %v2600
        %2609 = vst.msk [vmem:[#allocation4 + $0x60] sm:$0xf] %vm2363, %v2601
        %2610 = vst.msk [vmem:[#allocation4 + $0x7c] sm:$0xf] %vm2363, %v2602
        %2611 = vst.msk [vmem:[#allocation4 + $0x98] sm:$0xf] %vm2363, %v2603
        %2612 = vst.msk [vmem:[#allocation4 + $0xb4] sm:$0xf] %vm2363, %v2604
        %2613 = vst.msk [vmem:[#allocation4 + $0xd0] sm:$0xf] %vm2363, %v2605
        %v2614 = vld [vmem:[%s2589 + $0x1] sm:$0xff]
        %v2615 = vld [vmem:[%s2589 + $0x11] sm:$0xff]
        %v2616 = vld [vmem:[%s2589 + $0x21] sm:$0xff]
        %v2617 = vld [vmem:[%s2589 + $0x31] sm:$0xff]
        %v2618 = vld [vmem:[%s2589 + $0x41] sm:$0xff]
        %v2619 = vld [vmem:[%s2589 + $0x51] sm:$0xff]
        %v2620 = vld [vmem:[%s2589 + $0x61] sm:$0xff]
        %v2621 = vld [vmem:[%s2589 + $0x71] sm:$0xff]
        %v2622 = vpack.c.bf16 %v2614, %v2614
        %v2623 = vpack.c.bf16 %v2615, %v2615
        %v2624 = vpack.c.bf16 %v2616, %v2616
        %v2625 = vpack.c.bf16 %v2617, %v2617
        %v2626 = vpack.c.bf16 %v2618, %v2618
        %v2627 = vpack.c.bf16 %v2619, %v2619
        %v2628 = vpack.c.bf16 %v2620, %v2620
        %v2629 = vpack.c.bf16 %v2621, %v2621
        %2638 = vrot.lane.b32.xlu0 %v2622, 64
        %v2639 = vpop.permute.xlu0 %2638
        %2640 = vrot.lane.b32.xlu0 %v2623, 64
        %v2641 = vpop.permute.xlu0 %2640
        %2642 = vrot.lane.b32.xlu0 %v2624, 64
        %v2643 = vpop.permute.xlu0 %2642
        %2644 = vrot.lane.b32.xlu0 %v2625, 64
        %v2645 = vpop.permute.xlu0 %2644
        %2646 = vrot.lane.b32.xlu0 %v2626, 64
        %v2647 = vpop.permute.xlu0 %2646
        %2648 = vrot.lane.b32.xlu0 %v2627, 64
        %v2649 = vpop.permute.xlu0 %2648
        %2650 = vrot.lane.b32.xlu0 %v2628, 64
        %v2651 = vpop.permute.xlu0 %2650
        %2652 = vrot.lane.b32.xlu0 %v2629, 64
        %v2653 = vpop.permute.xlu0 %2652
        %2662 = vst.msk [vmem:[#allocation4 + $0xc] sm:$0xf] %vm2420, %v2639
        %2663 = vst.msk [vmem:[#allocation4 + $0x28] sm:$0xf] %vm2420, %v2641
        %2664 = vst.msk [vmem:[#allocation4 + $0x44] sm:$0xf] %vm2420, %v2643
        %2665 = vst.msk [vmem:[#allocation4 + $0x60] sm:$0xf] %vm2420, %v2645
        %2666 = vst.msk [vmem:[#allocation4 + $0x7c] sm:$0xf] %vm2420, %v2647
        %2667 = vst.msk [vmem:[#allocation4 + $0x98] sm:$0xf] %vm2420, %v2649
        %2668 = vst.msk [vmem:[#allocation4 + $0xb4] sm:$0xf] %vm2420, %v2651
        %2669 = vst.msk [vmem:[#allocation4 + $0xd0] sm:$0xf] %vm2420, %v2653
        %v2670 = vld [vmem:[%s2589 + $0x2] sm:$0xff]
        %v2671 = vld [vmem:[%s2589 + $0x12] sm:$0xff]
        %v2672 = vld [vmem:[%s2589 + $0x22] sm:$0xff]
        %v2673 = vld [vmem:[%s2589 + $0x32] sm:$0xff]
        %v2674 = vld [vmem:[%s2589 + $0x42] sm:$0xff]
        %v2675 = vld [vmem:[%s2589 + $0x52] sm:$0xff]
        %v2676 = vld [vmem:[%s2589 + $0x62] sm:$0xff]
        %v2677 = vld [vmem:[%s2589 + $0x72] sm:$0xff]
        %v2678 = vpack.c.bf16 %v2670, %v2670
        %v2679 = vpack.c.bf16 %v2671, %v2671
        %v2680 = vpack.c.bf16 %v2672, %v2672
        %v2681 = vpack.c.bf16 %v2673, %v2673
        %v2682 = vpack.c.bf16 %v2674, %v2674
        %v2683 = vpack.c.bf16 %v2675, %v2675
        %v2684 = vpack.c.bf16 %v2676, %v2676
        %v2685 = vpack.c.bf16 %v2677, %v2677
        %2686 = vst.msk [vmem:[#allocation4 + $0x10] sm:$0xf] %vm2363, %v2678
        %2687 = vst.msk [vmem:[#allocation4 + $0x2c] sm:$0xf] %vm2363, %v2679
        %2688 = vst.msk [vmem:[#allocation4 + $0x48] sm:$0xf] %vm2363, %v2680
        %2689 = vst.msk [vmem:[#allocation4 + $0x64] sm:$0xf] %vm2363, %v2681
        %2690 = vst.msk [vmem:[#allocation4 + $0x80] sm:$0xf] %vm2363, %v2682
        %2691 = vst.msk [vmem:[#allocation4 + $0x9c] sm:$0xf] %vm2363, %v2683
        %2692 = vst.msk [vmem:[#allocation4 + $0xb8] sm:$0xf] %vm2363, %v2684
        %2693 = vst.msk [vmem:[#allocation4 + $0xd4] sm:$0xf] %vm2363, %v2685
        %2694 = vst.msk [vmem:[%s2337 + $0x1] sm:$0xff] %vm2338, %v1846
        %2695 = vst.msk [vmem:[%s2337 + $0x11] sm:$0xff] %vm2338, %v1849
        %2696 = vst.msk [vmem:[%s2337 + $0x21] sm:$0xff] %vm2338, %v1852
        %2697 = vst.msk [vmem:[%s2337 + $0x31] sm:$0xff] %vm2338, %v1855
        %2698 = vst.msk [vmem:[%s2337 + $0x41] sm:$0xff] %vm2338, %v1858
        %2699 = vst.msk [vmem:[%s2337 + $0x51] sm:$0xff] %vm2338, %v1861
        %2700 = vst.msk [vmem:[%s2337 + $0x61] sm:$0xff] %vm2338, %v1864
        %2701 = vst.msk [vmem:[%s2337 + $0x71] sm:$0xff] %vm2338, %v1867
        %v2702 = vld [vmem:[#allocation2] sm:$0xff]
        %v2703 = vld [vmem:[#allocation2 + $0x10] sm:$0xff]
        %v2704 = vld [vmem:[#allocation2 + $0x20] sm:$0xff]
        %v2705 = vld [vmem:[#allocation2 + $0x30] sm:$0xff]
        %v2706 = vld [vmem:[#allocation2 + $0x40] sm:$0xff]
        %v2707 = vld [vmem:[#allocation2 + $0x50] sm:$0xff]
        %v2708 = vld [vmem:[#allocation2 + $0x60] sm:$0xff]
        %v2709 = vld [vmem:[#allocation2 + $0x70] sm:$0xff]
        %v2710 = vpack.c.bf16 %v2702, %v2702
        %v2711 = vpack.c.bf16 %v2703, %v2703
        %v2712 = vpack.c.bf16 %v2704, %v2704
        %v2713 = vpack.c.bf16 %v2705, %v2705
        %v2714 = vpack.c.bf16 %v2706, %v2706
        %v2715 = vpack.c.bf16 %v2707, %v2707
        %v2716 = vpack.c.bf16 %v2708, %v2708
        %v2717 = vpack.c.bf16 %v2709, %v2709
        %s2718 = scalar_lea.vmem [#allocation4], 224
        %2719 = vst.msk [vmem:[%s2718] sm:$0xf] %vm2363, %v2710
        %2720 = vst.msk [vmem:[%s2718 + $0x1c] sm:$0xf] %vm2363, %v2711
        %2721 = vst.msk [vmem:[%s2718 + $0x38] sm:$0xf] %vm2363, %v2712
        %2722 = vst.msk [vmem:[%s2718 + $0x54] sm:$0xf] %vm2363, %v2713
        %2723 = vst.msk [vmem:[%s2718 + $0x70] sm:$0xf] %vm2363, %v2714
        %2724 = vst.msk [vmem:[%s2718 + $0x8c] sm:$0xf] %vm2363, %v2715
        %2725 = vst.msk [vmem:[%s2718 + $0xa8] sm:$0xf] %vm2363, %v2716
        %2726 = vst.msk [vmem:[%s2718 + $0xc4] sm:$0xf] %vm2363, %v2717
        %v2727 = vld [vmem:[#allocation2 + $0x1] sm:$0xff]
        %v2728 = vld [vmem:[#allocation2 + $0x11] sm:$0xff]
        %v2729 = vld [vmem:[#allocation2 + $0x21] sm:$0xff]
        %v2730 = vld [vmem:[#allocation2 + $0x31] sm:$0xff]
        %v2731 = vld [vmem:[#allocation2 + $0x41] sm:$0xff]
        %v2732 = vld [vmem:[#allocation2 + $0x51] sm:$0xff]
        %v2733 = vld [vmem:[#allocation2 + $0x61] sm:$0xff]
        %v2734 = vld [vmem:[#allocation2 + $0x71] sm:$0xff]
        %v2735 = vpack.c.bf16 %v2727, %v2727
        %v2736 = vpack.c.bf16 %v2728, %v2728
        %v2737 = vpack.c.bf16 %v2729, %v2729
        %v2738 = vpack.c.bf16 %v2730, %v2730
        %v2739 = vpack.c.bf16 %v2731, %v2731
        %v2740 = vpack.c.bf16 %v2732, %v2732
        %v2741 = vpack.c.bf16 %v2733, %v2733
        %v2742 = vpack.c.bf16 %v2734, %v2734
        %2751 = vrot.lane.b32.xlu0 %v2735, 64
        %v2752 = vpop.permute.xlu0 %2751
        %2753 = vrot.lane.b32.xlu0 %v2736, 64
        %v2754 = vpop.permute.xlu0 %2753
        %2755 = vrot.lane.b32.xlu0 %v2737, 64
        %v2756 = vpop.permute.xlu0 %2755
        %2757 = vrot.lane.b32.xlu0 %v2738, 64
        %v2758 = vpop.permute.xlu0 %2757
        %2759 = vrot.lane.b32.xlu0 %v2739, 64
        %v2760 = vpop.permute.xlu0 %2759
        %2761 = vrot.lane.b32.xlu0 %v2740, 64
        %v2762 = vpop.permute.xlu0 %2761
        %2763 = vrot.lane.b32.xlu0 %v2741, 64
        %v2764 = vpop.permute.xlu0 %2763
        %2765 = vrot.lane.b32.xlu0 %v2742, 64
        %v2766 = vpop.permute.xlu0 %2765
        %2775 = vst.msk [vmem:[%s2718] sm:$0xf] %vm2420, %v2752
        %2776 = vst.msk [vmem:[%s2718 + $0x1c] sm:$0xf] %vm2420, %v2754
        %2777 = vst.msk [vmem:[%s2718 + $0x38] sm:$0xf] %vm2420, %v2756
        %2778 = vst.msk [vmem:[%s2718 + $0x54] sm:$0xf] %vm2420, %v2758
        %2779 = vst.msk [vmem:[%s2718 + $0x70] sm:$0xf] %vm2420, %v2760
        %2780 = vst.msk [vmem:[%s2718 + $0x8c] sm:$0xf] %vm2420, %v2762
        %2781 = vst.msk [vmem:[%s2718 + $0xa8] sm:$0xf] %vm2420, %v2764
        %2782 = vst.msk [vmem:[%s2718 + $0xc4] sm:$0xf] %vm2420, %v2766
        %v2783 = vld [vmem:[#allocation2 + $0x2] sm:$0xff]
        %v2784 = vld [vmem:[#allocation2 + $0x12] sm:$0xff]
        %v2785 = vld [vmem:[#allocation2 + $0x22] sm:$0xff]
        %v2786 = vld [vmem:[#allocation2 + $0x32] sm:$0xff]
        %v2787 = vld [vmem:[#allocation2 + $0x42] sm:$0xff]
        %v2788 = vld [vmem:[#allocation2 + $0x52] sm:$0xff]
        %v2789 = vld [vmem:[#allocation2 + $0x62] sm:$0xff]
        %v2790 = vld [vmem:[#allocation2 + $0x72] sm:$0xff]
        %v2791 = vpack.c.bf16 %v2783, %v2783
        %v2792 = vpack.c.bf16 %v2784, %v2784
        %v2793 = vpack.c.bf16 %v2785, %v2785
        %v2794 = vpack.c.bf16 %v2786, %v2786
        %v2795 = vpack.c.bf16 %v2787, %v2787
        %v2796 = vpack.c.bf16 %v2788, %v2788
        %v2797 = vpack.c.bf16 %v2789, %v2789
        %v2798 = vpack.c.bf16 %v2790, %v2790
        %2799 = vst.msk [vmem:[%s2718 + $0x4] sm:$0xf] %vm2363, %v2791
        %2800 = vst.msk [vmem:[%s2718 + $0x20] sm:$0xf] %vm2363, %v2792
        %2801 = vst.msk [vmem:[%s2718 + $0x3c] sm:$0xf] %vm2363, %v2793
        %2802 = vst.msk [vmem:[%s2718 + $0x58] sm:$0xf] %vm2363, %v2794
        %2803 = vst.msk [vmem:[%s2718 + $0x74] sm:$0xf] %vm2363, %v2795
        %2804 = vst.msk [vmem:[%s2718 + $0x90] sm:$0xf] %vm2363, %v2796
        %2805 = vst.msk [vmem:[%s2718 + $0xac] sm:$0xf] %vm2363, %v2797
        %2806 = vst.msk [vmem:[%s2718 + $0xc8] sm:$0xf] %vm2363, %v2798
        %v2807 = vld [vmem:[%s2337] sm:$0xff]
        %v2808 = vld [vmem:[%s2337 + $0x10] sm:$0xff]
        %v2809 = vld [vmem:[%s2337 + $0x20] sm:$0xff]
        %v2810 = vld [vmem:[%s2337 + $0x30] sm:$0xff]
        %v2811 = vld [vmem:[%s2337 + $0x40] sm:$0xff]
        %v2812 = vld [vmem:[%s2337 + $0x50] sm:$0xff]
        %v2813 = vld [vmem:[%s2337 + $0x60] sm:$0xff]
        %v2814 = vld [vmem:[%s2337 + $0x70] sm:$0xff]
        %v2815 = vpack.c.bf16 %v2807, %v2807
        %v2816 = vpack.c.bf16 %v2808, %v2808
        %v2817 = vpack.c.bf16 %v2809, %v2809
        %v2818 = vpack.c.bf16 %v2810, %v2810
        %v2819 = vpack.c.bf16 %v2811, %v2811
        %v2820 = vpack.c.bf16 %v2812, %v2812
        %v2821 = vpack.c.bf16 %v2813, %v2813
        %v2822 = vpack.c.bf16 %v2814, %v2814
        %2831 = vrot.lane.b32.xlu0 %v2815, 64
        %v2832 = vpop.permute.xlu0 %2831
        %2833 = vrot.lane.b32.xlu0 %v2816, 64
        %v2834 = vpop.permute.xlu0 %2833
        %2835 = vrot.lane.b32.xlu0 %v2817, 64
        %v2836 = vpop.permute.xlu0 %2835
        %2837 = vrot.lane.b32.xlu0 %v2818, 64
        %v2838 = vpop.permute.xlu0 %2837
        %2839 = vrot.lane.b32.xlu0 %v2819, 64
        %v2840 = vpop.permute.xlu0 %2839
        %2841 = vrot.lane.b32.xlu0 %v2820, 64
        %v2842 = vpop.permute.xlu0 %2841
        %2843 = vrot.lane.b32.xlu0 %v2821, 64
        %v2844 = vpop.permute.xlu0 %2843
        %2845 = vrot.lane.b32.xlu0 %v2822, 64
        %v2846 = vpop.permute.xlu0 %2845
        %2855 = vst.msk [vmem:[%s2718 + $0x4] sm:$0xf] %vm2420, %v2832
        %2856 = vst.msk [vmem:[%s2718 + $0x20] sm:$0xf] %vm2420, %v2834
        %2857 = vst.msk [vmem:[%s2718 + $0x3c] sm:$0xf] %vm2420, %v2836
        %2858 = vst.msk [vmem:[%s2718 + $0x58] sm:$0xf] %vm2420, %v2838
        %2859 = vst.msk [vmem:[%s2718 + $0x74] sm:$0xf] %vm2420, %v2840
        %2860 = vst.msk [vmem:[%s2718 + $0x90] sm:$0xf] %vm2420, %v2842
        %2861 = vst.msk [vmem:[%s2718 + $0xac] sm:$0xf] %vm2420, %v2844
        %2862 = vst.msk [vmem:[%s2718 + $0xc8] sm:$0xf] %vm2420, %v2846
        %v2863 = vld [vmem:[%s2337 + $0x1] sm:$0xff]
        %v2864 = vld [vmem:[%s2337 + $0x11] sm:$0xff]
        %v2865 = vld [vmem:[%s2337 + $0x21] sm:$0xff]
        %v2866 = vld [vmem:[%s2337 + $0x31] sm:$0xff]
        %v2867 = vld [vmem:[%s2337 + $0x41] sm:$0xff]
        %v2868 = vld [vmem:[%s2337 + $0x51] sm:$0xff]
        %v2869 = vld [vmem:[%s2337 + $0x61] sm:$0xff]
        %v2870 = vld [vmem:[%s2337 + $0x71] sm:$0xff]
        %v2871 = vpack.c.bf16 %v2863, %v2863
        %v2872 = vpack.c.bf16 %v2864, %v2864
        %v2873 = vpack.c.bf16 %v2865, %v2865
        %v2874 = vpack.c.bf16 %v2866, %v2866
        %v2875 = vpack.c.bf16 %v2867, %v2867
        %v2876 = vpack.c.bf16 %v2868, %v2868
        %v2877 = vpack.c.bf16 %v2869, %v2869
        %v2878 = vpack.c.bf16 %v2870, %v2870
        %2879 = vst.msk [vmem:[%s2718 + $0x8] sm:$0xf] %vm2363, %v2871
        %2880 = vst.msk [vmem:[%s2718 + $0x24] sm:$0xf] %vm2363, %v2872
        %2881 = vst.msk [vmem:[%s2718 + $0x40] sm:$0xf] %vm2363, %v2873
        %2882 = vst.msk [vmem:[%s2718 + $0x5c] sm:$0xf] %vm2363, %v2874
        %2883 = vst.msk [vmem:[%s2718 + $0x78] sm:$0xf] %vm2363, %v2875
        %2884 = vst.msk [vmem:[%s2718 + $0x94] sm:$0xf] %vm2363, %v2876
        %2885 = vst.msk [vmem:[%s2718 + $0xb0] sm:$0xf] %vm2363, %v2877
        %2886 = vst.msk [vmem:[%s2718 + $0xcc] sm:$0xf] %vm2363, %v2878
        %v2887 = vld [vmem:[%s2337 + $0x2] sm:$0xff]
        %v2888 = vld [vmem:[%s2337 + $0x12] sm:$0xff]
        %v2889 = vld [vmem:[%s2337 + $0x22] sm:$0xff]
        %v2890 = vld [vmem:[%s2337 + $0x32] sm:$0xff]
        %v2891 = vld [vmem:[%s2337 + $0x42] sm:$0xff]
        %v2892 = vld [vmem:[%s2337 + $0x52] sm:$0xff]
        %v2893 = vld [vmem:[%s2337 + $0x62] sm:$0xff]
        %v2894 = vld [vmem:[%s2337 + $0x72] sm:$0xff]
        %v2895 = vpack.c.bf16 %v2887, %v2887
        %v2896 = vpack.c.bf16 %v2888, %v2888
        %v2897 = vpack.c.bf16 %v2889, %v2889
        %v2898 = vpack.c.bf16 %v2890, %v2890
        %v2899 = vpack.c.bf16 %v2891, %v2891
        %v2900 = vpack.c.bf16 %v2892, %v2892
        %v2901 = vpack.c.bf16 %v2893, %v2893
        %v2902 = vpack.c.bf16 %v2894, %v2894
        %2911 = vrot.lane.b32.xlu0 %v2895, 64
        %v2912 = vpop.permute.xlu0 %2911
        %2913 = vrot.lane.b32.xlu0 %v2896, 64
        %v2914 = vpop.permute.xlu0 %2913
        %2915 = vrot.lane.b32.xlu0 %v2897, 64
        %v2916 = vpop.permute.xlu0 %2915
        %2917 = vrot.lane.b32.xlu0 %v2898, 64
        %v2918 = vpop.permute.xlu0 %2917
        %2919 = vrot.lane.b32.xlu0 %v2899, 64
        %v2920 = vpop.permute.xlu0 %2919
        %2921 = vrot.lane.b32.xlu0 %v2900, 64
        %v2922 = vpop.permute.xlu0 %2921
        %2923 = vrot.lane.b32.xlu0 %v2901, 64
        %v2924 = vpop.permute.xlu0 %2923
        %2925 = vrot.lane.b32.xlu0 %v2902, 64
        %v2926 = vpop.permute.xlu0 %2925
        %2935 = vst.msk [vmem:[%s2718 + $0x8] sm:$0xf] %vm2420, %v2912
        %2936 = vst.msk [vmem:[%s2718 + $0x24] sm:$0xf] %vm2420, %v2914
        %2937 = vst.msk [vmem:[%s2718 + $0x40] sm:$0xf] %vm2420, %v2916
        %2938 = vst.msk [vmem:[%s2718 + $0x5c] sm:$0xf] %vm2420, %v2918
        %2939 = vst.msk [vmem:[%s2718 + $0x78] sm:$0xf] %vm2420, %v2920
        %2940 = vst.msk [vmem:[%s2718 + $0x94] sm:$0xf] %vm2420, %v2922
        %2941 = vst.msk [vmem:[%s2718 + $0xb0] sm:$0xf] %vm2420, %v2924
        %2942 = vst.msk [vmem:[%s2718 + $0xcc] sm:$0xf] %vm2420, %v2926
        %v2943 = vld [vmem:[%s2589] sm:$0xff]
        %v2944 = vld [vmem:[%s2589 + $0x10] sm:$0xff]
        %v2945 = vld [vmem:[%s2589 + $0x20] sm:$0xff]
        %v2946 = vld [vmem:[%s2589 + $0x30] sm:$0xff]
        %v2947 = vld [vmem:[%s2589 + $0x40] sm:$0xff]
        %v2948 = vld [vmem:[%s2589 + $0x50] sm:$0xff]
        %v2949 = vld [vmem:[%s2589 + $0x60] sm:$0xff]
        %v2950 = vld [vmem:[%s2589 + $0x70] sm:$0xff]
        %v2951 = vpack.c.bf16 %v2943, %v2943
        %v2952 = vpack.c.bf16 %v2944, %v2944
        %v2953 = vpack.c.bf16 %v2945, %v2945
        %v2954 = vpack.c.bf16 %v2946, %v2946
        %v2955 = vpack.c.bf16 %v2947, %v2947
        %v2956 = vpack.c.bf16 %v2948, %v2948
        %v2957 = vpack.c.bf16 %v2949, %v2949
        %v2958 = vpack.c.bf16 %v2950, %v2950
        %2959 = vst.msk [vmem:[%s2718 + $0xc] sm:$0xf] %vm2363, %v2951
        %2960 = vst.msk [vmem:[%s2718 + $0x28] sm:$0xf] %vm2363, %v2952
        %2961 = vst.msk [vmem:[%s2718 + $0x44] sm:$0xf] %vm2363, %v2953
        %2962 = vst.msk [vmem:[%s2718 + $0x60] sm:$0xf] %vm2363, %v2954
        %2963 = vst.msk [vmem:[%s2718 + $0x7c] sm:$0xf] %vm2363, %v2955
        %2964 = vst.msk [vmem:[%s2718 + $0x98] sm:$0xf] %vm2363, %v2956
        %2965 = vst.msk [vmem:[%s2718 + $0xb4] sm:$0xf] %vm2363, %v2957
        %2966 = vst.msk [vmem:[%s2718 + $0xd0] sm:$0xf] %vm2363, %v2958
        %v2967 = vld [vmem:[%s2589 + $0x1] sm:$0xff]
        %v2968 = vld [vmem:[%s2589 + $0x11] sm:$0xff]
        %v2969 = vld [vmem:[%s2589 + $0x21] sm:$0xff]
        %v2970 = vld [vmem:[%s2589 + $0x31] sm:$0xff]
        %v2971 = vld [vmem:[%s2589 + $0x41] sm:$0xff]
        %v2972 = vld [vmem:[%s2589 + $0x51] sm:$0xff]
        %v2973 = vld [vmem:[%s2589 + $0x61] sm:$0xff]
        %v2974 = vld [vmem:[%s2589 + $0x71] sm:$0xff]
        %v2975 = vpack.c.bf16 %v2967, %v2967
        %v2976 = vpack.c.bf16 %v2968, %v2968
        %v2977 = vpack.c.bf16 %v2969, %v2969
        %v2978 = vpack.c.bf16 %v2970, %v2970
        %v2979 = vpack.c.bf16 %v2971, %v2971
        %v2980 = vpack.c.bf16 %v2972, %v2972
        %v2981 = vpack.c.bf16 %v2973, %v2973
        %v2982 = vpack.c.bf16 %v2974, %v2974
        %2991 = vrot.lane.b32.xlu0 %v2975, 64
        %v2992 = vpop.permute.xlu0 %2991
        %2993 = vrot.lane.b32.xlu0 %v2976, 64
        %v2994 = vpop.permute.xlu0 %2993
        %2995 = vrot.lane.b32.xlu0 %v2977, 64
        %v2996 = vpop.permute.xlu0 %2995
        %2997 = vrot.lane.b32.xlu0 %v2978, 64
        %v2998 = vpop.permute.xlu0 %2997
        %2999 = vrot.lane.b32.xlu0 %v2979, 64
        %v3000 = vpop.permute.xlu0 %2999
        %3001 = vrot.lane.b32.xlu0 %v2980, 64
        %v3002 = vpop.permute.xlu0 %3001
        %3003 = vrot.lane.b32.xlu0 %v2981, 64
        %v3004 = vpop.permute.xlu0 %3003
        %3005 = vrot.lane.b32.xlu0 %v2982, 64
        %v3006 = vpop.permute.xlu0 %3005
        %3015 = vst.msk [vmem:[%s2718 + $0xc] sm:$0xf] %vm2420, %v2992
        %3016 = vst.msk [vmem:[%s2718 + $0x28] sm:$0xf] %vm2420, %v2994
        %3017 = vst.msk [vmem:[%s2718 + $0x44] sm:$0xf] %vm2420, %v2996
        %3018 = vst.msk [vmem:[%s2718 + $0x60] sm:$0xf] %vm2420, %v2998
        %3019 = vst.msk [vmem:[%s2718 + $0x7c] sm:$0xf] %vm2420, %v3000
        %3020 = vst.msk [vmem:[%s2718 + $0x98] sm:$0xf] %vm2420, %v3002
        %3021 = vst.msk [vmem:[%s2718 + $0xb4] sm:$0xf] %vm2420, %v3004
        %3022 = vst.msk [vmem:[%s2718 + $0xd0] sm:$0xf] %vm2420, %v3006
        %v3023 = vld [vmem:[%s2589 + $0x2] sm:$0xff]
        %v3024 = vld [vmem:[%s2589 + $0x12] sm:$0xff]
        %v3025 = vld [vmem:[%s2589 + $0x22] sm:$0xff]
        %v3026 = vld [vmem:[%s2589 + $0x32] sm:$0xff]
        %v3027 = vld [vmem:[%s2589 + $0x42] sm:$0xff]
        %v3028 = vld [vmem:[%s2589 + $0x52] sm:$0xff]
        %v3029 = vld [vmem:[%s2589 + $0x62] sm:$0xff]
        %v3030 = vld [vmem:[%s2589 + $0x72] sm:$0xff]
        %v3031 = vpack.c.bf16 %v3023, %v3023
        %v3032 = vpack.c.bf16 %v3024, %v3024
        %v3033 = vpack.c.bf16 %v3025, %v3025
        %v3034 = vpack.c.bf16 %v3026, %v3026
        %v3035 = vpack.c.bf16 %v3027, %v3027
        %v3036 = vpack.c.bf16 %v3028, %v3028
        %v3037 = vpack.c.bf16 %v3029, %v3029
        %v3038 = vpack.c.bf16 %v3030, %v3030
        %3039 = vst.msk [vmem:[%s2718 + $0x10] sm:$0xf] %vm2363, %v3031
        %3040 = vst.msk [vmem:[%s2718 + $0x2c] sm:$0xf] %vm2363, %v3032
        %3041 = vst.msk [vmem:[%s2718 + $0x48] sm:$0xf] %vm2363, %v3033
        %3042 = vst.msk [vmem:[%s2718 + $0x64] sm:$0xf] %vm2363, %v3034
        %3043 = vst.msk [vmem:[%s2718 + $0x80] sm:$0xf] %vm2363, %v3035
        %3044 = vst.msk [vmem:[%s2718 + $0x9c] sm:$0xf] %vm2363, %v3036
        %3045 = vst.msk [vmem:[%s2718 + $0xb8] sm:$0xf] %vm2363, %v3037
        %3046 = vst.msk [vmem:[%s2718 + $0xd4] sm:$0xf] %vm2363, %v3038
        %v3047 = vld [vmem:[#allocation4] sm:$0xff]
        %v3048 = vld [vmem:[#allocation4 + $0x8] sm:$0xff]
        %v3049 = vld [vmem:[#allocation4 + $0x10] sm:$0xf]
        %v3050 = vld [vmem:[#allocation4 + $0x1c] sm:$0xff]
        %v3051 = vld [vmem:[#allocation4 + $0x24] sm:$0xff]
        %v3052 = vld [vmem:[#allocation4 + $0x2c] sm:$0xf]
        %v3053 = vld [vmem:[#allocation4 + $0x38] sm:$0xff]
        %v3054 = vld [vmem:[#allocation4 + $0x40] sm:$0xff]
        %v3055 = vld [vmem:[#allocation4 + $0x48] sm:$0xf]
        %v3056 = vld [vmem:[#allocation4 + $0x54] sm:$0xff]
        %v3057 = vld [vmem:[#allocation4 + $0x5c] sm:$0xff]
        %v3058 = vld [vmem:[#allocation4 + $0x64] sm:$0xf]
        %v3059 = vld [vmem:[#allocation4 + $0x70] sm:$0xff]
        %v3060 = vld [vmem:[#allocation4 + $0x78] sm:$0xff]
        %v3061 = vld [vmem:[#allocation4 + $0x80] sm:$0xf]
        %v3062 = vld [vmem:[#allocation4 + $0x8c] sm:$0xff]
        %v3063 = vld [vmem:[#allocation4 + $0x94] sm:$0xff]
        %v3064 = vld [vmem:[#allocation4 + $0x9c] sm:$0xf]
        %v3065 = vld [vmem:[#allocation4 + $0xa8] sm:$0xff]
        %v3066 = vld [vmem:[#allocation4 + $0xb0] sm:$0xff]
        %v3067 = vld [vmem:[#allocation4 + $0xb8] sm:$0xf]
        %v3068 = vld [vmem:[#allocation4 + $0xc4] sm:$0xff]
        %v3069 = vld [vmem:[#allocation4 + $0xcc] sm:$0xff]
        %v3070 = vld [vmem:[#allocation4 + $0xd4] sm:$0xf]
        %v3071 = vld [vmem:[#allocation4 + $0xe0] sm:$0xff]
        %v3072 = vld [vmem:[#allocation4 + $0xe8] sm:$0xff]
        %v3073 = vld [vmem:[#allocation4 + $0xf0] sm:$0xf]
        %v3074 = vld [vmem:[#allocation4 + $0xfc] sm:$0xff]
        %v3075 = vld [vmem:[#allocation4 + $0x104] sm:$0xff]
        %v3076 = vld [vmem:[#allocation4 + $0x10c] sm:$0xf]
        %v3077 = vld [vmem:[#allocation4 + $0x118] sm:$0xff]
        %v3078 = vld [vmem:[#allocation4 + $0x120] sm:$0xff]
        %v3079 = vld [vmem:[#allocation4 + $0x128] sm:$0xf]
        %v3080 = vld [vmem:[#allocation4 + $0x134] sm:$0xff]
        %v3081 = vld [vmem:[#allocation4 + $0x13c] sm:$0xff]
        %v3082 = vld [vmem:[#allocation4 + $0x144] sm:$0xf]
        %v3083 = vld [vmem:[#allocation4 + $0x150] sm:$0xff]
        %v3084 = vld [vmem:[#allocation4 + $0x158] sm:$0xff]
        %v3085 = vld [vmem:[#allocation4 + $0x160] sm:$0xf]
        %v3086 = vld [vmem:[#allocation4 + $0x16c] sm:$0xff]
        %v3087 = vld [vmem:[#allocation4 + $0x174] sm:$0xff]
        %v3088 = vld [vmem:[#allocation4 + $0x17c] sm:$0xf]
        %v3089 = vld [vmem:[#allocation4 + $0x188] sm:$0xff]
        %v3090 = vld [vmem:[#allocation4 + $0x190] sm:$0xff]
        %v3091 = vld [vmem:[#allocation4 + $0x198] sm:$0xf]
        %v3092 = vld [vmem:[#allocation4 + $0x1a4] sm:$0xff]
        %v3093 = vld [vmem:[#allocation4 + $0x1ac] sm:$0xff]
        %v3094 = vld [vmem:[#allocation4 + $0x1b4] sm:$0xf]
        %v3095 = vld [vmem:[%s4] sm:$0xf]
        %v3096 = vld [vmem:[%s4 + $0x4] sm:$0xf]
        %v3097 = vld [vmem:[%s4 + $0x8] sm:$0xf]
        %v3098 = vld [vmem:[%s4 + $0xc] sm:$0xf]
        %v3099 = vld [vmem:[%s4 + $0x10] sm:$0xf]
        %v3100 = vld [vmem:[%s4 + $0x14] sm:$0xf]
        %v3101 = vld [vmem:[%s4 + $0x18] sm:$0xf]
        %v3102 = vld [vmem:[%s4 + $0x1c] sm:$0xf]
        %v3103 = vld [vmem:[%s4 + $0x20] sm:$0xf]
        %v3104 = vld [vmem:[%s4 + $0x24] sm:$0xf]
        %v3105 = vld [vmem:[%s4 + $0x28] sm:$0xf]
        %v3106 = vld [vmem:[%s4 + $0x2c] sm:$0xf]
        %v3107 = vld [vmem:[%s4 + $0x30] sm:$0xf]
        %v3108 = vld [vmem:[%s4 + $0x34] sm:$0xf]
        %v3109 = vld [vmem:[%s4 + $0x38] sm:$0xf]
        %v3110 = vld [vmem:[%s4 + $0x3c] sm:$0xf]
        %v3111 = vld [vmem:[%s4 + $0x40] sm:$0xf]
        %v3112 = vld [vmem:[%s4 + $0x44] sm:$0xf]
        %v3113 = vld [vmem:[%s4 + $0x48] sm:$0xf]
        %v3114 = vld [vmem:[%s4 + $0x4c] sm:$0xf]
        %v3115 = vld [vmem:[%s4 + $0x50] sm:$0xf]
        %v3116 = vld [vmem:[%s4 + $0x54] sm:$0xf]
        %v3117 = vld [vmem:[%s4 + $0x58] sm:$0xf]
        %v3118 = vld [vmem:[%s4 + $0x5c] sm:$0xf]
        %v3119 = vld [vmem:[%s4 + $0x60] sm:$0xf]
        %v3120 = vld [vmem:[%s4 + $0x64] sm:$0xf]
        %v3121 = vld [vmem:[%s4 + $0x68] sm:$0xf]
        %v3122 = vld [vmem:[%s4 + $0x6c] sm:$0xf]
        %v3123 = vld [vmem:[%s4 + $0x70] sm:$0xf]
        %v3124 = vld [vmem:[%s4 + $0x74] sm:$0xf]
        %v3125 = vld [vmem:[%s4 + $0x78] sm:$0xf]
        %v3126 = vld [vmem:[%s4 + $0x7c] sm:$0xf]
        %v3127 = vld [vmem:[%s4 + $0x80] sm:$0xf]
        %v3128 = vld [vmem:[%s4 + $0x84] sm:$0xf]
        %v3129 = vld [vmem:[%s4 + $0x88] sm:$0xf]
        %v3130 = vld [vmem:[%s4 + $0x8c] sm:$0xf]
        %v3131 = vld [vmem:[%s4 + $0x90] sm:$0xf]
        %v3132 = vld [vmem:[%s4 + $0x94] sm:$0xf]
        %v3133 = vld [vmem:[%s4 + $0x98] sm:$0xf]
        %v3134 = vld [vmem:[%s4 + $0x9c] sm:$0xf]
        %v3135 = vld [vmem:[%s4 + $0xa0] sm:$0xf]
        %v3136 = vld [vmem:[%s4 + $0xa4] sm:$0xf]
        %v3137 = vld [vmem:[%s4 + $0xa8] sm:$0xf]
        %v3138 = vld [vmem:[%s4 + $0xac] sm:$0xf]
        %v3139 = vld [vmem:[%s4 + $0xb0] sm:$0xf]
        %v3140 = vld [vmem:[%s4 + $0xb4] sm:$0xf]
        %v3141 = vld [vmem:[%s4 + $0xb8] sm:$0xf]
        %v3142 = vld [vmem:[%s4 + $0xbc] sm:$0xf]
        %v3143 = vld [vmem:[%s4 + $0xc0] sm:$0xf]
        %v3144 = vld [vmem:[%s4 + $0xc4] sm:$0xf]
        %v3145 = vld [vmem:[%s4 + $0xc8] sm:$0xf]
        %v3146 = vld [vmem:[%s4 + $0xcc] sm:$0xf]
        %v3147 = vld [vmem:[%s4 + $0xd0] sm:$0xf]
        %v3148 = vld [vmem:[%s4 + $0xd4] sm:$0xf]
        %v3149 = vld [vmem:[%s4 + $0xd8] sm:$0xf]
        %v3150 = vld [vmem:[%s4 + $0xdc] sm:$0xf]
        %v3151 = vld [vmem:[%s4 + $0xe0] sm:$0xf]
        %v3152 = vld [vmem:[%s4 + $0xe4] sm:$0xf]
        %v3153 = vld [vmem:[%s4 + $0xe8] sm:$0xf]
        %v3154 = vld [vmem:[%s4 + $0xec] sm:$0xf]
        %v3155 = vld [vmem:[%s4 + $0xf0] sm:$0xf]
        %v3156 = vld [vmem:[%s4 + $0xf4] sm:$0xf]
        %v3157 = vld [vmem:[%s4 + $0xf8] sm:$0xf]
        %v3158 = vld [vmem:[%s4 + $0xfc] sm:$0xf]
        %v3159 = vld [vmem:[%s4 + $0x100] sm:$0xf]
        %v3160 = vld [vmem:[%s4 + $0x104] sm:$0xf]
        %v3161 = vld [vmem:[%s4 + $0x108] sm:$0xf]
        %v3162 = vld [vmem:[%s4 + $0x10c] sm:$0xf]
        %v3163 = vld [vmem:[%s4 + $0x110] sm:$0xf]
        %v3164 = vld [vmem:[%s4 + $0x114] sm:$0xf]
        %v3165 = vld [vmem:[%s4 + $0x118] sm:$0xf]
        %v3166 = vld [vmem:[%s4 + $0x11c] sm:$0xf]
        %v3167 = vld [vmem:[%s5] sm:$0x1]
        %v3169 = vperm.slane %v3167, 0
        %v3219 = vunpack.c.l.b16 %v3047
        %v3220 = vunpack.c.h.b16 %v3047
        %v3221 = vunpack.c.l.b16 %v3048
        %v3222 = vunpack.c.h.b16 %v3048
        %v3223 = vunpack.c.l.b16 %v3049
        %v3224 = vunpack.c.l.b16 %v3050
        %v3225 = vunpack.c.h.b16 %v3050
        %v3226 = vunpack.c.l.b16 %v3051
        %v3227 = vunpack.c.h.b16 %v3051
        %v3228 = vunpack.c.l.b16 %v3052
        %v3229 = vunpack.c.l.b16 %v3053
        %v3230 = vunpack.c.h.b16 %v3053
        %v3231 = vunpack.c.l.b16 %v3054
        %v3232 = vunpack.c.h.b16 %v3054
        %v3233 = vunpack.c.l.b16 %v3055
        %v3234 = vunpack.c.l.b16 %v3056
        %v3235 = vunpack.c.h.b16 %v3056
        %v3236 = vunpack.c.l.b16 %v3057
        %v3237 = vunpack.c.h.b16 %v3057
        %v3238 = vunpack.c.l.b16 %v3058
        %v3239 = vunpack.c.l.b16 %v3059
        %v3240 = vunpack.c.h.b16 %v3059
        %v3241 = vunpack.c.l.b16 %v3060
        %v3242 = vunpack.c.h.b16 %v3060
        %v3243 = vunpack.c.l.b16 %v3061
        %v3244 = vunpack.c.l.b16 %v3062
        %v3245 = vunpack.c.h.b16 %v3062
        %v3246 = vunpack.c.l.b16 %v3063
        %v3247 = vunpack.c.h.b16 %v3063
        %v3248 = vunpack.c.l.b16 %v3064
        %v3249 = vunpack.c.l.b16 %v3065
        %v3250 = vunpack.c.h.b16 %v3065
        %v3251 = vunpack.c.l.b16 %v3066
        %v3252 = vunpack.c.h.b16 %v3066
        %v3253 = vunpack.c.l.b16 %v3067
        %v3254 = vunpack.c.l.b16 %v3068
        %v3255 = vunpack.c.h.b16 %v3068
        %v3256 = vunpack.c.l.b16 %v3069
        %v3257 = vunpack.c.h.b16 %v3069
        %v3258 = vunpack.c.l.b16 %v3070
        %v3259 = vunpack.c.l.b16 %v3071
        %v3260 = vunpack.c.h.b16 %v3071
        %v3261 = vunpack.c.l.b16 %v3072
        %v3262 = vunpack.c.h.b16 %v3072
        %v3263 = vunpack.c.l.b16 %v3073
        %v3264 = vunpack.c.l.b16 %v3074
        %v3265 = vunpack.c.h.b16 %v3074
        %v3266 = vunpack.c.l.b16 %v3075
        %v3267 = vunpack.c.h.b16 %v3075
        %v3268 = vunpack.c.l.b16 %v3076
        %v3269 = vunpack.c.l.b16 %v3077
        %v3270 = vunpack.c.h.b16 %v3077
        %v3271 = vunpack.c.l.b16 %v3078
        %v3272 = vunpack.c.h.b16 %v3078
        %v3273 = vunpack.c.l.b16 %v3079
        %v3274 = vunpack.c.l.b16 %v3080
        %v3275 = vunpack.c.h.b16 %v3080
        %v3276 = vunpack.c.l.b16 %v3081
        %v3277 = vunpack.c.h.b16 %v3081
        %v3278 = vunpack.c.l.b16 %v3082
        %v3279 = vunpack.c.l.b16 %v3083
        %v3280 = vunpack.c.h.b16 %v3083
        %v3281 = vunpack.c.l.b16 %v3084
        %v3282 = vunpack.c.h.b16 %v3084
        %v3283 = vunpack.c.l.b16 %v3085
        %v3284 = vunpack.c.l.b16 %v3086
        %v3285 = vunpack.c.h.b16 %v3086
        %v3286 = vunpack.c.l.b16 %v3087
        %v3287 = vunpack.c.h.b16 %v3087
        %v3288 = vunpack.c.l.b16 %v3088
        %v3289 = vunpack.c.l.b16 %v3089
        %v3290 = vunpack.c.h.b16 %v3089
        %v3291 = vunpack.c.l.b16 %v3090
        %v3292 = vunpack.c.h.b16 %v3090
        %v3293 = vunpack.c.l.b16 %v3091
        %v3294 = vunpack.c.l.b16 %v3092
        %v3295 = vunpack.c.h.b16 %v3092
        %v3296 = vunpack.c.l.b16 %v3093
        %v3297 = vunpack.c.h.b16 %v3093
        %v3298 = vunpack.c.l.b16 %v3094
        %v3299 = vpack.c.b16 %v3224, %v3219
        %v3300 = vpack.c.b16 %v3225, %v3220
        %v3301 = vpack.c.b16 %v3226, %v3221
        %v3302 = vpack.c.b16 %v3227, %v3222
        %v3303 = vpack.c.b16 %v3228, %v3223
        %v3304 = vpack.c.b16 %v3234, %v3229
        %v3305 = vpack.c.b16 %v3235, %v3230
        %v3306 = vpack.c.b16 %v3236, %v3231
        %v3307 = vpack.c.b16 %v3237, %v3232
        %v3308 = vpack.c.b16 %v3238, %v3233
        %v3309 = vpack.c.b16 %v3244, %v3239
        %v3310 = vpack.c.b16 %v3245, %v3240
        %v3311 = vpack.c.b16 %v3246, %v3241
        %v3312 = vpack.c.b16 %v3247, %v3242
        %v3313 = vpack.c.b16 %v3248, %v3243
        %v3314 = vpack.c.b16 %v3254, %v3249
        %v3315 = vpack.c.b16 %v3255, %v3250
        %v3316 = vpack.c.b16 %v3256, %v3251
        %v3317 = vpack.c.b16 %v3257, %v3252
        %v3318 = vpack.c.b16 %v3258, %v3253
        %v3319 = vpack.c.b16 %v3264, %v3259
        %v3320 = vpack.c.b16 %v3265, %v3260
        %v3321 = vpack.c.b16 %v3266, %v3261
        %v3322 = vpack.c.b16 %v3267, %v3262
        %v3323 = vpack.c.b16 %v3268, %v3263
        %v3324 = vpack.c.b16 %v3274, %v3269
        %v3325 = vpack.c.b16 %v3275, %v3270
        %v3326 = vpack.c.b16 %v3276, %v3271
        %v3327 = vpack.c.b16 %v3277, %v3272
        %v3328 = vpack.c.b16 %v3278, %v3273
        %v3329 = vpack.c.b16 %v3284, %v3279
        %v3330 = vpack.c.b16 %v3285, %v3280
        %v3331 = vpack.c.b16 %v3286, %v3281
        %v3332 = vpack.c.b16 %v3287, %v3282
        %v3333 = vpack.c.b16 %v3288, %v3283
        %v3334 = vpack.c.b16 %v3294, %v3289
        %v3335 = vpack.c.b16 %v3295, %v3290
        %v3336 = vpack.c.b16 %v3296, %v3291
        %v3337 = vpack.c.b16 %v3297, %v3292
        %v3338 = vpack.c.b16 %v3298, %v3293
        %v3443 = vunpack.c.l.b16 %v3095
        %v3444 = vunpack.c.l.b16 %v3096
        %v3445 = vunpack.c.l.b16 %v3097
        %v3446 = vunpack.c.l.b16 %v3098
        %v3447 = vunpack.c.l.b16 %v3099
        %v3448 = vunpack.c.l.b16 %v3100
        %v3449 = vunpack.c.l.b16 %v3101
        %v3450 = vunpack.c.l.b16 %v3102
        %v3451 = vunpack.c.l.b16 %v3103
        %v3452 = vunpack.c.l.b16 %v3104
        %v3453 = vunpack.c.l.b16 %v3105
        %v3454 = vunpack.c.l.b16 %v3106
        %v3455 = vunpack.c.l.b16 %v3107
        %v3456 = vunpack.c.l.b16 %v3108
        %v3457 = vunpack.c.l.b16 %v3109
        %v3458 = vunpack.c.l.b16 %v3110
        %v3459 = vunpack.c.l.b16 %v3111
        %v3460 = vunpack.c.l.b16 %v3112
        %v3461 = vunpack.c.l.b16 %v3113
        %v3462 = vunpack.c.l.b16 %v3114
        %v3463 = vunpack.c.l.b16 %v3115
        %v3464 = vunpack.c.l.b16 %v3116
        %v3465 = vunpack.c.l.b16 %v3117
        %v3466 = vunpack.c.l.b16 %v3118
        %v3467 = vunpack.c.l.b16 %v3119
        %v3468 = vunpack.c.l.b16 %v3120
        %v3469 = vunpack.c.l.b16 %v3121
        %v3470 = vunpack.c.l.b16 %v3122
        %v3471 = vunpack.c.l.b16 %v3123
        %v3472 = vunpack.c.l.b16 %v3124
        %v3473 = vunpack.c.l.b16 %v3125
        %v3474 = vunpack.c.l.b16 %v3126
        %v3475 = vunpack.c.l.b16 %v3127
        %v3476 = vunpack.c.l.b16 %v3128
        %v3477 = vunpack.c.l.b16 %v3129
        %v3478 = vunpack.c.l.b16 %v3130
        %v3479 = vunpack.c.l.b16 %v3131
        %v3480 = vunpack.c.l.b16 %v3132
        %v3481 = vunpack.c.l.b16 %v3133
        %v3482 = vunpack.c.l.b16 %v3134
        %v3483 = vunpack.c.l.b16 %v3135
        %v3484 = vunpack.c.l.b16 %v3136
        %v3485 = vunpack.c.l.b16 %v3137
        %v3486 = vunpack.c.l.b16 %v3138
        %v3487 = vunpack.c.l.b16 %v3139
        %v3488 = vunpack.c.l.b16 %v3140
        %v3489 = vunpack.c.l.b16 %v3141
        %v3490 = vunpack.c.l.b16 %v3142
        %v3491 = vunpack.c.l.b16 %v3143
        %v3492 = vunpack.c.l.b16 %v3144
        %v3493 = vunpack.c.l.b16 %v3145
        %v3494 = vunpack.c.l.b16 %v3146
        %v3495 = vunpack.c.l.b16 %v3147
        %v3496 = vunpack.c.l.b16 %v3148
        %v3497 = vunpack.c.l.b16 %v3149
        %v3498 = vunpack.c.l.b16 %v3150
        %v3499 = vunpack.c.l.b16 %v3151
        %v3500 = vunpack.c.l.b16 %v3152
        %v3501 = vunpack.c.l.b16 %v3153
        %v3502 = vunpack.c.l.b16 %v3154
        %v3503 = vunpack.c.l.b16 %v3155
        %v3504 = vunpack.c.l.b16 %v3156
        %v3505 = vunpack.c.l.b16 %v3157
        %v3506 = vunpack.c.l.b16 %v3158
        %v3507 = vunpack.c.l.b16 %v3159
        %v3508 = vunpack.c.l.b16 %v3160
        %v3509 = vunpack.c.l.b16 %v3161
        %v3510 = vunpack.c.l.b16 %v3162
        %v3511 = vunpack.c.l.b16 %v3163
        %v3512 = vunpack.c.l.b16 %v3164
        %v3513 = vunpack.c.l.b16 %v3165
        %v3514 = vunpack.c.l.b16 %v3166
        %v3515 = vpack.c.b16 %v3444, %v3443
        %v3516 = vpack.c.b16 %v3446, %v3445
        %v3517 = vpack.c.b16 %v3448, %v3447
        %v3518 = vpack.c.b16 %v3450, %v3449
        %v3519 = vpack.c.b16 %v3452, %v3451
        %v3520 = vpack.c.b16 %v3454, %v3453
        %v3521 = vpack.c.b16 %v3456, %v3455
        %v3522 = vpack.c.b16 %v3458, %v3457
        %v3523 = vpack.c.b16 %v3460, %v3459
        %v3524 = vpack.c.b16 %v3462, %v3461
        %v3525 = vpack.c.b16 %v3464, %v3463
        %v3526 = vpack.c.b16 %v3466, %v3465
        %v3527 = vpack.c.b16 %v3468, %v3467
        %v3528 = vpack.c.b16 %v3470, %v3469
        %v3529 = vpack.c.b16 %v3472, %v3471
        %v3530 = vpack.c.b16 %v3474, %v3473
        %v3531 = vpack.c.b16 %v3476, %v3475
        %v3532 = vpack.c.b16 %v3478, %v3477
        %v3533 = vpack.c.b16 %v3480, %v3479
        %v3534 = vpack.c.b16 %v3482, %v3481
        %v3535 = vpack.c.b16 %v3484, %v3483
        %v3536 = vpack.c.b16 %v3486, %v3485
        %v3537 = vpack.c.b16 %v3488, %v3487
        %v3538 = vpack.c.b16 %v3490, %v3489
        %v3539 = vpack.c.b16 %v3492, %v3491
        %v3540 = vpack.c.b16 %v3494, %v3493
        %v3541 = vpack.c.b16 %v3496, %v3495
        %v3542 = vpack.c.b16 %v3498, %v3497
        %v3543 = vpack.c.b16 %v3500, %v3499
        %v3544 = vpack.c.b16 %v3502, %v3501
        %v3545 = vpack.c.b16 %v3504, %v3503
        %v3546 = vpack.c.b16 %v3506, %v3505
        %v3547 = vpack.c.b16 %v3508, %v3507
        %v3548 = vpack.c.b16 %v3510, %v3509
        %v3549 = vpack.c.b16 %v3512, %v3511
        %v3550 = vpack.c.b16 %v3514, %v3513
        %v3588 = vsel %vm2338, %v3303, 0
        %v3591 = vsel %vm2338, %v3308, 0
        %v3594 = vsel %vm2338, %v3313, 0
        %v3597 = vsel %vm2338, %v3318, 0
        %v3600 = vsel %vm2338, %v3323, 0
        %v3603 = vsel %vm2338, %v3328, 0
        %v3606 = vsel %vm2338, %v3333, 0
        %v3609 = vsel %vm2338, %v3338, 0
        %3611 = vmatpush.bf16.msra.mxu0 %v3522
        %3612 = vmatpush.bf16.msra.mxu0 %v3521
        %3613 = vmatpush.bf16.msra.mxu0 %v3520
        %3614 = vmatpush.bf16.msra.mxu0 %v3519
        %3615 = vmatpush.bf16.msra.mxu0 %v3518
        %3616 = vmatpush.bf16.msra.mxu0 %v3517
        %3617 = vmatpush.bf16.msra.mxu0 %v3516
        %3618 = vmatpush.bf16.msra.mxu0 %v3515
        %3619 = vmatmul.bf16.gmra.mxu0 %v3299
        %v3620 = vpop.f32.mrf.mxu0
        %v3621 = vadd.f32 %v3169, %v3620
        %v3622 = vpop.f32.mrf.mxu0
        %v3623 = vadd.f32 %v3169, %v3622
        %3624 = vmatmul.bf16.gmra.mxu0 %v3304
        %v3625 = vpop.f32.mrf.mxu0
        %v3626 = vadd.f32 %v3169, %v3625
        %v3627 = vpop.f32.mrf.mxu0
        %v3628 = vadd.f32 %v3169, %v3627
        %3629 = vmatmul.bf16.gmra.mxu0 %v3309
        %v3630 = vpop.f32.mrf.mxu0
        %v3631 = vadd.f32 %v3169, %v3630
        %v3632 = vpop.f32.mrf.mxu0
        %v3633 = vadd.f32 %v3169, %v3632
        %3634 = vmatmul.bf16.gmra.mxu0 %v3314
        %v3635 = vpop.f32.mrf.mxu0
        %v3636 = vadd.f32 %v3169, %v3635
        %v3637 = vpop.f32.mrf.mxu0
        %v3638 = vadd.f32 %v3169, %v3637
        %3639 = vmatmul.bf16.gmra.mxu0 %v3319
        %v3640 = vpop.f32.mrf.mxu0
        %v3641 = vadd.f32 %v3169, %v3640
        %v3642 = vpop.f32.mrf.mxu0
        %v3643 = vadd.f32 %v3169, %v3642
        %3644 = vmatmul.bf16.gmra.mxu0 %v3324
        %v3645 = vpop.f32.mrf.mxu0
        %v3646 = vadd.f32 %v3169, %v3645
        %v3647 = vpop.f32.mrf.mxu0
        %v3648 = vadd.f32 %v3169, %v3647
        %3649 = vmatmul.bf16.gmra.mxu0 %v3329
        %v3650 = vpop.f32.mrf.mxu0
        %v3651 = vadd.f32 %v3169, %v3650
        %v3652 = vpop.f32.mrf.mxu0
        %v3653 = vadd.f32 %v3169, %v3652
        %3654 = vmatmul.bf16.gmra.mxu0 %v3334
        %v3655 = vpop.f32.mrf.mxu0
        %v3656 = vadd.f32 %v3169, %v3655
        %v3657 = vpop.f32.mrf.mxu0
        %v3658 = vadd.f32 %v3169, %v3657
        %3659 = vdwg.mxu0
        %3660 = vmatpush.bf16.msra.mxu0 %v3530
        %3661 = vmatpush.bf16.msra.mxu0 %v3529
        %3662 = vmatpush.bf16.msra.mxu0 %v3528
        %3663 = vmatpush.bf16.msra.mxu0 %v3527
        %3664 = vmatpush.bf16.msra.mxu0 %v3526
        %3665 = vmatpush.bf16.msra.mxu0 %v3525
        %3666 = vmatpush.bf16.msra.mxu0 %v3524
        %3667 = vmatpush.bf16.msra.mxu0 %v3523
        %3668 = vmatmul.bf16.gmra.mxu0 %v3300
        %v3669 = vpop.f32.mrf.mxu0
        %v3670 = vadd.f32 %v3621, %v3669
        %v3671 = vpop.f32.mrf.mxu0
        %v3672 = vadd.f32 %v3623, %v3671
        %3673 = vmatmul.bf16.gmra.mxu0 %v3305
        %v3674 = vpop.f32.mrf.mxu0
        %v3675 = vadd.f32 %v3626, %v3674
        %v3676 = vpop.f32.mrf.mxu0
        %v3677 = vadd.f32 %v3628, %v3676
        %3678 = vmatmul.bf16.gmra.mxu0 %v3310
        %v3679 = vpop.f32.mrf.mxu0
        %v3680 = vadd.f32 %v3631, %v3679
        %v3681 = vpop.f32.mrf.mxu0
        %v3682 = vadd.f32 %v3633, %v3681
        %3683 = vmatmul.bf16.gmra.mxu0 %v3315
        %v3684 = vpop.f32.mrf.mxu0
        %v3685 = vadd.f32 %v3636, %v3684
        %v3686 = vpop.f32.mrf.mxu0
        %v3687 = vadd.f32 %v3638, %v3686
        %3688 = vmatmul.bf16.gmra.mxu0 %v3320
        %v3689 = vpop.f32.mrf.mxu0
        %v3690 = vadd.f32 %v3641, %v3689
        %v3691 = vpop.f32.mrf.mxu0
        %v3692 = vadd.f32 %v3643, %v3691
        %3693 = vmatmul.bf16.gmra.mxu0 %v3325
        %v3694 = vpop.f32.mrf.mxu0
        %v3695 = vadd.f32 %v3646, %v3694
        %v3696 = vpop.f32.mrf.mxu0
        %v3697 = vadd.f32 %v3648, %v3696
        %3698 = vmatmul.bf16.gmra.mxu0 %v3330
        %v3699 = vpop.f32.mrf.mxu0
        %v3700 = vadd.f32 %v3651, %v3699
        %v3701 = vpop.f32.mrf.mxu0
        %v3702 = vadd.f32 %v3653, %v3701
        %3703 = vmatmul.bf16.gmra.mxu0 %v3335
        %v3704 = vpop.f32.mrf.mxu0
        %v3705 = vadd.f32 %v3656, %v3704
        %v3706 = vpop.f32.mrf.mxu0
        %v3707 = vadd.f32 %v3658, %v3706
        %3708 = vdwg.mxu0
        %3709 = vmatpush.bf16.msra.mxu0 %v3538
        %3710 = vmatpush.bf16.msra.mxu0 %v3537
        %3711 = vmatpush.bf16.msra.mxu0 %v3536
        %3712 = vmatpush.bf16.msra.mxu0 %v3535
        %3713 = vmatpush.bf16.msra.mxu0 %v3534
        %3714 = vmatpush.bf16.msra.mxu0 %v3533
        %3715 = vmatpush.bf16.msra.mxu0 %v3532
        %3716 = vmatpush.bf16.msra.mxu0 %v3531
        %3717 = vmatmul.bf16.gmra.mxu0 %v3301
        %v3718 = vpop.f32.mrf.mxu0
        %v3719 = vadd.f32 %v3670, %v3718
        %v3720 = vpop.f32.mrf.mxu0
        %v3721 = vadd.f32 %v3672, %v3720
        %3722 = vmatmul.bf16.gmra.mxu0 %v3306
        %v3723 = vpop.f32.mrf.mxu0
        %v3724 = vadd.f32 %v3675, %v3723
        %v3725 = vpop.f32.mrf.mxu0
        %v3726 = vadd.f32 %v3677, %v3725
        %3727 = vmatmul.bf16.gmra.mxu0 %v3311
        %v3728 = vpop.f32.mrf.mxu0
        %v3729 = vadd.f32 %v3680, %v3728
        %v3730 = vpop.f32.mrf.mxu0
        %v3731 = vadd.f32 %v3682, %v3730
        %3732 = vmatmul.bf16.gmra.mxu0 %v3316
        %v3733 = vpop.f32.mrf.mxu0
        %v3734 = vadd.f32 %v3685, %v3733
        %v3735 = vpop.f32.mrf.mxu0
        %v3736 = vadd.f32 %v3687, %v3735
        %3737 = vmatmul.bf16.gmra.mxu0 %v3321
        %v3738 = vpop.f32.mrf.mxu0
        %v3739 = vadd.f32 %v3690, %v3738
        %v3740 = vpop.f32.mrf.mxu0
        %v3741 = vadd.f32 %v3692, %v3740
        %3742 = vmatmul.bf16.gmra.mxu0 %v3326
        %v3743 = vpop.f32.mrf.mxu0
        %v3744 = vadd.f32 %v3695, %v3743
        %v3745 = vpop.f32.mrf.mxu0
        %v3746 = vadd.f32 %v3697, %v3745
        %3747 = vmatmul.bf16.gmra.mxu0 %v3331
        %v3748 = vpop.f32.mrf.mxu0
        %v3749 = vadd.f32 %v3700, %v3748
        %v3750 = vpop.f32.mrf.mxu0
        %v3751 = vadd.f32 %v3702, %v3750
        %3752 = vmatmul.bf16.gmra.mxu0 %v3336
        %v3753 = vpop.f32.mrf.mxu0
        %v3754 = vadd.f32 %v3705, %v3753
        %v3755 = vpop.f32.mrf.mxu0
        %v3756 = vadd.f32 %v3707, %v3755
        %3757 = vdwg.mxu0
        %3758 = vmatpush.bf16.msra.mxu0 %v3546
        %3759 = vmatpush.bf16.msra.mxu0 %v3545
        %3760 = vmatpush.bf16.msra.mxu0 %v3544
        %3761 = vmatpush.bf16.msra.mxu0 %v3543
        %3762 = vmatpush.bf16.msra.mxu0 %v3542
        %3763 = vmatpush.bf16.msra.mxu0 %v3541
        %3764 = vmatpush.bf16.msra.mxu0 %v3540
        %3765 = vmatpush.bf16.msra.mxu0 %v3539
        %3766 = vmatmul.bf16.gmra.mxu0 %v3302
        %v3767 = vpop.f32.mrf.mxu0
        %v3768 = vadd.f32 %v3719, %v3767
        %v3769 = vpop.f32.mrf.mxu0
        %v3770 = vadd.f32 %v3721, %v3769
        %3771 = vmatmul.bf16.gmra.mxu0 %v3307
        %v3772 = vpop.f32.mrf.mxu0
        %v3773 = vadd.f32 %v3724, %v3772
        %v3774 = vpop.f32.mrf.mxu0
        %v3775 = vadd.f32 %v3726, %v3774
        %3776 = vmatmul.bf16.gmra.mxu0 %v3312
        %v3777 = vpop.f32.mrf.mxu0
        %v3778 = vadd.f32 %v3729, %v3777
        %v3779 = vpop.f32.mrf.mxu0
        %v3780 = vadd.f32 %v3731, %v3779
        %3781 = vmatmul.bf16.gmra.mxu0 %v3317
        %v3782 = vpop.f32.mrf.mxu0
        %v3783 = vadd.f32 %v3734, %v3782
        %v3784 = vpop.f32.mrf.mxu0
        %v3785 = vadd.f32 %v3736, %v3784
        %3786 = vmatmul.bf16.gmra.mxu0 %v3322
        %v3787 = vpop.f32.mrf.mxu0
        %v3788 = vadd.f32 %v3739, %v3787
        %v3789 = vpop.f32.mrf.mxu0
        %v3790 = vadd.f32 %v3741, %v3789
        %3791 = vmatmul.bf16.gmra.mxu0 %v3327
        %v3792 = vpop.f32.mrf.mxu0
        %v3793 = vadd.f32 %v3744, %v3792
        %v3794 = vpop.f32.mrf.mxu0
        %v3795 = vadd.f32 %v3746, %v3794
        %3796 = vmatmul.bf16.gmra.mxu0 %v3332
        %v3797 = vpop.f32.mrf.mxu0
        %v3798 = vadd.f32 %v3749, %v3797
        %v3799 = vpop.f32.mrf.mxu0
        %v3800 = vadd.f32 %v3751, %v3799
        %3801 = vmatmul.bf16.gmra.mxu0 %v3337
        %v3802 = vpop.f32.mrf.mxu0
        %v3803 = vadd.f32 %v3754, %v3802
        %v3804 = vpop.f32.mrf.mxu0
        %v3805 = vadd.f32 %v3756, %v3804
        %3806 = vdwg.mxu0
        %3807 = vmatpush.bf16.msra.mxu0 0
        %3808 = vmatpush.bf16.msra.mxu0 0
        %3809 = vmatpush.bf16.msra.mxu0 0
        %3810 = vmatpush.bf16.msra.mxu0 0
        %3811 = vmatpush.bf16.msra.mxu0 %v3550
        %3812 = vmatpush.bf16.msra.mxu0 %v3549
        %3813 = vmatpush.bf16.msra.mxu0 %v3548
        %3814 = vmatpush.bf16.msra.mxu0 %v3547
        %3815 = vmatmul.bf16.gmra.mxu0 %v3588
        %v3816 = vpop.f32.mrf.mxu0
        %v3817 = vadd.f32 %v3768, %v3816
        %v3818 = vpop.f32.mrf.mxu0
        %v3819 = vadd.f32 %v3770, %v3818
        %3820 = vmatmul.bf16.gmra.mxu0 %v3591
        %v3821 = vpop.f32.mrf.mxu0
        %v3822 = vadd.f32 %v3773, %v3821
        %v3823 = vpop.f32.mrf.mxu0
        %v3824 = vadd.f32 %v3775, %v3823
        %3825 = vmatmul.bf16.gmra.mxu0 %v3594
        %v3826 = vpop.f32.mrf.mxu0
        %v3827 = vadd.f32 %v3778, %v3826
        %v3828 = vpop.f32.mrf.mxu0
        %v3829 = vadd.f32 %v3780, %v3828
        %3830 = vmatmul.bf16.gmra.mxu0 %v3597
        %v3831 = vpop.f32.mrf.mxu0
        %v3832 = vadd.f32 %v3783, %v3831
        %v3833 = vpop.f32.mrf.mxu0
        %v3834 = vadd.f32 %v3785, %v3833
        %3835 = vmatmul.bf16.gmra.mxu0 %v3600
        %v3836 = vpop.f32.mrf.mxu0
        %v3837 = vadd.f32 %v3788, %v3836
        %v3838 = vpop.f32.mrf.mxu0
        %v3839 = vadd.f32 %v3790, %v3838
        %3840 = vmatmul.bf16.gmra.mxu0 %v3603
        %v3841 = vpop.f32.mrf.mxu0
        %v3842 = vadd.f32 %v3793, %v3841
        %v3843 = vpop.f32.mrf.mxu0
        %v3844 = vadd.f32 %v3795, %v3843
        %3845 = vmatmul.bf16.gmra.mxu0 %v3606
        %v3846 = vpop.f32.mrf.mxu0
        %v3847 = vadd.f32 %v3798, %v3846
        %v3848 = vpop.f32.mrf.mxu0
        %v3849 = vadd.f32 %v3800, %v3848
        %3850 = vmatmul.bf16.gmra.mxu0 %v3609
        %v3851 = vpop.f32.mrf.mxu0
        %v3852 = vadd.f32 %v3803, %v3851
        %v3853 = vpop.f32.mrf.mxu0
        %v3854 = vadd.f32 %v3805, %v3853
        %3855 = vdwg.mxu0
        %v3856 = vmax.f32 %v3817, 0.0
        %v3857 = vmax.f32 %v3819, 0.0
        %v3858 = vmax.f32 %v3822, 0.0
        %v3859 = vmax.f32 %v3824, 0.0
        %v3860 = vmax.f32 %v3827, 0.0
        %v3861 = vmax.f32 %v3829, 0.0
        %v3862 = vmax.f32 %v3832, 0.0
        %v3863 = vmax.f32 %v3834, 0.0
        %v3864 = vmax.f32 %v3837, 0.0
        %v3865 = vmax.f32 %v3839, 0.0
        %v3866 = vmax.f32 %v3842, 0.0
        %v3867 = vmax.f32 %v3844, 0.0
        %v3868 = vmax.f32 %v3847, 0.0
        %v3869 = vmax.f32 %v3849, 0.0
        %v3870 = vmax.f32 %v3852, 0.0
        %v3871 = vmax.f32 %v3854, 0.0
        %v3872 = vpack.c.bf16 %v3856, %v3856
        %v3873 = vpack.c.bf16 %v3857, %v3857
        %v3874 = vpack.c.bf16 %v3858, %v3858
        %v3875 = vpack.c.bf16 %v3859, %v3859
        %v3876 = vpack.c.bf16 %v3860, %v3860
        %v3877 = vpack.c.bf16 %v3861, %v3861
        %v3878 = vpack.c.bf16 %v3862, %v3862
        %v3879 = vpack.c.bf16 %v3863, %v3863
        %v3880 = vpack.c.bf16 %v3864, %v3864
        %v3881 = vpack.c.bf16 %v3865, %v3865
        %v3882 = vpack.c.bf16 %v3866, %v3866
        %v3883 = vpack.c.bf16 %v3867, %v3867
        %v3884 = vpack.c.bf16 %v3868, %v3868
        %v3885 = vpack.c.bf16 %v3869, %v3869
        %v3886 = vpack.c.bf16 %v3870, %v3870
        %v3887 = vpack.c.bf16 %v3871, %v3871
        %3888 = vst.msk [vmem:[%s2337 + $0x1] sm:$0xff] %vm2338, %v1823
        %3889 = vst.msk [vmem:[%s2337 + $0x11] sm:$0xff] %vm2338, %v1826
        %3890 = vst.msk [vmem:[%s2337 + $0x21] sm:$0xff] %vm2338, %v1829
        %3891 = vst.msk [vmem:[%s2337 + $0x31] sm:$0xff] %vm2338, %v1832
        %3892 = vst.msk [vmem:[%s2337 + $0x41] sm:$0xff] %vm2338, %v1835
        %3893 = vst.msk [vmem:[%s2337 + $0x51] sm:$0xff] %vm2338, %v1838
        %3894 = vst.msk [vmem:[%s2337 + $0x61] sm:$0xff] %vm2338, %v1841
        %3895 = vst.msk [vmem:[%s2337 + $0x71] sm:$0xff] %vm2338, %v1844
        %v3896 = vld [vmem:[#allocation2] sm:$0xff]
        %v3897 = vld [vmem:[#allocation2 + $0x10] sm:$0xff]
        %v3898 = vld [vmem:[#allocation2 + $0x20] sm:$0xff]
        %v3899 = vld [vmem:[#allocation2 + $0x30] sm:$0xff]
        %v3900 = vld [vmem:[#allocation2 + $0x40] sm:$0xff]
        %v3901 = vld [vmem:[#allocation2 + $0x50] sm:$0xff]
        %v3902 = vld [vmem:[#allocation2 + $0x60] sm:$0xff]
        %v3903 = vld [vmem:[#allocation2 + $0x70] sm:$0xff]
        %v3904 = vpack.c.bf16 %v3896, %v3896
        %v3905 = vpack.c.bf16 %v3897, %v3897
        %v3906 = vpack.c.bf16 %v3898, %v3898
        %v3907 = vpack.c.bf16 %v3899, %v3899
        %v3908 = vpack.c.bf16 %v3900, %v3900
        %v3909 = vpack.c.bf16 %v3901, %v3901
        %v3910 = vpack.c.bf16 %v3902, %v3902
        %v3911 = vpack.c.bf16 %v3903, %v3903
        %3912 = vst.msk [vmem:[#allocation4] sm:$0xf] %vm2363, %v3904
        %3913 = vst.msk [vmem:[#allocation4 + $0x1c] sm:$0xf] %vm2363, %v3905
        %3914 = vst.msk [vmem:[#allocation4 + $0x38] sm:$0xf] %vm2363, %v3906
        %3915 = vst.msk [vmem:[#allocation4 + $0x54] sm:$0xf] %vm2363, %v3907
        %3916 = vst.msk [vmem:[#allocation4 + $0x70] sm:$0xf] %vm2363, %v3908
        %3917 = vst.msk [vmem:[#allocation4 + $0x8c] sm:$0xf] %vm2363, %v3909
        %3918 = vst.msk [vmem:[#allocation4 + $0xa8] sm:$0xf] %vm2363, %v3910
        %3919 = vst.msk [vmem:[#allocation4 + $0xc4] sm:$0xf] %vm2363, %v3911
        %v3920 = vld [vmem:[#allocation2 + $0x1] sm:$0xff]
        %v3921 = vld [vmem:[#allocation2 + $0x11] sm:$0xff]
        %v3922 = vld [vmem:[#allocation2 + $0x21] sm:$0xff]
        %v3923 = vld [vmem:[#allocation2 + $0x31] sm:$0xff]
        %v3924 = vld [vmem:[#allocation2 + $0x41] sm:$0xff]
        %v3925 = vld [vmem:[#allocation2 + $0x51] sm:$0xff]
        %v3926 = vld [vmem:[#allocation2 + $0x61] sm:$0xff]
        %v3927 = vld [vmem:[#allocation2 + $0x71] sm:$0xff]
        %v3928 = vpack.c.bf16 %v3920, %v3920
        %v3929 = vpack.c.bf16 %v3921, %v3921
        %v3930 = vpack.c.bf16 %v3922, %v3922
        %v3931 = vpack.c.bf16 %v3923, %v3923
        %v3932 = vpack.c.bf16 %v3924, %v3924
        %v3933 = vpack.c.bf16 %v3925, %v3925
        %v3934 = vpack.c.bf16 %v3926, %v3926
        %v3935 = vpack.c.bf16 %v3927, %v3927
        %3944 = vrot.lane.b32.xlu0 %v3928, 64
        %v3945 = vpop.permute.xlu0 %3944
        %3946 = vrot.lane.b32.xlu0 %v3929, 64
        %v3947 = vpop.permute.xlu0 %3946
        %3948 = vrot.lane.b32.xlu0 %v3930, 64
        %v3949 = vpop.permute.xlu0 %3948
        %3950 = vrot.lane.b32.xlu0 %v3931, 64
        %v3951 = vpop.permute.xlu0 %3950
        %3952 = vrot.lane.b32.xlu0 %v3932, 64
        %v3953 = vpop.permute.xlu0 %3952
        %3954 = vrot.lane.b32.xlu0 %v3933, 64
        %v3955 = vpop.permute.xlu0 %3954
        %3956 = vrot.lane.b32.xlu0 %v3934, 64
        %v3957 = vpop.permute.xlu0 %3956
        %3958 = vrot.lane.b32.xlu0 %v3935, 64
        %v3959 = vpop.permute.xlu0 %3958
        %3968 = vst.msk [vmem:[#allocation4] sm:$0xf] %vm2420, %v3945
        %3969 = vst.msk [vmem:[#allocation4 + $0x1c] sm:$0xf] %vm2420, %v3947
        %3970 = vst.msk [vmem:[#allocation4 + $0x38] sm:$0xf] %vm2420, %v3949
        %3971 = vst.msk [vmem:[#allocation4 + $0x54] sm:$0xf] %vm2420, %v3951
        %3972 = vst.msk [vmem:[#allocation4 + $0x70] sm:$0xf] %vm2420, %v3953
        %3973 = vst.msk [vmem:[#allocation4 + $0x8c] sm:$0xf] %vm2420, %v3955
        %3974 = vst.msk [vmem:[#allocation4 + $0xa8] sm:$0xf] %vm2420, %v3957
        %3975 = vst.msk [vmem:[#allocation4 + $0xc4] sm:$0xf] %vm2420, %v3959
        %v3976 = vld [vmem:[#allocation2 + $0x2] sm:$0xff]
        %v3977 = vld [vmem:[#allocation2 + $0x12] sm:$0xff]
        %v3978 = vld [vmem:[#allocation2 + $0x22] sm:$0xff]
        %v3979 = vld [vmem:[#allocation2 + $0x32] sm:$0xff]
        %v3980 = vld [vmem:[#allocation2 + $0x42] sm:$0xff]
        %v3981 = vld [vmem:[#allocation2 + $0x52] sm:$0xff]
        %v3982 = vld [vmem:[#allocation2 + $0x62] sm:$0xff]
        %v3983 = vld [vmem:[#allocation2 + $0x72] sm:$0xff]
        %v3984 = vpack.c.bf16 %v3976, %v3976
        %v3985 = vpack.c.bf16 %v3977, %v3977
        %v3986 = vpack.c.bf16 %v3978, %v3978
        %v3987 = vpack.c.bf16 %v3979, %v3979
        %v3988 = vpack.c.bf16 %v3980, %v3980
        %v3989 = vpack.c.bf16 %v3981, %v3981
        %v3990 = vpack.c.bf16 %v3982, %v3982
        %v3991 = vpack.c.bf16 %v3983, %v3983
        %3992 = vst.msk [vmem:[#allocation4 + $0x4] sm:$0xf] %vm2363, %v3984
        %3993 = vst.msk [vmem:[#allocation4 + $0x20] sm:$0xf] %vm2363, %v3985
        %3994 = vst.msk [vmem:[#allocation4 + $0x3c] sm:$0xf] %vm2363, %v3986
        %3995 = vst.msk [vmem:[#allocation4 + $0x58] sm:$0xf] %vm2363, %v3987
        %3996 = vst.msk [vmem:[#allocation4 + $0x74] sm:$0xf] %vm2363, %v3988
        %3997 = vst.msk [vmem:[#allocation4 + $0x90] sm:$0xf] %vm2363, %v3989
        %3998 = vst.msk [vmem:[#allocation4 + $0xac] sm:$0xf] %vm2363, %v3990
        %3999 = vst.msk [vmem:[#allocation4 + $0xc8] sm:$0xf] %vm2363, %v3991
        %v4000 = vld [vmem:[%s2337] sm:$0xff]
        %v4001 = vld [vmem:[%s2337 + $0x10] sm:$0xff]
        %v4002 = vld [vmem:[%s2337 + $0x20] sm:$0xff]
        %v4003 = vld [vmem:[%s2337 + $0x30] sm:$0xff]
        %v4004 = vld [vmem:[%s2337 + $0x40] sm:$0xff]
        %v4005 = vld [vmem:[%s2337 + $0x50] sm:$0xff]
        %v4006 = vld [vmem:[%s2337 + $0x60] sm:$0xff]
        %v4007 = vld [vmem:[%s2337 + $0x70] sm:$0xff]
        %v4008 = vpack.c.bf16 %v4000, %v4000
        %v4009 = vpack.c.bf16 %v4001, %v4001
        %v4010 = vpack.c.bf16 %v4002, %v4002
        %v4011 = vpack.c.bf16 %v4003, %v4003
        %v4012 = vpack.c.bf16 %v4004, %v4004
        %v4013 = vpack.c.bf16 %v4005, %v4005
        %v4014 = vpack.c.bf16 %v4006, %v4006
        %v4015 = vpack.c.bf16 %v4007, %v4007
        %4024 = vrot.lane.b32.xlu0 %v4008, 64
        %v4025 = vpop.permute.xlu0 %4024
        %4026 = vrot.lane.b32.xlu0 %v4009, 64
        %v4027 = vpop.permute.xlu0 %4026
        %4028 = vrot.lane.b32.xlu0 %v4010, 64
        %v4029 = vpop.permute.xlu0 %4028
        %4030 = vrot.lane.b32.xlu0 %v4011, 64
        %v4031 = vpop.permute.xlu0 %4030
        %4032 = vrot.lane.b32.xlu0 %v4012, 64
        %v4033 = vpop.permute.xlu0 %4032
        %4034 = vrot.lane.b32.xlu0 %v4013, 64
        %v4035 = vpop.permute.xlu0 %4034
        %4036 = vrot.lane.b32.xlu0 %v4014, 64
        %v4037 = vpop.permute.xlu0 %4036
        %4038 = vrot.lane.b32.xlu0 %v4015, 64
        %v4039 = vpop.permute.xlu0 %4038
        %4048 = vst.msk [vmem:[#allocation4 + $0x4] sm:$0xf] %vm2420, %v4025
        %4049 = vst.msk [vmem:[#allocation4 + $0x20] sm:$0xf] %vm2420, %v4027
        %4050 = vst.msk [vmem:[#allocation4 + $0x3c] sm:$0xf] %vm2420, %v4029
        %4051 = vst.msk [vmem:[#allocation4 + $0x58] sm:$0xf] %vm2420, %v4031
        %4052 = vst.msk [vmem:[#allocation4 + $0x74] sm:$0xf] %vm2420, %v4033
        %4053 = vst.msk [vmem:[#allocation4 + $0x90] sm:$0xf] %vm2420, %v4035
        %4054 = vst.msk [vmem:[#allocation4 + $0xac] sm:$0xf] %vm2420, %v4037
        %4055 = vst.msk [vmem:[#allocation4 + $0xc8] sm:$0xf] %vm2420, %v4039
        %v4056 = vld [vmem:[%s2337 + $0x1] sm:$0xff]
        %v4057 = vld [vmem:[%s2337 + $0x11] sm:$0xff]
        %v4058 = vld [vmem:[%s2337 + $0x21] sm:$0xff]
        %v4059 = vld [vmem:[%s2337 + $0x31] sm:$0xff]
        %v4060 = vld [vmem:[%s2337 + $0x41] sm:$0xff]
        %v4061 = vld [vmem:[%s2337 + $0x51] sm:$0xff]
        %v4062 = vld [vmem:[%s2337 + $0x61] sm:$0xff]
        %v4063 = vld [vmem:[%s2337 + $0x71] sm:$0xff]
        %v4064 = vpack.c.bf16 %v4056, %v4056
        %v4065 = vpack.c.bf16 %v4057, %v4057
        %v4066 = vpack.c.bf16 %v4058, %v4058
        %v4067 = vpack.c.bf16 %v4059, %v4059
        %v4068 = vpack.c.bf16 %v4060, %v4060
        %v4069 = vpack.c.bf16 %v4061, %v4061
        %v4070 = vpack.c.bf16 %v4062, %v4062
        %v4071 = vpack.c.bf16 %v4063, %v4063
        %4072 = vst.msk [vmem:[#allocation4 + $0x8] sm:$0xf] %vm2363, %v4064
        %4073 = vst.msk [vmem:[#allocation4 + $0x24] sm:$0xf] %vm2363, %v4065
        %4074 = vst.msk [vmem:[#allocation4 + $0x40] sm:$0xf] %vm2363, %v4066
        %4075 = vst.msk [vmem:[#allocation4 + $0x5c] sm:$0xf] %vm2363, %v4067
        %4076 = vst.msk [vmem:[#allocation4 + $0x78] sm:$0xf] %vm2363, %v4068
        %4077 = vst.msk [vmem:[#allocation4 + $0x94] sm:$0xf] %vm2363, %v4069
        %4078 = vst.msk [vmem:[#allocation4 + $0xb0] sm:$0xf] %vm2363, %v4070
        %4079 = vst.msk [vmem:[#allocation4 + $0xcc] sm:$0xf] %vm2363, %v4071
        %v4080 = vld [vmem:[%s2337 + $0x2] sm:$0xff]
        %v4081 = vld [vmem:[%s2337 + $0x12] sm:$0xff]
        %v4082 = vld [vmem:[%s2337 + $0x22] sm:$0xff]
        %v4083 = vld [vmem:[%s2337 + $0x32] sm:$0xff]
        %v4084 = vld [vmem:[%s2337 + $0x42] sm:$0xff]
        %v4085 = vld [vmem:[%s2337 + $0x52] sm:$0xff]
        %v4086 = vld [vmem:[%s2337 + $0x62] sm:$0xff]
        %v4087 = vld [vmem:[%s2337 + $0x72] sm:$0xff]
        %v4088 = vpack.c.bf16 %v4080, %v4080
        %v4089 = vpack.c.bf16 %v4081, %v4081
        %v4090 = vpack.c.bf16 %v4082, %v4082
        %v4091 = vpack.c.bf16 %v4083, %v4083
        %v4092 = vpack.c.bf16 %v4084, %v4084
        %v4093 = vpack.c.bf16 %v4085, %v4085
        %v4094 = vpack.c.bf16 %v4086, %v4086
        %v4095 = vpack.c.bf16 %v4087, %v4087
        %4104 = vrot.lane.b32.xlu0 %v4088, 64
        %v4105 = vpop.permute.xlu0 %4104
        %4106 = vrot.lane.b32.xlu0 %v4089, 64
        %v4107 = vpop.permute.xlu0 %4106
        %4108 = vrot.lane.b32.xlu0 %v4090, 64
        %v4109 = vpop.permute.xlu0 %4108
        %4110 = vrot.lane.b32.xlu0 %v4091, 64
        %v4111 = vpop.permute.xlu0 %4110
        %4112 = vrot.lane.b32.xlu0 %v4092, 64
        %v4113 = vpop.permute.xlu0 %4112
        %4114 = vrot.lane.b32.xlu0 %v4093, 64
        %v4115 = vpop.permute.xlu0 %4114
        %4116 = vrot.lane.b32.xlu0 %v4094, 64
        %v4117 = vpop.permute.xlu0 %4116
        %4118 = vrot.lane.b32.xlu0 %v4095, 64
        %v4119 = vpop.permute.xlu0 %4118
        %4128 = vst.msk [vmem:[#allocation4 + $0x8] sm:$0xf] %vm2420, %v4105
        %4129 = vst.msk [vmem:[#allocation4 + $0x24] sm:$0xf] %vm2420, %v4107
        %4130 = vst.msk [vmem:[#allocation4 + $0x40] sm:$0xf] %vm2420, %v4109
        %4131 = vst.msk [vmem:[#allocation4 + $0x5c] sm:$0xf] %vm2420, %v4111
        %4132 = vst.msk [vmem:[#allocation4 + $0x78] sm:$0xf] %vm2420, %v4113
        %4133 = vst.msk [vmem:[#allocation4 + $0x94] sm:$0xf] %vm2420, %v4115
        %4134 = vst.msk [vmem:[#allocation4 + $0xb0] sm:$0xf] %vm2420, %v4117
        %4135 = vst.msk [vmem:[#allocation4 + $0xcc] sm:$0xf] %vm2420, %v4119
        %v4136 = vld [vmem:[%s2589] sm:$0xff]
        %v4137 = vld [vmem:[%s2589 + $0x10] sm:$0xff]
        %v4138 = vld [vmem:[%s2589 + $0x20] sm:$0xff]
        %v4139 = vld [vmem:[%s2589 + $0x30] sm:$0xff]
        %v4140 = vld [vmem:[%s2589 + $0x40] sm:$0xff]
        %v4141 = vld [vmem:[%s2589 + $0x50] sm:$0xff]
        %v4142 = vld [vmem:[%s2589 + $0x60] sm:$0xff]
        %v4143 = vld [vmem:[%s2589 + $0x70] sm:$0xff]
        %v4144 = vpack.c.bf16 %v4136, %v4136
        %v4145 = vpack.c.bf16 %v4137, %v4137
        %v4146 = vpack.c.bf16 %v4138, %v4138
        %v4147 = vpack.c.bf16 %v4139, %v4139
        %v4148 = vpack.c.bf16 %v4140, %v4140
        %v4149 = vpack.c.bf16 %v4141, %v4141
        %v4150 = vpack.c.bf16 %v4142, %v4142
        %v4151 = vpack.c.bf16 %v4143, %v4143
        %4152 = vst.msk [vmem:[#allocation4 + $0xc] sm:$0xf] %vm2363, %v4144
        %4153 = vst.msk [vmem:[#allocation4 + $0x28] sm:$0xf] %vm2363, %v4145
        %4154 = vst.msk [vmem:[#allocation4 + $0x44] sm:$0xf] %vm2363, %v4146
        %4155 = vst.msk [vmem:[#allocation4 + $0x60] sm:$0xf] %vm2363, %v4147
        %4156 = vst.msk [vmem:[#allocation4 + $0x7c] sm:$0xf] %vm2363, %v4148
        %4157 = vst.msk [vmem:[#allocation4 + $0x98] sm:$0xf] %vm2363, %v4149
        %4158 = vst.msk [vmem:[#allocation4 + $0xb4] sm:$0xf] %vm2363, %v4150
        %4159 = vst.msk [vmem:[#allocation4 + $0xd0] sm:$0xf] %vm2363, %v4151
        %v4160 = vld [vmem:[%s2589 + $0x1] sm:$0xff]
        %v4161 = vld [vmem:[%s2589 + $0x11] sm:$0xff]
        %v4162 = vld [vmem:[%s2589 + $0x21] sm:$0xff]
        %v4163 = vld [vmem:[%s2589 + $0x31] sm:$0xff]
        %v4164 = vld [vmem:[%s2589 + $0x41] sm:$0xff]
        %v4165 = vld [vmem:[%s2589 + $0x51] sm:$0xff]
        %v4166 = vld [vmem:[%s2589 + $0x61] sm:$0xff]
        %v4167 = vld [vmem:[%s2589 + $0x71] sm:$0xff]
        %v4168 = vpack.c.bf16 %v4160, %v4160
        %v4169 = vpack.c.bf16 %v4161, %v4161
        %v4170 = vpack.c.bf16 %v4162, %v4162
        %v4171 = vpack.c.bf16 %v4163, %v4163
        %v4172 = vpack.c.bf16 %v4164, %v4164
        %v4173 = vpack.c.bf16 %v4165, %v4165
        %v4174 = vpack.c.bf16 %v4166, %v4166
        %v4175 = vpack.c.bf16 %v4167, %v4167
        %4184 = vrot.lane.b32.xlu0 %v4168, 64
        %v4185 = vpop.permute.xlu0 %4184
        %4186 = vrot.lane.b32.xlu0 %v4169, 64
        %v4187 = vpop.permute.xlu0 %4186
        %4188 = vrot.lane.b32.xlu0 %v4170, 64
        %v4189 = vpop.permute.xlu0 %4188
        %4190 = vrot.lane.b32.xlu0 %v4171, 64
        %v4191 = vpop.permute.xlu0 %4190
        %4192 = vrot.lane.b32.xlu0 %v4172, 64
        %v4193 = vpop.permute.xlu0 %4192
        %4194 = vrot.lane.b32.xlu0 %v4173, 64
        %v4195 = vpop.permute.xlu0 %4194
        %4196 = vrot.lane.b32.xlu0 %v4174, 64
        %v4197 = vpop.permute.xlu0 %4196
        %4198 = vrot.lane.b32.xlu0 %v4175, 64
        %v4199 = vpop.permute.xlu0 %4198
        %4208 = vst.msk [vmem:[#allocation4 + $0xc] sm:$0xf] %vm2420, %v4185
        %4209 = vst.msk [vmem:[#allocation4 + $0x28] sm:$0xf] %vm2420, %v4187
        %4210 = vst.msk [vmem:[#allocation4 + $0x44] sm:$0xf] %vm2420, %v4189
        %4211 = vst.msk [vmem:[#allocation4 + $0x60] sm:$0xf] %vm2420, %v4191
        %4212 = vst.msk [vmem:[#allocation4 + $0x7c] sm:$0xf] %vm2420, %v4193
        %4213 = vst.msk [vmem:[#allocation4 + $0x98] sm:$0xf] %vm2420, %v4195
        %4214 = vst.msk [vmem:[#allocation4 + $0xb4] sm:$0xf] %vm2420, %v4197
        %4215 = vst.msk [vmem:[#allocation4 + $0xd0] sm:$0xf] %vm2420, %v4199
        %v4216 = vld [vmem:[%s2589 + $0x2] sm:$0xff]
        %v4217 = vld [vmem:[%s2589 + $0x12] sm:$0xff]
        %v4218 = vld [vmem:[%s2589 + $0x22] sm:$0xff]
        %v4219 = vld [vmem:[%s2589 + $0x32] sm:$0xff]
        %v4220 = vld [vmem:[%s2589 + $0x42] sm:$0xff]
        %v4221 = vld [vmem:[%s2589 + $0x52] sm:$0xff]
        %v4222 = vld [vmem:[%s2589 + $0x62] sm:$0xff]
        %v4223 = vld [vmem:[%s2589 + $0x72] sm:$0xff]
        %v4224 = vpack.c.bf16 %v4216, %v4216
        %v4225 = vpack.c.bf16 %v4217, %v4217
        %v4226 = vpack.c.bf16 %v4218, %v4218
        %v4227 = vpack.c.bf16 %v4219, %v4219
        %v4228 = vpack.c.bf16 %v4220, %v4220
        %v4229 = vpack.c.bf16 %v4221, %v4221
        %v4230 = vpack.c.bf16 %v4222, %v4222
        %v4231 = vpack.c.bf16 %v4223, %v4223
        %4232 = vst.msk [vmem:[#allocation4 + $0x10] sm:$0xf] %vm2363, %v4224
        %4233 = vst.msk [vmem:[#allocation4 + $0x2c] sm:$0xf] %vm2363, %v4225
        %4234 = vst.msk [vmem:[#allocation4 + $0x48] sm:$0xf] %vm2363, %v4226
        %4235 = vst.msk [vmem:[#allocation4 + $0x64] sm:$0xf] %vm2363, %v4227
        %4236 = vst.msk [vmem:[#allocation4 + $0x80] sm:$0xf] %vm2363, %v4228
        %4237 = vst.msk [vmem:[#allocation4 + $0x9c] sm:$0xf] %vm2363, %v4229
        %4238 = vst.msk [vmem:[#allocation4 + $0xb8] sm:$0xf] %vm2363, %v4230
        %4239 = vst.msk [vmem:[#allocation4 + $0xd4] sm:$0xf] %vm2363, %v4231
        %4240 = vst.msk [vmem:[%s2337 + $0x1] sm:$0xff] %vm2338, %v1847
        %4241 = vst.msk [vmem:[%s2337 + $0x11] sm:$0xff] %vm2338, %v1850
        %4242 = vst.msk [vmem:[%s2337 + $0x21] sm:$0xff] %vm2338, %v1853
        %4243 = vst.msk [vmem:[%s2337 + $0x31] sm:$0xff] %vm2338, %v1856
        %4244 = vst.msk [vmem:[%s2337 + $0x41] sm:$0xff] %vm2338, %v1859
        %4245 = vst.msk [vmem:[%s2337 + $0x51] sm:$0xff] %vm2338, %v1862
        %4246 = vst.msk [vmem:[%s2337 + $0x61] sm:$0xff] %vm2338, %v1865
        %4247 = vst.msk [vmem:[%s2337 + $0x71] sm:$0xff] %vm2338, %v1868
        %v4248 = vld [vmem:[#allocation2] sm:$0xff]
        %v4249 = vld [vmem:[#allocation2 + $0x10] sm:$0xff]
        %v4250 = vld [vmem:[#allocation2 + $0x20] sm:$0xff]
        %v4251 = vld [vmem:[#allocation2 + $0x30] sm:$0xff]
        %v4252 = vld [vmem:[#allocation2 + $0x40] sm:$0xff]
        %v4253 = vld [vmem:[#allocation2 + $0x50] sm:$0xff]
        %v4254 = vld [vmem:[#allocation2 + $0x60] sm:$0xff]
        %v4255 = vld [vmem:[#allocation2 + $0x70] sm:$0xff]
        %v4256 = vpack.c.bf16 %v4248, %v4248
        %v4257 = vpack.c.bf16 %v4249, %v4249
        %v4258 = vpack.c.bf16 %v4250, %v4250
        %v4259 = vpack.c.bf16 %v4251, %v4251
        %v4260 = vpack.c.bf16 %v4252, %v4252
        %v4261 = vpack.c.bf16 %v4253, %v4253
        %v4262 = vpack.c.bf16 %v4254, %v4254
        %v4263 = vpack.c.bf16 %v4255, %v4255
        %4264 = vst.msk [vmem:[%s2718] sm:$0xf] %vm2363, %v4256
        %4265 = vst.msk [vmem:[%s2718 + $0x1c] sm:$0xf] %vm2363, %v4257
        %4266 = vst.msk [vmem:[%s2718 + $0x38] sm:$0xf] %vm2363, %v4258
        %4267 = vst.msk [vmem:[%s2718 + $0x54] sm:$0xf] %vm2363, %v4259
        %4268 = vst.msk [vmem:[%s2718 + $0x70] sm:$0xf] %vm2363, %v4260
        %4269 = vst.msk [vmem:[%s2718 + $0x8c] sm:$0xf] %vm2363, %v4261
        %4270 = vst.msk [vmem:[%s2718 + $0xa8] sm:$0xf] %vm2363, %v4262
        %4271 = vst.msk [vmem:[%s2718 + $0xc4] sm:$0xf] %vm2363, %v4263
        %v4272 = vld [vmem:[#allocation2 + $0x1] sm:$0xff]
        %v4273 = vld [vmem:[#allocation2 + $0x11] sm:$0xff]
        %v4274 = vld [vmem:[#allocation2 + $0x21] sm:$0xff]
        %v4275 = vld [vmem:[#allocation2 + $0x31] sm:$0xff]
        %v4276 = vld [vmem:[#allocation2 + $0x41] sm:$0xff]
        %v4277 = vld [vmem:[#allocation2 + $0x51] sm:$0xff]
        %v4278 = vld [vmem:[#allocation2 + $0x61] sm:$0xff]
        %v4279 = vld [vmem:[#allocation2 + $0x71] sm:$0xff]
        %v4280 = vpack.c.bf16 %v4272, %v4272
        %v4281 = vpack.c.bf16 %v4273, %v4273
        %v4282 = vpack.c.bf16 %v4274, %v4274
        %v4283 = vpack.c.bf16 %v4275, %v4275
        %v4284 = vpack.c.bf16 %v4276, %v4276
        %v4285 = vpack.c.bf16 %v4277, %v4277
        %v4286 = vpack.c.bf16 %v4278, %v4278
        %v4287 = vpack.c.bf16 %v4279, %v4279
        %4296 = vrot.lane.b32.xlu0 %v4280, 64
        %v4297 = vpop.permute.xlu0 %4296
        %4298 = vrot.lane.b32.xlu0 %v4281, 64
        %v4299 = vpop.permute.xlu0 %4298
        %4300 = vrot.lane.b32.xlu0 %v4282, 64
        %v4301 = vpop.permute.xlu0 %4300
        %4302 = vrot.lane.b32.xlu0 %v4283, 64
        %v4303 = vpop.permute.xlu0 %4302
        %4304 = vrot.lane.b32.xlu0 %v4284, 64
        %v4305 = vpop.permute.xlu0 %4304
        %4306 = vrot.lane.b32.xlu0 %v4285, 64
        %v4307 = vpop.permute.xlu0 %4306
        %4308 = vrot.lane.b32.xlu0 %v4286, 64
        %v4309 = vpop.permute.xlu0 %4308
        %4310 = vrot.lane.b32.xlu0 %v4287, 64
        %v4311 = vpop.permute.xlu0 %4310
        %4320 = vst.msk [vmem:[%s2718] sm:$0xf] %vm2420, %v4297
        %4321 = vst.msk [vmem:[%s2718 + $0x1c] sm:$0xf] %vm2420, %v4299
        %4322 = vst.msk [vmem:[%s2718 + $0x38] sm:$0xf] %vm2420, %v4301
        %4323 = vst.msk [vmem:[%s2718 + $0x54] sm:$0xf] %vm2420, %v4303
        %4324 = vst.msk [vmem:[%s2718 + $0x70] sm:$0xf] %vm2420, %v4305
        %4325 = vst.msk [vmem:[%s2718 + $0x8c] sm:$0xf] %vm2420, %v4307
        %4326 = vst.msk [vmem:[%s2718 + $0xa8] sm:$0xf] %vm2420, %v4309
        %4327 = vst.msk [vmem:[%s2718 + $0xc4] sm:$0xf] %vm2420, %v4311
        %v4328 = vld [vmem:[#allocation2 + $0x2] sm:$0xff]
        %v4329 = vld [vmem:[#allocation2 + $0x12] sm:$0xff]
        %v4330 = vld [vmem:[#allocation2 + $0x22] sm:$0xff]
        %v4331 = vld [vmem:[#allocation2 + $0x32] sm:$0xff]
        %v4332 = vld [vmem:[#allocation2 + $0x42] sm:$0xff]
        %v4333 = vld [vmem:[#allocation2 + $0x52] sm:$0xff]
        %v4334 = vld [vmem:[#allocation2 + $0x62] sm:$0xff]
        %v4335 = vld [vmem:[#allocation2 + $0x72] sm:$0xff]
        %v4336 = vpack.c.bf16 %v4328, %v4328
        %v4337 = vpack.c.bf16 %v4329, %v4329
        %v4338 = vpack.c.bf16 %v4330, %v4330
        %v4339 = vpack.c.bf16 %v4331, %v4331
        %v4340 = vpack.c.bf16 %v4332, %v4332
        %v4341 = vpack.c.bf16 %v4333, %v4333
        %v4342 = vpack.c.bf16 %v4334, %v4334
        %v4343 = vpack.c.bf16 %v4335, %v4335
        %4344 = vst.msk [vmem:[%s2718 + $0x4] sm:$0xf] %vm2363, %v4336
        %4345 = vst.msk [vmem:[%s2718 + $0x20] sm:$0xf] %vm2363, %v4337
        %4346 = vst.msk [vmem:[%s2718 + $0x3c] sm:$0xf] %vm2363, %v4338
        %4347 = vst.msk [vmem:[%s2718 + $0x58] sm:$0xf] %vm2363, %v4339
        %4348 = vst.msk [vmem:[%s2718 + $0x74] sm:$0xf] %vm2363, %v4340
        %4349 = vst.msk [vmem:[%s2718 + $0x90] sm:$0xf] %vm2363, %v4341
        %4350 = vst.msk [vmem:[%s2718 + $0xac] sm:$0xf] %vm2363, %v4342
        %4351 = vst.msk [vmem:[%s2718 + $0xc8] sm:$0xf] %vm2363, %v4343
        %v4352 = vld [vmem:[%s2337] sm:$0xff]
        %v4353 = vld [vmem:[%s2337 + $0x10] sm:$0xff]
        %v4354 = vld [vmem:[%s2337 + $0x20] sm:$0xff]
        %v4355 = vld [vmem:[%s2337 + $0x30] sm:$0xff]
        %v4356 = vld [vmem:[%s2337 + $0x40] sm:$0xff]
        %v4357 = vld [vmem:[%s2337 + $0x50] sm:$0xff]
        %v4358 = vld [vmem:[%s2337 + $0x60] sm:$0xff]
        %v4359 = vld [vmem:[%s2337 + $0x70] sm:$0xff]
        %v4360 = vpack.c.bf16 %v4352, %v4352
        %v4361 = vpack.c.bf16 %v4353, %v4353
        %v4362 = vpack.c.bf16 %v4354, %v4354
        %v4363 = vpack.c.bf16 %v4355, %v4355
        %v4364 = vpack.c.bf16 %v4356, %v4356
        %v4365 = vpack.c.bf16 %v4357, %v4357
        %v4366 = vpack.c.bf16 %v4358, %v4358
        %v4367 = vpack.c.bf16 %v4359, %v4359
        %4376 = vrot.lane.b32.xlu0 %v4360, 64
        %v4377 = vpop.permute.xlu0 %4376
        %4378 = vrot.lane.b32.xlu0 %v4361, 64
        %v4379 = vpop.permute.xlu0 %4378
        %4380 = vrot.lane.b32.xlu0 %v4362, 64
        %v4381 = vpop.permute.xlu0 %4380
        %4382 = vrot.lane.b32.xlu0 %v4363, 64
        %v4383 = vpop.permute.xlu0 %4382
        %4384 = vrot.lane.b32.xlu0 %v4364, 64
        %v4385 = vpop.permute.xlu0 %4384
        %4386 = vrot.lane.b32.xlu0 %v4365, 64
        %v4387 = vpop.permute.xlu0 %4386
        %4388 = vrot.lane.b32.xlu0 %v4366, 64
        %v4389 = vpop.permute.xlu0 %4388
        %4390 = vrot.lane.b32.xlu0 %v4367, 64
        %v4391 = vpop.permute.xlu0 %4390
        %4400 = vst.msk [vmem:[%s2718 + $0x4] sm:$0xf] %vm2420, %v4377
        %4401 = vst.msk [vmem:[%s2718 + $0x20] sm:$0xf] %vm2420, %v4379
        %4402 = vst.msk [vmem:[%s2718 + $0x3c] sm:$0xf] %vm2420, %v4381
        %4403 = vst.msk [vmem:[%s2718 + $0x58] sm:$0xf] %vm2420, %v4383
        %4404 = vst.msk [vmem:[%s2718 + $0x74] sm:$0xf] %vm2420, %v4385
        %4405 = vst.msk [vmem:[%s2718 + $0x90] sm:$0xf] %vm2420, %v4387
        %4406 = vst.msk [vmem:[%s2718 + $0xac] sm:$0xf] %vm2420, %v4389
        %4407 = vst.msk [vmem:[%s2718 + $0xc8] sm:$0xf] %vm2420, %v4391
        %v4408 = vld [vmem:[%s2337 + $0x1] sm:$0xff]
        %v4409 = vld [vmem:[%s2337 + $0x11] sm:$0xff]
        %v4410 = vld [vmem:[%s2337 + $0x21] sm:$0xff]
        %v4411 = vld [vmem:[%s2337 + $0x31] sm:$0xff]
        %v4412 = vld [vmem:[%s2337 + $0x41] sm:$0xff]
        %v4413 = vld [vmem:[%s2337 + $0x51] sm:$0xff]
        %v4414 = vld [vmem:[%s2337 + $0x61] sm:$0xff]
        %v4415 = vld [vmem:[%s2337 + $0x71] sm:$0xff]
        %v4416 = vpack.c.bf16 %v4408, %v4408
        %v4417 = vpack.c.bf16 %v4409, %v4409
        %v4418 = vpack.c.bf16 %v4410, %v4410
        %v4419 = vpack.c.bf16 %v4411, %v4411
        %v4420 = vpack.c.bf16 %v4412, %v4412
        %v4421 = vpack.c.bf16 %v4413, %v4413
        %v4422 = vpack.c.bf16 %v4414, %v4414
        %v4423 = vpack.c.bf16 %v4415, %v4415
        %4424 = vst.msk [vmem:[%s2718 + $0x8] sm:$0xf] %vm2363, %v4416
        %4425 = vst.msk [vmem:[%s2718 + $0x24] sm:$0xf] %vm2363, %v4417
        %4426 = vst.msk [vmem:[%s2718 + $0x40] sm:$0xf] %vm2363, %v4418
        %4427 = vst.msk [vmem:[%s2718 + $0x5c] sm:$0xf] %vm2363, %v4419
        %4428 = vst.msk [vmem:[%s2718 + $0x78] sm:$0xf] %vm2363, %v4420
        %4429 = vst.msk [vmem:[%s2718 + $0x94] sm:$0xf] %vm2363, %v4421
        %4430 = vst.msk [vmem:[%s2718 + $0xb0] sm:$0xf] %vm2363, %v4422
        %4431 = vst.msk [vmem:[%s2718 + $0xcc] sm:$0xf] %vm2363, %v4423
        %v4432 = vld [vmem:[%s2337 + $0x2] sm:$0xff]
        %v4433 = vld [vmem:[%s2337 + $0x12] sm:$0xff]
        %v4434 = vld [vmem:[%s2337 + $0x22] sm:$0xff]
        %v4435 = vld [vmem:[%s2337 + $0x32] sm:$0xff]
        %v4436 = vld [vmem:[%s2337 + $0x42] sm:$0xff]
        %v4437 = vld [vmem:[%s2337 + $0x52] sm:$0xff]
        %v4438 = vld [vmem:[%s2337 + $0x62] sm:$0xff]
        %v4439 = vld [vmem:[%s2337 + $0x72] sm:$0xff]
        %v4440 = vpack.c.bf16 %v4432, %v4432
        %v4441 = vpack.c.bf16 %v4433, %v4433
        %v4442 = vpack.c.bf16 %v4434, %v4434
        %v4443 = vpack.c.bf16 %v4435, %v4435
        %v4444 = vpack.c.bf16 %v4436, %v4436
        %v4445 = vpack.c.bf16 %v4437, %v4437
        %v4446 = vpack.c.bf16 %v4438, %v4438
        %v4447 = vpack.c.bf16 %v4439, %v4439
        %4456 = vrot.lane.b32.xlu0 %v4440, 64
        %v4457 = vpop.permute.xlu0 %4456
        %4458 = vrot.lane.b32.xlu0 %v4441, 64
        %v4459 = vpop.permute.xlu0 %4458
        %4460 = vrot.lane.b32.xlu0 %v4442, 64
        %v4461 = vpop.permute.xlu0 %4460
        %4462 = vrot.lane.b32.xlu0 %v4443, 64
        %v4463 = vpop.permute.xlu0 %4462
        %4464 = vrot.lane.b32.xlu0 %v4444, 64
        %v4465 = vpop.permute.xlu0 %4464
        %4466 = vrot.lane.b32.xlu0 %v4445, 64
        %v4467 = vpop.permute.xlu0 %4466
        %4468 = vrot.lane.b32.xlu0 %v4446, 64
        %v4469 = vpop.permute.xlu0 %4468
        %4470 = vrot.lane.b32.xlu0 %v4447, 64
        %v4471 = vpop.permute.xlu0 %4470
        %4480 = vst.msk [vmem:[%s2718 + $0x8] sm:$0xf] %vm2420, %v4457
        %4481 = vst.msk [vmem:[%s2718 + $0x24] sm:$0xf] %vm2420, %v4459
        %4482 = vst.msk [vmem:[%s2718 + $0x40] sm:$0xf] %vm2420, %v4461
        %4483 = vst.msk [vmem:[%s2718 + $0x5c] sm:$0xf] %vm2420, %v4463
        %4484 = vst.msk [vmem:[%s2718 + $0x78] sm:$0xf] %vm2420, %v4465
        %4485 = vst.msk [vmem:[%s2718 + $0x94] sm:$0xf] %vm2420, %v4467
        %4486 = vst.msk [vmem:[%s2718 + $0xb0] sm:$0xf] %vm2420, %v4469
        %4487 = vst.msk [vmem:[%s2718 + $0xcc] sm:$0xf] %vm2420, %v4471
        %v4488 = vld [vmem:[%s2589] sm:$0xff]
        %v4489 = vld [vmem:[%s2589 + $0x10] sm:$0xff]
        %v4490 = vld [vmem:[%s2589 + $0x20] sm:$0xff]
        %v4491 = vld [vmem:[%s2589 + $0x30] sm:$0xff]
        %v4492 = vld [vmem:[%s2589 + $0x40] sm:$0xff]
        %v4493 = vld [vmem:[%s2589 + $0x50] sm:$0xff]
        %v4494 = vld [vmem:[%s2589 + $0x60] sm:$0xff]
        %v4495 = vld [vmem:[%s2589 + $0x70] sm:$0xff]
        %v4496 = vpack.c.bf16 %v4488, %v4488
        %v4497 = vpack.c.bf16 %v4489, %v4489
        %v4498 = vpack.c.bf16 %v4490, %v4490
        %v4499 = vpack.c.bf16 %v4491, %v4491
        %v4500 = vpack.c.bf16 %v4492, %v4492
        %v4501 = vpack.c.bf16 %v4493, %v4493
        %v4502 = vpack.c.bf16 %v4494, %v4494
        %v4503 = vpack.c.bf16 %v4495, %v4495
        %4504 = vst.msk [vmem:[%s2718 + $0xc] sm:$0xf] %vm2363, %v4496
        %4505 = vst.msk [vmem:[%s2718 + $0x28] sm:$0xf] %vm2363, %v4497
        %4506 = vst.msk [vmem:[%s2718 + $0x44] sm:$0xf] %vm2363, %v4498
        %4507 = vst.msk [vmem:[%s2718 + $0x60] sm:$0xf] %vm2363, %v4499
        %4508 = vst.msk [vmem:[%s2718 + $0x7c] sm:$0xf] %vm2363, %v4500
        %4509 = vst.msk [vmem:[%s2718 + $0x98] sm:$0xf] %vm2363, %v4501
        %4510 = vst.msk [vmem:[%s2718 + $0xb4] sm:$0xf] %vm2363, %v4502
        %4511 = vst.msk [vmem:[%s2718 + $0xd0] sm:$0xf] %vm2363, %v4503
        %v4512 = vld [vmem:[%s2589 + $0x1] sm:$0xff]
        %v4513 = vld [vmem:[%s2589 + $0x11] sm:$0xff]
        %v4514 = vld [vmem:[%s2589 + $0x21] sm:$0xff]
        %v4515 = vld [vmem:[%s2589 + $0x31] sm:$0xff]
        %v4516 = vld [vmem:[%s2589 + $0x41] sm:$0xff]
        %v4517 = vld [vmem:[%s2589 + $0x51] sm:$0xff]
        %v4518 = vld [vmem:[%s2589 + $0x61] sm:$0xff]
        %v4519 = vld [vmem:[%s2589 + $0x71] sm:$0xff]
        %v4520 = vpack.c.bf16 %v4512, %v4512
        %v4521 = vpack.c.bf16 %v4513, %v4513
        %v4522 = vpack.c.bf16 %v4514, %v4514
        %v4523 = vpack.c.bf16 %v4515, %v4515
        %v4524 = vpack.c.bf16 %v4516, %v4516
        %v4525 = vpack.c.bf16 %v4517, %v4517
        %v4526 = vpack.c.bf16 %v4518, %v4518
        %v4527 = vpack.c.bf16 %v4519, %v4519
        %4536 = vrot.lane.b32.xlu0 %v4520, 64
        %v4537 = vpop.permute.xlu0 %4536
        %4538 = vrot.lane.b32.xlu0 %v4521, 64
        %v4539 = vpop.permute.xlu0 %4538
        %4540 = vrot.lane.b32.xlu0 %v4522, 64
        %v4541 = vpop.permute.xlu0 %4540
        %4542 = vrot.lane.b32.xlu0 %v4523, 64
        %v4543 = vpop.permute.xlu0 %4542
        %4544 = vrot.lane.b32.xlu0 %v4524, 64
        %v4545 = vpop.permute.xlu0 %4544
        %4546 = vrot.lane.b32.xlu0 %v4525, 64
        %v4547 = vpop.permute.xlu0 %4546
        %4548 = vrot.lane.b32.xlu0 %v4526, 64
        %v4549 = vpop.permute.xlu0 %4548
        %4550 = vrot.lane.b32.xlu0 %v4527, 64
        %v4551 = vpop.permute.xlu0 %4550
        %4560 = vst.msk [vmem:[%s2718 + $0xc] sm:$0xf] %vm2420, %v4537
        %4561 = vst.msk [vmem:[%s2718 + $0x28] sm:$0xf] %vm2420, %v4539
        %4562 = vst.msk [vmem:[%s2718 + $0x44] sm:$0xf] %vm2420, %v4541
        %4563 = vst.msk [vmem:[%s2718 + $0x60] sm:$0xf] %vm2420, %v4543
        %4564 = vst.msk [vmem:[%s2718 + $0x7c] sm:$0xf] %vm2420, %v4545
        %4565 = vst.msk [vmem:[%s2718 + $0x98] sm:$0xf] %vm2420, %v4547
        %4566 = vst.msk [vmem:[%s2718 + $0xb4] sm:$0xf] %vm2420, %v4549
        %4567 = vst.msk [vmem:[%s2718 + $0xd0] sm:$0xf] %vm2420, %v4551
        %v4568 = vld [vmem:[%s2589 + $0x2] sm:$0xff]
        %v4569 = vld [vmem:[%s2589 + $0x12] sm:$0xff]
        %v4570 = vld [vmem:[%s2589 + $0x22] sm:$0xff]
        %v4571 = vld [vmem:[%s2589 + $0x32] sm:$0xff]
        %v4572 = vld [vmem:[%s2589 + $0x42] sm:$0xff]
        %v4573 = vld [vmem:[%s2589 + $0x52] sm:$0xff]
        %v4574 = vld [vmem:[%s2589 + $0x62] sm:$0xff]
        %v4575 = vld [vmem:[%s2589 + $0x72] sm:$0xff]
        %v4576 = vpack.c.bf16 %v4568, %v4568
        %v4577 = vpack.c.bf16 %v4569, %v4569
        %v4578 = vpack.c.bf16 %v4570, %v4570
        %v4579 = vpack.c.bf16 %v4571, %v4571
        %v4580 = vpack.c.bf16 %v4572, %v4572
        %v4581 = vpack.c.bf16 %v4573, %v4573
        %v4582 = vpack.c.bf16 %v4574, %v4574
        %v4583 = vpack.c.bf16 %v4575, %v4575
        %4584 = vst.msk [vmem:[%s2718 + $0x10] sm:$0xf] %vm2363, %v4576
        %4585 = vst.msk [vmem:[%s2718 + $0x2c] sm:$0xf] %vm2363, %v4577
        %4586 = vst.msk [vmem:[%s2718 + $0x48] sm:$0xf] %vm2363, %v4578
        %4587 = vst.msk [vmem:[%s2718 + $0x64] sm:$0xf] %vm2363, %v4579
        %4588 = vst.msk [vmem:[%s2718 + $0x80] sm:$0xf] %vm2363, %v4580
        %4589 = vst.msk [vmem:[%s2718 + $0x9c] sm:$0xf] %vm2363, %v4581
        %4590 = vst.msk [vmem:[%s2718 + $0xb8] sm:$0xf] %vm2363, %v4582
        %4591 = vst.msk [vmem:[%s2718 + $0xd4] sm:$0xf] %vm2363, %v4583
        %v4592 = vld [vmem:[#allocation4] sm:$0xff]
        %v4593 = vld [vmem:[#allocation4 + $0x8] sm:$0xff]
        %v4594 = vld [vmem:[#allocation4 + $0x10] sm:$0xf]
        %v4595 = vld [vmem:[#allocation4 + $0x1c] sm:$0xff]
        %v4596 = vld [vmem:[#allocation4 + $0x24] sm:$0xff]
        %v4597 = vld [vmem:[#allocation4 + $0x2c] sm:$0xf]
        %v4598 = vld [vmem:[#allocation4 + $0x38] sm:$0xff]
        %v4599 = vld [vmem:[#allocation4 + $0x40] sm:$0xff]
        %v4600 = vld [vmem:[#allocation4 + $0x48] sm:$0xf]
        %v4601 = vld [vmem:[#allocation4 + $0x54] sm:$0xff]
        %v4602 = vld [vmem:[#allocation4 + $0x5c] sm:$0xff]
        %v4603 = vld [vmem:[#allocation4 + $0x64] sm:$0xf]
        %v4604 = vld [vmem:[#allocation4 + $0x70] sm:$0xff]
        %v4605 = vld [vmem:[#allocation4 + $0x78] sm:$0xff]
        %v4606 = vld [vmem:[#allocation4 + $0x80] sm:$0xf]
        %v4607 = vld [vmem:[#allocation4 + $0x8c] sm:$0xff]
        %v4608 = vld [vmem:[#allocation4 + $0x94] sm:$0xff]
        %v4609 = vld [vmem:[#allocation4 + $0x9c] sm:$0xf]
        %v4610 = vld [vmem:[#allocation4 + $0xa8] sm:$0xff]
        %v4611 = vld [vmem:[#allocation4 + $0xb0] sm:$0xff]
        %v4612 = vld [vmem:[#allocation4 + $0xb8] sm:$0xf]
        %v4613 = vld [vmem:[#allocation4 + $0xc4] sm:$0xff]
        %v4614 = vld [vmem:[#allocation4 + $0xcc] sm:$0xff]
        %v4615 = vld [vmem:[#allocation4 + $0xd4] sm:$0xf]
        %v4616 = vld [vmem:[#allocation4 + $0xe0] sm:$0xff]
        %v4617 = vld [vmem:[#allocation4 + $0xe8] sm:$0xff]
        %v4618 = vld [vmem:[#allocation4 + $0xf0] sm:$0xf]
        %v4619 = vld [vmem:[#allocation4 + $0xfc] sm:$0xff]
        %v4620 = vld [vmem:[#allocation4 + $0x104] sm:$0xff]
        %v4621 = vld [vmem:[#allocation4 + $0x10c] sm:$0xf]
        %v4622 = vld [vmem:[#allocation4 + $0x118] sm:$0xff]
        %v4623 = vld [vmem:[#allocation4 + $0x120] sm:$0xff]
        %v4624 = vld [vmem:[#allocation4 + $0x128] sm:$0xf]
        %v4625 = vld [vmem:[#allocation4 + $0x134] sm:$0xff]
        %v4626 = vld [vmem:[#allocation4 + $0x13c] sm:$0xff]
        %v4627 = vld [vmem:[#allocation4 + $0x144] sm:$0xf]
        %v4628 = vld [vmem:[#allocation4 + $0x150] sm:$0xff]
        %v4629 = vld [vmem:[#allocation4 + $0x158] sm:$0xff]
        %v4630 = vld [vmem:[#allocation4 + $0x160] sm:$0xf]
        %v4631 = vld [vmem:[#allocation4 + $0x16c] sm:$0xff]
        %v4632 = vld [vmem:[#allocation4 + $0x174] sm:$0xff]
        %v4633 = vld [vmem:[#allocation4 + $0x17c] sm:$0xf]
        %v4634 = vld [vmem:[#allocation4 + $0x188] sm:$0xff]
        %v4635 = vld [vmem:[#allocation4 + $0x190] sm:$0xff]
        %v4636 = vld [vmem:[#allocation4 + $0x198] sm:$0xf]
        %v4637 = vld [vmem:[#allocation4 + $0x1a4] sm:$0xff]
        %v4638 = vld [vmem:[#allocation4 + $0x1ac] sm:$0xff]
        %v4639 = vld [vmem:[#allocation4 + $0x1b4] sm:$0xf]
        %v4640 = vld [vmem:[%s6] sm:$0xf]
        %v4641 = vld [vmem:[%s6 + $0x4] sm:$0xf]
        %v4642 = vld [vmem:[%s6 + $0x8] sm:$0xf]
        %v4643 = vld [vmem:[%s6 + $0xc] sm:$0xf]
        %v4644 = vld [vmem:[%s6 + $0x10] sm:$0xf]
        %v4645 = vld [vmem:[%s6 + $0x14] sm:$0xf]
        %v4646 = vld [vmem:[%s6 + $0x18] sm:$0xf]
        %v4647 = vld [vmem:[%s6 + $0x1c] sm:$0xf]
        %v4648 = vld [vmem:[%s6 + $0x20] sm:$0xf]
        %v4649 = vld [vmem:[%s6 + $0x24] sm:$0xf]
        %v4650 = vld [vmem:[%s6 + $0x28] sm:$0xf]
        %v4651 = vld [vmem:[%s6 + $0x2c] sm:$0xf]
        %v4652 = vld [vmem:[%s6 + $0x30] sm:$0xf]
        %v4653 = vld [vmem:[%s6 + $0x34] sm:$0xf]
        %v4654 = vld [vmem:[%s6 + $0x38] sm:$0xf]
        %v4655 = vld [vmem:[%s6 + $0x3c] sm:$0xf]
        %v4656 = vld [vmem:[%s6 + $0x40] sm:$0xf]
        %v4657 = vld [vmem:[%s6 + $0x44] sm:$0xf]
        %v4658 = vld [vmem:[%s6 + $0x48] sm:$0xf]
        %v4659 = vld [vmem:[%s6 + $0x4c] sm:$0xf]
        %v4660 = vld [vmem:[%s6 + $0x50] sm:$0xf]
        %v4661 = vld [vmem:[%s6 + $0x54] sm:$0xf]
        %v4662 = vld [vmem:[%s6 + $0x58] sm:$0xf]
        %v4663 = vld [vmem:[%s6 + $0x5c] sm:$0xf]
        %v4664 = vld [vmem:[%s6 + $0x60] sm:$0xf]
        %v4665 = vld [vmem:[%s6 + $0x64] sm:$0xf]
        %v4666 = vld [vmem:[%s6 + $0x68] sm:$0xf]
        %v4667 = vld [vmem:[%s6 + $0x6c] sm:$0xf]
        %v4668 = vld [vmem:[%s6 + $0x70] sm:$0xf]
        %v4669 = vld [vmem:[%s6 + $0x74] sm:$0xf]
        %v4670 = vld [vmem:[%s6 + $0x78] sm:$0xf]
        %v4671 = vld [vmem:[%s6 + $0x7c] sm:$0xf]
        %v4672 = vld [vmem:[%s6 + $0x80] sm:$0xf]
        %v4673 = vld [vmem:[%s6 + $0x84] sm:$0xf]
        %v4674 = vld [vmem:[%s6 + $0x88] sm:$0xf]
        %v4675 = vld [vmem:[%s6 + $0x8c] sm:$0xf]
        %v4676 = vld [vmem:[%s6 + $0x90] sm:$0xf]
        %v4677 = vld [vmem:[%s6 + $0x94] sm:$0xf]
        %v4678 = vld [vmem:[%s6 + $0x98] sm:$0xf]
        %v4679 = vld [vmem:[%s6 + $0x9c] sm:$0xf]
        %v4680 = vld [vmem:[%s6 + $0xa0] sm:$0xf]
        %v4681 = vld [vmem:[%s6 + $0xa4] sm:$0xf]
        %v4682 = vld [vmem:[%s6 + $0xa8] sm:$0xf]
        %v4683 = vld [vmem:[%s6 + $0xac] sm:$0xf]
        %v4684 = vld [vmem:[%s6 + $0xb0] sm:$0xf]
        %v4685 = vld [vmem:[%s6 + $0xb4] sm:$0xf]
        %v4686 = vld [vmem:[%s6 + $0xb8] sm:$0xf]
        %v4687 = vld [vmem:[%s6 + $0xbc] sm:$0xf]
        %v4688 = vld [vmem:[%s6 + $0xc0] sm:$0xf]
        %v4689 = vld [vmem:[%s6 + $0xc4] sm:$0xf]
        %v4690 = vld [vmem:[%s6 + $0xc8] sm:$0xf]
        %v4691 = vld [vmem:[%s6 + $0xcc] sm:$0xf]
        %v4692 = vld [vmem:[%s6 + $0xd0] sm:$0xf]
        %v4693 = vld [vmem:[%s6 + $0xd4] sm:$0xf]
        %v4694 = vld [vmem:[%s6 + $0xd8] sm:$0xf]
        %v4695 = vld [vmem:[%s6 + $0xdc] sm:$0xf]
        %v4696 = vld [vmem:[%s6 + $0xe0] sm:$0xf]
        %v4697 = vld [vmem:[%s6 + $0xe4] sm:$0xf]
        %v4698 = vld [vmem:[%s6 + $0xe8] sm:$0xf]
        %v4699 = vld [vmem:[%s6 + $0xec] sm:$0xf]
        %v4700 = vld [vmem:[%s6 + $0xf0] sm:$0xf]
        %v4701 = vld [vmem:[%s6 + $0xf4] sm:$0xf]
        %v4702 = vld [vmem:[%s6 + $0xf8] sm:$0xf]
        %v4703 = vld [vmem:[%s6 + $0xfc] sm:$0xf]
        %v4704 = vld [vmem:[%s6 + $0x100] sm:$0xf]
        %v4705 = vld [vmem:[%s6 + $0x104] sm:$0xf]
        %v4706 = vld [vmem:[%s6 + $0x108] sm:$0xf]
        %v4707 = vld [vmem:[%s6 + $0x10c] sm:$0xf]
        %v4708 = vld [vmem:[%s6 + $0x110] sm:$0xf]
        %v4709 = vld [vmem:[%s6 + $0x114] sm:$0xf]
        %v4710 = vld [vmem:[%s6 + $0x118] sm:$0xf]
        %v4711 = vld [vmem:[%s6 + $0x11c] sm:$0xf]
        %v4712 = vld [vmem:[%s7] sm:$0x1]
        %v4714 = vperm.slane %v4712, 0
        %v4764 = vunpack.c.l.b16 %v4592
        %v4765 = vunpack.c.h.b16 %v4592
        %v4766 = vunpack.c.l.b16 %v4593
        %v4767 = vunpack.c.h.b16 %v4593
        %v4768 = vunpack.c.l.b16 %v4594
        %v4769 = vunpack.c.l.b16 %v4595
        %v4770 = vunpack.c.h.b16 %v4595
        %v4771 = vunpack.c.l.b16 %v4596
        %v4772 = vunpack.c.h.b16 %v4596
        %v4773 = vunpack.c.l.b16 %v4597
        %v4774 = vunpack.c.l.b16 %v4598
        %v4775 = vunpack.c.h.b16 %v4598
        %v4776 = vunpack.c.l.b16 %v4599
        %v4777 = vunpack.c.h.b16 %v4599
        %v4778 = vunpack.c.l.b16 %v4600
        %v4779 = vunpack.c.l.b16 %v4601
        %v4780 = vunpack.c.h.b16 %v4601
        %v4781 = vunpack.c.l.b16 %v4602
        %v4782 = vunpack.c.h.b16 %v4602
        %v4783 = vunpack.c.l.b16 %v4603
        %v4784 = vunpack.c.l.b16 %v4604
        %v4785 = vunpack.c.h.b16 %v4604
        %v4786 = vunpack.c.l.b16 %v4605
        %v4787 = vunpack.c.h.b16 %v4605
        %v4788 = vunpack.c.l.b16 %v4606
        %v4789 = vunpack.c.l.b16 %v4607
        %v4790 = vunpack.c.h.b16 %v4607
        %v4791 = vunpack.c.l.b16 %v4608
        %v4792 = vunpack.c.h.b16 %v4608
        %v4793 = vunpack.c.l.b16 %v4609
        %v4794 = vunpack.c.l.b16 %v4610
        %v4795 = vunpack.c.h.b16 %v4610
        %v4796 = vunpack.c.l.b16 %v4611
        %v4797 = vunpack.c.h.b16 %v4611
        %v4798 = vunpack.c.l.b16 %v4612
        %v4799 = vunpack.c.l.b16 %v4613
        %v4800 = vunpack.c.h.b16 %v4613
        %v4801 = vunpack.c.l.b16 %v4614
        %v4802 = vunpack.c.h.b16 %v4614
        %v4803 = vunpack.c.l.b16 %v4615
        %v4804 = vunpack.c.l.b16 %v4616
        %v4805 = vunpack.c.h.b16 %v4616
        %v4806 = vunpack.c.l.b16 %v4617
        %v4807 = vunpack.c.h.b16 %v4617
        %v4808 = vunpack.c.l.b16 %v4618
        %v4809 = vunpack.c.l.b16 %v4619
        %v4810 = vunpack.c.h.b16 %v4619
        %v4811 = vunpack.c.l.b16 %v4620
        %v4812 = vunpack.c.h.b16 %v4620
        %v4813 = vunpack.c.l.b16 %v4621
        %v4814 = vunpack.c.l.b16 %v4622
        %v4815 = vunpack.c.h.b16 %v4622
        %v4816 = vunpack.c.l.b16 %v4623
        %v4817 = vunpack.c.h.b16 %v4623
        %v4818 = vunpack.c.l.b16 %v4624
        %v4819 = vunpack.c.l.b16 %v4625
        %v4820 = vunpack.c.h.b16 %v4625
        %v4821 = vunpack.c.l.b16 %v4626
        %v4822 = vunpack.c.h.b16 %v4626
        %v4823 = vunpack.c.l.b16 %v4627
        %v4824 = vunpack.c.l.b16 %v4628
        %v4825 = vunpack.c.h.b16 %v4628
        %v4826 = vunpack.c.l.b16 %v4629
        %v4827 = vunpack.c.h.b16 %v4629
        %v4828 = vunpack.c.l.b16 %v4630
        %v4829 = vunpack.c.l.b16 %v4631
        %v4830 = vunpack.c.h.b16 %v4631
        %v4831 = vunpack.c.l.b16 %v4632
        %v4832 = vunpack.c.h.b16 %v4632
        %v4833 = vunpack.c.l.b16 %v4633
        %v4834 = vunpack.c.l.b16 %v4634
        %v4835 = vunpack.c.h.b16 %v4634
        %v4836 = vunpack.c.l.b16 %v4635
        %v4837 = vunpack.c.h.b16 %v4635
        %v4838 = vunpack.c.l.b16 %v4636
        %v4839 = vunpack.c.l.b16 %v4637
        %v4840 = vunpack.c.h.b16 %v4637
        %v4841 = vunpack.c.l.b16 %v4638
        %v4842 = vunpack.c.h.b16 %v4638
        %v4843 = vunpack.c.l.b16 %v4639
        %v4844 = vpack.c.b16 %v4769, %v4764
        %v4845 = vpack.c.b16 %v4770, %v4765
        %v4846 = vpack.c.b16 %v4771, %v4766
        %v4847 = vpack.c.b16 %v4772, %v4767
        %v4848 = vpack.c.b16 %v4773, %v4768
        %v4849 = vpack.c.b16 %v4779, %v4774
        %v4850 = vpack.c.b16 %v4780, %v4775
        %v4851 = vpack.c.b16 %v4781, %v4776
        %v4852 = vpack.c.b16 %v4782, %v4777
        %v4853 = vpack.c.b16 %v4783, %v4778
        %v4854 = vpack.c.b16 %v4789, %v4784
        %v4855 = vpack.c.b16 %v4790, %v4785
        %v4856 = vpack.c.b16 %v4791, %v4786
        %v4857 = vpack.c.b16 %v4792, %v4787
        %v4858 = vpack.c.b16 %v4793, %v4788
        %v4859 = vpack.c.b16 %v4799, %v4794
        %v4860 = vpack.c.b16 %v4800, %v4795
        %v4861 = vpack.c.b16 %v4801, %v4796
        %v4862 = vpack.c.b16 %v4802, %v4797
        %v4863 = vpack.c.b16 %v4803, %v4798
        %v4864 = vpack.c.b16 %v4809, %v4804
        %v4865 = vpack.c.b16 %v4810, %v4805
        %v4866 = vpack.c.b16 %v4811, %v4806
        %v4867 = vpack.c.b16 %v4812, %v4807
        %v4868 = vpack.c.b16 %v4813, %v4808
        %v4869 = vpack.c.b16 %v4819, %v4814
        %v4870 = vpack.c.b16 %v4820, %v4815
        %v4871 = vpack.c.b16 %v4821, %v4816
        %v4872 = vpack.c.b16 %v4822, %v4817
        %v4873 = vpack.c.b16 %v4823, %v4818
        %v4874 = vpack.c.b16 %v4829, %v4824
        %v4875 = vpack.c.b16 %v4830, %v4825
        %v4876 = vpack.c.b16 %v4831, %v4826
        %v4877 = vpack.c.b16 %v4832, %v4827
        %v4878 = vpack.c.b16 %v4833, %v4828
        %v4879 = vpack.c.b16 %v4839, %v4834
        %v4880 = vpack.c.b16 %v4840, %v4835
        %v4881 = vpack.c.b16 %v4841, %v4836
        %v4882 = vpack.c.b16 %v4842, %v4837
        %v4883 = vpack.c.b16 %v4843, %v4838
        %v4988 = vunpack.c.l.b16 %v4640
        %v4989 = vunpack.c.l.b16 %v4641
        %v4990 = vunpack.c.l.b16 %v4642
        %v4991 = vunpack.c.l.b16 %v4643
        %v4992 = vunpack.c.l.b16 %v4644
        %v4993 = vunpack.c.l.b16 %v4645
        %v4994 = vunpack.c.l.b16 %v4646
        %v4995 = vunpack.c.l.b16 %v4647
        %v4996 = vunpack.c.l.b16 %v4648
        %v4997 = vunpack.c.l.b16 %v4649
        %v4998 = vunpack.c.l.b16 %v4650
        %v4999 = vunpack.c.l.b16 %v4651
        %v5000 = vunpack.c.l.b16 %v4652
        %v5001 = vunpack.c.l.b16 %v4653
        %v5002 = vunpack.c.l.b16 %v4654
        %v5003 = vunpack.c.l.b16 %v4655
        %v5004 = vunpack.c.l.b16 %v4656
        %v5005 = vunpack.c.l.b16 %v4657
        %v5006 = vunpack.c.l.b16 %v4658
        %v5007 = vunpack.c.l.b16 %v4659
        %v5008 = vunpack.c.l.b16 %v4660
        %v5009 = vunpack.c.l.b16 %v4661
        %v5010 = vunpack.c.l.b16 %v4662
        %v5011 = vunpack.c.l.b16 %v4663
        %v5012 = vunpack.c.l.b16 %v4664
        %v5013 = vunpack.c.l.b16 %v4665
        %v5014 = vunpack.c.l.b16 %v4666
        %v5015 = vunpack.c.l.b16 %v4667
        %v5016 = vunpack.c.l.b16 %v4668
        %v5017 = vunpack.c.l.b16 %v4669
        %v5018 = vunpack.c.l.b16 %v4670
        %v5019 = vunpack.c.l.b16 %v4671
        %v5020 = vunpack.c.l.b16 %v4672
        %v5021 = vunpack.c.l.b16 %v4673
        %v5022 = vunpack.c.l.b16 %v4674
        %v5023 = vunpack.c.l.b16 %v4675
        %v5024 = vunpack.c.l.b16 %v4676
        %v5025 = vunpack.c.l.b16 %v4677
        %v5026 = vunpack.c.l.b16 %v4678
        %v5027 = vunpack.c.l.b16 %v4679
        %v5028 = vunpack.c.l.b16 %v4680
        %v5029 = vunpack.c.l.b16 %v4681
        %v5030 = vunpack.c.l.b16 %v4682
        %v5031 = vunpack.c.l.b16 %v4683
        %v5032 = vunpack.c.l.b16 %v4684
        %v5033 = vunpack.c.l.b16 %v4685
        %v5034 = vunpack.c.l.b16 %v4686
        %v5035 = vunpack.c.l.b16 %v4687
        %v5036 = vunpack.c.l.b16 %v4688
        %v5037 = vunpack.c.l.b16 %v4689
        %v5038 = vunpack.c.l.b16 %v4690
        %v5039 = vunpack.c.l.b16 %v4691
        %v5040 = vunpack.c.l.b16 %v4692
        %v5041 = vunpack.c.l.b16 %v4693
        %v5042 = vunpack.c.l.b16 %v4694
        %v5043 = vunpack.c.l.b16 %v4695
        %v5044 = vunpack.c.l.b16 %v4696
        %v5045 = vunpack.c.l.b16 %v4697
        %v5046 = vunpack.c.l.b16 %v4698
        %v5047 = vunpack.c.l.b16 %v4699
        %v5048 = vunpack.c.l.b16 %v4700
        %v5049 = vunpack.c.l.b16 %v4701
        %v5050 = vunpack.c.l.b16 %v4702
        %v5051 = vunpack.c.l.b16 %v4703
        %v5052 = vunpack.c.l.b16 %v4704
        %v5053 = vunpack.c.l.b16 %v4705
        %v5054 = vunpack.c.l.b16 %v4706
        %v5055 = vunpack.c.l.b16 %v4707
        %v5056 = vunpack.c.l.b16 %v4708
        %v5057 = vunpack.c.l.b16 %v4709
        %v5058 = vunpack.c.l.b16 %v4710
        %v5059 = vunpack.c.l.b16 %v4711
        %v5060 = vpack.c.b16 %v4989, %v4988
        %v5061 = vpack.c.b16 %v4991, %v4990
        %v5062 = vpack.c.b16 %v4993, %v4992
        %v5063 = vpack.c.b16 %v4995, %v4994
        %v5064 = vpack.c.b16 %v4997, %v4996
        %v5065 = vpack.c.b16 %v4999, %v4998
        %v5066 = vpack.c.b16 %v5001, %v5000
        %v5067 = vpack.c.b16 %v5003, %v5002
        %v5068 = vpack.c.b16 %v5005, %v5004
        %v5069 = vpack.c.b16 %v5007, %v5006
        %v5070 = vpack.c.b16 %v5009, %v5008
        %v5071 = vpack.c.b16 %v5011, %v5010
        %v5072 = vpack.c.b16 %v5013, %v5012
        %v5073 = vpack.c.b16 %v5015, %v5014
        %v5074 = vpack.c.b16 %v5017, %v5016
        %v5075 = vpack.c.b16 %v5019, %v5018
        %v5076 = vpack.c.b16 %v5021, %v5020
        %v5077 = vpack.c.b16 %v5023, %v5022
        %v5078 = vpack.c.b16 %v5025, %v5024
        %v5079 = vpack.c.b16 %v5027, %v5026
        %v5080 = vpack.c.b16 %v5029, %v5028
        %v5081 = vpack.c.b16 %v5031, %v5030
        %v5082 = vpack.c.b16 %v5033, %v5032
        %v5083 = vpack.c.b16 %v5035, %v5034
        %v5084 = vpack.c.b16 %v5037, %v5036
        %v5085 = vpack.c.b16 %v5039, %v5038
        %v5086 = vpack.c.b16 %v5041, %v5040
        %v5087 = vpack.c.b16 %v5043, %v5042
        %v5088 = vpack.c.b16 %v5045, %v5044
        %v5089 = vpack.c.b16 %v5047, %v5046
        %v5090 = vpack.c.b16 %v5049, %v5048
        %v5091 = vpack.c.b16 %v5051, %v5050
        %v5092 = vpack.c.b16 %v5053, %v5052
        %v5093 = vpack.c.b16 %v5055, %v5054
        %v5094 = vpack.c.b16 %v5057, %v5056
        %v5095 = vpack.c.b16 %v5059, %v5058
        %v5133 = vsel %vm2338, %v4848, 0
        %v5136 = vsel %vm2338, %v4853, 0
        %v5139 = vsel %vm2338, %v4858, 0
        %v5142 = vsel %vm2338, %v4863, 0
        %v5145 = vsel %vm2338, %v4868, 0
        %v5148 = vsel %vm2338, %v4873, 0
        %v5151 = vsel %vm2338, %v4878, 0
        %v5154 = vsel %vm2338, %v4883, 0
        %5156 = vmatpush.bf16.msra.mxu0 %v5067
        %5157 = vmatpush.bf16.msra.mxu0 %v5066
        %5158 = vmatpush.bf16.msra.mxu0 %v5065
        %5159 = vmatpush.bf16.msra.mxu0 %v5064
        %5160 = vmatpush.bf16.msra.mxu0 %v5063
        %5161 = vmatpush.bf16.msra.mxu0 %v5062
        %5162 = vmatpush.bf16.msra.mxu0 %v5061
        %5163 = vmatpush.bf16.msra.mxu0 %v5060
        %5164 = vmatmul.bf16.gmra.mxu0 %v4844
        %v5165 = vpop.f32.mrf.mxu0
        %v5166 = vadd.f32 %v4714, %v5165
        %v5167 = vpop.f32.mrf.mxu0
        %v5168 = vadd.f32 %v4714, %v5167
        %5169 = vmatmul.bf16.gmra.mxu0 %v4849
        %v5170 = vpop.f32.mrf.mxu0
        %v5171 = vadd.f32 %v4714, %v5170
        %v5172 = vpop.f32.mrf.mxu0
        %v5173 = vadd.f32 %v4714, %v5172
        %5174 = vmatmul.bf16.gmra.mxu0 %v4854
        %v5175 = vpop.f32.mrf.mxu0
        %v5176 = vadd.f32 %v4714, %v5175
        %v5177 = vpop.f32.mrf.mxu0
        %v5178 = vadd.f32 %v4714, %v5177
        %5179 = vmatmul.bf16.gmra.mxu0 %v4859
        %v5180 = vpop.f32.mrf.mxu0
        %v5181 = vadd.f32 %v4714, %v5180
        %v5182 = vpop.f32.mrf.mxu0
        %v5183 = vadd.f32 %v4714, %v5182
        %5184 = vmatmul.bf16.gmra.mxu0 %v4864
        %v5185 = vpop.f32.mrf.mxu0
        %v5186 = vadd.f32 %v4714, %v5185
        %v5187 = vpop.f32.mrf.mxu0
        %v5188 = vadd.f32 %v4714, %v5187
        %5189 = vmatmul.bf16.gmra.mxu0 %v4869
        %v5190 = vpop.f32.mrf.mxu0
        %v5191 = vadd.f32 %v4714, %v5190
        %v5192 = vpop.f32.mrf.mxu0
        %v5193 = vadd.f32 %v4714, %v5192
        %5194 = vmatmul.bf16.gmra.mxu0 %v4874
        %v5195 = vpop.f32.mrf.mxu0
        %v5196 = vadd.f32 %v4714, %v5195
        %v5197 = vpop.f32.mrf.mxu0
        %v5198 = vadd.f32 %v4714, %v5197
        %5199 = vmatmul.bf16.gmra.mxu0 %v4879
        %v5200 = vpop.f32.mrf.mxu0
        %v5201 = vadd.f32 %v4714, %v5200
        %v5202 = vpop.f32.mrf.mxu0
        %v5203 = vadd.f32 %v4714, %v5202
        %5204 = vdwg.mxu0
        %5205 = vmatpush.bf16.msra.mxu0 %v5075
        %5206 = vmatpush.bf16.msra.mxu0 %v5074
        %5207 = vmatpush.bf16.msra.mxu0 %v5073
        %5208 = vmatpush.bf16.msra.mxu0 %v5072
        %5209 = vmatpush.bf16.msra.mxu0 %v5071
        %5210 = vmatpush.bf16.msra.mxu0 %v5070
        %5211 = vmatpush.bf16.msra.mxu0 %v5069
        %5212 = vmatpush.bf16.msra.mxu0 %v5068
        %5213 = vmatmul.bf16.gmra.mxu0 %v4845
        %v5214 = vpop.f32.mrf.mxu0
        %v5215 = vadd.f32 %v5166, %v5214
        %v5216 = vpop.f32.mrf.mxu0
        %v5217 = vadd.f32 %v5168, %v5216
        %5218 = vmatmul.bf16.gmra.mxu0 %v4850
        %v5219 = vpop.f32.mrf.mxu0
        %v5220 = vadd.f32 %v5171, %v5219
        %v5221 = vpop.f32.mrf.mxu0
        %v5222 = vadd.f32 %v5173, %v5221
        %5223 = vmatmul.bf16.gmra.mxu0 %v4855
        %v5224 = vpop.f32.mrf.mxu0
        %v5225 = vadd.f32 %v5176, %v5224
        %v5226 = vpop.f32.mrf.mxu0
        %v5227 = vadd.f32 %v5178, %v5226
        %5228 = vmatmul.bf16.gmra.mxu0 %v4860
        %v5229 = vpop.f32.mrf.mxu0
        %v5230 = vadd.f32 %v5181, %v5229
        %v5231 = vpop.f32.mrf.mxu0
        %v5232 = vadd.f32 %v5183, %v5231
        %5233 = vmatmul.bf16.gmra.mxu0 %v4865
        %v5234 = vpop.f32.mrf.mxu0
        %v5235 = vadd.f32 %v5186, %v5234
        %v5236 = vpop.f32.mrf.mxu0
        %v5237 = vadd.f32 %v5188, %v5236
        %5238 = vmatmul.bf16.gmra.mxu0 %v4870
        %v5239 = vpop.f32.mrf.mxu0
        %v5240 = vadd.f32 %v5191, %v5239
        %v5241 = vpop.f32.mrf.mxu0
        %v5242 = vadd.f32 %v5193, %v5241
        %5243 = vmatmul.bf16.gmra.mxu0 %v4875
        %v5244 = vpop.f32.mrf.mxu0
        %v5245 = vadd.f32 %v5196, %v5244
        %v5246 = vpop.f32.mrf.mxu0
        %v5247 = vadd.f32 %v5198, %v5246
        %5248 = vmatmul.bf16.gmra.mxu0 %v4880
        %v5249 = vpop.f32.mrf.mxu0
        %v5250 = vadd.f32 %v5201, %v5249
        %v5251 = vpop.f32.mrf.mxu0
        %v5252 = vadd.f32 %v5203, %v5251
        %5253 = vdwg.mxu0
        %5254 = vmatpush.bf16.msra.mxu0 %v5083
        %5255 = vmatpush.bf16.msra.mxu0 %v5082
        %5256 = vmatpush.bf16.msra.mxu0 %v5081
        %5257 = vmatpush.bf16.msra.mxu0 %v5080
        %5258 = vmatpush.bf16.msra.mxu0 %v5079
        %5259 = vmatpush.bf16.msra.mxu0 %v5078
        %5260 = vmatpush.bf16.msra.mxu0 %v5077
        %5261 = vmatpush.bf16.msra.mxu0 %v5076
        %5262 = vmatmul.bf16.gmra.mxu0 %v4846
        %v5263 = vpop.f32.mrf.mxu0
        %v5264 = vadd.f32 %v5215, %v5263
        %v5265 = vpop.f32.mrf.mxu0
        %v5266 = vadd.f32 %v5217, %v5265
        %5267 = vmatmul.bf16.gmra.mxu0 %v4851
        %v5268 = vpop.f32.mrf.mxu0
        %v5269 = vadd.f32 %v5220, %v5268
        %v5270 = vpop.f32.mrf.mxu0
        %v5271 = vadd.f32 %v5222, %v5270
        %5272 = vmatmul.bf16.gmra.mxu0 %v4856
        %v5273 = vpop.f32.mrf.mxu0
        %v5274 = vadd.f32 %v5225, %v5273
        %v5275 = vpop.f32.mrf.mxu0
        %v5276 = vadd.f32 %v5227, %v5275
        %5277 = vmatmul.bf16.gmra.mxu0 %v4861
        %v5278 = vpop.f32.mrf.mxu0
        %v5279 = vadd.f32 %v5230, %v5278
        %v5280 = vpop.f32.mrf.mxu0
        %v5281 = vadd.f32 %v5232, %v5280
        %5282 = vmatmul.bf16.gmra.mxu0 %v4866
        %v5283 = vpop.f32.mrf.mxu0
        %v5284 = vadd.f32 %v5235, %v5283
        %v5285 = vpop.f32.mrf.mxu0
        %v5286 = vadd.f32 %v5237, %v5285
        %5287 = vmatmul.bf16.gmra.mxu0 %v4871
        %v5288 = vpop.f32.mrf.mxu0
        %v5289 = vadd.f32 %v5240, %v5288
        %v5290 = vpop.f32.mrf.mxu0
        %v5291 = vadd.f32 %v5242, %v5290
        %5292 = vmatmul.bf16.gmra.mxu0 %v4876
        %v5293 = vpop.f32.mrf.mxu0
        %v5294 = vadd.f32 %v5245, %v5293
        %v5295 = vpop.f32.mrf.mxu0
        %v5296 = vadd.f32 %v5247, %v5295
        %5297 = vmatmul.bf16.gmra.mxu0 %v4881
        %v5298 = vpop.f32.mrf.mxu0
        %v5299 = vadd.f32 %v5250, %v5298
        %v5300 = vpop.f32.mrf.mxu0
        %v5301 = vadd.f32 %v5252, %v5300
        %5302 = vdwg.mxu0
        %5303 = vmatpush.bf16.msra.mxu0 %v5091
        %5304 = vmatpush.bf16.msra.mxu0 %v5090
        %5305 = vmatpush.bf16.msra.mxu0 %v5089
        %5306 = vmatpush.bf16.msra.mxu0 %v5088
        %5307 = vmatpush.bf16.msra.mxu0 %v5087
        %5308 = vmatpush.bf16.msra.mxu0 %v5086
        %5309 = vmatpush.bf16.msra.mxu0 %v5085
        %5310 = vmatpush.bf16.msra.mxu0 %v5084
        %5311 = vmatmul.bf16.gmra.mxu0 %v4847
        %v5312 = vpop.f32.mrf.mxu0
        %v5313 = vadd.f32 %v5264, %v5312
        %v5314 = vpop.f32.mrf.mxu0
        %v5315 = vadd.f32 %v5266, %v5314
        %5316 = vmatmul.bf16.gmra.mxu0 %v4852
        %v5317 = vpop.f32.mrf.mxu0
        %v5318 = vadd.f32 %v5269, %v5317
        %v5319 = vpop.f32.mrf.mxu0
        %v5320 = vadd.f32 %v5271, %v5319
        %5321 = vmatmul.bf16.gmra.mxu0 %v4857
        %v5322 = vpop.f32.mrf.mxu0
        %v5323 = vadd.f32 %v5274, %v5322
        %v5324 = vpop.f32.mrf.mxu0
        %v5325 = vadd.f32 %v5276, %v5324
        %5326 = vmatmul.bf16.gmra.mxu0 %v4862
        %v5327 = vpop.f32.mrf.mxu0
        %v5328 = vadd.f32 %v5279, %v5327
        %v5329 = vpop.f32.mrf.mxu0
        %v5330 = vadd.f32 %v5281, %v5329
        %5331 = vmatmul.bf16.gmra.mxu0 %v4867
        %v5332 = vpop.f32.mrf.mxu0
        %v5333 = vadd.f32 %v5284, %v5332
        %v5334 = vpop.f32.mrf.mxu0
        %v5335 = vadd.f32 %v5286, %v5334
        %5336 = vmatmul.bf16.gmra.mxu0 %v4872
        %v5337 = vpop.f32.mrf.mxu0
        %v5338 = vadd.f32 %v5289, %v5337
        %v5339 = vpop.f32.mrf.mxu0
        %v5340 = vadd.f32 %v5291, %v5339
        %5341 = vmatmul.bf16.gmra.mxu0 %v4877
        %v5342 = vpop.f32.mrf.mxu0
        %v5343 = vadd.f32 %v5294, %v5342
        %v5344 = vpop.f32.mrf.mxu0
        %v5345 = vadd.f32 %v5296, %v5344
        %5346 = vmatmul.bf16.gmra.mxu0 %v4882
        %v5347 = vpop.f32.mrf.mxu0
        %v5348 = vadd.f32 %v5299, %v5347
        %v5349 = vpop.f32.mrf.mxu0
        %v5350 = vadd.f32 %v5301, %v5349
        %5351 = vdwg.mxu0
        %5352 = vmatpush.bf16.msra.mxu0 0
        %5353 = vmatpush.bf16.msra.mxu0 0
        %5354 = vmatpush.bf16.msra.mxu0 0
        %5355 = vmatpush.bf16.msra.mxu0 0
        %5356 = vmatpush.bf16.msra.mxu0 %v5095
        %5357 = vmatpush.bf16.msra.mxu0 %v5094
        %5358 = vmatpush.bf16.msra.mxu0 %v5093
        %5359 = vmatpush.bf16.msra.mxu0 %v5092
        %5360 = vmatmul.bf16.gmra.mxu0 %v5133
        %v5361 = vpop.f32.mrf.mxu0
        %v5362 = vadd.f32 %v5313, %v5361
        %v5363 = vpop.f32.mrf.mxu0
        %v5364 = vadd.f32 %v5315, %v5363
        %5365 = vmatmul.bf16.gmra.mxu0 %v5136
        %v5366 = vpop.f32.mrf.mxu0
        %v5367 = vadd.f32 %v5318, %v5366
        %v5368 = vpop.f32.mrf.mxu0
        %v5369 = vadd.f32 %v5320, %v5368
        %5370 = vmatmul.bf16.gmra.mxu0 %v5139
        %v5371 = vpop.f32.mrf.mxu0
        %v5372 = vadd.f32 %v5323, %v5371
        %v5373 = vpop.f32.mrf.mxu0
        %v5374 = vadd.f32 %v5325, %v5373
        %5375 = vmatmul.bf16.gmra.mxu0 %v5142
        %v5376 = vpop.f32.mrf.mxu0
        %v5377 = vadd.f32 %v5328, %v5376
        %v5378 = vpop.f32.mrf.mxu0
        %v5379 = vadd.f32 %v5330, %v5378
        %5380 = vmatmul.bf16.gmra.mxu0 %v5145
        %v5381 = vpop.f32.mrf.mxu0
        %v5382 = vadd.f32 %v5333, %v5381
        %v5383 = vpop.f32.mrf.mxu0
        %v5384 = vadd.f32 %v5335, %v5383
        %5385 = vmatmul.bf16.gmra.mxu0 %v5148
        %v5386 = vpop.f32.mrf.mxu0
        %v5387 = vadd.f32 %v5338, %v5386
        %v5388 = vpop.f32.mrf.mxu0
        %v5389 = vadd.f32 %v5340, %v5388
        %5390 = vmatmul.bf16.gmra.mxu0 %v5151
        %v5391 = vpop.f32.mrf.mxu0
        %v5392 = vadd.f32 %v5343, %v5391
        %v5393 = vpop.f32.mrf.mxu0
        %v5394 = vadd.f32 %v5345, %v5393
        %5395 = vmatmul.bf16.gmra.mxu0 %v5154
        %v5396 = vpop.f32.mrf.mxu0
        %v5397 = vadd.f32 %v5348, %v5396
        %v5398 = vpop.f32.mrf.mxu0
        %v5399 = vadd.f32 %v5350, %v5398
        %5400 = vdwg.mxu0
        %v5401 = vmax.f32 %v5362, 0.0
        %v5402 = vmax.f32 %v5364, 0.0
        %v5403 = vmax.f32 %v5367, 0.0
        %v5404 = vmax.f32 %v5369, 0.0
        %v5405 = vmax.f32 %v5372, 0.0
        %v5406 = vmax.f32 %v5374, 0.0
        %v5407 = vmax.f32 %v5377, 0.0
        %v5408 = vmax.f32 %v5379, 0.0
        %v5409 = vmax.f32 %v5382, 0.0
        %v5410 = vmax.f32 %v5384, 0.0
        %v5411 = vmax.f32 %v5387, 0.0
        %v5412 = vmax.f32 %v5389, 0.0
        %v5413 = vmax.f32 %v5392, 0.0
        %v5414 = vmax.f32 %v5394, 0.0
        %v5415 = vmax.f32 %v5397, 0.0
        %v5416 = vmax.f32 %v5399, 0.0
        %5417 = vst.msk [vmem:[%s2337 + $0x1] sm:$0xff] %vm1895, %v5401
        %5418 = vst.msk [vmem:[%s2337 + $0x11] sm:$0xff] %vm1895, %v5402
        %5419 = vst.msk [vmem:[%s2337 + $0x21] sm:$0xff] %vm1895, %v5403
        %5420 = vst.msk [vmem:[%s2337 + $0x31] sm:$0xff] %vm1895, %v5404
        %5421 = vst.msk [vmem:[%s2337 + $0x41] sm:$0xff] %vm1895, %v5405
        %5422 = vst.msk [vmem:[%s2337 + $0x51] sm:$0xff] %vm1895, %v5406
        %5423 = vst.msk [vmem:[%s2337 + $0x61] sm:$0xff] %vm1895, %v5407
        %5424 = vst.msk [vmem:[%s2337 + $0x71] sm:$0xff] %vm1895, %v5408
        %v5425 = vld [vmem:[#allocation2] sm:$0xff]
        %v5426 = vld [vmem:[#allocation2 + $0x10] sm:$0xff]
        %v5427 = vld [vmem:[#allocation2 + $0x20] sm:$0xff]
        %v5428 = vld [vmem:[#allocation2 + $0x30] sm:$0xff]
        %v5429 = vld [vmem:[#allocation2 + $0x40] sm:$0xff]
        %v5430 = vld [vmem:[#allocation2 + $0x50] sm:$0xff]
        %v5431 = vld [vmem:[#allocation2 + $0x60] sm:$0xff]
        %v5432 = vld [vmem:[#allocation2 + $0x70] sm:$0xff]
        %v5433 = vpack.c.bf16 %v5425, %v5425
        %v5434 = vpack.c.bf16 %v5426, %v5426
        %v5435 = vpack.c.bf16 %v5427, %v5427
        %v5436 = vpack.c.bf16 %v5428, %v5428
        %v5437 = vpack.c.bf16 %v5429, %v5429
        %v5438 = vpack.c.bf16 %v5430, %v5430
        %v5439 = vpack.c.bf16 %v5431, %v5431
        %v5440 = vpack.c.bf16 %v5432, %v5432
        %vm5441 = vcmask 781312
        %5442 = vst.msk [vmem:[#allocation4] sm:$0xf] %vm5441, %v5433
        %5443 = vst.msk [vmem:[#allocation4 + $0x1c] sm:$0xf] %vm5441, %v5434
        %5444 = vst.msk [vmem:[#allocation4 + $0x38] sm:$0xf] %vm5441, %v5435
        %5445 = vst.msk [vmem:[#allocation4 + $0x54] sm:$0xf] %vm5441, %v5436
        %5446 = vst.msk [vmem:[#allocation4 + $0x70] sm:$0xf] %vm5441, %v5437
        %5447 = vst.msk [vmem:[#allocation4 + $0x8c] sm:$0xf] %vm5441, %v5438
        %5448 = vst.msk [vmem:[#allocation4 + $0xa8] sm:$0xf] %vm5441, %v5439
        %5449 = vst.msk [vmem:[#allocation4 + $0xc4] sm:$0xf] %vm5441, %v5440
        %v5450 = vld [vmem:[#allocation2 + $0x1] sm:$0xff]
        %v5451 = vld [vmem:[#allocation2 + $0x11] sm:$0xff]
        %v5452 = vld [vmem:[#allocation2 + $0x21] sm:$0xff]
        %v5453 = vld [vmem:[#allocation2 + $0x31] sm:$0xff]
        %v5454 = vld [vmem:[#allocation2 + $0x41] sm:$0xff]
        %v5455 = vld [vmem:[#allocation2 + $0x51] sm:$0xff]
        %v5456 = vld [vmem:[#allocation2 + $0x61] sm:$0xff]
        %v5457 = vld [vmem:[#allocation2 + $0x71] sm:$0xff]
        %v5458 = vpack.c.bf16 %v5450, %v5450
        %v5459 = vpack.c.bf16 %v5451, %v5451
        %v5460 = vpack.c.bf16 %v5452, %v5452
        %v5461 = vpack.c.bf16 %v5453, %v5453
        %v5462 = vpack.c.bf16 %v5454, %v5454
        %v5463 = vpack.c.bf16 %v5455, %v5455
        %v5464 = vpack.c.bf16 %v5456, %v5456
        %v5465 = vpack.c.bf16 %v5457, %v5457
        %5474 = vrot.lane.b32.xlu0 %v5458, 96
        %v5475 = vpop.permute.xlu0 %5474
        %5476 = vrot.lane.b32.xlu0 %v5459, 96
        %v5477 = vpop.permute.xlu0 %5476
        %5478 = vrot.lane.b32.xlu0 %v5460, 96
        %v5479 = vpop.permute.xlu0 %5478
        %5480 = vrot.lane.b32.xlu0 %v5461, 96
        %v5481 = vpop.permute.xlu0 %5480
        %5482 = vrot.lane.b32.xlu0 %v5462, 96
        %v5483 = vpop.permute.xlu0 %5482
        %5484 = vrot.lane.b32.xlu0 %v5463, 96
        %v5485 = vpop.permute.xlu0 %5484
        %5486 = vrot.lane.b32.xlu0 %v5464, 96
        %v5487 = vpop.permute.xlu0 %5486
        %5488 = vrot.lane.b32.xlu0 %v5465, 96
        %v5489 = vpop.permute.xlu0 %5488
        %v5490 = vrot.slane %v5475, 4
        %v5491 = vrot.slane %v5477, 4
        %v5492 = vrot.slane %v5479, 4
        %v5493 = vrot.slane %v5481, 4
        %v5494 = vrot.slane %v5483, 4
        %v5495 = vrot.slane %v5485, 4
        %v5496 = vrot.slane %v5487, 4
        %v5497 = vrot.slane %v5489, 4
        %vm5498 = vcmask 785408
        %v5499 = vsel %vm5498, %v5490, %v5475
        %v5500 = vsel %vm5498, %v5491, %v5477
        %v5501 = vsel %vm5498, %v5492, %v5479
        %v5502 = vsel %vm5498, %v5493, %v5481
        %v5503 = vsel %vm5498, %v5494, %v5483
        %v5504 = vsel %vm5498, %v5495, %v5485
        %v5505 = vsel %vm5498, %v5496, %v5487
        %v5506 = vsel %vm5498, %v5497, %v5489
        %vm5515 = vcmask 1044224
        %vm5516 = vcmask 523268
        %vm5517 = vmor %vm5516, %vm5515
        %5518 = vst.msk [vmem:[#allocation4] sm:$0xff] %vm5517, %v5499
        %5519 = vst.msk [vmem:[#allocation4 + $0x1c] sm:$0xff] %vm5517, %v5500
        %5520 = vst.msk [vmem:[#allocation4 + $0x38] sm:$0xff] %vm5517, %v5501
        %5521 = vst.msk [vmem:[#allocation4 + $0x54] sm:$0xff] %vm5517, %v5502
        %5522 = vst.msk [vmem:[#allocation4 + $0x70] sm:$0xff] %vm5517, %v5503
        %5523 = vst.msk [vmem:[#allocation4 + $0x8c] sm:$0xff] %vm5517, %v5504
        %5524 = vst.msk [vmem:[#allocation4 + $0xa8] sm:$0xff] %vm5517, %v5505
        %5525 = vst.msk [vmem:[#allocation4 + $0xc4] sm:$0xff] %vm5517, %v5506
        %v5526 = vld [vmem:[#allocation2 + $0x2] sm:$0xff]
        %v5527 = vld [vmem:[#allocation2 + $0x12] sm:$0xff]
        %v5528 = vld [vmem:[#allocation2 + $0x22] sm:$0xff]
        %v5529 = vld [vmem:[#allocation2 + $0x32] sm:$0xff]
        %v5530 = vld [vmem:[#allocation2 + $0x42] sm:$0xff]
        %v5531 = vld [vmem:[#allocation2 + $0x52] sm:$0xff]
        %v5532 = vld [vmem:[#allocation2 + $0x62] sm:$0xff]
        %v5533 = vld [vmem:[#allocation2 + $0x72] sm:$0xff]
        %v5534 = vpack.c.bf16 %v5526, %v5526
        %v5535 = vpack.c.bf16 %v5527, %v5527
        %v5536 = vpack.c.bf16 %v5528, %v5528
        %v5537 = vpack.c.bf16 %v5529, %v5529
        %v5538 = vpack.c.bf16 %v5530, %v5530
        %v5539 = vpack.c.bf16 %v5531, %v5531
        %v5540 = vpack.c.bf16 %v5532, %v5532
        %v5541 = vpack.c.bf16 %v5533, %v5533
        %5550 = vrot.lane.b32.xlu0 %v5534, 64
        %v5551 = vpop.permute.xlu0 %5550
        %5552 = vrot.lane.b32.xlu0 %v5535, 64
        %v5553 = vpop.permute.xlu0 %5552
        %5554 = vrot.lane.b32.xlu0 %v5536, 64
        %v5555 = vpop.permute.xlu0 %5554
        %5556 = vrot.lane.b32.xlu0 %v5537, 64
        %v5557 = vpop.permute.xlu0 %5556
        %5558 = vrot.lane.b32.xlu0 %v5538, 64
        %v5559 = vpop.permute.xlu0 %5558
        %5560 = vrot.lane.b32.xlu0 %v5539, 64
        %v5561 = vpop.permute.xlu0 %5560
        %5562 = vrot.lane.b32.xlu0 %v5540, 64
        %v5563 = vpop.permute.xlu0 %5562
        %5564 = vrot.lane.b32.xlu0 %v5541, 64
        %v5565 = vpop.permute.xlu0 %5564
        %v5566 = vrot.slane %v5551, 4
        %v5567 = vrot.slane %v5553, 4
        %v5568 = vrot.slane %v5555, 4
        %v5569 = vrot.slane %v5557, 4
        %v5570 = vrot.slane %v5559, 4
        %v5571 = vrot.slane %v5561, 4
        %v5572 = vrot.slane %v5563, 4
        %v5573 = vrot.slane %v5565, 4
        %vm5574 = vcmask 523264
        %v5575 = vsel %vm5574, %v5566, %v5551
        %v5576 = vsel %vm5574, %v5567, %v5553
        %v5577 = vsel %vm5574, %v5568, %v5555
        %v5578 = vsel %vm5574, %v5569, %v5557
        %v5579 = vsel %vm5574, %v5570, %v5559
        %v5580 = vsel %vm5574, %v5571, %v5561
        %v5581 = vsel %vm5574, %v5572, %v5563
        %v5582 = vsel %vm5574, %v5573, %v5565
        %vm5591 = vcmask 261124
        %vm5592 = vmor %vm5591, %vm2420
        %5593 = vst.msk [vmem:[#allocation4 + $0x4] sm:$0xff] %vm5592, %v5575
        %5594 = vst.msk [vmem:[#allocation4 + $0x20] sm:$0xff] %vm5592, %v5576
        %5595 = vst.msk [vmem:[#allocation4 + $0x3c] sm:$0xff] %vm5592, %v5577
        %5596 = vst.msk [vmem:[#allocation4 + $0x58] sm:$0xff] %vm5592, %v5578
        %5597 = vst.msk [vmem:[#allocation4 + $0x74] sm:$0xff] %vm5592, %v5579
        %5598 = vst.msk [vmem:[#allocation4 + $0x90] sm:$0xff] %vm5592, %v5580
        %5599 = vst.msk [vmem:[#allocation4 + $0xac] sm:$0xff] %vm5592, %v5581
        %5600 = vst.msk [vmem:[#allocation4 + $0xc8] sm:$0xff] %vm5592, %v5582
        %v5601 = vld [vmem:[%s2337] sm:$0xff]
        %v5602 = vld [vmem:[%s2337 + $0x10] sm:$0xff]
        %v5603 = vld [vmem:[%s2337 + $0x20] sm:$0xff]
        %v5604 = vld [vmem:[%s2337 + $0x30] sm:$0xff]
        %v5605 = vld [vmem:[%s2337 + $0x40] sm:$0xff]
        %v5606 = vld [vmem:[%s2337 + $0x50] sm:$0xff]
        %v5607 = vld [vmem:[%s2337 + $0x60] sm:$0xff]
        %v5608 = vld [vmem:[%s2337 + $0x70] sm:$0xff]
        %v5609 = vpack.c.bf16 %v5601, %v5601
        %v5610 = vpack.c.bf16 %v5602, %v5602
        %v5611 = vpack.c.bf16 %v5603, %v5603
        %v5612 = vpack.c.bf16 %v5604, %v5604
        %v5613 = vpack.c.bf16 %v5605, %v5605
        %v5614 = vpack.c.bf16 %v5606, %v5606
        %v5615 = vpack.c.bf16 %v5607, %v5607
        %v5616 = vpack.c.bf16 %v5608, %v5608
        %5625 = vrot.lane.b32.xlu0 %v5609, 32
        %v5626 = vpop.permute.xlu0 %5625
        %5627 = vrot.lane.b32.xlu0 %v5610, 32
        %v5628 = vpop.permute.xlu0 %5627
        %5629 = vrot.lane.b32.xlu0 %v5611, 32
        %v5630 = vpop.permute.xlu0 %5629
        %5631 = vrot.lane.b32.xlu0 %v5612, 32
        %v5632 = vpop.permute.xlu0 %5631
        %5633 = vrot.lane.b32.xlu0 %v5613, 32
        %v5634 = vpop.permute.xlu0 %5633
        %5635 = vrot.lane.b32.xlu0 %v5614, 32
        %v5636 = vpop.permute.xlu0 %5635
        %5637 = vrot.lane.b32.xlu0 %v5615, 32
        %v5638 = vpop.permute.xlu0 %5637
        %5639 = vrot.lane.b32.xlu0 %v5616, 32
        %v5640 = vpop.permute.xlu0 %5639
        %vm5649 = vcmask 1043712
        %5650 = vst.msk [vmem:[#allocation4 + $0x8] sm:$0xf] %vm5649, %v5626
        %5651 = vst.msk [vmem:[#allocation4 + $0x24] sm:$0xf] %vm5649, %v5628
        %5652 = vst.msk [vmem:[#allocation4 + $0x40] sm:$0xf] %vm5649, %v5630
        %5653 = vst.msk [vmem:[#allocation4 + $0x5c] sm:$0xf] %vm5649, %v5632
        %5654 = vst.msk [vmem:[#allocation4 + $0x78] sm:$0xf] %vm5649, %v5634
        %5655 = vst.msk [vmem:[#allocation4 + $0x94] sm:$0xf] %vm5649, %v5636
        %5656 = vst.msk [vmem:[#allocation4 + $0xb0] sm:$0xf] %vm5649, %v5638
        %5657 = vst.msk [vmem:[#allocation4 + $0xcc] sm:$0xf] %vm5649, %v5640
        %v5658 = vld [vmem:[%s2337 + $0x1] sm:$0xff]
        %v5659 = vld [vmem:[%s2337 + $0x11] sm:$0xff]
        %v5660 = vld [vmem:[%s2337 + $0x21] sm:$0xff]
        %v5661 = vld [vmem:[%s2337 + $0x31] sm:$0xff]
        %v5662 = vld [vmem:[%s2337 + $0x41] sm:$0xff]
        %v5663 = vld [vmem:[%s2337 + $0x51] sm:$0xff]
        %v5664 = vld [vmem:[%s2337 + $0x61] sm:$0xff]
        %v5665 = vld [vmem:[%s2337 + $0x71] sm:$0xff]
        %v5666 = vpack.c.bf16 %v5658, %v5658
        %v5667 = vpack.c.bf16 %v5659, %v5659
        %v5668 = vpack.c.bf16 %v5660, %v5660
        %v5669 = vpack.c.bf16 %v5661, %v5661
        %v5670 = vpack.c.bf16 %v5662, %v5662
        %v5671 = vpack.c.bf16 %v5663, %v5663
        %v5672 = vpack.c.bf16 %v5664, %v5664
        %v5673 = vpack.c.bf16 %v5665, %v5665
        %5674 = vst.msk [vmem:[#allocation4 + $0xc] sm:$0xf] %vm5441, %v5666
        %5675 = vst.msk [vmem:[#allocation4 + $0x28] sm:$0xf] %vm5441, %v5667
        %5676 = vst.msk [vmem:[#allocation4 + $0x44] sm:$0xf] %vm5441, %v5668
        %5677 = vst.msk [vmem:[#allocation4 + $0x60] sm:$0xf] %vm5441, %v5669
        %5678 = vst.msk [vmem:[#allocation4 + $0x7c] sm:$0xf] %vm5441, %v5670
        %5679 = vst.msk [vmem:[#allocation4 + $0x98] sm:$0xf] %vm5441, %v5671
        %5680 = vst.msk [vmem:[#allocation4 + $0xb4] sm:$0xf] %vm5441, %v5672
        %5681 = vst.msk [vmem:[#allocation4 + $0xd0] sm:$0xf] %vm5441, %v5673
        %v5682 = vld [vmem:[%s2337 + $0x2] sm:$0xff]
        %v5683 = vld [vmem:[%s2337 + $0x12] sm:$0xff]
        %v5684 = vld [vmem:[%s2337 + $0x22] sm:$0xff]
        %v5685 = vld [vmem:[%s2337 + $0x32] sm:$0xff]
        %v5686 = vld [vmem:[%s2337 + $0x42] sm:$0xff]
        %v5687 = vld [vmem:[%s2337 + $0x52] sm:$0xff]
        %v5688 = vld [vmem:[%s2337 + $0x62] sm:$0xff]
        %v5689 = vld [vmem:[%s2337 + $0x72] sm:$0xff]
        %v5690 = vpack.c.bf16 %v5682, %v5682
        %v5691 = vpack.c.bf16 %v5683, %v5683
        %v5692 = vpack.c.bf16 %v5684, %v5684
        %v5693 = vpack.c.bf16 %v5685, %v5685
        %v5694 = vpack.c.bf16 %v5686, %v5686
        %v5695 = vpack.c.bf16 %v5687, %v5687
        %v5696 = vpack.c.bf16 %v5688, %v5688
        %v5697 = vpack.c.bf16 %v5689, %v5689
        %5706 = vrot.lane.b32.xlu0 %v5690, 96
        %v5707 = vpop.permute.xlu0 %5706
        %5708 = vrot.lane.b32.xlu0 %v5691, 96
        %v5709 = vpop.permute.xlu0 %5708
        %5710 = vrot.lane.b32.xlu0 %v5692, 96
        %v5711 = vpop.permute.xlu0 %5710
        %5712 = vrot.lane.b32.xlu0 %v5693, 96
        %v5713 = vpop.permute.xlu0 %5712
        %5714 = vrot.lane.b32.xlu0 %v5694, 96
        %v5715 = vpop.permute.xlu0 %5714
        %5716 = vrot.lane.b32.xlu0 %v5695, 96
        %v5717 = vpop.permute.xlu0 %5716
        %5718 = vrot.lane.b32.xlu0 %v5696, 96
        %v5719 = vpop.permute.xlu0 %5718
        %5720 = vrot.lane.b32.xlu0 %v5697, 96
        %v5721 = vpop.permute.xlu0 %5720
        %v5722 = vrot.slane %v5707, 4
        %v5723 = vrot.slane %v5709, 4
        %v5724 = vrot.slane %v5711, 4
        %v5725 = vrot.slane %v5713, 4
        %v5726 = vrot.slane %v5715, 4
        %v5727 = vrot.slane %v5717, 4
        %v5728 = vrot.slane %v5719, 4
        %v5729 = vrot.slane %v5721, 4
        %v5730 = vsel %vm5498, %v5722, %v5707
        %v5731 = vsel %vm5498, %v5723, %v5709
        %v5732 = vsel %vm5498, %v5724, %v5711
        %v5733 = vsel %vm5498, %v5725, %v5713
        %v5734 = vsel %vm5498, %v5726, %v5715
        %v5735 = vsel %vm5498, %v5727, %v5717
        %v5736 = vsel %vm5498, %v5728, %v5719
        %v5737 = vsel %vm5498, %v5729, %v5721
        %5746 = vst.msk [vmem:[#allocation4 + $0xc] sm:$0xff] %vm5517, %v5730
        %5747 = vst.msk [vmem:[#allocation4 + $0x28] sm:$0xff] %vm5517, %v5731
        %5748 = vst.msk [vmem:[#allocation4 + $0x44] sm:$0xff] %vm5517, %v5732
        %5749 = vst.msk [vmem:[#allocation4 + $0x60] sm:$0xff] %vm5517, %v5733
        %5750 = vst.msk [vmem:[#allocation4 + $0x7c] sm:$0xff] %vm5517, %v5734
        %5751 = vst.msk [vmem:[#allocation4 + $0x98] sm:$0xff] %vm5517, %v5735
        %5752 = vst.msk [vmem:[#allocation4 + $0xb4] sm:$0xff] %vm5517, %v5736
        %5753 = vst.msk [vmem:[#allocation4 + $0xd0] sm:$0xff] %vm5517, %v5737
        %v5754 = vld [vmem:[%s2589] sm:$0xff]
        %v5755 = vld [vmem:[%s2589 + $0x10] sm:$0xff]
        %v5756 = vld [vmem:[%s2589 + $0x20] sm:$0xff]
        %v5757 = vld [vmem:[%s2589 + $0x30] sm:$0xff]
        %v5758 = vld [vmem:[%s2589 + $0x40] sm:$0xff]
        %v5759 = vld [vmem:[%s2589 + $0x50] sm:$0xff]
        %v5760 = vld [vmem:[%s2589 + $0x60] sm:$0xff]
        %v5761 = vld [vmem:[%s2589 + $0x70] sm:$0xff]
        %v5762 = vpack.c.bf16 %v5754, %v5754
        %v5763 = vpack.c.bf16 %v5755, %v5755
        %v5764 = vpack.c.bf16 %v5756, %v5756
        %v5765 = vpack.c.bf16 %v5757, %v5757
        %v5766 = vpack.c.bf16 %v5758, %v5758
        %v5767 = vpack.c.bf16 %v5759, %v5759
        %v5768 = vpack.c.bf16 %v5760, %v5760
        %v5769 = vpack.c.bf16 %v5761, %v5761
        %5778 = vrot.lane.b32.xlu0 %v5762, 64
        %v5779 = vpop.permute.xlu0 %5778
        %5780 = vrot.lane.b32.xlu0 %v5763, 64
        %v5781 = vpop.permute.xlu0 %5780
        %5782 = vrot.lane.b32.xlu0 %v5764, 64
        %v5783 = vpop.permute.xlu0 %5782
        %5784 = vrot.lane.b32.xlu0 %v5765, 64
        %v5785 = vpop.permute.xlu0 %5784
        %5786 = vrot.lane.b32.xlu0 %v5766, 64
        %v5787 = vpop.permute.xlu0 %5786
        %5788 = vrot.lane.b32.xlu0 %v5767, 64
        %v5789 = vpop.permute.xlu0 %5788
        %5790 = vrot.lane.b32.xlu0 %v5768, 64
        %v5791 = vpop.permute.xlu0 %5790
        %5792 = vrot.lane.b32.xlu0 %v5769, 64
        %v5793 = vpop.permute.xlu0 %5792
        %v5794 = vrot.slane %v5779, 4
        %v5795 = vrot.slane %v5781, 4
        %v5796 = vrot.slane %v5783, 4
        %v5797 = vrot.slane %v5785, 4
        %v5798 = vrot.slane %v5787, 4
        %v5799 = vrot.slane %v5789, 4
        %v5800 = vrot.slane %v5791, 4
        %v5801 = vrot.slane %v5793, 4
        %v5802 = vsel %vm5574, %v5794, %v5779
        %v5803 = vsel %vm5574, %v5795, %v5781
        %v5804 = vsel %vm5574, %v5796, %v5783
        %v5805 = vsel %vm5574, %v5797, %v5785
        %v5806 = vsel %vm5574, %v5798, %v5787
        %v5807 = vsel %vm5574, %v5799, %v5789
        %v5808 = vsel %vm5574, %v5800, %v5791
        %v5809 = vsel %vm5574, %v5801, %v5793
        %5818 = vst.msk [vmem:[#allocation4 + $0x10] sm:$0xff] %vm5592, %v5802
        %5819 = vst.msk [vmem:[#allocation4 + $0x2c] sm:$0xff] %vm5592, %v5803
        %5820 = vst.msk [vmem:[#allocation4 + $0x48] sm:$0xff] %vm5592, %v5804
        %5821 = vst.msk [vmem:[#allocation4 + $0x64] sm:$0xff] %vm5592, %v5805
        %5822 = vst.msk [vmem:[#allocation4 + $0x80] sm:$0xff] %vm5592, %v5806
        %5823 = vst.msk [vmem:[#allocation4 + $0x9c] sm:$0xff] %vm5592, %v5807
        %5824 = vst.msk [vmem:[#allocation4 + $0xb8] sm:$0xff] %vm5592, %v5808
        %5825 = vst.msk [vmem:[#allocation4 + $0xd4] sm:$0xff] %vm5592, %v5809
        %v5826 = vld [vmem:[%s2589 + $0x1] sm:$0xff]
        %v5827 = vld [vmem:[%s2589 + $0x11] sm:$0xff]
        %v5828 = vld [vmem:[%s2589 + $0x21] sm:$0xff]
        %v5829 = vld [vmem:[%s2589 + $0x31] sm:$0xff]
        %v5830 = vld [vmem:[%s2589 + $0x41] sm:$0xff]
        %v5831 = vld [vmem:[%s2589 + $0x51] sm:$0xff]
        %v5832 = vld [vmem:[%s2589 + $0x61] sm:$0xff]
        %v5833 = vld [vmem:[%s2589 + $0x71] sm:$0xff]
        %v5834 = vpack.c.bf16 %v5826, %v5826
        %v5835 = vpack.c.bf16 %v5827, %v5827
        %v5836 = vpack.c.bf16 %v5828, %v5828
        %v5837 = vpack.c.bf16 %v5829, %v5829
        %v5838 = vpack.c.bf16 %v5830, %v5830
        %v5839 = vpack.c.bf16 %v5831, %v5831
        %v5840 = vpack.c.bf16 %v5832, %v5832
        %v5841 = vpack.c.bf16 %v5833, %v5833
        %5850 = vrot.lane.b32.xlu0 %v5834, 32
        %v5851 = vpop.permute.xlu0 %5850
        %5852 = vrot.lane.b32.xlu0 %v5835, 32
        %v5853 = vpop.permute.xlu0 %5852
        %5854 = vrot.lane.b32.xlu0 %v5836, 32
        %v5855 = vpop.permute.xlu0 %5854
        %5856 = vrot.lane.b32.xlu0 %v5837, 32
        %v5857 = vpop.permute.xlu0 %5856
        %5858 = vrot.lane.b32.xlu0 %v5838, 32
        %v5859 = vpop.permute.xlu0 %5858
        %5860 = vrot.lane.b32.xlu0 %v5839, 32
        %v5861 = vpop.permute.xlu0 %5860
        %5862 = vrot.lane.b32.xlu0 %v5840, 32
        %v5863 = vpop.permute.xlu0 %5862
        %5864 = vrot.lane.b32.xlu0 %v5841, 32
        %v5865 = vpop.permute.xlu0 %5864
        %5874 = vst.msk [vmem:[#allocation4 + $0x14] sm:$0xf] %vm5649, %v5851
        %5875 = vst.msk [vmem:[#allocation4 + $0x30] sm:$0xf] %vm5649, %v5853
        %5876 = vst.msk [vmem:[#allocation4 + $0x4c] sm:$0xf] %vm5649, %v5855
        %5877 = vst.msk [vmem:[#allocation4 + $0x68] sm:$0xf] %vm5649, %v5857
        %5878 = vst.msk [vmem:[#allocation4 + $0x84] sm:$0xf] %vm5649, %v5859
        %5879 = vst.msk [vmem:[#allocation4 + $0xa0] sm:$0xf] %vm5649, %v5861
        %5880 = vst.msk [vmem:[#allocation4 + $0xbc] sm:$0xf] %vm5649, %v5863
        %5881 = vst.msk [vmem:[#allocation4 + $0xd8] sm:$0xf] %vm5649, %v5865
        %v5882 = vld [vmem:[%s2589 + $0x2] sm:$0xff]
        %v5883 = vld [vmem:[%s2589 + $0x12] sm:$0xff]
        %v5884 = vld [vmem:[%s2589 + $0x22] sm:$0xff]
        %v5885 = vld [vmem:[%s2589 + $0x32] sm:$0xff]
        %v5886 = vld [vmem:[%s2589 + $0x42] sm:$0xff]
        %v5887 = vld [vmem:[%s2589 + $0x52] sm:$0xff]
        %v5888 = vld [vmem:[%s2589 + $0x62] sm:$0xff]
        %v5889 = vld [vmem:[%s2589 + $0x72] sm:$0xff]
        %v5890 = vpack.c.bf16 %v5882, %v5882
        %v5891 = vpack.c.bf16 %v5883, %v5883
        %v5892 = vpack.c.bf16 %v5884, %v5884
        %v5893 = vpack.c.bf16 %v5885, %v5885
        %v5894 = vpack.c.bf16 %v5886, %v5886
        %v5895 = vpack.c.bf16 %v5887, %v5887
        %v5896 = vpack.c.bf16 %v5888, %v5888
        %v5897 = vpack.c.bf16 %v5889, %v5889
        %5898 = vst.msk [vmem:[#allocation4 + $0x18] sm:$0xf] %vm5441, %v5890
        %5899 = vst.msk [vmem:[#allocation4 + $0x34] sm:$0xf] %vm5441, %v5891
        %5900 = vst.msk [vmem:[#allocation4 + $0x50] sm:$0xf] %vm5441, %v5892
        %5901 = vst.msk [vmem:[#allocation4 + $0x6c] sm:$0xf] %vm5441, %v5893
        %5902 = vst.msk [vmem:[#allocation4 + $0x88] sm:$0xf] %vm5441, %v5894
        %5903 = vst.msk [vmem:[#allocation4 + $0xa4] sm:$0xf] %vm5441, %v5895
        %5904 = vst.msk [vmem:[#allocation4 + $0xc0] sm:$0xf] %vm5441, %v5896
        %5905 = vst.msk [vmem:[#allocation4 + $0xdc] sm:$0xf] %vm5441, %v5897
        %5906 = vst.msk [vmem:[%s2337 + $0x1] sm:$0xff] %vm1895, %v5409
        %5907 = vst.msk [vmem:[%s2337 + $0x11] sm:$0xff] %vm1895, %v5410
        %5908 = vst.msk [vmem:[%s2337 + $0x21] sm:$0xff] %vm1895, %v5411
        %5909 = vst.msk [vmem:[%s2337 + $0x31] sm:$0xff] %vm1895, %v5412
        %5910 = vst.msk [vmem:[%s2337 + $0x41] sm:$0xff] %vm1895, %v5413
        %5911 = vst.msk [vmem:[%s2337 + $0x51] sm:$0xff] %vm1895, %v5414
        %5912 = vst.msk [vmem:[%s2337 + $0x61] sm:$0xff] %vm1895, %v5415
        %5913 = vst.msk [vmem:[%s2337 + $0x71] sm:$0xff] %vm1895, %v5416
        %v5914 = vld [vmem:[#allocation2] sm:$0xff]
        %v5915 = vld [vmem:[#allocation2 + $0x10] sm:$0xff]
        %v5916 = vld [vmem:[#allocation2 + $0x20] sm:$0xff]
        %v5917 = vld [vmem:[#allocation2 + $0x30] sm:$0xff]
        %v5918 = vld [vmem:[#allocation2 + $0x40] sm:$0xff]
        %v5919 = vld [vmem:[#allocation2 + $0x50] sm:$0xff]
        %v5920 = vld [vmem:[#allocation2 + $0x60] sm:$0xff]
        %v5921 = vld [vmem:[#allocation2 + $0x70] sm:$0xff]
        %v5922 = vpack.c.bf16 %v5914, %v5914
        %v5923 = vpack.c.bf16 %v5915, %v5915
        %v5924 = vpack.c.bf16 %v5916, %v5916
        %v5925 = vpack.c.bf16 %v5917, %v5917
        %v5926 = vpack.c.bf16 %v5918, %v5918
        %v5927 = vpack.c.bf16 %v5919, %v5919
        %v5928 = vpack.c.bf16 %v5920, %v5920
        %v5929 = vpack.c.bf16 %v5921, %v5921
        %5930 = vst.msk [vmem:[%s2718] sm:$0xf] %vm5441, %v5922
        %5931 = vst.msk [vmem:[%s2718 + $0x1c] sm:$0xf] %vm5441, %v5923
        %5932 = vst.msk [vmem:[%s2718 + $0x38] sm:$0xf] %vm5441, %v5924
        %5933 = vst.msk [vmem:[%s2718 + $0x54] sm:$0xf] %vm5441, %v5925
        %5934 = vst.msk [vmem:[%s2718 + $0x70] sm:$0xf] %vm5441, %v5926
        %5935 = vst.msk [vmem:[%s2718 + $0x8c] sm:$0xf] %vm5441, %v5927
        %5936 = vst.msk [vmem:[%s2718 + $0xa8] sm:$0xf] %vm5441, %v5928
        %5937 = vst.msk [vmem:[%s2718 + $0xc4] sm:$0xf] %vm5441, %v5929
        %v5938 = vld [vmem:[#allocation2 + $0x1] sm:$0xff]
        %v5939 = vld [vmem:[#allocation2 + $0x11] sm:$0xff]
        %v5940 = vld [vmem:[#allocation2 + $0x21] sm:$0xff]
        %v5941 = vld [vmem:[#allocation2 + $0x31] sm:$0xff]
        %v5942 = vld [vmem:[#allocation2 + $0x41] sm:$0xff]
        %v5943 = vld [vmem:[#allocation2 + $0x51] sm:$0xff]
        %v5944 = vld [vmem:[#allocation2 + $0x61] sm:$0xff]
        %v5945 = vld [vmem:[#allocation2 + $0x71] sm:$0xff]
        %v5946 = vpack.c.bf16 %v5938, %v5938
        %v5947 = vpack.c.bf16 %v5939, %v5939
        %v5948 = vpack.c.bf16 %v5940, %v5940
        %v5949 = vpack.c.bf16 %v5941, %v5941
        %v5950 = vpack.c.bf16 %v5942, %v5942
        %v5951 = vpack.c.bf16 %v5943, %v5943
        %v5952 = vpack.c.bf16 %v5944, %v5944
        %v5953 = vpack.c.bf16 %v5945, %v5945
        %5962 = vrot.lane.b32.xlu0 %v5946, 96
        %v5963 = vpop.permute.xlu0 %5962
        %5964 = vrot.lane.b32.xlu0 %v5947, 96
        %v5965 = vpop.permute.xlu0 %5964
        %5966 = vrot.lane.b32.xlu0 %v5948, 96
        %v5967 = vpop.permute.xlu0 %5966
        %5968 = vrot.lane.b32.xlu0 %v5949, 96
        %v5969 = vpop.permute.xlu0 %5968
        %5970 = vrot.lane.b32.xlu0 %v5950, 96
        %v5971 = vpop.permute.xlu0 %5970
        %5972 = vrot.lane.b32.xlu0 %v5951, 96
        %v5973 = vpop.permute.xlu0 %5972
        %5974 = vrot.lane.b32.xlu0 %v5952, 96
        %v5975 = vpop.permute.xlu0 %5974
        %5976 = vrot.lane.b32.xlu0 %v5953, 96
        %v5977 = vpop.permute.xlu0 %5976
        %v5978 = vrot.slane %v5963, 4
        %v5979 = vrot.slane %v5965, 4
        %v5980 = vrot.slane %v5967, 4
        %v5981 = vrot.slane %v5969, 4
        %v5982 = vrot.slane %v5971, 4
        %v5983 = vrot.slane %v5973, 4
        %v5984 = vrot.slane %v5975, 4
        %v5985 = vrot.slane %v5977, 4
        %v5986 = vsel %vm5498, %v5978, %v5963
        %v5987 = vsel %vm5498, %v5979, %v5965
        %v5988 = vsel %vm5498, %v5980, %v5967
        %v5989 = vsel %vm5498, %v5981, %v5969
        %v5990 = vsel %vm5498, %v5982, %v5971
        %v5991 = vsel %vm5498, %v5983, %v5973
        %v5992 = vsel %vm5498, %v5984, %v5975
        %v5993 = vsel %vm5498, %v5985, %v5977
        %6002 = vst.msk [vmem:[%s2718] sm:$0xff] %vm5517, %v5986
        %6003 = vst.msk [vmem:[%s2718 + $0x1c] sm:$0xff] %vm5517, %v5987
        %6004 = vst.msk [vmem:[%s2718 + $0x38] sm:$0xff] %vm5517, %v5988
        %6005 = vst.msk [vmem:[%s2718 + $0x54] sm:$0xff] %vm5517, %v5989
        %6006 = vst.msk [vmem:[%s2718 + $0x70] sm:$0xff] %vm5517, %v5990
        %6007 = vst.msk [vmem:[%s2718 + $0x8c] sm:$0xff] %vm5517, %v5991
        %6008 = vst.msk [vmem:[%s2718 + $0xa8] sm:$0xff] %vm5517, %v5992
        %6009 = vst.msk [vmem:[%s2718 + $0xc4] sm:$0xff] %vm5517, %v5993
        %v6010 = vld [vmem:[#allocation2 + $0x2] sm:$0xff]
        %v6011 = vld [vmem:[#allocation2 + $0x12] sm:$0xff]
        %v6012 = vld [vmem:[#allocation2 + $0x22] sm:$0xff]
        %v6013 = vld [vmem:[#allocation2 + $0x32] sm:$0xff]
        %v6014 = vld [vmem:[#allocation2 + $0x42] sm:$0xff]
        %v6015 = vld [vmem:[#allocation2 + $0x52] sm:$0xff]
        %v6016 = vld [vmem:[#allocation2 + $0x62] sm:$0xff]
        %v6017 = vld [vmem:[#allocation2 + $0x72] sm:$0xff]
        %v6018 = vpack.c.bf16 %v6010, %v6010
        %v6019 = vpack.c.bf16 %v6011, %v6011
        %v6020 = vpack.c.bf16 %v6012, %v6012
        %v6021 = vpack.c.bf16 %v6013, %v6013
        %v6022 = vpack.c.bf16 %v6014, %v6014
        %v6023 = vpack.c.bf16 %v6015, %v6015
        %v6024 = vpack.c.bf16 %v6016, %v6016
        %v6025 = vpack.c.bf16 %v6017, %v6017
        %6034 = vrot.lane.b32.xlu0 %v6018, 64
        %v6035 = vpop.permute.xlu0 %6034
        %6036 = vrot.lane.b32.xlu0 %v6019, 64
        %v6037 = vpop.permute.xlu0 %6036
        %6038 = vrot.lane.b32.xlu0 %v6020, 64
        %v6039 = vpop.permute.xlu0 %6038
        %6040 = vrot.lane.b32.xlu0 %v6021, 64
        %v6041 = vpop.permute.xlu0 %6040
        %6042 = vrot.lane.b32.xlu0 %v6022, 64
        %v6043 = vpop.permute.xlu0 %6042
        %6044 = vrot.lane.b32.xlu0 %v6023, 64
        %v6045 = vpop.permute.xlu0 %6044
        %6046 = vrot.lane.b32.xlu0 %v6024, 64
        %v6047 = vpop.permute.xlu0 %6046
        %6048 = vrot.lane.b32.xlu0 %v6025, 64
        %v6049 = vpop.permute.xlu0 %6048
        %v6050 = vrot.slane %v6035, 4
        %v6051 = vrot.slane %v6037, 4
        %v6052 = vrot.slane %v6039, 4
        %v6053 = vrot.slane %v6041, 4
        %v6054 = vrot.slane %v6043, 4
        %v6055 = vrot.slane %v6045, 4
        %v6056 = vrot.slane %v6047, 4
        %v6057 = vrot.slane %v6049, 4
        %v6058 = vsel %vm5574, %v6050, %v6035
        %v6059 = vsel %vm5574, %v6051, %v6037
        %v6060 = vsel %vm5574, %v6052, %v6039
        %v6061 = vsel %vm5574, %v6053, %v6041
        %v6062 = vsel %vm5574, %v6054, %v6043
        %v6063 = vsel %vm5574, %v6055, %v6045
        %v6064 = vsel %vm5574, %v6056, %v6047
        %v6065 = vsel %vm5574, %v6057, %v6049
        %6074 = vst.msk [vmem:[%s2718 + $0x4] sm:$0xff] %vm5592, %v6058
        %6075 = vst.msk [vmem:[%s2718 + $0x20] sm:$0xff] %vm5592, %v6059
        %6076 = vst.msk [vmem:[%s2718 + $0x3c] sm:$0xff] %vm5592, %v6060
        %6077 = vst.msk [vmem:[%s2718 + $0x58] sm:$0xff] %vm5592, %v6061
        %6078 = vst.msk [vmem:[%s2718 + $0x74] sm:$0xff] %vm5592, %v6062
        %6079 = vst.msk [vmem:[%s2718 + $0x90] sm:$0xff] %vm5592, %v6063
        %6080 = vst.msk [vmem:[%s2718 + $0xac] sm:$0xff] %vm5592, %v6064
        %6081 = vst.msk [vmem:[%s2718 + $0xc8] sm:$0xff] %vm5592, %v6065
        %v6082 = vld [vmem:[%s2337] sm:$0xff]
        %v6083 = vld [vmem:[%s2337 + $0x10] sm:$0xff]
        %v6084 = vld [vmem:[%s2337 + $0x20] sm:$0xff]
        %v6085 = vld [vmem:[%s2337 + $0x30] sm:$0xff]
        %v6086 = vld [vmem:[%s2337 + $0x40] sm:$0xff]
        %v6087 = vld [vmem:[%s2337 + $0x50] sm:$0xff]
        %v6088 = vld [vmem:[%s2337 + $0x60] sm:$0xff]
        %v6089 = vld [vmem:[%s2337 + $0x70] sm:$0xff]
        %v6090 = vpack.c.bf16 %v6082, %v6082
        %v6091 = vpack.c.bf16 %v6083, %v6083
        %v6092 = vpack.c.bf16 %v6084, %v6084
        %v6093 = vpack.c.bf16 %v6085, %v6085
        %v6094 = vpack.c.bf16 %v6086, %v6086
        %v6095 = vpack.c.bf16 %v6087, %v6087
        %v6096 = vpack.c.bf16 %v6088, %v6088
        %v6097 = vpack.c.bf16 %v6089, %v6089
        %6106 = vrot.lane.b32.xlu0 %v6090, 32
        %v6107 = vpop.permute.xlu0 %6106
        %6108 = vrot.lane.b32.xlu0 %v6091, 32
        %v6109 = vpop.permute.xlu0 %6108
        %6110 = vrot.lane.b32.xlu0 %v6092, 32
        %v6111 = vpop.permute.xlu0 %6110
        %6112 = vrot.lane.b32.xlu0 %v6093, 32
        %v6113 = vpop.permute.xlu0 %6112
        %6114 = vrot.lane.b32.xlu0 %v6094, 32
        %v6115 = vpop.permute.xlu0 %6114
        %6116 = vrot.lane.b32.xlu0 %v6095, 32
        %v6117 = vpop.permute.xlu0 %6116
        %6118 = vrot.lane.b32.xlu0 %v6096, 32
        %v6119 = vpop.permute.xlu0 %6118
        %6120 = vrot.lane.b32.xlu0 %v6097, 32
        %v6121 = vpop.permute.xlu0 %6120
        %6130 = vst.msk [vmem:[%s2718 + $0x8] sm:$0xf] %vm5649, %v6107
        %6131 = vst.msk [vmem:[%s2718 + $0x24] sm:$0xf] %vm5649, %v6109
        %6132 = vst.msk [vmem:[%s2718 + $0x40] sm:$0xf] %vm5649, %v6111
        %6133 = vst.msk [vmem:[%s2718 + $0x5c] sm:$0xf] %vm5649, %v6113
        %6134 = vst.msk [vmem:[%s2718 + $0x78] sm:$0xf] %vm5649, %v6115
        %6135 = vst.msk [vmem:[%s2718 + $0x94] sm:$0xf] %vm5649, %v6117
        %6136 = vst.msk [vmem:[%s2718 + $0xb0] sm:$0xf] %vm5649, %v6119
        %6137 = vst.msk [vmem:[%s2718 + $0xcc] sm:$0xf] %vm5649, %v6121
        %v6138 = vld [vmem:[%s2337 + $0x1] sm:$0xff]
        %v6139 = vld [vmem:[%s2337 + $0x11] sm:$0xff]
        %v6140 = vld [vmem:[%s2337 + $0x21] sm:$0xff]
        %v6141 = vld [vmem:[%s2337 + $0x31] sm:$0xff]
        %v6142 = vld [vmem:[%s2337 + $0x41] sm:$0xff]
        %v6143 = vld [vmem:[%s2337 + $0x51] sm:$0xff]
        %v6144 = vld [vmem:[%s2337 + $0x61] sm:$0xff]
        %v6145 = vld [vmem:[%s2337 + $0x71] sm:$0xff]
        %v6146 = vpack.c.bf16 %v6138, %v6138
        %v6147 = vpack.c.bf16 %v6139, %v6139
        %v6148 = vpack.c.bf16 %v6140, %v6140
        %v6149 = vpack.c.bf16 %v6141, %v6141
        %v6150 = vpack.c.bf16 %v6142, %v6142
        %v6151 = vpack.c.bf16 %v6143, %v6143
        %v6152 = vpack.c.bf16 %v6144, %v6144
        %v6153 = vpack.c.bf16 %v6145, %v6145
        %6154 = vst.msk [vmem:[%s2718 + $0xc] sm:$0xf] %vm5441, %v6146
        %6155 = vst.msk [vmem:[%s2718 + $0x28] sm:$0xf] %vm5441, %v6147
        %6156 = vst.msk [vmem:[%s2718 + $0x44] sm:$0xf] %vm5441, %v6148
        %6157 = vst.msk [vmem:[%s2718 + $0x60] sm:$0xf] %vm5441, %v6149
        %6158 = vst.msk [vmem:[%s2718 + $0x7c] sm:$0xf] %vm5441, %v6150
        %6159 = vst.msk [vmem:[%s2718 + $0x98] sm:$0xf] %vm5441, %v6151
        %6160 = vst.msk [vmem:[%s2718 + $0xb4] sm:$0xf] %vm5441, %v6152
        %6161 = vst.msk [vmem:[%s2718 + $0xd0] sm:$0xf] %vm5441, %v6153
        %v6162 = vld [vmem:[%s2337 + $0x2] sm:$0xff]
        %v6163 = vld [vmem:[%s2337 + $0x12] sm:$0xff]
        %v6164 = vld [vmem:[%s2337 + $0x22] sm:$0xff]
        %v6165 = vld [vmem:[%s2337 + $0x32] sm:$0xff]
        %v6166 = vld [vmem:[%s2337 + $0x42] sm:$0xff]
        %v6167 = vld [vmem:[%s2337 + $0x52] sm:$0xff]
        %v6168 = vld [vmem:[%s2337 + $0x62] sm:$0xff]
        %v6169 = vld [vmem:[%s2337 + $0x72] sm:$0xff]
        %v6170 = vpack.c.bf16 %v6162, %v6162
        %v6171 = vpack.c.bf16 %v6163, %v6163
        %v6172 = vpack.c.bf16 %v6164, %v6164
        %v6173 = vpack.c.bf16 %v6165, %v6165
        %v6174 = vpack.c.bf16 %v6166, %v6166
        %v6175 = vpack.c.bf16 %v6167, %v6167
        %v6176 = vpack.c.bf16 %v6168, %v6168
        %v6177 = vpack.c.bf16 %v6169, %v6169
        %6186 = vrot.lane.b32.xlu0 %v6170, 96
        %v6187 = vpop.permute.xlu0 %6186
        %6188 = vrot.lane.b32.xlu0 %v6171, 96
        %v6189 = vpop.permute.xlu0 %6188
        %6190 = vrot.lane.b32.xlu0 %v6172, 96
        %v6191 = vpop.permute.xlu0 %6190
        %6192 = vrot.lane.b32.xlu0 %v6173, 96
        %v6193 = vpop.permute.xlu0 %6192
        %6194 = vrot.lane.b32.xlu0 %v6174, 96
        %v6195 = vpop.permute.xlu0 %6194
        %6196 = vrot.lane.b32.xlu0 %v6175, 96
        %v6197 = vpop.permute.xlu0 %6196
        %6198 = vrot.lane.b32.xlu0 %v6176, 96
        %v6199 = vpop.permute.xlu0 %6198
        %6200 = vrot.lane.b32.xlu0 %v6177, 96
        %v6201 = vpop.permute.xlu0 %6200
        %v6202 = vrot.slane %v6187, 4
        %v6203 = vrot.slane %v6189, 4
        %v6204 = vrot.slane %v6191, 4
        %v6205 = vrot.slane %v6193, 4
        %v6206 = vrot.slane %v6195, 4
        %v6207 = vrot.slane %v6197, 4
        %v6208 = vrot.slane %v6199, 4
        %v6209 = vrot.slane %v6201, 4
        %v6210 = vsel %vm5498, %v6202, %v6187
        %v6211 = vsel %vm5498, %v6203, %v6189
        %v6212 = vsel %vm5498, %v6204, %v6191
        %v6213 = vsel %vm5498, %v6205, %v6193
        %v6214 = vsel %vm5498, %v6206, %v6195
        %v6215 = vsel %vm5498, %v6207, %v6197
        %v6216 = vsel %vm5498, %v6208, %v6199
        %v6217 = vsel %vm5498, %v6209, %v6201
        %6226 = vst.msk [vmem:[%s2718 + $0xc] sm:$0xff] %vm5517, %v6210
        %6227 = vst.msk [vmem:[%s2718 + $0x28] sm:$0xff] %vm5517, %v6211
        %6228 = vst.msk [vmem:[%s2718 + $0x44] sm:$0xff] %vm5517, %v6212
        %6229 = vst.msk [vmem:[%s2718 + $0x60] sm:$0xff] %vm5517, %v6213
        %6230 = vst.msk [vmem:[%s2718 + $0x7c] sm:$0xff] %vm5517, %v6214
        %6231 = vst.msk [vmem:[%s2718 + $0x98] sm:$0xff] %vm5517, %v6215
        %6232 = vst.msk [vmem:[%s2718 + $0xb4] sm:$0xff] %vm5517, %v6216
        %6233 = vst.msk [vmem:[%s2718 + $0xd0] sm:$0xff] %vm5517, %v6217
        %v6234 = vld [vmem:[%s2589] sm:$0xff]
        %v6235 = vld [vmem:[%s2589 + $0x10] sm:$0xff]
        %v6236 = vld [vmem:[%s2589 + $0x20] sm:$0xff]
        %v6237 = vld [vmem:[%s2589 + $0x30] sm:$0xff]
        %v6238 = vld [vmem:[%s2589 + $0x40] sm:$0xff]
        %v6239 = vld [vmem:[%s2589 + $0x50] sm:$0xff]
        %v6240 = vld [vmem:[%s2589 + $0x60] sm:$0xff]
        %v6241 = vld [vmem:[%s2589 + $0x70] sm:$0xff]
        %v6242 = vpack.c.bf16 %v6234, %v6234
        %v6243 = vpack.c.bf16 %v6235, %v6235
        %v6244 = vpack.c.bf16 %v6236, %v6236
        %v6245 = vpack.c.bf16 %v6237, %v6237
        %v6246 = vpack.c.bf16 %v6238, %v6238
        %v6247 = vpack.c.bf16 %v6239, %v6239
        %v6248 = vpack.c.bf16 %v6240, %v6240
        %v6249 = vpack.c.bf16 %v6241, %v6241
        %6258 = vrot.lane.b32.xlu0 %v6242, 64
        %v6259 = vpop.permute.xlu0 %6258
        %6260 = vrot.lane.b32.xlu0 %v6243, 64
        %v6261 = vpop.permute.xlu0 %6260
        %6262 = vrot.lane.b32.xlu0 %v6244, 64
        %v6263 = vpop.permute.xlu0 %6262
        %6264 = vrot.lane.b32.xlu0 %v6245, 64
        %v6265 = vpop.permute.xlu0 %6264
        %6266 = vrot.lane.b32.xlu0 %v6246, 64
        %v6267 = vpop.permute.xlu0 %6266
        %6268 = vrot.lane.b32.xlu0 %v6247, 64
        %v6269 = vpop.permute.xlu0 %6268
        %6270 = vrot.lane.b32.xlu0 %v6248, 64
        %v6271 = vpop.permute.xlu0 %6270
        %6272 = vrot.lane.b32.xlu0 %v6249, 64
        %v6273 = vpop.permute.xlu0 %6272
        %v6274 = vrot.slane %v6259, 4
        %v6275 = vrot.slane %v6261, 4
        %v6276 = vrot.slane %v6263, 4
        %v6277 = vrot.slane %v6265, 4
        %v6278 = vrot.slane %v6267, 4
        %v6279 = vrot.slane %v6269, 4
        %v6280 = vrot.slane %v6271, 4
        %v6281 = vrot.slane %v6273, 4
        %v6282 = vsel %vm5574, %v6274, %v6259
        %v6283 = vsel %vm5574, %v6275, %v6261
        %v6284 = vsel %vm5574, %v6276, %v6263
        %v6285 = vsel %vm5574, %v6277, %v6265
        %v6286 = vsel %vm5574, %v6278, %v6267
        %v6287 = vsel %vm5574, %v6279, %v6269
        %v6288 = vsel %vm5574, %v6280, %v6271
        %v6289 = vsel %vm5574, %v6281, %v6273
        %6298 = vst.msk [vmem:[%s2718 + $0x10] sm:$0xff] %vm5592, %v6282
        %6299 = vst.msk [vmem:[%s2718 + $0x2c] sm:$0xff] %vm5592, %v6283
        %6300 = vst.msk [vmem:[%s2718 + $0x48] sm:$0xff] %vm5592, %v6284
        %6301 = vst.msk [vmem:[%s2718 + $0x64] sm:$0xff] %vm5592, %v6285
        %6302 = vst.msk [vmem:[%s2718 + $0x80] sm:$0xff] %vm5592, %v6286
        %6303 = vst.msk [vmem:[%s2718 + $0x9c] sm:$0xff] %vm5592, %v6287
        %6304 = vst.msk [vmem:[%s2718 + $0xb8] sm:$0xff] %vm5592, %v6288
        %6305 = vst.msk [vmem:[%s2718 + $0xd4] sm:$0xff] %vm5592, %v6289
        %v6306 = vld [vmem:[%s2589 + $0x1] sm:$0xff]
        %v6307 = vld [vmem:[%s2589 + $0x11] sm:$0xff]
        %v6308 = vld [vmem:[%s2589 + $0x21] sm:$0xff]
        %v6309 = vld [vmem:[%s2589 + $0x31] sm:$0xff]
        %v6310 = vld [vmem:[%s2589 + $0x41] sm:$0xff]
        %v6311 = vld [vmem:[%s2589 + $0x51] sm:$0xff]
        %v6312 = vld [vmem:[%s2589 + $0x61] sm:$0xff]
        %v6313 = vld [vmem:[%s2589 + $0x71] sm:$0xff]
        %v6314 = vpack.c.bf16 %v6306, %v6306
        %v6315 = vpack.c.bf16 %v6307, %v6307
        %v6316 = vpack.c.bf16 %v6308, %v6308
        %v6317 = vpack.c.bf16 %v6309, %v6309
        %v6318 = vpack.c.bf16 %v6310, %v6310
        %v6319 = vpack.c.bf16 %v6311, %v6311
        %v6320 = vpack.c.bf16 %v6312, %v6312
        %v6321 = vpack.c.bf16 %v6313, %v6313
        %6330 = vrot.lane.b32.xlu0 %v6314, 32
        %v6331 = vpop.permute.xlu0 %6330
        %6332 = vrot.lane.b32.xlu0 %v6315, 32
        %v6333 = vpop.permute.xlu0 %6332
        %6334 = vrot.lane.b32.xlu0 %v6316, 32
        %v6335 = vpop.permute.xlu0 %6334
        %6336 = vrot.lane.b32.xlu0 %v6317, 32
        %v6337 = vpop.permute.xlu0 %6336
        %6338 = vrot.lane.b32.xlu0 %v6318, 32
        %v6339 = vpop.permute.xlu0 %6338
        %6340 = vrot.lane.b32.xlu0 %v6319, 32
        %v6341 = vpop.permute.xlu0 %6340
        %6342 = vrot.lane.b32.xlu0 %v6320, 32
        %v6343 = vpop.permute.xlu0 %6342
        %6344 = vrot.lane.b32.xlu0 %v6321, 32
        %v6345 = vpop.permute.xlu0 %6344
        %6354 = vst.msk [vmem:[%s2718 + $0x14] sm:$0xf] %vm5649, %v6331
        %6355 = vst.msk [vmem:[%s2718 + $0x30] sm:$0xf] %vm5649, %v6333
        %6356 = vst.msk [vmem:[%s2718 + $0x4c] sm:$0xf] %vm5649, %v6335
        %6357 = vst.msk [vmem:[%s2718 + $0x68] sm:$0xf] %vm5649, %v6337
        %6358 = vst.msk [vmem:[%s2718 + $0x84] sm:$0xf] %vm5649, %v6339
        %6359 = vst.msk [vmem:[%s2718 + $0xa0] sm:$0xf] %vm5649, %v6341
        %6360 = vst.msk [vmem:[%s2718 + $0xbc] sm:$0xf] %vm5649, %v6343
        %6361 = vst.msk [vmem:[%s2718 + $0xd8] sm:$0xf] %vm5649, %v6345
        %v6362 = vld [vmem:[%s2589 + $0x2] sm:$0xff]
        %v6363 = vld [vmem:[%s2589 + $0x12] sm:$0xff]
        %v6364 = vld [vmem:[%s2589 + $0x22] sm:$0xff]
        %v6365 = vld [vmem:[%s2589 + $0x32] sm:$0xff]
        %v6366 = vld [vmem:[%s2589 + $0x42] sm:$0xff]
        %v6367 = vld [vmem:[%s2589 + $0x52] sm:$0xff]
        %v6368 = vld [vmem:[%s2589 + $0x62] sm:$0xff]
        %v6369 = vld [vmem:[%s2589 + $0x72] sm:$0xff]
        %v6370 = vpack.c.bf16 %v6362, %v6362
        %v6371 = vpack.c.bf16 %v6363, %v6363
        %v6372 = vpack.c.bf16 %v6364, %v6364
        %v6373 = vpack.c.bf16 %v6365, %v6365
        %v6374 = vpack.c.bf16 %v6366, %v6366
        %v6375 = vpack.c.bf16 %v6367, %v6367
        %v6376 = vpack.c.bf16 %v6368, %v6368
        %v6377 = vpack.c.bf16 %v6369, %v6369
        %6378 = vst.msk [vmem:[%s2718 + $0x18] sm:$0xf] %vm5441, %v6370
        %6379 = vst.msk [vmem:[%s2718 + $0x34] sm:$0xf] %vm5441, %v6371
        %6380 = vst.msk [vmem:[%s2718 + $0x50] sm:$0xf] %vm5441, %v6372
        %6381 = vst.msk [vmem:[%s2718 + $0x6c] sm:$0xf] %vm5441, %v6373
        %6382 = vst.msk [vmem:[%s2718 + $0x88] sm:$0xf] %vm5441, %v6374
        %6383 = vst.msk [vmem:[%s2718 + $0xa4] sm:$0xf] %vm5441, %v6375
        %6384 = vst.msk [vmem:[%s2718 + $0xc0] sm:$0xf] %vm5441, %v6376
        %6385 = vst.msk [vmem:[%s2718 + $0xdc] sm:$0xf] %vm5441, %v6377
        %v6386 = vld [vmem:[#allocation4] sm:$0xff]
        %v6387 = vld [vmem:[#allocation4 + $0x8] sm:$0xff]
        %v6388 = vld [vmem:[#allocation4 + $0x10] sm:$0xff]
        %v6389 = vld [vmem:[#allocation4 + $0x18] sm:$0xf]
        %v6390 = vld [vmem:[#allocation4 + $0x1c] sm:$0xff]
        %v6391 = vld [vmem:[#allocation4 + $0x24] sm:$0xff]
        %v6392 = vld [vmem:[#allocation4 + $0x2c] sm:$0xff]
        %v6393 = vld [vmem:[#allocation4 + $0x34] sm:$0xf]
        %v6394 = vld [vmem:[#allocation4 + $0x38] sm:$0xff]
        %v6395 = vld [vmem:[#allocation4 + $0x40] sm:$0xff]
        %v6396 = vld [vmem:[#allocation4 + $0x48] sm:$0xff]
        %v6397 = vld [vmem:[#allocation4 + $0x50] sm:$0xf]
        %v6398 = vld [vmem:[#allocation4 + $0x54] sm:$0xff]
        %v6399 = vld [vmem:[#allocation4 + $0x5c] sm:$0xff]
        %v6400 = vld [vmem:[#allocation4 + $0x64] sm:$0xff]
        %v6401 = vld [vmem:[#allocation4 + $0x6c] sm:$0xf]
        %v6402 = vld [vmem:[#allocation4 + $0x70] sm:$0xff]
        %v6403 = vld [vmem:[#allocation4 + $0x78] sm:$0xff]
        %v6404 = vld [vmem:[#allocation4 + $0x80] sm:$0xff]
        %v6405 = vld [vmem:[#allocation4 + $0x88] sm:$0xf]
        %v6406 = vld [vmem:[#allocation4 + $0x8c] sm:$0xff]
        %v6407 = vld [vmem:[#allocation4 + $0x94] sm:$0xff]
        %v6408 = vld [vmem:[#allocation4 + $0x9c] sm:$0xff]
        %v6409 = vld [vmem:[#allocation4 + $0xa4] sm:$0xf]
        %v6410 = vld [vmem:[#allocation4 + $0xa8] sm:$0xff]
        %v6411 = vld [vmem:[#allocation4 + $0xb0] sm:$0xff]
        %v6412 = vld [vmem:[#allocation4 + $0xb8] sm:$0xff]
        %v6413 = vld [vmem:[#allocation4 + $0xc0] sm:$0xf]
        %v6414 = vld [vmem:[#allocation4 + $0xc4] sm:$0xff]
        %v6415 = vld [vmem:[#allocation4 + $0xcc] sm:$0xff]
        %v6416 = vld [vmem:[#allocation4 + $0xd4] sm:$0xff]
        %v6417 = vld [vmem:[#allocation4 + $0xdc] sm:$0xf]
        %v6418 = vld [vmem:[#allocation4 + $0xe0] sm:$0xff]
        %v6419 = vld [vmem:[#allocation4 + $0xe8] sm:$0xff]
        %v6420 = vld [vmem:[#allocation4 + $0xf0] sm:$0xff]
        %v6421 = vld [vmem:[#allocation4 + $0xf8] sm:$0xf]
        %v6422 = vld [vmem:[#allocation4 + $0xfc] sm:$0xff]
        %v6423 = vld [vmem:[#allocation4 + $0x104] sm:$0xff]
        %v6424 = vld [vmem:[#allocation4 + $0x10c] sm:$0xff]
        %v6425 = vld [vmem:[#allocation4 + $0x114] sm:$0xf]
        %v6426 = vld [vmem:[#allocation4 + $0x118] sm:$0xff]
        %v6427 = vld [vmem:[#allocation4 + $0x120] sm:$0xff]
        %v6428 = vld [vmem:[#allocation4 + $0x128] sm:$0xff]
        %v6429 = vld [vmem:[#allocation4 + $0x130] sm:$0xf]
        %v6430 = vld [vmem:[#allocation4 + $0x134] sm:$0xff]
        %v6431 = vld [vmem:[#allocation4 + $0x13c] sm:$0xff]
        %v6432 = vld [vmem:[#allocation4 + $0x144] sm:$0xff]
        %v6433 = vld [vmem:[#allocation4 + $0x14c] sm:$0xf]
        %v6434 = vld [vmem:[#allocation4 + $0x150] sm:$0xff]
        %v6435 = vld [vmem:[#allocation4 + $0x158] sm:$0xff]
        %v6436 = vld [vmem:[#allocation4 + $0x160] sm:$0xff]
        %v6437 = vld [vmem:[#allocation4 + $0x168] sm:$0xf]
        %v6438 = vld [vmem:[#allocation4 + $0x16c] sm:$0xff]
        %v6439 = vld [vmem:[#allocation4 + $0x174] sm:$0xff]
        %v6440 = vld [vmem:[#allocation4 + $0x17c] sm:$0xff]
        %v6441 = vld [vmem:[#allocation4 + $0x184] sm:$0xf]
        %v6442 = vld [vmem:[#allocation4 + $0x188] sm:$0xff]
        %v6443 = vld [vmem:[#allocation4 + $0x190] sm:$0xff]
        %v6444 = vld [vmem:[#allocation4 + $0x198] sm:$0xff]
        %v6445 = vld [vmem:[#allocation4 + $0x1a0] sm:$0xf]
        %v6446 = vld [vmem:[#allocation4 + $0x1a4] sm:$0xff]
        %v6447 = vld [vmem:[#allocation4 + $0x1ac] sm:$0xff]
        %v6448 = vld [vmem:[#allocation4 + $0x1b4] sm:$0xff]
        %v6449 = vld [vmem:[#allocation4 + $0x1bc] sm:$0xf]
        %v6450 = vld [vmem:[%s8] sm:$0xf]
        %v6451 = vld [vmem:[%s8 + $0x4] sm:$0xf]
        %v6452 = vld [vmem:[%s8 + $0x8] sm:$0xf]
        %v6453 = vld [vmem:[%s8 + $0xc] sm:$0xf]
        %v6454 = vld [vmem:[%s8 + $0x10] sm:$0xf]
        %v6455 = vld [vmem:[%s8 + $0x14] sm:$0xf]
        %v6456 = vld [vmem:[%s8 + $0x18] sm:$0xf]
        %v6457 = vld [vmem:[%s8 + $0x1c] sm:$0xf]
        %v6458 = vld [vmem:[%s8 + $0x20] sm:$0xf]
        %v6459 = vld [vmem:[%s8 + $0x24] sm:$0xf]
        %v6460 = vld [vmem:[%s8 + $0x28] sm:$0xf]
        %v6461 = vld [vmem:[%s8 + $0x2c] sm:$0xf]
        %v6462 = vld [vmem:[%s8 + $0x30] sm:$0xf]
        %v6463 = vld [vmem:[%s8 + $0x34] sm:$0xf]
        %v6464 = vld [vmem:[%s8 + $0x38] sm:$0xf]
        %v6465 = vld [vmem:[%s8 + $0x3c] sm:$0xf]
        %v6466 = vld [vmem:[%s8 + $0x40] sm:$0xf]
        %v6467 = vld [vmem:[%s8 + $0x44] sm:$0xf]
        %v6468 = vld [vmem:[%s8 + $0x48] sm:$0xf]
        %v6469 = vld [vmem:[%s8 + $0x4c] sm:$0xf]
        %v6470 = vld [vmem:[%s8 + $0x50] sm:$0xf]
        %v6471 = vld [vmem:[%s8 + $0x54] sm:$0xf]
        %v6472 = vld [vmem:[%s8 + $0x58] sm:$0xf]
        %v6473 = vld [vmem:[%s8 + $0x5c] sm:$0xf]
        %v6474 = vld [vmem:[%s8 + $0x60] sm:$0xf]
        %v6475 = vld [vmem:[%s8 + $0x64] sm:$0xf]
        %v6476 = vld [vmem:[%s8 + $0x68] sm:$0xf]
        %v6477 = vld [vmem:[%s8 + $0x6c] sm:$0xf]
        %v6478 = vld [vmem:[%s8 + $0x70] sm:$0xf]
        %v6479 = vld [vmem:[%s8 + $0x74] sm:$0xf]
        %v6480 = vld [vmem:[%s8 + $0x78] sm:$0xf]
        %v6481 = vld [vmem:[%s8 + $0x7c] sm:$0xf]
        %v6482 = vld [vmem:[%s8 + $0x80] sm:$0xf]
        %v6483 = vld [vmem:[%s8 + $0x84] sm:$0xf]
        %v6484 = vld [vmem:[%s8 + $0x88] sm:$0xf]
        %v6485 = vld [vmem:[%s8 + $0x8c] sm:$0xf]
        %v6486 = vld [vmem:[%s8 + $0x90] sm:$0xf]
        %v6487 = vld [vmem:[%s8 + $0x94] sm:$0xf]
        %v6488 = vld [vmem:[%s8 + $0x98] sm:$0xf]
        %v6489 = vld [vmem:[%s8 + $0x9c] sm:$0xf]
        %v6490 = vld [vmem:[%s8 + $0xa0] sm:$0xf]
        %v6491 = vld [vmem:[%s8 + $0xa4] sm:$0xf]
        %v6492 = vld [vmem:[%s8 + $0xa8] sm:$0xf]
        %v6493 = vld [vmem:[%s8 + $0xac] sm:$0xf]
        %v6494 = vld [vmem:[%s8 + $0xb0] sm:$0xf]
        %v6495 = vld [vmem:[%s8 + $0xb4] sm:$0xf]
        %v6496 = vld [vmem:[%s8 + $0xb8] sm:$0xf]
        %v6497 = vld [vmem:[%s8 + $0xbc] sm:$0xf]
        %v6498 = vld [vmem:[%s8 + $0xc0] sm:$0xf]
        %v6499 = vld [vmem:[%s8 + $0xc4] sm:$0xf]
        %v6500 = vld [vmem:[%s8 + $0xc8] sm:$0xf]
        %v6501 = vld [vmem:[%s8 + $0xcc] sm:$0xf]
        %v6502 = vld [vmem:[%s8 + $0xd0] sm:$0xf]
        %v6503 = vld [vmem:[%s8 + $0xd4] sm:$0xf]
        %v6504 = vld [vmem:[%s8 + $0xd8] sm:$0xf]
        %v6505 = vld [vmem:[%s8 + $0xdc] sm:$0xf]
        %v6506 = vld [vmem:[%s8 + $0xe0] sm:$0xf]
        %v6507 = vld [vmem:[%s8 + $0xe4] sm:$0xf]
        %v6508 = vld [vmem:[%s8 + $0xe8] sm:$0xf]
        %v6509 = vld [vmem:[%s8 + $0xec] sm:$0xf]
        %v6510 = vld [vmem:[%s8 + $0xf0] sm:$0xf]
        %v6511 = vld [vmem:[%s8 + $0xf4] sm:$0xf]
        %v6512 = vld [vmem:[%s8 + $0xf8] sm:$0xf]
        %v6513 = vld [vmem:[%s8 + $0xfc] sm:$0xf]
        %v6514 = vld [vmem:[%s8 + $0x100] sm:$0xf]
        %v6515 = vld [vmem:[%s8 + $0x104] sm:$0xf]
        %v6516 = vld [vmem:[%s8 + $0x108] sm:$0xf]
        %v6517 = vld [vmem:[%s8 + $0x10c] sm:$0xf]
        %v6518 = vld [vmem:[%s8 + $0x110] sm:$0xf]
        %v6519 = vld [vmem:[%s8 + $0x114] sm:$0xf]
        %v6520 = vld [vmem:[%s8 + $0x118] sm:$0xf]
        %v6521 = vld [vmem:[%s8 + $0x11c] sm:$0xf]
        %v6522 = vld [vmem:[%s8 + $0x120] sm:$0xf]
        %v6523 = vld [vmem:[%s8 + $0x124] sm:$0xf]
        %v6524 = vld [vmem:[%s8 + $0x128] sm:$0xf]
        %v6525 = vld [vmem:[%s8 + $0x12c] sm:$0xf]
        %v6526 = vld [vmem:[%s8 + $0x130] sm:$0xf]
        %v6527 = vld [vmem:[%s8 + $0x134] sm:$0xf]
        %v6528 = vld [vmem:[%s8 + $0x138] sm:$0xf]
        %v6529 = vld [vmem:[%s8 + $0x13c] sm:$0xf]
        %v6530 = vld [vmem:[%s8 + $0x140] sm:$0xf]
        %v6531 = vld [vmem:[%s8 + $0x144] sm:$0xf]
        %v6532 = vld [vmem:[%s8 + $0x148] sm:$0xf]
        %v6533 = vld [vmem:[%s8 + $0x14c] sm:$0xf]
        %v6534 = vld [vmem:[%s8 + $0x150] sm:$0xf]
        %v6535 = vld [vmem:[%s8 + $0x154] sm:$0xf]
        %v6536 = vld [vmem:[%s8 + $0x158] sm:$0xf]
        %v6537 = vld [vmem:[%s8 + $0x15c] sm:$0xf]
        %v6538 = vld [vmem:[%s8 + $0x160] sm:$0xf]
        %v6539 = vld [vmem:[%s8 + $0x164] sm:$0xf]
        %v6540 = vld [vmem:[%s8 + $0x168] sm:$0xf]
        %v6541 = vld [vmem:[%s8 + $0x16c] sm:$0xf]
        %v6542 = vld [vmem:[%s8 + $0x170] sm:$0xf]
        %v6543 = vld [vmem:[%s8 + $0x174] sm:$0xf]
        %v6544 = vld [vmem:[%s8 + $0x178] sm:$0xf]
        %v6545 = vld [vmem:[%s8 + $0x17c] sm:$0xf]
        %v6546 = vld [vmem:[%s8 + $0x180] sm:$0xf]
        %v6547 = vld [vmem:[%s8 + $0x184] sm:$0xf]
        %v6548 = vld [vmem:[%s8 + $0x188] sm:$0xf]
        %v6549 = vld [vmem:[%s8 + $0x18c] sm:$0xf]
        %v6550 = vld [vmem:[%s8 + $0x190] sm:$0xf]
        %v6551 = vld [vmem:[%s8 + $0x194] sm:$0xf]
        %v6552 = vld [vmem:[%s8 + $0x198] sm:$0xf]
        %v6553 = vld [vmem:[%s8 + $0x19c] sm:$0xf]
        %v6554 = vld [vmem:[%s8 + $0x1a0] sm:$0xf]
        %v6555 = vld [vmem:[%s8 + $0x1a4] sm:$0xf]
        %v6556 = vld [vmem:[%s8 + $0x1a8] sm:$0xf]
        %v6557 = vld [vmem:[%s8 + $0x1ac] sm:$0xf]
        %v6558 = vld [vmem:[%s9] sm:$0x1]
        %v6560 = vperm.slane %v6558, 0
        %v6626 = vunpack.c.l.b16 %v6386
        %v6627 = vunpack.c.h.b16 %v6386
        %v6628 = vunpack.c.l.b16 %v6387
        %v6629 = vunpack.c.h.b16 %v6387
        %v6630 = vunpack.c.l.b16 %v6388
        %v6631 = vunpack.c.h.b16 %v6388
        %v6632 = vunpack.c.l.b16 %v6389
        %v6633 = vunpack.c.l.b16 %v6390
        %v6634 = vunpack.c.h.b16 %v6390
        %v6635 = vunpack.c.l.b16 %v6391
        %v6636 = vunpack.c.h.b16 %v6391
        %v6637 = vunpack.c.l.b16 %v6392
        %v6638 = vunpack.c.h.b16 %v6392
        %v6639 = vunpack.c.l.b16 %v6393
        %v6640 = vunpack.c.l.b16 %v6394
        %v6641 = vunpack.c.h.b16 %v6394
        %v6642 = vunpack.c.l.b16 %v6395
        %v6643 = vunpack.c.h.b16 %v6395
        %v6644 = vunpack.c.l.b16 %v6396
        %v6645 = vunpack.c.h.b16 %v6396
        %v6646 = vunpack.c.l.b16 %v6397
        %v6647 = vunpack.c.l.b16 %v6398
        %v6648 = vunpack.c.h.b16 %v6398
        %v6649 = vunpack.c.l.b16 %v6399
        %v6650 = vunpack.c.h.b16 %v6399
        %v6651 = vunpack.c.l.b16 %v6400
        %v6652 = vunpack.c.h.b16 %v6400
        %v6653 = vunpack.c.l.b16 %v6401
        %v6654 = vunpack.c.l.b16 %v6402
        %v6655 = vunpack.c.h.b16 %v6402
        %v6656 = vunpack.c.l.b16 %v6403
        %v6657 = vunpack.c.h.b16 %v6403
        %v6658 = vunpack.c.l.b16 %v6404
        %v6659 = vunpack.c.h.b16 %v6404
        %v6660 = vunpack.c.l.b16 %v6405
        %v6661 = vunpack.c.l.b16 %v6406
        %v6662 = vunpack.c.h.b16 %v6406
        %v6663 = vunpack.c.l.b16 %v6407
        %v6664 = vunpack.c.h.b16 %v6407
        %v6665 = vunpack.c.l.b16 %v6408
        %v6666 = vunpack.c.h.b16 %v6408
        %v6667 = vunpack.c.l.b16 %v6409
        %v6668 = vunpack.c.l.b16 %v6410
        %v6669 = vunpack.c.h.b16 %v6410
        %v6670 = vunpack.c.l.b16 %v6411
        %v6671 = vunpack.c.h.b16 %v6411
        %v6672 = vunpack.c.l.b16 %v6412
        %v6673 = vunpack.c.h.b16 %v6412
        %v6674 = vunpack.c.l.b16 %v6413
        %v6675 = vunpack.c.l.b16 %v6414
        %v6676 = vunpack.c.h.b16 %v6414
        %v6677 = vunpack.c.l.b16 %v6415
        %v6678 = vunpack.c.h.b16 %v6415
        %v6679 = vunpack.c.l.b16 %v6416
        %v6680 = vunpack.c.h.b16 %v6416
        %v6681 = vunpack.c.l.b16 %v6417
        %v6682 = vunpack.c.l.b16 %v6418
        %v6683 = vunpack.c.h.b16 %v6418
        %v6684 = vunpack.c.l.b16 %v6419
        %v6685 = vunpack.c.h.b16 %v6419
        %v6686 = vunpack.c.l.b16 %v6420
        %v6687 = vunpack.c.h.b16 %v6420
        %v6688 = vunpack.c.l.b16 %v6421
        %v6689 = vunpack.c.l.b16 %v6422
        %v6690 = vunpack.c.h.b16 %v6422
        %v6691 = vunpack.c.l.b16 %v6423
        %v6692 = vunpack.c.h.b16 %v6423
        %v6693 = vunpack.c.l.b16 %v6424
        %v6694 = vunpack.c.h.b16 %v6424
        %v6695 = vunpack.c.l.b16 %v6425
        %v6696 = vunpack.c.l.b16 %v6426
        %v6697 = vunpack.c.h.b16 %v6426
        %v6698 = vunpack.c.l.b16 %v6427
        %v6699 = vunpack.c.h.b16 %v6427
        %v6700 = vunpack.c.l.b16 %v6428
        %v6701 = vunpack.c.h.b16 %v6428
        %v6702 = vunpack.c.l.b16 %v6429
        %v6703 = vunpack.c.l.b16 %v6430
        %v6704 = vunpack.c.h.b16 %v6430
        %v6705 = vunpack.c.l.b16 %v6431
        %v6706 = vunpack.c.h.b16 %v6431
        %v6707 = vunpack.c.l.b16 %v6432
        %v6708 = vunpack.c.h.b16 %v6432
        %v6709 = vunpack.c.l.b16 %v6433
        %v6710 = vunpack.c.l.b16 %v6434
        %v6711 = vunpack.c.h.b16 %v6434
        %v6712 = vunpack.c.l.b16 %v6435
        %v6713 = vunpack.c.h.b16 %v6435
        %v6714 = vunpack.c.l.b16 %v6436
        %v6715 = vunpack.c.h.b16 %v6436
        %v6716 = vunpack.c.l.b16 %v6437
        %v6717 = vunpack.c.l.b16 %v6438
        %v6718 = vunpack.c.h.b16 %v6438
        %v6719 = vunpack.c.l.b16 %v6439
        %v6720 = vunpack.c.h.b16 %v6439
        %v6721 = vunpack.c.l.b16 %v6440
        %v6722 = vunpack.c.h.b16 %v6440
        %v6723 = vunpack.c.l.b16 %v6441
        %v6724 = vunpack.c.l.b16 %v6442
        %v6725 = vunpack.c.h.b16 %v6442
        %v6726 = vunpack.c.l.b16 %v6443
        %v6727 = vunpack.c.h.b16 %v6443
        %v6728 = vunpack.c.l.b16 %v6444
        %v6729 = vunpack.c.h.b16 %v6444
        %v6730 = vunpack.c.l.b16 %v6445
        %v6731 = vunpack.c.l.b16 %v6446
        %v6732 = vunpack.c.h.b16 %v6446
        %v6733 = vunpack.c.l.b16 %v6447
        %v6734 = vunpack.c.h.b16 %v6447
        %v6735 = vunpack.c.l.b16 %v6448
        %v6736 = vunpack.c.h.b16 %v6448
        %v6737 = vunpack.c.l.b16 %v6449
        %v6738 = vpack.c.b16 %v6633, %v6626
        %v6739 = vpack.c.b16 %v6634, %v6627
        %v6740 = vpack.c.b16 %v6635, %v6628
        %v6741 = vpack.c.b16 %v6636, %v6629
        %v6742 = vpack.c.b16 %v6637, %v6630
        %v6743 = vpack.c.b16 %v6638, %v6631
        %v6744 = vpack.c.b16 %v6639, %v6632
        %v6745 = vpack.c.b16 %v6647, %v6640
        %v6746 = vpack.c.b16 %v6648, %v6641
        %v6747 = vpack.c.b16 %v6649, %v6642
        %v6748 = vpack.c.b16 %v6650, %v6643
        %v6749 = vpack.c.b16 %v6651, %v6644
        %v6750 = vpack.c.b16 %v6652, %v6645
        %v6751 = vpack.c.b16 %v6653, %v6646
        %v6752 = vpack.c.b16 %v6661, %v6654
        %v6753 = vpack.c.b16 %v6662, %v6655
        %v6754 = vpack.c.b16 %v6663, %v6656
        %v6755 = vpack.c.b16 %v6664, %v6657
        %v6756 = vpack.c.b16 %v6665, %v6658
        %v6757 = vpack.c.b16 %v6666, %v6659
        %v6758 = vpack.c.b16 %v6667, %v6660
        %v6759 = vpack.c.b16 %v6675, %v6668
        %v6760 = vpack.c.b16 %v6676, %v6669
        %v6761 = vpack.c.b16 %v6677, %v6670
        %v6762 = vpack.c.b16 %v6678, %v6671
        %v6763 = vpack.c.b16 %v6679, %v6672
        %v6764 = vpack.c.b16 %v6680, %v6673
        %v6765 = vpack.c.b16 %v6681, %v6674
        %v6766 = vpack.c.b16 %v6689, %v6682
        %v6767 = vpack.c.b16 %v6690, %v6683
        %v6768 = vpack.c.b16 %v6691, %v6684
        %v6769 = vpack.c.b16 %v6692, %v6685
        %v6770 = vpack.c.b16 %v6693, %v6686
        %v6771 = vpack.c.b16 %v6694, %v6687
        %v6772 = vpack.c.b16 %v6695, %v6688
        %v6773 = vpack.c.b16 %v6703, %v6696
        %v6774 = vpack.c.b16 %v6704, %v6697
        %v6775 = vpack.c.b16 %v6705, %v6698
        %v6776 = vpack.c.b16 %v6706, %v6699
        %v6777 = vpack.c.b16 %v6707, %v6700
        %v6778 = vpack.c.b16 %v6708, %v6701
        %v6779 = vpack.c.b16 %v6709, %v6702
        %v6780 = vpack.c.b16 %v6717, %v6710
        %v6781 = vpack.c.b16 %v6718, %v6711
        %v6782 = vpack.c.b16 %v6719, %v6712
        %v6783 = vpack.c.b16 %v6720, %v6713
        %v6784 = vpack.c.b16 %v6721, %v6714
        %v6785 = vpack.c.b16 %v6722, %v6715
        %v6786 = vpack.c.b16 %v6723, %v6716
        %v6787 = vpack.c.b16 %v6731, %v6724
        %v6788 = vpack.c.b16 %v6732, %v6725
        %v6789 = vpack.c.b16 %v6733, %v6726
        %v6790 = vpack.c.b16 %v6734, %v6727
        %v6791 = vpack.c.b16 %v6735, %v6728
        %v6792 = vpack.c.b16 %v6736, %v6729
        %v6793 = vpack.c.b16 %v6737, %v6730
        %v6950 = vunpack.c.l.b16 %v6450
        %v6951 = vunpack.c.l.b16 %v6451
        %v6952 = vunpack.c.l.b16 %v6452
        %v6953 = vunpack.c.l.b16 %v6453
        %v6954 = vunpack.c.l.b16 %v6454
        %v6955 = vunpack.c.l.b16 %v6455
        %v6956 = vunpack.c.l.b16 %v6456
        %v6957 = vunpack.c.l.b16 %v6457
        %v6958 = vunpack.c.l.b16 %v6458
        %v6959 = vunpack.c.l.b16 %v6459
        %v6960 = vunpack.c.l.b16 %v6460
        %v6961 = vunpack.c.l.b16 %v6461
        %v6962 = vunpack.c.l.b16 %v6462
        %v6963 = vunpack.c.l.b16 %v6463
        %v6964 = vunpack.c.l.b16 %v6464
        %v6965 = vunpack.c.l.b16 %v6465
        %v6966 = vunpack.c.l.b16 %v6466
        %v6967 = vunpack.c.l.b16 %v6467
        %v6968 = vunpack.c.l.b16 %v6468
        %v6969 = vunpack.c.l.b16 %v6469
        %v6970 = vunpack.c.l.b16 %v6470
        %v6971 = vunpack.c.l.b16 %v6471
        %v6972 = vunpack.c.l.b16 %v6472
        %v6973 = vunpack.c.l.b16 %v6473
        %v6974 = vunpack.c.l.b16 %v6474
        %v6975 = vunpack.c.l.b16 %v6475
        %v6976 = vunpack.c.l.b16 %v6476
        %v6977 = vunpack.c.l.b16 %v6477
        %v6978 = vunpack.c.l.b16 %v6478
        %v6979 = vunpack.c.l.b16 %v6479
        %v6980 = vunpack.c.l.b16 %v6480
        %v6981 = vunpack.c.l.b16 %v6481
        %v6982 = vunpack.c.l.b16 %v6482
        %v6983 = vunpack.c.l.b16 %v6483
        %v6984 = vunpack.c.l.b16 %v6484
        %v6985 = vunpack.c.l.b16 %v6485
        %v6986 = vunpack.c.l.b16 %v6486
        %v6987 = vunpack.c.l.b16 %v6487
        %v6988 = vunpack.c.l.b16 %v6488
        %v6989 = vunpack.c.l.b16 %v6489
        %v6990 = vunpack.c.l.b16 %v6490
        %v6991 = vunpack.c.l.b16 %v6491
        %v6992 = vunpack.c.l.b16 %v6492
        %v6993 = vunpack.c.l.b16 %v6493
        %v6994 = vunpack.c.l.b16 %v6494
        %v6995 = vunpack.c.l.b16 %v6495
        %v6996 = vunpack.c.l.b16 %v6496
        %v6997 = vunpack.c.l.b16 %v6497
        %v6998 = vunpack.c.l.b16 %v6498
        %v6999 = vunpack.c.l.b16 %v6499
        %v7000 = vunpack.c.l.b16 %v6500
        %v7001 = vunpack.c.l.b16 %v6501
        %v7002 = vunpack.c.l.b16 %v6502
        %v7003 = vunpack.c.l.b16 %v6503
        %v7004 = vunpack.c.l.b16 %v6504
        %v7005 = vunpack.c.l.b16 %v6505
        %v7006 = vunpack.c.l.b16 %v6506
        %v7007 = vunpack.c.l.b16 %v6507
        %v7008 = vunpack.c.l.b16 %v6508
        %v7009 = vunpack.c.l.b16 %v6509
        %v7010 = vunpack.c.l.b16 %v6510
        %v7011 = vunpack.c.l.b16 %v6511
        %v7012 = vunpack.c.l.b16 %v6512
        %v7013 = vunpack.c.l.b16 %v6513
        %v7014 = vunpack.c.l.b16 %v6514
        %v7015 = vunpack.c.l.b16 %v6515
        %v7016 = vunpack.c.l.b16 %v6516
        %v7017 = vunpack.c.l.b16 %v6517
        %v7018 = vunpack.c.l.b16 %v6518
        %v7019 = vunpack.c.l.b16 %v6519
        %v7020 = vunpack.c.l.b16 %v6520
        %v7021 = vunpack.c.l.b16 %v6521
        %v7022 = vunpack.c.l.b16 %v6522
        %v7023 = vunpack.c.l.b16 %v6523
        %v7024 = vunpack.c.l.b16 %v6524
        %v7025 = vunpack.c.l.b16 %v6525
        %v7026 = vunpack.c.l.b16 %v6526
        %v7027 = vunpack.c.l.b16 %v6527
        %v7028 = vunpack.c.l.b16 %v6528
        %v7029 = vunpack.c.l.b16 %v6529
        %v7030 = vunpack.c.l.b16 %v6530
        %v7031 = vunpack.c.l.b16 %v6531
        %v7032 = vunpack.c.l.b16 %v6532
        %v7033 = vunpack.c.l.b16 %v6533
        %v7034 = vunpack.c.l.b16 %v6534
        %v7035 = vunpack.c.l.b16 %v6535
        %v7036 = vunpack.c.l.b16 %v6536
        %v7037 = vunpack.c.l.b16 %v6537
        %v7038 = vunpack.c.l.b16 %v6538
        %v7039 = vunpack.c.l.b16 %v6539
        %v7040 = vunpack.c.l.b16 %v6540
        %v7041 = vunpack.c.l.b16 %v6541
        %v7042 = vunpack.c.l.b16 %v6542
        %v7043 = vunpack.c.l.b16 %v6543
        %v7044 = vunpack.c.l.b16 %v6544
        %v7045 = vunpack.c.l.b16 %v6545
        %v7046 = vunpack.c.l.b16 %v6546
        %v7047 = vunpack.c.l.b16 %v6547
        %v7048 = vunpack.c.l.b16 %v6548
        %v7049 = vunpack.c.l.b16 %v6549
        %v7050 = vunpack.c.l.b16 %v6550
        %v7051 = vunpack.c.l.b16 %v6551
        %v7052 = vunpack.c.l.b16 %v6552
        %v7053 = vunpack.c.l.b16 %v6553
        %v7054 = vunpack.c.l.b16 %v6554
        %v7055 = vunpack.c.l.b16 %v6555
        %v7056 = vunpack.c.l.b16 %v6556
        %v7057 = vunpack.c.l.b16 %v6557
        %v7058 = vpack.c.b16 %v6951, %v6950
        %v7059 = vpack.c.b16 %v6953, %v6952
        %v7060 = vpack.c.b16 %v6955, %v6954
        %v7061 = vpack.c.b16 %v6957, %v6956
        %v7062 = vpack.c.b16 %v6959, %v6958
        %v7063 = vpack.c.b16 %v6961, %v6960
        %v7064 = vpack.c.b16 %v6963, %v6962
        %v7065 = vpack.c.b16 %v6965, %v6964
        %v7066 = vpack.c.b16 %v6967, %v6966
        %v7067 = vpack.c.b16 %v6969, %v6968
        %v7068 = vpack.c.b16 %v6971, %v6970
        %v7069 = vpack.c.b16 %v6973, %v6972
        %v7070 = vpack.c.b16 %v6975, %v6974
        %v7071 = vpack.c.b16 %v6977, %v6976
        %v7072 = vpack.c.b16 %v6979, %v6978
        %v7073 = vpack.c.b16 %v6981, %v6980
        %v7074 = vpack.c.b16 %v6983, %v6982
        %v7075 = vpack.c.b16 %v6985, %v6984
        %v7076 = vpack.c.b16 %v6987, %v6986
        %v7077 = vpack.c.b16 %v6989, %v6988
        %v7078 = vpack.c.b16 %v6991, %v6990
        %v7079 = vpack.c.b16 %v6993, %v6992
        %v7080 = vpack.c.b16 %v6995, %v6994
        %v7081 = vpack.c.b16 %v6997, %v6996
        %v7082 = vpack.c.b16 %v6999, %v6998
        %v7083 = vpack.c.b16 %v7001, %v7000
        %v7084 = vpack.c.b16 %v7003, %v7002
        %v7085 = vpack.c.b16 %v7005, %v7004
        %v7086 = vpack.c.b16 %v7007, %v7006
        %v7087 = vpack.c.b16 %v7009, %v7008
        %v7088 = vpack.c.b16 %v7011, %v7010
        %v7089 = vpack.c.b16 %v7013, %v7012
        %v7090 = vpack.c.b16 %v7015, %v7014
        %v7091 = vpack.c.b16 %v7017, %v7016
        %v7092 = vpack.c.b16 %v7019, %v7018
        %v7093 = vpack.c.b16 %v7021, %v7020
        %v7094 = vpack.c.b16 %v7023, %v7022
        %v7095 = vpack.c.b16 %v7025, %v7024
        %v7096 = vpack.c.b16 %v7027, %v7026
        %v7097 = vpack.c.b16 %v7029, %v7028
        %v7098 = vpack.c.b16 %v7031, %v7030
        %v7099 = vpack.c.b16 %v7033, %v7032
        %v7100 = vpack.c.b16 %v7035, %v7034
        %v7101 = vpack.c.b16 %v7037, %v7036
        %v7102 = vpack.c.b16 %v7039, %v7038
        %v7103 = vpack.c.b16 %v7041, %v7040
        %v7104 = vpack.c.b16 %v7043, %v7042
        %v7105 = vpack.c.b16 %v7045, %v7044
        %v7106 = vpack.c.b16 %v7047, %v7046
        %v7107 = vpack.c.b16 %v7049, %v7048
        %v7108 = vpack.c.b16 %v7051, %v7050
        %v7109 = vpack.c.b16 %v7053, %v7052
        %v7110 = vpack.c.b16 %v7055, %v7054
        %v7111 = vpack.c.b16 %v7057, %v7056
        %v7167 = vsel %vm1895, %v6744, 0
        %v7170 = vsel %vm1895, %v6751, 0
        %v7173 = vsel %vm1895, %v6758, 0
        %v7176 = vsel %vm1895, %v6765, 0
        %v7179 = vsel %vm1895, %v6772, 0
        %v7182 = vsel %vm1895, %v6779, 0
        %v7185 = vsel %vm1895, %v6786, 0
        %v7188 = vsel %vm1895, %v6793, 0
        %7190 = vmatpush.bf16.msra.mxu0 %v7065
        %7191 = vmatpush.bf16.msra.mxu0 %v7064
        %7192 = vmatpush.bf16.msra.mxu0 %v7063
        %7193 = vmatpush.bf16.msra.mxu0 %v7062
        %7194 = vmatpush.bf16.msra.mxu0 %v7061
        %7195 = vmatpush.bf16.msra.mxu0 %v7060
        %7196 = vmatpush.bf16.msra.mxu0 %v7059
        %7197 = vmatpush.bf16.msra.mxu0 %v7058
        %7198 = vmatmul.bf16.gmra.mxu0 %v6738
        %v7199 = vpop.f32.mrf.mxu0
        %v7200 = vadd.f32 %v6560, %v7199
        %v7201 = vpop.f32.mrf.mxu0
        %v7202 = vadd.f32 %v6560, %v7201
        %7203 = vmatmul.bf16.gmra.mxu0 %v6745
        %v7204 = vpop.f32.mrf.mxu0
        %v7205 = vadd.f32 %v6560, %v7204
        %v7206 = vpop.f32.mrf.mxu0
        %v7207 = vadd.f32 %v6560, %v7206
        %7208 = vmatmul.bf16.gmra.mxu0 %v6752
        %v7209 = vpop.f32.mrf.mxu0
        %v7210 = vadd.f32 %v6560, %v7209
        %v7211 = vpop.f32.mrf.mxu0
        %v7212 = vadd.f32 %v6560, %v7211
        %7213 = vmatmul.bf16.gmra.mxu0 %v6759
        %v7214 = vpop.f32.mrf.mxu0
        %v7215 = vadd.f32 %v6560, %v7214
        %v7216 = vpop.f32.mrf.mxu0
        %v7217 = vadd.f32 %v6560, %v7216
        %7218 = vmatmul.bf16.gmra.mxu0 %v6766
        %v7219 = vpop.f32.mrf.mxu0
        %v7220 = vadd.f32 %v6560, %v7219
        %v7221 = vpop.f32.mrf.mxu0
        %v7222 = vadd.f32 %v6560, %v7221
        %7223 = vmatmul.bf16.gmra.mxu0 %v6773
        %v7224 = vpop.f32.mrf.mxu0
        %v7225 = vadd.f32 %v6560, %v7224
        %v7226 = vpop.f32.mrf.mxu0
        %v7227 = vadd.f32 %v6560, %v7226
        %7228 = vmatmul.bf16.gmra.mxu0 %v6780
        %v7229 = vpop.f32.mrf.mxu0
        %v7230 = vadd.f32 %v6560, %v7229
        %v7231 = vpop.f32.mrf.mxu0
        %v7232 = vadd.f32 %v6560, %v7231
        %7233 = vmatmul.bf16.gmra.mxu0 %v6787
        %v7234 = vpop.f32.mrf.mxu0
        %v7235 = vadd.f32 %v6560, %v7234
        %v7236 = vpop.f32.mrf.mxu0
        %v7237 = vadd.f32 %v6560, %v7236
        %7238 = vdwg.mxu0
        %7239 = vmatpush.bf16.msra.mxu0 %v7073
        %7240 = vmatpush.bf16.msra.mxu0 %v7072
        %7241 = vmatpush.bf16.msra.mxu0 %v7071
        %7242 = vmatpush.bf16.msra.mxu0 %v7070
        %7243 = vmatpush.bf16.msra.mxu0 %v7069
        %7244 = vmatpush.bf16.msra.mxu0 %v7068
        %7245 = vmatpush.bf16.msra.mxu0 %v7067
        %7246 = vmatpush.bf16.msra.mxu0 %v7066
        %7247 = vmatmul.bf16.gmra.mxu0 %v6739
        %v7248 = vpop.f32.mrf.mxu0
        %v7249 = vadd.f32 %v7200, %v7248
        %v7250 = vpop.f32.mrf.mxu0
        %v7251 = vadd.f32 %v7202, %v7250
        %7252 = vmatmul.bf16.gmra.mxu0 %v6746
        %v7253 = vpop.f32.mrf.mxu0
        %v7254 = vadd.f32 %v7205, %v7253
        %v7255 = vpop.f32.mrf.mxu0
        %v7256 = vadd.f32 %v7207, %v7255
        %7257 = vmatmul.bf16.gmra.mxu0 %v6753
        %v7258 = vpop.f32.mrf.mxu0
        %v7259 = vadd.f32 %v7210, %v7258
        %v7260 = vpop.f32.mrf.mxu0
        %v7261 = vadd.f32 %v7212, %v7260
        %7262 = vmatmul.bf16.gmra.mxu0 %v6760
        %v7263 = vpop.f32.mrf.mxu0
        %v7264 = vadd.f32 %v7215, %v7263
        %v7265 = vpop.f32.mrf.mxu0
        %v7266 = vadd.f32 %v7217, %v7265
        %7267 = vmatmul.bf16.gmra.mxu0 %v6767
        %v7268 = vpop.f32.mrf.mxu0
        %v7269 = vadd.f32 %v7220, %v7268
        %v7270 = vpop.f32.mrf.mxu0
        %v7271 = vadd.f32 %v7222, %v7270
        %7272 = vmatmul.bf16.gmra.mxu0 %v6774
        %v7273 = vpop.f32.mrf.mxu0
        %v7274 = vadd.f32 %v7225, %v7273
        %v7275 = vpop.f32.mrf.mxu0
        %v7276 = vadd.f32 %v7227, %v7275
        %7277 = vmatmul.bf16.gmra.mxu0 %v6781
        %v7278 = vpop.f32.mrf.mxu0
        %v7279 = vadd.f32 %v7230, %v7278
        %v7280 = vpop.f32.mrf.mxu0
        %v7281 = vadd.f32 %v7232, %v7280
        %7282 = vmatmul.bf16.gmra.mxu0 %v6788
        %v7283 = vpop.f32.mrf.mxu0
        %v7284 = vadd.f32 %v7235, %v7283
        %v7285 = vpop.f32.mrf.mxu0
        %v7286 = vadd.f32 %v7237, %v7285
        %7287 = vdwg.mxu0
        %7288 = vmatpush.bf16.msra.mxu0 %v7081
        %7289 = vmatpush.bf16.msra.mxu0 %v7080
        %7290 = vmatpush.bf16.msra.mxu0 %v7079
        %7291 = vmatpush.bf16.msra.mxu0 %v7078
        %7292 = vmatpush.bf16.msra.mxu0 %v7077
        %7293 = vmatpush.bf16.msra.mxu0 %v7076
        %7294 = vmatpush.bf16.msra.mxu0 %v7075
        %7295 = vmatpush.bf16.msra.mxu0 %v7074
        %7296 = vmatmul.bf16.gmra.mxu0 %v6740
        %v7297 = vpop.f32.mrf.mxu0
        %v7298 = vadd.f32 %v7249, %v7297
        %v7299 = vpop.f32.mrf.mxu0
        %v7300 = vadd.f32 %v7251, %v7299
        %7301 = vmatmul.bf16.gmra.mxu0 %v6747
        %v7302 = vpop.f32.mrf.mxu0
        %v7303 = vadd.f32 %v7254, %v7302
        %v7304 = vpop.f32.mrf.mxu0
        %v7305 = vadd.f32 %v7256, %v7304
        %7306 = vmatmul.bf16.gmra.mxu0 %v6754
        %v7307 = vpop.f32.mrf.mxu0
        %v7308 = vadd.f32 %v7259, %v7307
        %v7309 = vpop.f32.mrf.mxu0
        %v7310 = vadd.f32 %v7261, %v7309
        %7311 = vmatmul.bf16.gmra.mxu0 %v6761
        %v7312 = vpop.f32.mrf.mxu0
        %v7313 = vadd.f32 %v7264, %v7312
        %v7314 = vpop.f32.mrf.mxu0
        %v7315 = vadd.f32 %v7266, %v7314
        %7316 = vmatmul.bf16.gmra.mxu0 %v6768
        %v7317 = vpop.f32.mrf.mxu0
        %v7318 = vadd.f32 %v7269, %v7317
        %v7319 = vpop.f32.mrf.mxu0
        %v7320 = vadd.f32 %v7271, %v7319
        %7321 = vmatmul.bf16.gmra.mxu0 %v6775
        %v7322 = vpop.f32.mrf.mxu0
        %v7323 = vadd.f32 %v7274, %v7322
        %v7324 = vpop.f32.mrf.mxu0
        %v7325 = vadd.f32 %v7276, %v7324
        %7326 = vmatmul.bf16.gmra.mxu0 %v6782
        %v7327 = vpop.f32.mrf.mxu0
        %v7328 = vadd.f32 %v7279, %v7327
        %v7329 = vpop.f32.mrf.mxu0
        %v7330 = vadd.f32 %v7281, %v7329
        %7331 = vmatmul.bf16.gmra.mxu0 %v6789
        %v7332 = vpop.f32.mrf.mxu0
        %v7333 = vadd.f32 %v7284, %v7332
        %v7334 = vpop.f32.mrf.mxu0
        %v7335 = vadd.f32 %v7286, %v7334
        %7336 = vdwg.mxu0
        %7337 = vmatpush.bf16.msra.mxu0 %v7089
        %7338 = vmatpush.bf16.msra.mxu0 %v7088
        %7339 = vmatpush.bf16.msra.mxu0 %v7087
        %7340 = vmatpush.bf16.msra.mxu0 %v7086
        %7341 = vmatpush.bf16.msra.mxu0 %v7085
        %7342 = vmatpush.bf16.msra.mxu0 %v7084
        %7343 = vmatpush.bf16.msra.mxu0 %v7083
        %7344 = vmatpush.bf16.msra.mxu0 %v7082
        %7345 = vmatmul.bf16.gmra.mxu0 %v6741
        %v7346 = vpop.f32.mrf.mxu0
        %v7347 = vadd.f32 %v7298, %v7346
        %v7348 = vpop.f32.mrf.mxu0
        %v7349 = vadd.f32 %v7300, %v7348
        %7350 = vmatmul.bf16.gmra.mxu0 %v6748
        %v7351 = vpop.f32.mrf.mxu0
        %v7352 = vadd.f32 %v7303, %v7351
        %v7353 = vpop.f32.mrf.mxu0
        %v7354 = vadd.f32 %v7305, %v7353
        %7355 = vmatmul.bf16.gmra.mxu0 %v6755
        %v7356 = vpop.f32.mrf.mxu0
        %v7357 = vadd.f32 %v7308, %v7356
        %v7358 = vpop.f32.mrf.mxu0
        %v7359 = vadd.f32 %v7310, %v7358
        %7360 = vmatmul.bf16.gmra.mxu0 %v6762
        %v7361 = vpop.f32.mrf.mxu0
        %v7362 = vadd.f32 %v7313, %v7361
        %v7363 = vpop.f32.mrf.mxu0
        %v7364 = vadd.f32 %v7315, %v7363
        %7365 = vmatmul.bf16.gmra.mxu0 %v6769
        %v7366 = vpop.f32.mrf.mxu0
        %v7367 = vadd.f32 %v7318, %v7366
        %v7368 = vpop.f32.mrf.mxu0
        %v7369 = vadd.f32 %v7320, %v7368
        %7370 = vmatmul.bf16.gmra.mxu0 %v6776
        %v7371 = vpop.f32.mrf.mxu0
        %v7372 = vadd.f32 %v7323, %v7371
        %v7373 = vpop.f32.mrf.mxu0
        %v7374 = vadd.f32 %v7325, %v7373
        %7375 = vmatmul.bf16.gmra.mxu0 %v6783
        %v7376 = vpop.f32.mrf.mxu0
        %v7377 = vadd.f32 %v7328, %v7376
        %v7378 = vpop.f32.mrf.mxu0
        %v7379 = vadd.f32 %v7330, %v7378
        %7380 = vmatmul.bf16.gmra.mxu0 %v6790
        %v7381 = vpop.f32.mrf.mxu0
        %v7382 = vadd.f32 %v7333, %v7381
        %v7383 = vpop.f32.mrf.mxu0
        %v7384 = vadd.f32 %v7335, %v7383
        %7385 = vdwg.mxu0
        %7386 = vmatpush.bf16.msra.mxu0 %v7097
        %7387 = vmatpush.bf16.msra.mxu0 %v7096
        %7388 = vmatpush.bf16.msra.mxu0 %v7095
        %7389 = vmatpush.bf16.msra.mxu0 %v7094
        %7390 = vmatpush.bf16.msra.mxu0 %v7093
        %7391 = vmatpush.bf16.msra.mxu0 %v7092
        %7392 = vmatpush.bf16.msra.mxu0 %v7091
        %7393 = vmatpush.bf16.msra.mxu0 %v7090
        %7394 = vmatmul.bf16.gmra.mxu0 %v6742
        %v7395 = vpop.f32.mrf.mxu0
        %v7396 = vadd.f32 %v7347, %v7395
        %v7397 = vpop.f32.mrf.mxu0
        %v7398 = vadd.f32 %v7349, %v7397
        %7399 = vmatmul.bf16.gmra.mxu0 %v6749
        %v7400 = vpop.f32.mrf.mxu0
        %v7401 = vadd.f32 %v7352, %v7400
        %v7402 = vpop.f32.mrf.mxu0
        %v7403 = vadd.f32 %v7354, %v7402
        %7404 = vmatmul.bf16.gmra.mxu0 %v6756
        %v7405 = vpop.f32.mrf.mxu0
        %v7406 = vadd.f32 %v7357, %v7405
        %v7407 = vpop.f32.mrf.mxu0
        %v7408 = vadd.f32 %v7359, %v7407
        %7409 = vmatmul.bf16.gmra.mxu0 %v6763
        %v7410 = vpop.f32.mrf.mxu0
        %v7411 = vadd.f32 %v7362, %v7410
        %v7412 = vpop.f32.mrf.mxu0
        %v7413 = vadd.f32 %v7364, %v7412
        %7414 = vmatmul.bf16.gmra.mxu0 %v6770
        %v7415 = vpop.f32.mrf.mxu0
        %v7416 = vadd.f32 %v7367, %v7415
        %v7417 = vpop.f32.mrf.mxu0
        %v7418 = vadd.f32 %v7369, %v7417
        %7419 = vmatmul.bf16.gmra.mxu0 %v6777
        %v7420 = vpop.f32.mrf.mxu0
        %v7421 = vadd.f32 %v7372, %v7420
        %v7422 = vpop.f32.mrf.mxu0
        %v7423 = vadd.f32 %v7374, %v7422
        %7424 = vmatmul.bf16.gmra.mxu0 %v6784
        %v7425 = vpop.f32.mrf.mxu0
        %v7426 = vadd.f32 %v7377, %v7425
        %v7427 = vpop.f32.mrf.mxu0
        %v7428 = vadd.f32 %v7379, %v7427
        %7429 = vmatmul.bf16.gmra.mxu0 %v6791
        %v7430 = vpop.f32.mrf.mxu0
        %v7431 = vadd.f32 %v7382, %v7430
        %v7432 = vpop.f32.mrf.mxu0
        %v7433 = vadd.f32 %v7384, %v7432
        %7434 = vdwg.mxu0
        %7435 = vmatpush.bf16.msra.mxu0 %v7105
        %7436 = vmatpush.bf16.msra.mxu0 %v7104
        %7437 = vmatpush.bf16.msra.mxu0 %v7103
        %7438 = vmatpush.bf16.msra.mxu0 %v7102
        %7439 = vmatpush.bf16.msra.mxu0 %v7101
        %7440 = vmatpush.bf16.msra.mxu0 %v7100
        %7441 = vmatpush.bf16.msra.mxu0 %v7099
        %7442 = vmatpush.bf16.msra.mxu0 %v7098
        %7443 = vmatmul.bf16.gmra.mxu0 %v6743
        %v7444 = vpop.f32.mrf.mxu0
        %v7445 = vadd.f32 %v7396, %v7444
        %v7446 = vpop.f32.mrf.mxu0
        %v7447 = vadd.f32 %v7398, %v7446
        %7448 = vmatmul.bf16.gmra.mxu0 %v6750
        %v7449 = vpop.f32.mrf.mxu0
        %v7450 = vadd.f32 %v7401, %v7449
        %v7451 = vpop.f32.mrf.mxu0
        %v7452 = vadd.f32 %v7403, %v7451
        %7453 = vmatmul.bf16.gmra.mxu0 %v6757
        %v7454 = vpop.f32.mrf.mxu0
        %v7455 = vadd.f32 %v7406, %v7454
        %v7456 = vpop.f32.mrf.mxu0
        %v7457 = vadd.f32 %v7408, %v7456
        %7458 = vmatmul.bf16.gmra.mxu0 %v6764
        %v7459 = vpop.f32.mrf.mxu0
        %v7460 = vadd.f32 %v7411, %v7459
        %v7461 = vpop.f32.mrf.mxu0
        %v7462 = vadd.f32 %v7413, %v7461
        %7463 = vmatmul.bf16.gmra.mxu0 %v6771
        %v7464 = vpop.f32.mrf.mxu0
        %v7465 = vadd.f32 %v7416, %v7464
        %v7466 = vpop.f32.mrf.mxu0
        %v7467 = vadd.f32 %v7418, %v7466
        %7468 = vmatmul.bf16.gmra.mxu0 %v6778
        %v7469 = vpop.f32.mrf.mxu0
        %v7470 = vadd.f32 %v7421, %v7469
        %v7471 = vpop.f32.mrf.mxu0
        %v7472 = vadd.f32 %v7423, %v7471
        %7473 = vmatmul.bf16.gmra.mxu0 %v6785
        %v7474 = vpop.f32.mrf.mxu0
        %v7475 = vadd.f32 %v7426, %v7474
        %v7476 = vpop.f32.mrf.mxu0
        %v7477 = vadd.f32 %v7428, %v7476
        %7478 = vmatmul.bf16.gmra.mxu0 %v6792
        %v7479 = vpop.f32.mrf.mxu0
        %v7480 = vadd.f32 %v7431, %v7479
        %v7481 = vpop.f32.mrf.mxu0
        %v7482 = vadd.f32 %v7433, %v7481
        %7483 = vdwg.mxu0
        %7484 = vmatpush.bf16.msra.mxu0 0
        %7485 = vmatpush.bf16.msra.mxu0 0
        %7486 = vmatpush.bf16.msra.mxu0 %v7111
        %7487 = vmatpush.bf16.msra.mxu0 %v7110
        %7488 = vmatpush.bf16.msra.mxu0 %v7109
        %7489 = vmatpush.bf16.msra.mxu0 %v7108
        %7490 = vmatpush.bf16.msra.mxu0 %v7107
        %7491 = vmatpush.bf16.msra.mxu0 %v7106
        %7492 = vmatmul.bf16.gmra.mxu0 %v7167
        %v7493 = vpop.f32.mrf.mxu0
        %v7494 = vadd.f32 %v7445, %v7493
        %v7495 = vpop.f32.mrf.mxu0
        %v7496 = vadd.f32 %v7447, %v7495
        %7497 = vmatmul.bf16.gmra.mxu0 %v7170
        %v7498 = vpop.f32.mrf.mxu0
        %v7499 = vadd.f32 %v7450, %v7498
        %v7500 = vpop.f32.mrf.mxu0
        %v7501 = vadd.f32 %v7452, %v7500
        %7502 = vmatmul.bf16.gmra.mxu0 %v7173
        %v7503 = vpop.f32.mrf.mxu0
        %v7504 = vadd.f32 %v7455, %v7503
        %v7505 = vpop.f32.mrf.mxu0
        %v7506 = vadd.f32 %v7457, %v7505
        %7507 = vmatmul.bf16.gmra.mxu0 %v7176
        %v7508 = vpop.f32.mrf.mxu0
        %v7509 = vadd.f32 %v7460, %v7508
        %v7510 = vpop.f32.mrf.mxu0
        %v7511 = vadd.f32 %v7462, %v7510
        %7512 = vmatmul.bf16.gmra.mxu0 %v7179
        %v7513 = vpop.f32.mrf.mxu0
        %v7514 = vadd.f32 %v7465, %v7513
        %v7515 = vpop.f32.mrf.mxu0
        %v7516 = vadd.f32 %v7467, %v7515
        %7517 = vmatmul.bf16.gmra.mxu0 %v7182
        %v7518 = vpop.f32.mrf.mxu0
        %v7519 = vadd.f32 %v7470, %v7518
        %v7520 = vpop.f32.mrf.mxu0
        %v7521 = vadd.f32 %v7472, %v7520
        %7522 = vmatmul.bf16.gmra.mxu0 %v7185
        %v7523 = vpop.f32.mrf.mxu0
        %v7524 = vadd.f32 %v7475, %v7523
        %v7525 = vpop.f32.mrf.mxu0
        %v7526 = vadd.f32 %v7477, %v7525
        %7527 = vmatmul.bf16.gmra.mxu0 %v7188
        %v7528 = vpop.f32.mrf.mxu0
        %v7529 = vadd.f32 %v7480, %v7528
        %v7530 = vpop.f32.mrf.mxu0
        %v7531 = vadd.f32 %v7482, %v7530
        %7532 = vdwg.mxu0
        %v7533 = vmax.f32 %v7494, 0.0
        %v7534 = vmax.f32 %v7496, 0.0
        %v7535 = vmax.f32 %v7499, 0.0
        %v7536 = vmax.f32 %v7501, 0.0
        %v7537 = vmax.f32 %v7504, 0.0
        %v7538 = vmax.f32 %v7506, 0.0
        %v7539 = vmax.f32 %v7509, 0.0
        %v7540 = vmax.f32 %v7511, 0.0
        %v7541 = vmax.f32 %v7514, 0.0
        %v7542 = vmax.f32 %v7516, 0.0
        %v7543 = vmax.f32 %v7519, 0.0
        %v7544 = vmax.f32 %v7521, 0.0
        %v7545 = vmax.f32 %v7524, 0.0
        %v7546 = vmax.f32 %v7526, 0.0
        %v7547 = vmax.f32 %v7529, 0.0
        %v7548 = vmax.f32 %v7531, 0.0
        %v7549 = vpack.c.bf16 %v7533, %v7533
        %v7550 = vpack.c.bf16 %v7534, %v7534
        %v7551 = vpack.c.bf16 %v7535, %v7535
        %v7552 = vpack.c.bf16 %v7536, %v7536
        %v7553 = vpack.c.bf16 %v7537, %v7537
        %v7554 = vpack.c.bf16 %v7538, %v7538
        %v7555 = vpack.c.bf16 %v7539, %v7539
        %v7556 = vpack.c.bf16 %v7540, %v7540
        %v7557 = vpack.c.bf16 %v7541, %v7541
        %v7558 = vpack.c.bf16 %v7542, %v7542
        %v7559 = vpack.c.bf16 %v7543, %v7543
        %v7560 = vpack.c.bf16 %v7544, %v7544
        %v7561 = vpack.c.bf16 %v7545, %v7545
        %v7562 = vpack.c.bf16 %v7546, %v7546
        %v7563 = vpack.c.bf16 %v7547, %v7547
        %v7564 = vpack.c.bf16 %v7548, %v7548
        %v7581 = vunpack.c.l.b16 %v1870
        %v7582 = vunpack.c.l.b16 %v1871
        %v7583 = vunpack.c.l.b16 %v1872
        %v7584 = vunpack.c.l.b16 %v1873
        %v7585 = vunpack.c.l.b16 %v1874
        %v7586 = vunpack.c.l.b16 %v1875
        %v7587 = vunpack.c.l.b16 %v1876
        %v7588 = vunpack.c.l.b16 %v1877
        %v7589 = vunpack.c.l.b16 %v1878
        %v7590 = vunpack.c.l.b16 %v1879
        %v7591 = vunpack.c.l.b16 %v1880
        %v7592 = vunpack.c.l.b16 %v1881
        %v7593 = vunpack.c.l.b16 %v1882
        %v7594 = vunpack.c.l.b16 %v1883
        %v7595 = vunpack.c.l.b16 %v1884
        %v7596 = vunpack.c.l.b16 %v1885
        %v7597 = vpack.c.b16 %v7582, %v7581
        %v7598 = vpack.c.b16 %v7584, %v7583
        %v7599 = vpack.c.b16 %v7586, %v7585
        %v7600 = vpack.c.b16 %v7588, %v7587
        %v7601 = vpack.c.b16 %v7590, %v7589
        %v7602 = vpack.c.b16 %v7592, %v7591
        %v7603 = vpack.c.b16 %v7594, %v7593
        %v7604 = vpack.c.b16 %v7596, %v7595
        %v7621 = vunpack.c.l.b16 %v3872
        %v7622 = vunpack.c.l.b16 %v3873
        %v7623 = vunpack.c.l.b16 %v3874
        %v7624 = vunpack.c.l.b16 %v3875
        %v7625 = vunpack.c.l.b16 %v3876
        %v7626 = vunpack.c.l.b16 %v3877
        %v7627 = vunpack.c.l.b16 %v3878
        %v7628 = vunpack.c.l.b16 %v3879
        %v7629 = vunpack.c.l.b16 %v3880
        %v7630 = vunpack.c.l.b16 %v3881
        %v7631 = vunpack.c.l.b16 %v3882
        %v7632 = vunpack.c.l.b16 %v3883
        %v7633 = vunpack.c.l.b16 %v3884
        %v7634 = vunpack.c.l.b16 %v3885
        %v7635 = vunpack.c.l.b16 %v3886
        %v7636 = vunpack.c.l.b16 %v3887
        %v7637 = vpack.c.b16 %v7622, %v7621
        %v7638 = vpack.c.b16 %v7624, %v7623
        %v7639 = vpack.c.b16 %v7626, %v7625
        %v7640 = vpack.c.b16 %v7628, %v7627
        %v7641 = vpack.c.b16 %v7630, %v7629
        %v7642 = vpack.c.b16 %v7632, %v7631
        %v7643 = vpack.c.b16 %v7634, %v7633
        %v7644 = vpack.c.b16 %v7636, %v7635
        %7645 = vrot.lane.b32.xlu0 %v7637, 96
        %v7646 = vpop.permute.xlu0 %7645
        %7647 = vrot.lane.b32.xlu0 %v7638, 96
        %v7648 = vpop.permute.xlu0 %7647
        %7649 = vrot.lane.b32.xlu0 %v7639, 96
        %v7650 = vpop.permute.xlu0 %7649
        %7651 = vrot.lane.b32.xlu0 %v7640, 96
        %v7652 = vpop.permute.xlu0 %7651
        %7653 = vrot.lane.b32.xlu0 %v7641, 96
        %v7654 = vpop.permute.xlu0 %7653
        %7655 = vrot.lane.b32.xlu0 %v7642, 96
        %v7656 = vpop.permute.xlu0 %7655
        %7657 = vrot.lane.b32.xlu0 %v7643, 96
        %v7658 = vpop.permute.xlu0 %7657
        %7659 = vrot.lane.b32.xlu0 %v7644, 96
        %v7660 = vpop.permute.xlu0 %7659
        %v7677 = vunpack.c.l.b16 %v7549
        %v7678 = vunpack.c.l.b16 %v7550
        %v7679 = vunpack.c.l.b16 %v7551
        %v7680 = vunpack.c.l.b16 %v7552
        %v7681 = vunpack.c.l.b16 %v7553
        %v7682 = vunpack.c.l.b16 %v7554
        %v7683 = vunpack.c.l.b16 %v7555
        %v7684 = vunpack.c.l.b16 %v7556
        %v7685 = vunpack.c.l.b16 %v7557
        %v7686 = vunpack.c.l.b16 %v7558
        %v7687 = vunpack.c.l.b16 %v7559
        %v7688 = vunpack.c.l.b16 %v7560
        %v7689 = vunpack.c.l.b16 %v7561
        %v7690 = vunpack.c.l.b16 %v7562
        %v7691 = vunpack.c.l.b16 %v7563
        %v7692 = vunpack.c.l.b16 %v7564
        %v7693 = vpack.c.b16 %v7678, %v7677
        %v7694 = vpack.c.b16 %v7680, %v7679
        %v7695 = vpack.c.b16 %v7682, %v7681
        %v7696 = vpack.c.b16 %v7684, %v7683
        %v7697 = vpack.c.b16 %v7686, %v7685
        %v7698 = vpack.c.b16 %v7688, %v7687
        %v7699 = vpack.c.b16 %v7690, %v7689
        %v7700 = vpack.c.b16 %v7692, %v7691
        %7701 = vrot.lane.b32.xlu0 %v7693, 64
        %v7702 = vpop.permute.xlu0 %7701
        %7703 = vrot.lane.b32.xlu0 %v7694, 64
        %v7704 = vpop.permute.xlu0 %7703
        %7705 = vrot.lane.b32.xlu0 %v7695, 64
        %v7706 = vpop.permute.xlu0 %7705
        %7707 = vrot.lane.b32.xlu0 %v7696, 64
        %v7708 = vpop.permute.xlu0 %7707
        %7709 = vrot.lane.b32.xlu0 %v7697, 64
        %v7710 = vpop.permute.xlu0 %7709
        %7711 = vrot.lane.b32.xlu0 %v7698, 64
        %v7712 = vpop.permute.xlu0 %7711
        %7713 = vrot.lane.b32.xlu0 %v7699, 64
        %v7714 = vpop.permute.xlu0 %7713
        %7715 = vrot.lane.b32.xlu0 %v7700, 64
        %v7716 = vpop.permute.xlu0 %7715
        %7717 = vrot.lane.b32.xlu0 %v2313, 32
        %v7718 = vpop.permute.xlu0 %7717
        %7719 = vrot.lane.b32.xlu0 %v2314, 32
        %v7720 = vpop.permute.xlu0 %7719
        %7721 = vrot.lane.b32.xlu0 %v2315, 32
        %v7722 = vpop.permute.xlu0 %7721
        %7723 = vrot.lane.b32.xlu0 %v2316, 32
        %v7724 = vpop.permute.xlu0 %7723
        %7725 = vrot.lane.b32.xlu0 %v2333, 32
        %v7726 = vpop.permute.xlu0 %7725
        %7727 = vrot.lane.b32.xlu0 %v2334, 32
        %v7728 = vpop.permute.xlu0 %7727
        %7729 = vrot.lane.b32.xlu0 %v2335, 32
        %v7730 = vpop.permute.xlu0 %7729
        %7731 = vrot.lane.b32.xlu0 %v2336, 32
        %v7732 = vpop.permute.xlu0 %7731
        %v7735 = vsel %vm1895, %v7597, %v7646
        %v7738 = vsel %vm1895, %v7598, %v7648
        %v7741 = vsel %vm1895, %v7599, %v7650
        %v7744 = vsel %vm1895, %v7600, %v7652
        %v7747 = vsel %vm1895, %v7601, %v7654
        %v7750 = vsel %vm1895, %v7602, %v7656
        %v7753 = vsel %vm1895, %v7603, %v7658
        %v7756 = vsel %vm1895, %v7604, %v7660
        %v7758 = vsel %vm2338, %v7646, %v7702
        %v7760 = vsel %vm2338, %v7648, %v7704
        %v7762 = vsel %vm2338, %v7650, %v7706
        %v7764 = vsel %vm2338, %v7652, %v7708
        %v7766 = vsel %vm2338, %v7654, %v7710
        %v7768 = vsel %vm2338, %v7656, %v7712
        %v7770 = vsel %vm2338, %v7658, %v7714
        %v7772 = vsel %vm2338, %v7660, %v7716
        %vm7773 = vcmask 261120
        %v7775 = vsel %vm7773, %v7702, %v7718
        %v7777 = vsel %vm7773, %v7704, %v7720
        %v7779 = vsel %vm7773, %v7706, %v7722
        %v7781 = vsel %vm7773, %v7708, %v7724
        %v7783 = vsel %vm7773, %v7710, %v7726
        %v7785 = vsel %vm7773, %v7712, %v7728
        %v7787 = vsel %vm7773, %v7714, %v7730
        %v7789 = vsel %vm7773, %v7716, %v7732
        %v7814 = vunpack.c.l.b16 %v7735
        %v7815 = vunpack.c.l.b16 %v7758
        %v7816 = vunpack.c.l.b16 %v7775
        %v7817 = vunpack.c.h.b16 %v7735
        %v7818 = vunpack.c.h.b16 %v7758
        %v7819 = vunpack.c.h.b16 %v7775
        %v7820 = vunpack.c.l.b16 %v7738
        %v7821 = vunpack.c.l.b16 %v7760
        %v7822 = vunpack.c.l.b16 %v7777
        %v7823 = vunpack.c.h.b16 %v7738
        %v7824 = vunpack.c.h.b16 %v7760
        %v7825 = vunpack.c.h.b16 %v7777
        %v7826 = vunpack.c.l.b16 %v7741
        %v7827 = vunpack.c.l.b16 %v7762
        %v7828 = vunpack.c.l.b16 %v7779
        %v7829 = vunpack.c.h.b16 %v7741
        %v7830 = vunpack.c.h.b16 %v7762
        %v7831 = vunpack.c.h.b16 %v7779
        %v7832 = vunpack.c.l.b16 %v7744
        %v7833 = vunpack.c.l.b16 %v7764
        %v7834 = vunpack.c.l.b16 %v7781
        %v7835 = vunpack.c.h.b16 %v7744
        %v7836 = vunpack.c.h.b16 %v7764
        %v7837 = vunpack.c.h.b16 %v7781
        %v7838 = vunpack.c.l.b16 %v7747
        %v7839 = vunpack.c.l.b16 %v7766
        %v7840 = vunpack.c.l.b16 %v7783
        %v7841 = vunpack.c.h.b16 %v7747
        %v7842 = vunpack.c.h.b16 %v7766
        %v7843 = vunpack.c.h.b16 %v7783
        %v7844 = vunpack.c.l.b16 %v7750
        %v7845 = vunpack.c.l.b16 %v7768
        %v7846 = vunpack.c.l.b16 %v7785
        %v7847 = vunpack.c.h.b16 %v7750
        %v7848 = vunpack.c.h.b16 %v7768
        %v7849 = vunpack.c.h.b16 %v7785
        %v7850 = vunpack.c.l.b16 %v7753
        %v7851 = vunpack.c.l.b16 %v7770
        %v7852 = vunpack.c.l.b16 %v7787
        %v7853 = vunpack.c.h.b16 %v7753
        %v7854 = vunpack.c.h.b16 %v7770
        %v7855 = vunpack.c.h.b16 %v7787
        %v7856 = vunpack.c.l.b16 %v7756
        %v7857 = vunpack.c.l.b16 %v7772
        %v7858 = vunpack.c.l.b16 %v7789
        %v7859 = vunpack.c.h.b16 %v7756
        %v7860 = vunpack.c.h.b16 %v7772
        %v7861 = vunpack.c.h.b16 %v7789
        %v7862 = vpack.c.b16 %v7815, %v7814
        %v7863 = vpack.c.b16 %v7816, %v7816
        %v7864 = vpack.c.b16 %v7818, %v7817
        %v7865 = vpack.c.b16 %v7819, %v7819
        %v7866 = vpack.c.b16 %v7821, %v7820
        %v7867 = vpack.c.b16 %v7822, %v7822
        %v7868 = vpack.c.b16 %v7824, %v7823
        %v7869 = vpack.c.b16 %v7825, %v7825
        %v7870 = vpack.c.b16 %v7827, %v7826
        %v7871 = vpack.c.b16 %v7828, %v7828
        %v7872 = vpack.c.b16 %v7830, %v7829
        %v7873 = vpack.c.b16 %v7831, %v7831
        %v7874 = vpack.c.b16 %v7833, %v7832
        %v7875 = vpack.c.b16 %v7834, %v7834
        %v7876 = vpack.c.b16 %v7836, %v7835
        %v7877 = vpack.c.b16 %v7837, %v7837
        %v7878 = vpack.c.b16 %v7839, %v7838
        %v7879 = vpack.c.b16 %v7840, %v7840
        %v7880 = vpack.c.b16 %v7842, %v7841
        %v7881 = vpack.c.b16 %v7843, %v7843
        %v7882 = vpack.c.b16 %v7845, %v7844
        %v7883 = vpack.c.b16 %v7846, %v7846
        %v7884 = vpack.c.b16 %v7848, %v7847
        %v7885 = vpack.c.b16 %v7849, %v7849
        %v7886 = vpack.c.b16 %v7851, %v7850
        %v7887 = vpack.c.b16 %v7852, %v7852
        %v7888 = vpack.c.b16 %v7854, %v7853
        %v7889 = vpack.c.b16 %v7855, %v7855
        %v7890 = vpack.c.b16 %v7857, %v7856
        %v7891 = vpack.c.b16 %v7858, %v7858
        %v7892 = vpack.c.b16 %v7860, %v7859
        %v7893 = vpack.c.b16 %v7861, %v7861
        %7926 = vst [vmem:[%s382] sm:$0xff] %v7862
        %7927 = vst [vmem:[%s382 + $0x8] sm:$0xf] %v7863
        %7928 = vst [vmem:[%s382 + $0xc] sm:$0xff] %v7864
        %7929 = vst [vmem:[%s382 + $0x14] sm:$0xf] %v7865
        %7930 = vst [vmem:[%s382 + $0x18] sm:$0xff] %v7866
        %7931 = vst [vmem:[%s382 + $0x20] sm:$0xf] %v7867
        %7932 = vst [vmem:[%s382 + $0x24] sm:$0xff] %v7868
        %7933 = vst [vmem:[%s382 + $0x2c] sm:$0xf] %v7869
        %7934 = vst [vmem:[%s382 + $0x30] sm:$0xff] %v7870
        %7935 = vst [vmem:[%s382 + $0x38] sm:$0xf] %v7871
        %7936 = vst [vmem:[%s382 + $0x3c] sm:$0xff] %v7872
        %7937 = vst [vmem:[%s382 + $0x44] sm:$0xf] %v7873
        %7938 = vst [vmem:[%s382 + $0x48] sm:$0xff] %v7874
        %7939 = vst [vmem:[%s382 + $0x50] sm:$0xf] %v7875
        %7940 = vst [vmem:[%s382 + $0x54] sm:$0xff] %v7876
        %7941 = vst [vmem:[%s382 + $0x5c] sm:$0xf] %v7877
        %7942 = vst [vmem:[%s382 + $0x60] sm:$0xff] %v7878
        %7943 = vst [vmem:[%s382 + $0x68] sm:$0xf] %v7879
        %7944 = vst [vmem:[%s382 + $0x6c] sm:$0xff] %v7880
        %7945 = vst [vmem:[%s382 + $0x74] sm:$0xf] %v7881
        %7946 = vst [vmem:[%s382 + $0x78] sm:$0xff] %v7882
        %7947 = vst [vmem:[%s382 + $0x80] sm:$0xf] %v7883
        %7948 = vst [vmem:[%s382 + $0x84] sm:$0xff] %v7884
        %7949 = vst [vmem:[%s382 + $0x8c] sm:$0xf] %v7885
        %7950 = vst [vmem:[%s382 + $0x90] sm:$0xff] %v7886
        %7951 = vst [vmem:[%s382 + $0x98] sm:$0xf] %v7887
        %7952 = vst [vmem:[%s382 + $0x9c] sm:$0xff] %v7888
        %7953 = vst [vmem:[%s382 + $0xa4] sm:$0xf] %v7889
        %7954 = vst [vmem:[%s382 + $0xa8] sm:$0xff] %v7890
        %7955 = vst [vmem:[%s382 + $0xb0] sm:$0xf] %v7891
        %7956 = vst [vmem:[%s382 + $0xb4] sm:$0xff] %v7892
        %7957 = vst [vmem:[%s382 + $0xbc] sm:$0xf] %v7893
        %s7958 = sand.u32 %s269, 1
        %s7959 = scalar_lea.sflag [#allocation6], %s7958
        %s7960 = sand.u32 %s269, 1
        %s7961 = smul.addr %s7960, 192
        %s7962 = scalar_lea.vmem [#allocation5], %s7961
        // Predicated region
        $region65: #{inception_a_forward.1} parent=63 // pred_check
          %p7963 = pneg %p279
        $region66: #{inception_a_forward.1} parent=63 // pred_check_branch
          %7965 = sbr.rel (%p7963) target = $region68
        $region67: #{inception_a_forward.1} parent=63 // pred_region
          %s7966 = smul.u32 2, %s25
          %7968 = vsyncadd %s7959, 0
          %s7969 = smul.addr %s7966, 24
          %s7970 = smul.addr %s7969, 4
          %s7971 = scalar_lea.hbm %s11, %s7970
          %s7972 = sshll.u32 %s7962, 4
          %s7973 = int_to_ptr.vmem [resolvable:$true] %s7972
          %s7974 = sshll.u32 %s7971, 4
          %s7975 = int_to_ptr.hbm [resolvable:$true] %s7974
          %7980 = dma.vmem_to_hbm [thread:$0]  %s7973, 3072, %s7975, %s7959, 192, 192, 12
        $region68: #{inception_a_forward.1} parent=63 // pred_fallthru
          _
      $region64: #{inception_a_forward.1} parent=5 // pred_fallthru
        _
      %p7981 = scmp.le.s32.totalorder 2, %s20
      // Predicated region
      $region69: #{inception_a_forward.1} parent=5 // pred_check
        %p7982 = pneg %p7981
      $region70: #{inception_a_forward.1} parent=5 // pred_check_branch
        %7984 = sbr.rel (%p7982) target = $region72
      $region71: #{inception_a_forward.1} parent=5 // pred_region
        %s7985 = ssub.s32 %s20, 2
        // Predicated region
        $region73: #{inception_a_forward.1} parent=71 // pred_check
          %p7986 = pneg %p285
        $region74: #{inception_a_forward.1} parent=71 // pred_check_branch
          %7988 = sbr.rel (%p7986) target = $region76
        $region75: #{inception_a_forward.1} parent=71 // pred_region
          %s7989 = sand.u32 %s270, 1
          %s7990 = scalar_lea.sflag [#allocation6], %s7989
          %s7991 = sand.u32 %s270, 1
          %s7992 = smul.addr %s7991, 192
          %s7993 = scalar_lea.vmem [#allocation5], %s7992
          %7995 = dma.done %s7990, 3072
        $region76: #{inception_a_forward.1} parent=71 // pred_fallthru
          _
      $region72: #{inception_a_forward.1} parent=5 // pred_fallthru
        _
    $region6: #{inception_a_forward.1} parent=1 // loop_footer
      %s24 = sadd.s32 1, %s20
    $region7: #{inception_a_forward.1} parent=1 // loop_footer_branch
      %19 = sbr.rel target = $region3
    $region8: #{inception_a_forward.1} parent=1 // loop_exit
      _
    %7996 = vsyncpa [#allocation6], 1
    %s7997 = scalar_lea.sflag [#allocation6], 1
    %7998 = vsyncpa %s7997, 1

</llo_original>
